<compile_context>
chip_gen: v5e
topology: v5e:2x2
jax: 0.10.0
libtpu: 0.0.40
codegen_flags: <defaults>
</compile_context>

<pallas_src>
import jax
import jax.numpy as jnp
from jax.experimental import pallas as pl
from jax.experimental.pallas import tpu as pltpu

_EPS = 1e-5  # nn.GroupNorm default eps


def time_encoding_vec(dim, t):
    """Per-channel equivalent of time_encoding2d (it is constant over H, W)."""
    assert dim % 2 == 0
    h_dim = dim // 2
    i = jnp.arange(h_dim, dtype=jnp.float32)
    div = jnp.power(10000.0, i * 2.0 / dim)
    pe = jnp.zeros((dim,), jnp.float32)
    pe = pe.at[0::2].set(jnp.sin(t) / div)
    pe = pe.at[1::2].set(jnp.cos(t) / div)
    return pe


# ---------------------------------------------------------------------------
# Chip-aware tiling helpers
# ---------------------------------------------------------------------------
def _vmem_budget_bytes():
    """~75% of the chip's per-core VMEM (v5e/v6e: 128 MiB, v7x: 64 MiB)."""
    cap = None
    try:
        cap = int(pltpu.get_tpu_info().vmem_capacity_bytes)
    except Exception:
        cap = None
    if not cap or cap <= 0:
        cap = 64 * 1024 * 1024  # conservative (v7x per-TensorCore) fallback
    return (cap * 3) // 4


def _num_tensorcores():
    """2 TensorCores per chip on v7x, 1 on v5e/v6e (best-effort detection)."""
    try:
        kind = (jax.devices()[0].device_kind or "").lower()
    except Exception:
        return 1
    return 2 if ("v7" in kind or "tpu7" in kind) else 1


def _step_vmem_bytes(Bt, H, W, Cin, Cout, in_bytes, mxu_bytes, out_bytes, downsample):
    """Rough per-grid-step VMEM footprint (double-buffered I/O + scratch + live values)."""
    HW = H * W
    M = Bt * HW
    Hp, Wp = H + 2, W + 2
    inp = 2 * Bt * Hp * Wp * Cin * in_bytes            # double-buffered input block
    out = 2 * Bt * Cout * HW * out_bytes               # double-buffered output block
    pad_b = Bt * Hp * Wp * Cout * mxu_bytes            # conv2 padded scratch
    weights = 2 * (9 * Cin * Cout + 9 * Cout * Cout
                   + (Cin * Cout if downsample else 0)) * mxu_bytes
    inter = 4 * M * Cout * 4                           # f32 h1 / acc / gn / residual
    if Cin < 128:
        inter += M * 9 * Cin * mxu_bytes               # conv1 concat slab (small-C path)
    if Cout < 128:
        inter += M * 9 * Cout * mxu_bytes              # conv2 concat slab (small-C path)
    return inp + out + pad_b + weights + inter + (2 << 20)


def _pick_batch_tile(B, budget, footprint, num_cores):
    """Largest batch tile whose footprint fits; on 2-core chips prefer even step counts."""
    divisors = [d for d in range(B, 0, -1) if B % d == 0]
    fitting = [d for d in divisors if footprint(d) <= budget] or [1]
    if num_cores >= 2:
        even = [d for d in fitting if (B // d) % 2 == 0]
        if even:
            return even[0]
    return fitting[0]


# ---------------------------------------------------------------------------
# Kernel
# ---------------------------------------------------------------------------
def _make_kernel(Bt, H, W, Cin, Cout, downsample, mxu_dtype, accum1, accum2):
    HW = H * W
    M = Bt * HW

    def kernel(*refs):
        if downsample:
            (xpad_ref,
             w1_ref, b1_ref, g1_ref, be1_ref,
             w2_ref, b2_ref, g2_ref, be2_ref,
             wd_ref, bd_ref, gd_ref, bed_ref,
             out_ref, padB) = refs
        else:
            (xpad_ref,
             w1_ref, b1_ref, g1_ref, be1_ref,
             w2_ref, b2_ref, g2_ref, be2_ref,
             out_ref, padB) = refs

        def group_norm(h, g, b):
            # GroupNorm with num_groups == num_channels: per-image, per-channel stats over H*W.
            h3 = h.reshape(Bt, HW, Cout)
            mean = jnp.mean(h3, axis=1, keepdims=True)
            var = jnp.mean(jnp.square(h3 - mean), axis=1, keepdims=True)
            out = (h3 - mean) * jax.lax.rsqrt(var + _EPS) * g + b
            return out.reshape(M, Cout)

        def conv3x3(tap, w_ref, b_ref, use_accum):
            if use_accum:
                # 9 accumulated MXU matmuls with per-tap (C, Cout) weights: no (M, 9C) slab.
                acc = None
                for ky in range(3):
                    for kx in range(3):
                        p = jnp.dot(tap(ky, kx), w_ref[ky, kx],
                                    preferred_element_type=jnp.float32)
                        acc = p if acc is None else acc + p
            else:
                # Small-channel path: single im2col matmul with K = 9*C.
                slab = jnp.concatenate(
                    [tap(ky, kx) for ky in range(3) for kx in range(3)], axis=-1)
                acc = jnp.dot(slab, w_ref[...], preferred_element_type=jnp.float32)
            return acc + b_ref[...]

        # ---- conv1: 3x3 taps taken straight from the pre-padded input block ----
        def tap1(ky, kx):
            return xpad_ref[:, ky:ky + H, kx:kx + W, :].reshape(M, Cin).astype(mxu_dtype)

        acc1 = conv3x3(tap1, w1_ref, b1_ref, accum1)
        h1 = jnp.maximum(group_norm(acc1, g1_ref[...], be1_ref[...]), 0.0)

        # ---- conv2: pad h1 into the VMEM scratch.  Only the thin halo is re-zeroed each
        #      step; the interior is fully overwritten every grid step (keep that invariant).
        zeros_row = jnp.zeros((Bt, 1, W + 2, Cout), padB.dtype)
        zeros_col = jnp.zeros((Bt, H, 1, Cout), padB.dtype)
        padB[:, 0:1, :, :] = zeros_row
        padB[:, H + 1:H + 2, :, :] = zeros_row
        padB[:, 1:H + 1, 0:1, :] = zeros_col
        padB[:, 1:H + 1, W + 1:W + 2, :] = zeros_col
        padB[:, 1:H + 1, 1:W + 1, :] = h1.reshape(Bt, H, W, Cout).astype(padB.dtype)

        def tap2(ky, kx):
            return padB[:, ky:ky + H, kx:kx + W, :].reshape(M, Cout)

        acc2 = conv3x3(tap2, w2_ref, b2_ref, accum2)
        gn2 = group_norm(acc2, g2_ref[...], be2_ref[...])

        # ---- residual / 1x1-downsample path: center tap of the padded input ----
        xpe = xpad_ref[:, 1:H + 1, 1:W + 1, :].reshape(M, Cin)
        if downsample:
            d = jnp.dot(xpe.astype(mxu_dtype), wd_ref[...],
                        preferred_element_type=jnp.float32) + bd_ref[...]
            res = group_norm(d, gd_ref[...], bed_ref[...])
        else:
            res = xpe.astype(jnp.float32)   # identity path: input was kept f32; Cin == Cout

        z = jnp.maximum(res + gn2, 0.0)                               # (M, Cout) f32
        # Lane-dense store: (Bt, Cout, HW) with HW on the lane axis.
        out_ref[...] = jnp.transpose(z.reshape(Bt, HW, Cout), (0, 2, 1)).astype(out_ref.dtype)

    return kernel


# ---------------------------------------------------------------------------
# Wrapper
# ---------------------------------------------------------------------------
def downsample_block_forward(params, x_nchw, t, *, batch_tile=None,
                             mxu_dtype=jnp.bfloat16, out_dtype=jnp.float32,
                             force_tap_accum=False):
    """Forward pass of DownsampleBlock.

    x_nchw: (B, Cin, H, W) float32, t: scalar.  Returns (z_nchw, t).
    mxu_dtype=bf16 by default (f32 accumulation / f32 GN stats kept on all chips).
    """
    B, Cin, H, W = x_nchw.shape
    Cout = params["w1"].shape[-1]
    downsample = "wd" in params
    if not downsample:
        assert Cin == Cout
    HW = H * W

    # bf16 activations are fine when the residual goes through the 1x1-conv+GN path;
    # the identity residual keeps the f32 x+pe for full precision.
    in_dtype = mxu_dtype if downsample else jnp.float32
    in_bytes = jnp.dtype(in_dtype).itemsize
    mxu_bytes = jnp.dtype(mxu_dtype).itemsize
    out_bytes = jnp.dtype(out_dtype).itemsize

    budget = int(_vmem_budget_bytes())
    cores = _num_tensorcores()
    if batch_tile is None:
        Bt = _pick_batch_tile(
            B, budget,
            lambda bt: _step_vmem_bytes(bt, H, W, Cin, Cout,
                                        in_bytes, mxu_bytes, out_bytes, downsample),
            cores)
    else:
        Bt = batch_tile
    assert B % Bt == 0

    # x + time encoding (constant over H, W -> per-channel), padded once in XLA (NHWC).
    pe = time_encoding_vec(Cin, t)
    x = jnp.transpose(x_nchw, (0, 2, 3, 1)).astype(jnp.float32) + pe.reshape(1, 1, 1, Cin)
    xpad = jnp.pad(x, ((0, 0), (1, 1), (1, 1), (0, 0))).astype(in_dtype)  # (B, H+2, W+2, Cin)

    # Per-tap accumulated matmuls when the channel count gives a reasonable MXU K.
    accum1 = force_tap_accum or (Cin >= 128)
    accum2 = force_tap_accum or (Cout >= 128)

    w1 = params["w1"].astype(mxu_dtype)
    if not accum1:
        w1 = w1.reshape(9 * Cin, Cout)          # (ky, kx, cin) flattening matches the taps
    w2 = params["w2"].astype(mxu_dtype)
    if not accum2:
        w2 = w2.reshape(9 * Cout, Cout)

    inputs = [xpad,
              w1, params["b1"], params["g1"], params["be1"],
              w2, params["b2"], params["g2"], params["be2"]]
    if downsample:
        inputs += [params["wd"].astype(mxu_dtype),
                   params["bd"], params["gd"], params["bed"]]

    def full_spec(a):
        nd = a.ndim
        return pl.BlockSpec(a.shape, lambda n, _nd=nd: (0,) * _nd)

    in_specs = [pl.BlockSpec((Bt, H + 2, W + 2, Cin), lambda n: (n, 0, 0, 0))]
    in_specs += [full_spec(a) for a in inputs[1:]]

    kernel = _make_kernel(Bt, H, W, Cin, Cout, downsample, mxu_dtype, accum1, accum2)

    out = pl.pallas_call(
        kernel,
        out_shape=jax.ShapeDtypeStruct((B, Cout, HW), out_dtype),
        grid=(B // Bt,),
        in_specs=in_specs,
        out_specs=pl.BlockSpec((Bt, Cout, HW), lambda n: (n, 0, 0)),
        scratch_shapes=[pltpu.VMEM((Bt, H + 2, W + 2, Cout), mxu_dtype)],
        compiler_params=pltpu.CompilerParams(
            dimension_semantics=("parallel",),
            vmem_limit_bytes=budget),
    )(*inputs)

    # Kernel already emitted NCHW-flattened (B, Cout, H*W); reshape only (no transpose).
    z_nchw = out.reshape(B, Cout, H, W)
    return z_nchw, t


# ---------------------------------------------------------------------------
# Synthetic parameters + pure-JAX reference
# ---------------------------------------------------------------------------
def init_params(key, in_channels, out_channels):
    """Deterministic synthetic parameters matching the nn.Module shapes."""
    ks = jax.random.split(key, 16)

    def conv_w(k, kh, kw, ci, co):
        bound = 1.0 / jnp.sqrt(float(ci * kh * kw))
        return jax.random.uniform(k, (kh, kw, ci, co), jnp.float32, -bound, bound)

    def vec(k, c, lo=-0.1, hi=0.1):
        return jax.random.uniform(k, (1, c), jnp.float32, lo, hi)

    p = {
        "w1": conv_w(ks[0], 3, 3, in_channels, out_channels),
        "b1": vec(ks[1], out_channels),
        "g1": 1.0 + 0.05 * jax.random.normal(ks[2], (1, out_channels), jnp.float32),
        "be1": 0.05 * jax.random.normal(ks[3], (1, out_channels), jnp.float32),
        "w2": conv_w(ks[4], 3, 3, out_channels, out_channels),
        "b2": vec(ks[5], out_channels),
        "g2": 1.0 + 0.05 * jax.random.normal(ks[6], (1, out_channels), jnp.float32),
        "be2": 0.05 * jax.random.normal(ks[7], (1, out_channels), jnp.float32),
    }
    if in_channels != out_channels:
        p["wd"] = conv_w(ks[8], 1, 1, in_channels, out_channels).reshape(in_channels, out_channels)
        p["bd"] = vec(ks[9], out_channels)
        p["gd"] = 1.0 + 0.05 * jax.random.normal(ks[10], (1, out_channels), jnp.float32)
        p["bed"] = 0.05 * jax.random.normal(ks[11], (1, out_channels), jnp.float32)
    return p


def _ref_forward(params, x_nchw, t):
    """Pure-JAX reference (no Pallas) used to sanity-check the kernel."""
    B, C, H, W = x_nchw.shape
    pe = time_encoding_vec(C, t)
    x = jnp.transpose(x_nchw, (0, 2, 3, 1)).astype(jnp.float32) + pe.reshape(1, 1, 1, C)

    def conv(xx, w, b):
        y = jax.lax.conv_general_dilated(
            xx, w, (1, 1), "SAME",
            dimension_numbers=("NHWC", "HWIO", "NHWC"),
            precision=jax.lax.Precision.HIGHEST)
        return y + b.reshape(1, 1, 1, -1)

    def gn(h, g, b):
        mean = jnp.mean(h, axis=(1, 2), keepdims=True)
        var = jnp.mean(jnp.square(h - mean), axis=(1, 2), keepdims=True)
        return (h - mean) / jnp.sqrt(var + _EPS) * g.reshape(1, 1, 1, -1) + b.reshape(1, 1, 1, -1)

    h = conv(x, params["w1"], params["b1"])
    h = jnp.maximum(gn(h, params["g1"], params["be1"]), 0.0)
    h = conv(h, params["w2"], params["b2"])
    h = gn(h, params["g2"], params["be2"])
    if "wd" in params:
        d = jnp.einsum("bhwc,cd->bhwd", x, params["wd"],
                       precision=jax.lax.Precision.HIGHEST) + params["bd"].reshape(1, 1, 1, -1)
        res = gn(d, params["gd"], params["bed"])
    else:
        res = x
    z = jnp.maximum(res + h, 0.0)
    return jnp.transpose(z, (0, 3, 1, 2)), t


if __name__ == "__main__":
    key = jax.random.PRNGKey(0)
    kx, kp1, kp2 = jax.random.split(key, 3)

    B, Cin, Cout, H, W = 2, 4, 8, 16, 16
    x = jax.random.normal(kx, (B, Cin, H, W), jnp.float32)
    t = jnp.float32(0.7)

    p1 = init_params(kp1, Cin, Cout)   # in != out -> downsample (1x1 conv + GN) residual path
    p2 = init_params(kp2, Cin, Cin)    # in == out -> identity residual path
    z1_ref, _ = _ref_forward(p1, x, t)
    z2_ref, _ = _ref_forward(p2, x, t)

    # Case 1/2: f32 MXU operands — tight tolerance.
    z1, t1 = downsample_block_forward(p1, x, t, mxu_dtype=jnp.float32)
    z1 = jax.block_until_ready(z1)
    assert z1.shape == (B, Cout, H, W)
    assert jnp.allclose(z1, z1_ref, atol=1e-2, rtol=1e-2), float(jnp.max(jnp.abs(z1 - z1_ref)))

    z2, _ = downsample_block_forward(p2, x, t, mxu_dtype=jnp.float32)
    z2 = jax.block_until_ready(z2)
    assert z2.shape == (B, Cin, H, W)
    assert jnp.allclose(z2, z2_ref, atol=1e-2, rtol=1e-2), float(jnp.max(jnp.abs(z2 - z2_ref)))

    # Case 3/4: default bf16 MXU operands (fast path on v5e/v6e/v7x) — looser tolerance.
    z3, _ = downsample_block_forward(p1, x, t)
    z3 = jax.block_until_ready(z3)
    assert jnp.allclose(z3, z1_ref, atol=7e-2, rtol=7e-2), float(jnp.max(jnp.abs(z3 - z1_ref)))

    z4, _ = downsample_block_forward(p2, x, t)
    z4 = jax.block_until_ready(z4)
    assert jnp.allclose(z4, z2_ref, atol=7e-2, rtol=7e-2), float(jnp.max(jnp.abs(z4 - z2_ref)))

    # Case 5: exercise the per-tap accumulated-matmul conv path (used when C >= 128).
    z5, _ = downsample_block_forward(p1, x, t, mxu_dtype=jnp.float32, force_tap_accum=True)
    z5 = jax.block_until_ready(z5)
    assert jnp.allclose(z5, z1_ref, atol=1e-2, rtol=1e-2), float(jnp.max(jnp.abs(z5 - z1_ref)))

    print("KERNEL_OK")
</pallas_src>

<mosaic_0001>
module attributes {stable_mosaic.version = 11 : i64} {
  func.func @kernel(%arg0: i32, %arg1: memref<2x18x18x4xf32, #tpu.memory_space<vmem>>, %arg2: memref<36x8xf32, #tpu.memory_space<vmem>>, %arg3: memref<1x8xf32, #tpu.memory_space<vmem>>, %arg4: memref<1x8xf32, #tpu.memory_space<vmem>>, %arg5: memref<1x8xf32, #tpu.memory_space<vmem>>, %arg6: memref<72x8xf32, #tpu.memory_space<vmem>>, %arg7: memref<1x8xf32, #tpu.memory_space<vmem>>, %arg8: memref<1x8xf32, #tpu.memory_space<vmem>>, %arg9: memref<1x8xf32, #tpu.memory_space<vmem>>, %arg10: memref<4x8xf32, #tpu.memory_space<vmem>>, %arg11: memref<1x8xf32, #tpu.memory_space<vmem>>, %arg12: memref<1x8xf32, #tpu.memory_space<vmem>>, %arg13: memref<1x8xf32, #tpu.memory_space<vmem>>, %arg14: memref<2x8x256xf32, #tpu.memory_space<vmem>>, %arg15: memref<2x18x18x8xf32, #tpu.memory_space<vmem>>) attributes {dimension_semantics = [#tpu.dimension_semantics<parallel>], iteration_bounds = array<i64: 1>, scalar_prefetch = 0 : i64, scratch_operands = 1 : i64, tpu.core_type = #tpu.core_type<tc>, window_params = [{transform_indices = @transform_0, window_bounds = array<i64: 2, 18, 18, 4>}, {pipeline_mode = #tpu.pipeline_mode<synchronous>, transform_indices = @transform_1, window_bounds = array<i64: 36, 8>}, {pipeline_mode = #tpu.pipeline_mode<synchronous>, transform_indices = @transform_2, window_bounds = array<i64: 1, 8>}, {pipeline_mode = #tpu.pipeline_mode<synchronous>, transform_indices = @transform_3, window_bounds = array<i64: 1, 8>}, {pipeline_mode = #tpu.pipeline_mode<synchronous>, transform_indices = @transform_4, window_bounds = array<i64: 1, 8>}, {pipeline_mode = #tpu.pipeline_mode<synchronous>, transform_indices = @transform_5, window_bounds = array<i64: 72, 8>}, {pipeline_mode = #tpu.pipeline_mode<synchronous>, transform_indices = @transform_6, window_bounds = array<i64: 1, 8>}, {pipeline_mode = #tpu.pipeline_mode<synchronous>, transform_indices = @transform_7, window_bounds = array<i64: 1, 8>}, {pipeline_mode = #tpu.pipeline_mode<synchronous>, transform_indices = @transform_8, window_bounds = array<i64: 1, 8>}, {pipeline_mode = #tpu.pipeline_mode<synchronous>, transform_indices = @transform_9, window_bounds = array<i64: 4, 8>}, {pipeline_mode = #tpu.pipeline_mode<synchronous>, transform_indices = @transform_10, window_bounds = array<i64: 1, 8>}, {pipeline_mode = #tpu.pipeline_mode<synchronous>, transform_indices = @transform_11, window_bounds = array<i64: 1, 8>}, {pipeline_mode = #tpu.pipeline_mode<synchronous>, transform_indices = @transform_12, window_bounds = array<i64: 1, 8>}, {transform_indices = @transform_13, window_bounds = array<i64: 2, 8, 256>}]} {
    %c0 = arith.constant 0 : index
    %c0_0 = arith.constant 0 : index
    %c0_1 = arith.constant 0 : index
    %c0_2 = arith.constant 0 : index
    %0 = vector.load %arg1[%c0, %c0_0, %c0_1, %c0_2] : memref<2x18x18x4xf32, #tpu.memory_space<vmem>>, vector<2x16x16x4xf32>
    %1 = vector.shape_cast %0 : vector<2x16x16x4xf32> to vector<512x4xf32>
    %c0_3 = arith.constant 0 : index
    %c0_4 = arith.constant 0 : index
    %c1 = arith.constant 1 : index
    %c0_5 = arith.constant 0 : index
    %2 = vector.load %arg1[%c0_3, %c0_4, %c1, %c0_5] : memref<2x18x18x4xf32, #tpu.memory_space<vmem>>, vector<2x16x16x4xf32>
    %3 = vector.shape_cast %2 : vector<2x16x16x4xf32> to vector<512x4xf32>
    %c0_6 = arith.constant 0 : index
    %c0_7 = arith.constant 0 : index
    %c2 = arith.constant 2 : index
    %c0_8 = arith.constant 0 : index
    %4 = vector.load %arg1[%c0_6, %c0_7, %c2, %c0_8] : memref<2x18x18x4xf32, #tpu.memory_space<vmem>>, vector<2x16x16x4xf32>
    %5 = vector.shape_cast %4 : vector<2x16x16x4xf32> to vector<512x4xf32>
    %c0_9 = arith.constant 0 : index
    %c1_10 = arith.constant 1 : index
    %c0_11 = arith.constant 0 : index
    %c0_12 = arith.constant 0 : index
    %6 = vector.load %arg1[%c0_9, %c1_10, %c0_11, %c0_12] : memref<2x18x18x4xf32, #tpu.memory_space<vmem>>, vector<2x16x16x4xf32>
    %7 = vector.shape_cast %6 : vector<2x16x16x4xf32> to vector<512x4xf32>
    %c0_13 = arith.constant 0 : index
    %c1_14 = arith.constant 1 : index
    %c1_15 = arith.constant 1 : index
    %c0_16 = arith.constant 0 : index
    %8 = vector.load %arg1[%c0_13, %c1_14, %c1_15, %c0_16] : memref<2x18x18x4xf32, #tpu.memory_space<vmem>>, vector<2x16x16x4xf32>
    %9 = vector.shape_cast %8 : vector<2x16x16x4xf32> to vector<512x4xf32>
    %c0_17 = arith.constant 0 : index
    %c1_18 = arith.constant 1 : index
    %c2_19 = arith.constant 2 : index
    %c0_20 = arith.constant 0 : index
    %10 = vector.load %arg1[%c0_17, %c1_18, %c2_19, %c0_20] : memref<2x18x18x4xf32, #tpu.memory_space<vmem>>, vector<2x16x16x4xf32>
    %11 = vector.shape_cast %10 : vector<2x16x16x4xf32> to vector<512x4xf32>
    %c0_21 = arith.constant 0 : index
    %c2_22 = arith.constant 2 : index
    %c0_23 = arith.constant 0 : index
    %c0_24 = arith.constant 0 : index
    %12 = vector.load %arg1[%c0_21, %c2_22, %c0_23, %c0_24] : memref<2x18x18x4xf32, #tpu.memory_space<vmem>>, vector<2x16x16x4xf32>
    %13 = vector.shape_cast %12 : vector<2x16x16x4xf32> to vector<512x4xf32>
    %c0_25 = arith.constant 0 : index
    %c2_26 = arith.constant 2 : index
    %c1_27 = arith.constant 1 : index
    %c0_28 = arith.constant 0 : index
    %14 = vector.load %arg1[%c0_25, %c2_26, %c1_27, %c0_28] : memref<2x18x18x4xf32, #tpu.memory_space<vmem>>, vector<2x16x16x4xf32>
    %15 = vector.shape_cast %14 : vector<2x16x16x4xf32> to vector<512x4xf32>
    %c0_29 = arith.constant 0 : index
    %c2_30 = arith.constant 2 : index
    %c2_31 = arith.constant 2 : index
    %c0_32 = arith.constant 0 : index
    %16 = vector.load %arg1[%c0_29, %c2_30, %c2_31, %c0_32] : memref<2x18x18x4xf32, #tpu.memory_space<vmem>>, vector<2x16x16x4xf32>
    %17 = vector.shape_cast %16 : vector<2x16x16x4xf32> to vector<512x4xf32>
    %18 = tpu.concatenate %1, %3, %5, %7, %9, %11, %13, %15, %17 in 1 : vector<512x4xf32>, vector<512x4xf32>, vector<512x4xf32>, vector<512x4xf32>, vector<512x4xf32>, vector<512x4xf32>, vector<512x4xf32>, vector<512x4xf32>, vector<512x4xf32> -> vector<512x36xf32>
    %c0_33 = arith.constant 0 : index
    %c0_34 = arith.constant 0 : index
    %19 = vector.load %arg2[%c0_33, %c0_34] : memref<36x8xf32, #tpu.memory_space<vmem>>, vector<36x8xf32>
    %cst = arith.constant dense<0.000000e+00> : vector<512x8xf32>
    %20 = tpu.matmul %18, %19, %cst {dimension_numbers = #tpu.dot_dimension_numbers<[1], [0], [0], [1], [0, 0, 1, 1], [], []>} : vector<512x36xf32>, vector<36x8xf32>, vector<512x8xf32> -> vector<512x8xf32>
    %c0_35 = arith.constant 0 : index
    %c0_36 = arith.constant 0 : index
    %21 = vector.load %arg3[%c0_35, %c0_36] : memref<1x8xf32, #tpu.memory_space<vmem>>, vector<1x8xf32>
    %22 = vector.broadcast %21 : vector<1x8xf32> to vector<512x8xf32>
    %23 = arith.addf %20, %22 : vector<512x8xf32>
    %c0_37 = arith.constant 0 : index
    %c0_38 = arith.constant 0 : index
    %24 = vector.load %arg4[%c0_37, %c0_38] : memref<1x8xf32, #tpu.memory_space<vmem>>, vector<1x8xf32>
    %c0_39 = arith.constant 0 : index
    %c0_40 = arith.constant 0 : index
    %25 = vector.load %arg5[%c0_39, %c0_40] : memref<1x8xf32, #tpu.memory_space<vmem>>, vector<1x8xf32>
    %26 = vector.shape_cast %23 : vector<512x8xf32> to vector<2x256x8xf32>
    %cst_41 = arith.constant dense<0.000000e+00> : vector<2x8xf32>
    %27 = vector.multi_reduction <add>, %26, %cst_41 [1] : vector<2x256x8xf32> to vector<2x8xf32>
    %28 = vector.shape_cast %27 : vector<2x8xf32> to vector<2x1x8xf32>
    %cst_42 = arith.constant 2.560000e+02 : f32
    %29 = vector.broadcast %cst_42 : f32 to vector<2x1x8xf32>
    %30 = arith.divf %28, %29 : vector<2x1x8xf32>
    %31 = vector.broadcast %30 : vector<2x1x8xf32> to vector<2x256x8xf32>
    %32 = arith.subf %26, %31 : vector<2x256x8xf32>
    %33 = arith.mulf %32, %32 : vector<2x256x8xf32>
    %cst_43 = arith.constant dense<0.000000e+00> : vector<2x8xf32>
    %34 = vector.multi_reduction <add>, %33, %cst_43 [1] : vector<2x256x8xf32> to vector<2x8xf32>
    %35 = vector.shape_cast %34 : vector<2x8xf32> to vector<2x1x8xf32>
    %cst_44 = arith.constant 2.560000e+02 : f32
    %36 = vector.broadcast %cst_44 : f32 to vector<2x1x8xf32>
    %37 = arith.divf %35, %36 : vector<2x1x8xf32>
    %38 = vector.broadcast %30 : vector<2x1x8xf32> to vector<2x256x8xf32>
    %39 = arith.subf %26, %38 : vector<2x256x8xf32>
    %cst_45 = arith.constant 9.99999974E-6 : f32
    %40 = vector.broadcast %cst_45 : f32 to vector<2x1x8xf32>
    %41 = arith.addf %37, %40 : vector<2x1x8xf32>
    %42 = math.rsqrt %41 : vector<2x1x8xf32>
    %43 = vector.broadcast %42 : vector<2x1x8xf32> to vector<2x256x8xf32>
    %44 = arith.mulf %39, %43 : vector<2x256x8xf32>
    %45 = vector.shape_cast %24 : vector<1x8xf32> to vector<1x1x8xf32>
    %46 = vector.broadcast %45 : vector<1x1x8xf32> to vector<2x256x8xf32>
    %47 = arith.mulf %44, %46 : vector<2x256x8xf32>
    %48 = vector.shape_cast %25 : vector<1x8xf32> to vector<1x1x8xf32>
    %49 = vector.broadcast %48 : vector<1x1x8xf32> to vector<2x256x8xf32>
    %50 = arith.addf %47, %49 : vector<2x256x8xf32>
    %51 = vector.shape_cast %50 : vector<2x256x8xf32> to vector<512x8xf32>
    %cst_46 = arith.constant 0.000000e+00 : f32
    %52 = vector.broadcast %cst_46 : f32 to vector<512x8xf32>
    %53 = arith.maximumf %51, %52 : vector<512x8xf32>
    %cst_47 = arith.constant 0.000000e+00 : f32
    %54 = vector.broadcast %cst_47 : f32 to vector<2x1x18x8xf32>
    %cst_48 = arith.constant 0.000000e+00 : f32
    %55 = vector.broadcast %cst_48 : f32 to vector<2x16x1x8xf32>
    %c0_49 = arith.constant 0 : index
    %c0_50 = arith.constant 0 : index
    %c0_51 = arith.constant 0 : index
    %c0_52 = arith.constant 0 : index
    %56 = vector.load %arg15[%c0_49, %c0_50, %c0_51, %c0_52] : memref<2x18x18x8xf32, #tpu.memory_space<vmem>>, vector<2x1x18x8xf32>
    tpu.vector_store %arg15[%c0_49, %c0_50, %c0_51, %c0_52], %54 {strides = array<i32>} : memref<2x18x18x8xf32, #tpu.memory_space<vmem>>, vector<2x1x18x8xf32>,
    %c0_53 = arith.constant 0 : index
    %c17 = arith.constant 17 : index
    %c0_54 = arith.constant 0 : index
    %c0_55 = arith.constant 0 : index
    %57 = vector.load %arg15[%c0_53, %c17, %c0_54, %c0_55] : memref<2x18x18x8xf32, #tpu.memory_space<vmem>>, vector<2x1x18x8xf32>
    tpu.vector_store %arg15[%c0_53, %c17, %c0_54, %c0_55], %54 {strides = array<i32>} : memref<2x18x18x8xf32, #tpu.memory_space<vmem>>, vector<2x1x18x8xf32>,
    %c0_56 = arith.constant 0 : index
    %c1_57 = arith.constant 1 : index
    %c0_58 = arith.constant 0 : index
    %c0_59 = arith.constant 0 : index
    %58 = vector.load %arg15[%c0_56, %c1_57, %c0_58, %c0_59] : memref<2x18x18x8xf32, #tpu.memory_space<vmem>>, vector<2x16x1x8xf32>
    tpu.vector_store %arg15[%c0_56, %c1_57, %c0_58, %c0_59], %55 {strides = array<i32>} : memref<2x18x18x8xf32, #tpu.memory_space<vmem>>, vector<2x16x1x8xf32>,
    %c0_60 = arith.constant 0 : index
    %c1_61 = arith.constant 1 : index
    %c17_62 = arith.constant 17 : index
    %c0_63 = arith.constant 0 : index
    %59 = vector.load %arg15[%c0_60, %c1_61, %c17_62, %c0_63] : memref<2x18x18x8xf32, #tpu.memory_space<vmem>>, vector<2x16x1x8xf32>
    tpu.vector_store %arg15[%c0_60, %c1_61, %c17_62, %c0_63], %55 {strides = array<i32>} : memref<2x18x18x8xf32, #tpu.memory_space<vmem>>, vector<2x16x1x8xf32>,
    %60 = vector.shape_cast %53 : vector<512x8xf32> to vector<2x16x16x8xf32>
    %c0_64 = arith.constant 0 : index
    %c1_65 = arith.constant 1 : index
    %c1_66 = arith.constant 1 : index
    %c0_67 = arith.constant 0 : index
    %61 = vector.load %arg15[%c0_64, %c1_65, %c1_66, %c0_67] : memref<2x18x18x8xf32, #tpu.memory_space<vmem>>, vector<2x16x16x8xf32>
    tpu.vector_store %arg15[%c0_64, %c1_65, %c1_66, %c0_67], %60 {strides = array<i32>} : memref<2x18x18x8xf32, #tpu.memory_space<vmem>>, vector<2x16x16x8xf32>,
    %c0_68 = arith.constant 0 : index
    %c0_69 = arith.constant 0 : index
    %c0_70 = arith.constant 0 : index
    %c0_71 = arith.constant 0 : index
    %62 = vector.load %arg15[%c0_68, %c0_69, %c0_70, %c0_71] : memref<2x18x18x8xf32, #tpu.memory_space<vmem>>, vector<2x16x16x8xf32>
    %63 = vector.shape_cast %62 : vector<2x16x16x8xf32> to vector<512x8xf32>
    %c0_72 = arith.constant 0 : index
    %c0_73 = arith.constant 0 : index
    %c1_74 = arith.constant 1 : index
    %c0_75 = arith.constant 0 : index
    %64 = vector.load %arg15[%c0_72, %c0_73, %c1_74, %c0_75] : memref<2x18x18x8xf32, #tpu.memory_space<vmem>>, vector<2x16x16x8xf32>
    %65 = vector.shape_cast %64 : vector<2x16x16x8xf32> to vector<512x8xf32>
    %c0_76 = arith.constant 0 : index
    %c0_77 = arith.constant 0 : index
    %c2_78 = arith.constant 2 : index
    %c0_79 = arith.constant 0 : index
    %66 = vector.load %arg15[%c0_76, %c0_77, %c2_78, %c0_79] : memref<2x18x18x8xf32, #tpu.memory_space<vmem>>, vector<2x16x16x8xf32>
    %67 = vector.shape_cast %66 : vector<2x16x16x8xf32> to vector<512x8xf32>
    %c0_80 = arith.constant 0 : index
    %c1_81 = arith.constant 1 : index
    %c0_82 = arith.constant 0 : index
    %c0_83 = arith.constant 0 : index
    %68 = vector.load %arg15[%c0_80, %c1_81, %c0_82, %c0_83] : memref<2x18x18x8xf32, #tpu.memory_space<vmem>>, vector<2x16x16x8xf32>
    %69 = vector.shape_cast %68 : vector<2x16x16x8xf32> to vector<512x8xf32>
    %c0_84 = arith.constant 0 : index
    %c1_85 = arith.constant 1 : index
    %c1_86 = arith.constant 1 : index
    %c0_87 = arith.constant 0 : index
    %70 = vector.load %arg15[%c0_84, %c1_85, %c1_86, %c0_87] : memref<2x18x18x8xf32, #tpu.memory_space<vmem>>, vector<2x16x16x8xf32>
    %71 = vector.shape_cast %70 : vector<2x16x16x8xf32> to vector<512x8xf32>
    %c0_88 = arith.constant 0 : index
    %c1_89 = arith.constant 1 : index
    %c2_90 = arith.constant 2 : index
    %c0_91 = arith.constant 0 : index
    %72 = vector.load %arg15[%c0_88, %c1_89, %c2_90, %c0_91] : memref<2x18x18x8xf32, #tpu.memory_space<vmem>>, vector<2x16x16x8xf32>
    %73 = vector.shape_cast %72 : vector<2x16x16x8xf32> to vector<512x8xf32>
    %c0_92 = arith.constant 0 : index
    %c2_93 = arith.constant 2 : index
    %c0_94 = arith.constant 0 : index
    %c0_95 = arith.constant 0 : index
    %74 = vector.load %arg15[%c0_92, %c2_93, %c0_94, %c0_95] : memref<2x18x18x8xf32, #tpu.memory_space<vmem>>, vector<2x16x16x8xf32>
    %75 = vector.shape_cast %74 : vector<2x16x16x8xf32> to vector<512x8xf32>
    %c0_96 = arith.constant 0 : index
    %c2_97 = arith.constant 2 : index
    %c1_98 = arith.constant 1 : index
    %c0_99 = arith.constant 0 : index
    %76 = vector.load %arg15[%c0_96, %c2_97, %c1_98, %c0_99] : memref<2x18x18x8xf32, #tpu.memory_space<vmem>>, vector<2x16x16x8xf32>
    %77 = vector.shape_cast %76 : vector<2x16x16x8xf32> to vector<512x8xf32>
    %c0_100 = arith.constant 0 : index
    %c2_101 = arith.constant 2 : index
    %c2_102 = arith.constant 2 : index
    %c0_103 = arith.constant 0 : index
    %78 = vector.load %arg15[%c0_100, %c2_101, %c2_102, %c0_103] : memref<2x18x18x8xf32, #tpu.memory_space<vmem>>, vector<2x16x16x8xf32>
    %79 = vector.shape_cast %78 : vector<2x16x16x8xf32> to vector<512x8xf32>
    %80 = tpu.concatenate %63, %65, %67, %69, %71, %73, %75, %77, %79 in 1 : vector<512x8xf32>, vector<512x8xf32>, vector<512x8xf32>, vector<512x8xf32>, vector<512x8xf32>, vector<512x8xf32>, vector<512x8xf32>, vector<512x8xf32>, vector<512x8xf32> -> vector<512x72xf32>
    %c0_104 = arith.constant 0 : index
    %c0_105 = arith.constant 0 : index
    %81 = vector.load %arg6[%c0_104, %c0_105] : memref<72x8xf32, #tpu.memory_space<vmem>>, vector<72x8xf32>
    %cst_106 = arith.constant dense<0.000000e+00> : vector<512x8xf32>
    %82 = tpu.matmul %80, %81, %cst_106 {dimension_numbers = #tpu.dot_dimension_numbers<[1], [0], [0], [1], [0, 0, 1, 1], [], []>} : vector<512x72xf32>, vector<72x8xf32>, vector<512x8xf32> -> vector<512x8xf32>
    %c0_107 = arith.constant 0 : index
    %c0_108 = arith.constant 0 : index
    %83 = vector.load %arg7[%c0_107, %c0_108] : memref<1x8xf32, #tpu.memory_space<vmem>>, vector<1x8xf32>
    %84 = vector.broadcast %83 : vector<1x8xf32> to vector<512x8xf32>
    %85 = arith.addf %82, %84 : vector<512x8xf32>
    %c0_109 = arith.constant 0 : index
    %c0_110 = arith.constant 0 : index
    %86 = vector.load %arg8[%c0_109, %c0_110] : memref<1x8xf32, #tpu.memory_space<vmem>>, vector<1x8xf32>
    %c0_111 = arith.constant 0 : index
    %c0_112 = arith.constant 0 : index
    %87 = vector.load %arg9[%c0_111, %c0_112] : memref<1x8xf32, #tpu.memory_space<vmem>>, vector<1x8xf32>
    %88 = vector.shape_cast %85 : vector<512x8xf32> to vector<2x256x8xf32>
    %cst_113 = arith.constant dense<0.000000e+00> : vector<2x8xf32>
    %89 = vector.multi_reduction <add>, %88, %cst_113 [1] : vector<2x256x8xf32> to vector<2x8xf32>
    %90 = vector.shape_cast %89 : vector<2x8xf32> to vector<2x1x8xf32>
    %cst_114 = arith.constant 2.560000e+02 : f32
    %91 = vector.broadcast %cst_114 : f32 to vector<2x1x8xf32>
    %92 = arith.divf %90, %91 : vector<2x1x8xf32>
    %93 = vector.broadcast %92 : vector<2x1x8xf32> to vector<2x256x8xf32>
    %94 = arith.subf %88, %93 : vector<2x256x8xf32>
    %95 = arith.mulf %94, %94 : vector<2x256x8xf32>
    %cst_115 = arith.constant dense<0.000000e+00> : vector<2x8xf32>
    %96 = vector.multi_reduction <add>, %95, %cst_115 [1] : vector<2x256x8xf32> to vector<2x8xf32>
    %97 = vector.shape_cast %96 : vector<2x8xf32> to vector<2x1x8xf32>
    %cst_116 = arith.constant 2.560000e+02 : f32
    %98 = vector.broadcast %cst_116 : f32 to vector<2x1x8xf32>
    %99 = arith.divf %97, %98 : vector<2x1x8xf32>
    %100 = vector.broadcast %92 : vector<2x1x8xf32> to vector<2x256x8xf32>
    %101 = arith.subf %88, %100 : vector<2x256x8xf32>
    %cst_117 = arith.constant 9.99999974E-6 : f32
    %102 = vector.broadcast %cst_117 : f32 to vector<2x1x8xf32>
    %103 = arith.addf %99, %102 : vector<2x1x8xf32>
    %104 = math.rsqrt %103 : vector<2x1x8xf32>
    %105 = vector.broadcast %104 : vector<2x1x8xf32> to vector<2x256x8xf32>
    %106 = arith.mulf %101, %105 : vector<2x256x8xf32>
    %107 = vector.shape_cast %86 : vector<1x8xf32> to vector<1x1x8xf32>
    %108 = vector.broadcast %107 : vector<1x1x8xf32> to vector<2x256x8xf32>
    %109 = arith.mulf %106, %108 : vector<2x256x8xf32>
    %110 = vector.shape_cast %87 : vector<1x8xf32> to vector<1x1x8xf32>
    %111 = vector.broadcast %110 : vector<1x1x8xf32> to vector<2x256x8xf32>
    %112 = arith.addf %109, %111 : vector<2x256x8xf32>
    %113 = vector.shape_cast %112 : vector<2x256x8xf32> to vector<512x8xf32>
    %c0_118 = arith.constant 0 : index
    %c1_119 = arith.constant 1 : index
    %c1_120 = arith.constant 1 : index
    %c0_121 = arith.constant 0 : index
    %114 = vector.load %arg1[%c0_118, %c1_119, %c1_120, %c0_121] : memref<2x18x18x4xf32, #tpu.memory_space<vmem>>, vector<2x16x16x4xf32>
    %115 = vector.shape_cast %114 : vector<2x16x16x4xf32> to vector<512x4xf32>
    %c0_122 = arith.constant 0 : index
    %c0_123 = arith.constant 0 : index
    %116 = vector.load %arg10[%c0_122, %c0_123] : memref<4x8xf32, #tpu.memory_space<vmem>>, vector<4x8xf32>
    %cst_124 = arith.constant dense<0.000000e+00> : vector<512x8xf32>
    %117 = tpu.matmul %115, %116, %cst_124 {dimension_numbers = #tpu.dot_dimension_numbers<[1], [0], [0], [1], [0, 0, 1, 1], [], []>} : vector<512x4xf32>, vector<4x8xf32>, vector<512x8xf32> -> vector<512x8xf32>
    %c0_125 = arith.constant 0 : index
    %c0_126 = arith.constant 0 : index
    %118 = vector.load %arg11[%c0_125, %c0_126] : memref<1x8xf32, #tpu.memory_space<vmem>>, vector<1x8xf32>
    %119 = vector.broadcast %118 : vector<1x8xf32> to vector<512x8xf32>
    %120 = arith.addf %117, %119 : vector<512x8xf32>
    %c0_127 = arith.constant 0 : index
    %c0_128 = arith.constant 0 : index
    %121 = vector.load %arg12[%c0_127, %c0_128] : memref<1x8xf32, #tpu.memory_space<vmem>>, vector<1x8xf32>
    %c0_129 = arith.constant 0 : index
    %c0_130 = arith.constant 0 : index
    %122 = vector.load %arg13[%c0_129, %c0_130] : memref<1x8xf32, #tpu.memory_space<vmem>>, vector<1x8xf32>
    %123 = vector.shape_cast %120 : vector<512x8xf32> to vector<2x256x8xf32>
    %cst_131 = arith.constant dense<0.000000e+00> : vector<2x8xf32>
    %124 = vector.multi_reduction <add>, %123, %cst_131 [1] : vector<2x256x8xf32> to vector<2x8xf32>
    %125 = vector.shape_cast %124 : vector<2x8xf32> to vector<2x1x8xf32>
    %cst_132 = arith.constant 2.560000e+02 : f32
    %126 = vector.broadcast %cst_132 : f32 to vector<2x1x8xf32>
    %127 = arith.divf %125, %126 : vector<2x1x8xf32>
    %128 = vector.broadcast %127 : vector<2x1x8xf32> to vector<2x256x8xf32>
    %129 = arith.subf %123, %128 : vector<2x256x8xf32>
    %130 = arith.mulf %129, %129 : vector<2x256x8xf32>
    %cst_133 = arith.constant dense<0.000000e+00> : vector<2x8xf32>
    %131 = vector.multi_reduction <add>, %130, %cst_133 [1] : vector<2x256x8xf32> to vector<2x8xf32>
    %132 = vector.shape_cast %131 : vector<2x8xf32> to vector<2x1x8xf32>
    %cst_134 = arith.constant 2.560000e+02 : f32
    %133 = vector.broadcast %cst_134 : f32 to vector<2x1x8xf32>
    %134 = arith.divf %132, %133 : vector<2x1x8xf32>
    %135 = vector.broadcast %127 : vector<2x1x8xf32> to vector<2x256x8xf32>
    %136 = arith.subf %123, %135 : vector<2x256x8xf32>
    %cst_135 = arith.constant 9.99999974E-6 : f32
    %137 = vector.broadcast %cst_135 : f32 to vector<2x1x8xf32>
    %138 = arith.addf %134, %137 : vector<2x1x8xf32>
    %139 = math.rsqrt %138 : vector<2x1x8xf32>
    %140 = vector.broadcast %139 : vector<2x1x8xf32> to vector<2x256x8xf32>
    %141 = arith.mulf %136, %140 : vector<2x256x8xf32>
    %142 = vector.shape_cast %121 : vector<1x8xf32> to vector<1x1x8xf32>
    %143 = vector.broadcast %142 : vector<1x1x8xf32> to vector<2x256x8xf32>
    %144 = arith.mulf %141, %143 : vector<2x256x8xf32>
    %145 = vector.shape_cast %122 : vector<1x8xf32> to vector<1x1x8xf32>
    %146 = vector.broadcast %145 : vector<1x1x8xf32> to vector<2x256x8xf32>
    %147 = arith.addf %144, %146 : vector<2x256x8xf32>
    %148 = vector.shape_cast %147 : vector<2x256x8xf32> to vector<512x8xf32>
    %149 = arith.addf %148, %113 : vector<512x8xf32>
    %cst_136 = arith.constant 0.000000e+00 : f32
    %150 = vector.broadcast %cst_136 : f32 to vector<512x8xf32>
    %151 = arith.maximumf %149, %150 : vector<512x8xf32>
    %152 = vector.shape_cast %151 : vector<512x8xf32> to vector<2x256x8xf32>
    %153 = tpu.transpose %152, [0, 2, 1] : vector<2x256x8xf32> -> vector<2x8x256xf32>
    %c0_137 = arith.constant 0 : index
    %c0_138 = arith.constant 0 : index
    %c0_139 = arith.constant 0 : index
    %154 = vector.load %arg14[%c0_137, %c0_138, %c0_139] : memref<2x8x256xf32, #tpu.memory_space<vmem>>, vector<2x8x256xf32>
    tpu.vector_store %arg14[%c0_137, %c0_138, %c0_139], %153 {strides = array<i32>} : memref<2x8x256xf32, #tpu.memory_space<vmem>>, vector<2x8x256xf32>,
    return
  }
  func.func @transform_0(%arg0: i32) -> (i32, i32, i32, i32) {
    %c0_i32 = arith.constant 0 : i32
    %c0_i32_0 = arith.constant 0 : i32
    %c0_i32_1 = arith.constant 0 : i32
    %c0_i32_2 = arith.constant 0 : i32
    return %arg0, %c0_i32, %c0_i32_0, %c0_i32_1 : i32, i32, i32, i32
  }
  func.func @transform_1(%arg0: i32) -> (i32, i32) {
    %c0_i32 = arith.constant 0 : i32
    %c0_i32_0 = arith.constant 0 : i32
    %c0_i32_1 = arith.constant 0 : i32
    return %c0_i32, %c0_i32_0 : i32, i32
  }
  func.func @transform_2(%arg0: i32) -> (i32, i32) {
    %c0_i32 = arith.constant 0 : i32
    %c0_i32_0 = arith.constant 0 : i32
    %c0_i32_1 = arith.constant 0 : i32
    return %c0_i32, %c0_i32_0 : i32, i32
  }
  func.func @transform_3(%arg0: i32) -> (i32, i32) {
    %c0_i32 = arith.constant 0 : i32
    %c0_i32_0 = arith.constant 0 : i32
    %c0_i32_1 = arith.constant 0 : i32
    return %c0_i32, %c0_i32_0 : i32, i32
  }
  func.func @transform_4(%arg0: i32) -> (i32, i32) {
    %c0_i32 = arith.constant 0 : i32
    %c0_i32_0 = arith.constant 0 : i32
    %c0_i32_1 = arith.constant 0 : i32
    return %c0_i32, %c0_i32_0 : i32, i32
  }
  func.func @transform_5(%arg0: i32) -> (i32, i32) {
    %c0_i32 = arith.constant 0 : i32
    %c0_i32_0 = arith.constant 0 : i32
    %c0_i32_1 = arith.constant 0 : i32
    return %c0_i32, %c0_i32_0 : i32, i32
  }
  func.func @transform_6(%arg0: i32) -> (i32, i32) {
    %c0_i32 = arith.constant 0 : i32
    %c0_i32_0 = arith.constant 0 : i32
    %c0_i32_1 = arith.constant 0 : i32
    return %c0_i32, %c0_i32_0 : i32, i32
  }
  func.func @transform_7(%arg0: i32) -> (i32, i32) {
    %c0_i32 = arith.constant 0 : i32
    %c0_i32_0 = arith.constant 0 : i32
    %c0_i32_1 = arith.constant 0 : i32
    return %c0_i32, %c0_i32_0 : i32, i32
  }
  func.func @transform_8(%arg0: i32) -> (i32, i32) {
    %c0_i32 = arith.constant 0 : i32
    %c0_i32_0 = arith.constant 0 : i32
    %c0_i32_1 = arith.constant 0 : i32
    return %c0_i32, %c0_i32_0 : i32, i32
  }
  func.func @transform_9(%arg0: i32) -> (i32, i32) {
    %c0_i32 = arith.constant 0 : i32
    %c0_i32_0 = arith.constant 0 : i32
    %c0_i32_1 = arith.constant 0 : i32
    return %c0_i32, %c0_i32_0 : i32, i32
  }
  func.func @transform_10(%arg0: i32) -> (i32, i32) {
    %c0_i32 = arith.constant 0 : i32
    %c0_i32_0 = arith.constant 0 : i32
    %c0_i32_1 = arith.constant 0 : i32
    return %c0_i32, %c0_i32_0 : i32, i32
  }
  func.func @transform_11(%arg0: i32) -> (i32, i32) {
    %c0_i32 = arith.constant 0 : i32
    %c0_i32_0 = arith.constant 0 : i32
    %c0_i32_1 = arith.constant 0 : i32
    return %c0_i32, %c0_i32_0 : i32, i32
  }
  func.func @transform_12(%arg0: i32) -> (i32, i32) {
    %c0_i32 = arith.constant 0 : i32
    %c0_i32_0 = arith.constant 0 : i32
    %c0_i32_1 = arith.constant 0 : i32
    return %c0_i32, %c0_i32_0 : i32, i32
  }
  func.func @transform_13(%arg0: i32) -> (i32, i32, i32) {
    %c0_i32 = arith.constant 0 : i32
    %c0_i32_0 = arith.constant 0 : i32
    %c0_i32_1 = arith.constant 0 : i32
    return %arg0, %c0_i32, %c0_i32_0 : i32, i32, i32
  }
}

</mosaic_0001>

<llo_original>
// kernel: tpu_custom_call.1
$region0: #{tpu_custom_call.1}
  #allocation0 [shape = 'u32[]', space=smem, size = 0x4, offset = 0x4, fixed_abs, tag = 'smem constant byte address 0x4 - core index']
  #allocation1 [shape = 'u32[72,128]{1,0:T(1,128)}', space=vmem, size = 0x9000, scoped, tag = 'internal scratch']
  #allocation2 [shape = 'f32[2,18,18,8]{3,2,1,0:T(8,128)}', space=vmem, size = 0x6c000, scoped, tag = 'scratch operand']
  %s0 = inlined_call_operand.vmem [shape: f32[2,18,18,4], index: 0, kind: input, shape index: {}]
  %s1 = inlined_call_operand.vmem [shape: f32[36,8], index: 1, kind: input, shape index: {}]
  %s2 = inlined_call_operand.vmem [shape: f32[1,8], index: 2, kind: input, shape index: {}]
  %s3 = inlined_call_operand.vmem [shape: f32[1,8], index: 3, kind: input, shape index: {}]
  %s4 = inlined_call_operand.vmem [shape: f32[1,8], index: 4, kind: input, shape index: {}]
  %s5 = inlined_call_operand.vmem [shape: f32[72,8], index: 5, kind: input, shape index: {}]
  %s6 = inlined_call_operand.vmem [shape: f32[1,8], index: 6, kind: input, shape index: {}]
  %s7 = inlined_call_operand.vmem [shape: f32[1,8], index: 7, kind: input, shape index: {}]
  %s8 = inlined_call_operand.vmem [shape: f32[1,8], index: 8, kind: input, shape index: {}]
  %s9 = inlined_call_operand.vmem [shape: f32[4,8], index: 9, kind: input, shape index: {}]
  %s10 = inlined_call_operand.vmem [shape: f32[1,8], index: 10, kind: input, shape index: {}]
  %s11 = inlined_call_operand.vmem [shape: f32[1,8], index: 11, kind: input, shape index: {}]
  %s12 = inlined_call_operand.vmem [shape: f32[1,8], index: 12, kind: input, shape index: {}]
  %s13 = inlined_call_operand.hbm [shape: f32[2,8,256], index: 13, kind: output, shape index: {}]
  %s14 = sld [smem:[#allocation0]]
  $region62: #{tpu_custom_call.1} parent=0
    _
  %s16 = ssub.s32 1, %s14
  %s17 = scalar_select 0, %s16, %s14
  $region1: #{tpu_custom_call.1} parent=0
    #allocation3 [shape = 'u8[16384]{0}', space=vmem, size = 0x4000, scoped, tag = 'output window, operand 0, single buffered']
    #allocation4 [shape = 's32[1]{0}', space=sflag, size = 0x4, scoped, tag = 'scoped memory for tpu_custom_call.1']
    %18 = vsyncpa [#allocation4], 0
    // Predicated region
    $region2: #{tpu_custom_call.1} parent=1 // pred_check
      _
    $region3: #{tpu_custom_call.1} parent=1 // pred_check_branch
      %20 = sbr.rel (0) target = $region5
    $region4: #{tpu_custom_call.1} parent=1 // pred_region
      _
    $region5: #{tpu_custom_call.1} parent=1 // pred_fallthru
      _
    // Predicated region
    $region6: #{tpu_custom_call.1} parent=1 // pred_check
      _
    $region7: #{tpu_custom_call.1} parent=1 // pred_check_branch
      %22 = sbr.rel (0) target = $region9
    $region8: #{tpu_custom_call.1} parent=1 // pred_region
      _
    $region9: #{tpu_custom_call.1} parent=1 // pred_fallthru
      _
    // Predicated region
    $region10: #{tpu_custom_call.1} parent=1 // pred_check
      _
    $region11: #{tpu_custom_call.1} parent=1 // pred_check_branch
      %24 = sbr.rel (0) target = $region13
    $region12: #{tpu_custom_call.1} parent=1 // pred_region
      _
    $region13: #{tpu_custom_call.1} parent=1 // pred_fallthru
      _
    // Predicated region
    $region14: #{tpu_custom_call.1} parent=1 // pred_check
      _
    $region15: #{tpu_custom_call.1} parent=1 // pred_check_branch
      %26 = sbr.rel (0) target = $region17
    $region16: #{tpu_custom_call.1} parent=1 // pred_region
      _
    $region17: #{tpu_custom_call.1} parent=1 // pred_fallthru
      _
    // Predicated region
    $region18: #{tpu_custom_call.1} parent=1 // pred_check
      _
    $region19: #{tpu_custom_call.1} parent=1 // pred_check_branch
      %28 = sbr.rel (0) target = $region21
    $region20: #{tpu_custom_call.1} parent=1 // pred_region
      _
    $region21: #{tpu_custom_call.1} parent=1 // pred_fallthru
      _
    // Predicated region
    $region22: #{tpu_custom_call.1} parent=1 // pred_check
      _
    $region23: #{tpu_custom_call.1} parent=1 // pred_check_branch
      %30 = sbr.rel (0) target = $region25
    $region24: #{tpu_custom_call.1} parent=1 // pred_region
      _
    $region25: #{tpu_custom_call.1} parent=1 // pred_fallthru
      _
    // Predicated region
    $region26: #{tpu_custom_call.1} parent=1 // pred_check
      _
    $region27: #{tpu_custom_call.1} parent=1 // pred_check_branch
      %32 = sbr.rel (0) target = $region29
    $region28: #{tpu_custom_call.1} parent=1 // pred_region
      _
    $region29: #{tpu_custom_call.1} parent=1 // pred_fallthru
      _
    // Predicated region
    $region30: #{tpu_custom_call.1} parent=1 // pred_check
      _
    $region31: #{tpu_custom_call.1} parent=1 // pred_check_branch
      %34 = sbr.rel (0) target = $region33
    $region32: #{tpu_custom_call.1} parent=1 // pred_region
      _
    $region33: #{tpu_custom_call.1} parent=1 // pred_fallthru
      _
    // Predicated region
    $region34: #{tpu_custom_call.1} parent=1 // pred_check
      _
    $region35: #{tpu_custom_call.1} parent=1 // pred_check_branch
      %36 = sbr.rel (0) target = $region37
    $region36: #{tpu_custom_call.1} parent=1 // pred_region
      _
    $region37: #{tpu_custom_call.1} parent=1 // pred_fallthru
      _
    // Predicated region
    $region38: #{tpu_custom_call.1} parent=1 // pred_check
      _
    $region39: #{tpu_custom_call.1} parent=1 // pred_check_branch
      %38 = sbr.rel (0) target = $region41
    $region40: #{tpu_custom_call.1} parent=1 // pred_region
      _
    $region41: #{tpu_custom_call.1} parent=1 // pred_fallthru
      _
    // Predicated region
    $region42: #{tpu_custom_call.1} parent=1 // pred_check
      _
    $region43: #{tpu_custom_call.1} parent=1 // pred_check_branch
      %40 = sbr.rel (0) target = $region45
    $region44: #{tpu_custom_call.1} parent=1 // pred_region
      _
    $region45: #{tpu_custom_call.1} parent=1 // pred_fallthru
      _
    // Predicated region
    $region46: #{tpu_custom_call.1} parent=1 // pred_check
      _
    $region47: #{tpu_custom_call.1} parent=1 // pred_check_branch
      %42 = sbr.rel (0) target = $region49
    $region48: #{tpu_custom_call.1} parent=1 // pred_region
      _
    $region49: #{tpu_custom_call.1} parent=1 // pred_fallthru
      _
    // Predicated region
    $region50: #{tpu_custom_call.1} parent=1 // pred_check
      _
    $region51: #{tpu_custom_call.1} parent=1 // pred_check_branch
      %44 = sbr.rel (0) target = $region53
    $region52: #{tpu_custom_call.1} parent=1 // pred_region
      _
    $region53: #{tpu_custom_call.1} parent=1 // pred_fallthru
      _
    %v45 = vld [vmem:[%s0] sm:$0xff]
    %v46 = vld [vmem:[%s0 + $0x8] sm:$0xff]
    %v47 = vld [vmem:[%s0 + $0x18] sm:$0xff]
    %v48 = vld [vmem:[%s0 + $0x20] sm:$0xff]
    %v49 = vld [vmem:[%s0 + $0x30] sm:$0xff]
    %v50 = vld [vmem:[%s0 + $0x38] sm:$0xff]
    %v51 = vld [vmem:[%s0 + $0x48] sm:$0xff]
    %v52 = vld [vmem:[%s0 + $0x50] sm:$0xff]
    %v53 = vld [vmem:[%s0 + $0x60] sm:$0xff]
    %v54 = vld [vmem:[%s0 + $0x68] sm:$0xff]
    %v55 = vld [vmem:[%s0 + $0x78] sm:$0xff]
    %v56 = vld [vmem:[%s0 + $0x80] sm:$0xff]
    %v57 = vld [vmem:[%s0 + $0x90] sm:$0xff]
    %v58 = vld [vmem:[%s0 + $0x98] sm:$0xff]
    %v59 = vld [vmem:[%s0 + $0xa8] sm:$0xff]
    %v60 = vld [vmem:[%s0 + $0xb0] sm:$0xff]
    %v61 = vld [vmem:[%s0 + $0xc0] sm:$0xff]
    %v62 = vld [vmem:[%s0 + $0xc8] sm:$0xff]
    %v63 = vld [vmem:[%s0 + $0xd8] sm:$0xff]
    %v64 = vld [vmem:[%s0 + $0xe0] sm:$0xff]
    %v65 = vld [vmem:[%s0 + $0xf0] sm:$0xff]
    %v66 = vld [vmem:[%s0 + $0xf8] sm:$0xff]
    %v67 = vld [vmem:[%s0 + $0x108] sm:$0xff]
    %v68 = vld [vmem:[%s0 + $0x110] sm:$0xff]
    %v69 = vld [vmem:[%s0 + $0x120] sm:$0xff]
    %v70 = vld [vmem:[%s0 + $0x128] sm:$0xff]
    %v71 = vld [vmem:[%s0 + $0x138] sm:$0xff]
    %v72 = vld [vmem:[%s0 + $0x140] sm:$0xff]
    %v73 = vld [vmem:[%s0 + $0x150] sm:$0xff]
    %v74 = vld [vmem:[%s0 + $0x158] sm:$0xff]
    %v75 = vld [vmem:[%s0 + $0x168] sm:$0xff]
    %v76 = vld [vmem:[%s0 + $0x170] sm:$0xff]
    %v77 = vld [vmem:[%s0 + $0x1b0] sm:$0xff]
    %v78 = vld [vmem:[%s0 + $0x1b8] sm:$0xff]
    %v79 = vld [vmem:[%s0 + $0x1c8] sm:$0xff]
    %v80 = vld [vmem:[%s0 + $0x1d0] sm:$0xff]
    %v81 = vld [vmem:[%s0 + $0x1e0] sm:$0xff]
    %v82 = vld [vmem:[%s0 + $0x1e8] sm:$0xff]
    %v83 = vld [vmem:[%s0 + $0x1f8] sm:$0xff]
    %v84 = vld [vmem:[%s0 + $0x200] sm:$0xff]
    %v85 = vld [vmem:[%s0 + $0x210] sm:$0xff]
    %v86 = vld [vmem:[%s0 + $0x218] sm:$0xff]
    %v87 = vld [vmem:[%s0 + $0x228] sm:$0xff]
    %v88 = vld [vmem:[%s0 + $0x230] sm:$0xff]
    %v89 = vld [vmem:[%s0 + $0x240] sm:$0xff]
    %v90 = vld [vmem:[%s0 + $0x248] sm:$0xff]
    %v91 = vld [vmem:[%s0 + $0x258] sm:$0xff]
    %v92 = vld [vmem:[%s0 + $0x260] sm:$0xff]
    %v93 = vld [vmem:[%s0 + $0x270] sm:$0xff]
    %v94 = vld [vmem:[%s0 + $0x278] sm:$0xff]
    %v95 = vld [vmem:[%s0 + $0x288] sm:$0xff]
    %v96 = vld [vmem:[%s0 + $0x290] sm:$0xff]
    %v97 = vld [vmem:[%s0 + $0x2a0] sm:$0xff]
    %v98 = vld [vmem:[%s0 + $0x2a8] sm:$0xff]
    %v99 = vld [vmem:[%s0 + $0x2b8] sm:$0xff]
    %v100 = vld [vmem:[%s0 + $0x2c0] sm:$0xff]
    %v101 = vld [vmem:[%s0 + $0x2d0] sm:$0xff]
    %v102 = vld [vmem:[%s0 + $0x2d8] sm:$0xff]
    %v103 = vld [vmem:[%s0 + $0x2e8] sm:$0xff]
    %v104 = vld [vmem:[%s0 + $0x2f0] sm:$0xff]
    %v105 = vld [vmem:[%s0 + $0x300] sm:$0xff]
    %v106 = vld [vmem:[%s0 + $0x308] sm:$0xff]
    %v107 = vld [vmem:[%s0 + $0x318] sm:$0xff]
    %v108 = vld [vmem:[%s0 + $0x320] sm:$0xff]
    %v109 = vld [vmem:[%s0 + $0x1] sm:$0xff]
    %v110 = vld [vmem:[%s0 + $0x9] sm:$0xff]
    %v111 = vld [vmem:[%s0 + $0x19] sm:$0xff]
    %v112 = vld [vmem:[%s0 + $0x21] sm:$0xff]
    %v113 = vld [vmem:[%s0 + $0x31] sm:$0xff]
    %v114 = vld [vmem:[%s0 + $0x39] sm:$0xff]
    %v115 = vld [vmem:[%s0 + $0x49] sm:$0xff]
    %v116 = vld [vmem:[%s0 + $0x51] sm:$0xff]
    %v117 = vld [vmem:[%s0 + $0x61] sm:$0xff]
    %v118 = vld [vmem:[%s0 + $0x69] sm:$0xff]
    %v119 = vld [vmem:[%s0 + $0x79] sm:$0xff]
    %v120 = vld [vmem:[%s0 + $0x81] sm:$0xff]
    %v121 = vld [vmem:[%s0 + $0x91] sm:$0xff]
    %v122 = vld [vmem:[%s0 + $0x99] sm:$0xff]
    %v123 = vld [vmem:[%s0 + $0xa9] sm:$0xff]
    %v124 = vld [vmem:[%s0 + $0xb1] sm:$0xff]
    %v125 = vld [vmem:[%s0 + $0xc1] sm:$0xff]
    %v126 = vld [vmem:[%s0 + $0xc9] sm:$0xff]
    %v127 = vld [vmem:[%s0 + $0xd9] sm:$0xff]
    %v128 = vld [vmem:[%s0 + $0xe1] sm:$0xff]
    %v129 = vld [vmem:[%s0 + $0xf1] sm:$0xff]
    %v130 = vld [vmem:[%s0 + $0xf9] sm:$0xff]
    %v131 = vld [vmem:[%s0 + $0x109] sm:$0xff]
    %v132 = vld [vmem:[%s0 + $0x111] sm:$0xff]
    %v133 = vld [vmem:[%s0 + $0x121] sm:$0xff]
    %v134 = vld [vmem:[%s0 + $0x129] sm:$0xff]
    %v135 = vld [vmem:[%s0 + $0x139] sm:$0xff]
    %v136 = vld [vmem:[%s0 + $0x141] sm:$0xff]
    %v137 = vld [vmem:[%s0 + $0x151] sm:$0xff]
    %v138 = vld [vmem:[%s0 + $0x159] sm:$0xff]
    %v139 = vld [vmem:[%s0 + $0x169] sm:$0xff]
    %v140 = vld [vmem:[%s0 + $0x171] sm:$0xff]
    %v141 = vld [vmem:[%s0 + $0x1b1] sm:$0xff]
    %v142 = vld [vmem:[%s0 + $0x1b9] sm:$0xff]
    %v143 = vld [vmem:[%s0 + $0x1c9] sm:$0xff]
    %v144 = vld [vmem:[%s0 + $0x1d1] sm:$0xff]
    %v145 = vld [vmem:[%s0 + $0x1e1] sm:$0xff]
    %v146 = vld [vmem:[%s0 + $0x1e9] sm:$0xff]
    %v147 = vld [vmem:[%s0 + $0x1f9] sm:$0xff]
    %v148 = vld [vmem:[%s0 + $0x201] sm:$0xff]
    %v149 = vld [vmem:[%s0 + $0x211] sm:$0xff]
    %v150 = vld [vmem:[%s0 + $0x219] sm:$0xff]
    %v151 = vld [vmem:[%s0 + $0x229] sm:$0xff]
    %v152 = vld [vmem:[%s0 + $0x231] sm:$0xff]
    %v153 = vld [vmem:[%s0 + $0x241] sm:$0xff]
    %v154 = vld [vmem:[%s0 + $0x249] sm:$0xff]
    %v155 = vld [vmem:[%s0 + $0x259] sm:$0xff]
    %v156 = vld [vmem:[%s0 + $0x261] sm:$0xff]
    %v157 = vld [vmem:[%s0 + $0x271] sm:$0xff]
    %v158 = vld [vmem:[%s0 + $0x279] sm:$0xff]
    %v159 = vld [vmem:[%s0 + $0x289] sm:$0xff]
    %v160 = vld [vmem:[%s0 + $0x291] sm:$0xff]
    %v161 = vld [vmem:[%s0 + $0x2a1] sm:$0xff]
    %v162 = vld [vmem:[%s0 + $0x2a9] sm:$0xff]
    %v163 = vld [vmem:[%s0 + $0x2b9] sm:$0xff]
    %v164 = vld [vmem:[%s0 + $0x2c1] sm:$0xff]
    %v165 = vld [vmem:[%s0 + $0x2d1] sm:$0xff]
    %v166 = vld [vmem:[%s0 + $0x2d9] sm:$0xff]
    %v167 = vld [vmem:[%s0 + $0x2e9] sm:$0xff]
    %v168 = vld [vmem:[%s0 + $0x2f1] sm:$0xff]
    %v169 = vld [vmem:[%s0 + $0x301] sm:$0xff]
    %v170 = vld [vmem:[%s0 + $0x309] sm:$0xff]
    %v171 = vld [vmem:[%s0 + $0x319] sm:$0xff]
    %v172 = vld [vmem:[%s0 + $0x321] sm:$0xff]
    %v173 = vld [vmem:[%s0 + $0x2] sm:$0xff]
    %v174 = vld [vmem:[%s0 + $0xa] sm:$0xff]
    %v175 = vld [vmem:[%s0 + $0x1a] sm:$0xff]
    %v176 = vld [vmem:[%s0 + $0x22] sm:$0xff]
    %v177 = vld [vmem:[%s0 + $0x32] sm:$0xff]
    %v178 = vld [vmem:[%s0 + $0x3a] sm:$0xff]
    %v179 = vld [vmem:[%s0 + $0x4a] sm:$0xff]
    %v180 = vld [vmem:[%s0 + $0x52] sm:$0xff]
    %v181 = vld [vmem:[%s0 + $0x62] sm:$0xff]
    %v182 = vld [vmem:[%s0 + $0x6a] sm:$0xff]
    %v183 = vld [vmem:[%s0 + $0x7a] sm:$0xff]
    %v184 = vld [vmem:[%s0 + $0x82] sm:$0xff]
    %v185 = vld [vmem:[%s0 + $0x92] sm:$0xff]
    %v186 = vld [vmem:[%s0 + $0x9a] sm:$0xff]
    %v187 = vld [vmem:[%s0 + $0xaa] sm:$0xff]
    %v188 = vld [vmem:[%s0 + $0xb2] sm:$0xff]
    %v189 = vld [vmem:[%s0 + $0xc2] sm:$0xff]
    %v190 = vld [vmem:[%s0 + $0xca] sm:$0xff]
    %v191 = vld [vmem:[%s0 + $0xda] sm:$0xff]
    %v192 = vld [vmem:[%s0 + $0xe2] sm:$0xff]
    %v193 = vld [vmem:[%s0 + $0xf2] sm:$0xff]
    %v194 = vld [vmem:[%s0 + $0xfa] sm:$0xff]
    %v195 = vld [vmem:[%s0 + $0x10a] sm:$0xff]
    %v196 = vld [vmem:[%s0 + $0x112] sm:$0xff]
    %v197 = vld [vmem:[%s0 + $0x122] sm:$0xff]
    %v198 = vld [vmem:[%s0 + $0x12a] sm:$0xff]
    %v199 = vld [vmem:[%s0 + $0x13a] sm:$0xff]
    %v200 = vld [vmem:[%s0 + $0x142] sm:$0xff]
    %v201 = vld [vmem:[%s0 + $0x152] sm:$0xff]
    %v202 = vld [vmem:[%s0 + $0x15a] sm:$0xff]
    %v203 = vld [vmem:[%s0 + $0x16a] sm:$0xff]
    %v204 = vld [vmem:[%s0 + $0x172] sm:$0xff]
    %v205 = vld [vmem:[%s0 + $0x1b2] sm:$0xff]
    %v206 = vld [vmem:[%s0 + $0x1ba] sm:$0xff]
    %v207 = vld [vmem:[%s0 + $0x1ca] sm:$0xff]
    %v208 = vld [vmem:[%s0 + $0x1d2] sm:$0xff]
    %v209 = vld [vmem:[%s0 + $0x1e2] sm:$0xff]
    %v210 = vld [vmem:[%s0 + $0x1ea] sm:$0xff]
    %v211 = vld [vmem:[%s0 + $0x1fa] sm:$0xff]
    %v212 = vld [vmem:[%s0 + $0x202] sm:$0xff]
    %v213 = vld [vmem:[%s0 + $0x212] sm:$0xff]
    %v214 = vld [vmem:[%s0 + $0x21a] sm:$0xff]
    %v215 = vld [vmem:[%s0 + $0x22a] sm:$0xff]
    %v216 = vld [vmem:[%s0 + $0x232] sm:$0xff]
    %v217 = vld [vmem:[%s0 + $0x242] sm:$0xff]
    %v218 = vld [vmem:[%s0 + $0x24a] sm:$0xff]
    %v219 = vld [vmem:[%s0 + $0x25a] sm:$0xff]
    %v220 = vld [vmem:[%s0 + $0x262] sm:$0xff]
    %v221 = vld [vmem:[%s0 + $0x272] sm:$0xff]
    %v222 = vld [vmem:[%s0 + $0x27a] sm:$0xff]
    %v223 = vld [vmem:[%s0 + $0x28a] sm:$0xff]
    %v224 = vld [vmem:[%s0 + $0x292] sm:$0xff]
    %v225 = vld [vmem:[%s0 + $0x2a2] sm:$0xff]
    %v226 = vld [vmem:[%s0 + $0x2aa] sm:$0xff]
    %v227 = vld [vmem:[%s0 + $0x2ba] sm:$0xff]
    %v228 = vld [vmem:[%s0 + $0x2c2] sm:$0xff]
    %v229 = vld [vmem:[%s0 + $0x2d2] sm:$0xff]
    %v230 = vld [vmem:[%s0 + $0x2da] sm:$0xff]
    %v231 = vld [vmem:[%s0 + $0x2ea] sm:$0xff]
    %v232 = vld [vmem:[%s0 + $0x2f2] sm:$0xff]
    %v233 = vld [vmem:[%s0 + $0x302] sm:$0xff]
    %v234 = vld [vmem:[%s0 + $0x30a] sm:$0xff]
    %v235 = vld [vmem:[%s0 + $0x31a] sm:$0xff]
    %v236 = vld [vmem:[%s0 + $0x322] sm:$0xff]
    %s237 = scalar_lea.vmem %s0, 24
    %v238 = vld [vmem:[%s237] sm:$0xff]
    %v239 = vld [vmem:[%s237 + $0x8] sm:$0xff]
    %v240 = vld [vmem:[%s237 + $0x18] sm:$0xff]
    %v241 = vld [vmem:[%s237 + $0x20] sm:$0xff]
    %v242 = vld [vmem:[%s237 + $0x30] sm:$0xff]
    %v243 = vld [vmem:[%s237 + $0x38] sm:$0xff]
    %v244 = vld [vmem:[%s237 + $0x48] sm:$0xff]
    %v245 = vld [vmem:[%s237 + $0x50] sm:$0xff]
    %v246 = vld [vmem:[%s237 + $0x60] sm:$0xff]
    %v247 = vld [vmem:[%s237 + $0x68] sm:$0xff]
    %v248 = vld [vmem:[%s237 + $0x78] sm:$0xff]
    %v249 = vld [vmem:[%s237 + $0x80] sm:$0xff]
    %v250 = vld [vmem:[%s237 + $0x90] sm:$0xff]
    %v251 = vld [vmem:[%s237 + $0x98] sm:$0xff]
    %v252 = vld [vmem:[%s237 + $0xa8] sm:$0xff]
    %v253 = vld [vmem:[%s237 + $0xb0] sm:$0xff]
    %v254 = vld [vmem:[%s237 + $0xc0] sm:$0xff]
    %v255 = vld [vmem:[%s237 + $0xc8] sm:$0xff]
    %v256 = vld [vmem:[%s237 + $0xd8] sm:$0xff]
    %v257 = vld [vmem:[%s237 + $0xe0] sm:$0xff]
    %v258 = vld [vmem:[%s237 + $0xf0] sm:$0xff]
    %v259 = vld [vmem:[%s237 + $0xf8] sm:$0xff]
    %v260 = vld [vmem:[%s237 + $0x108] sm:$0xff]
    %v261 = vld [vmem:[%s237 + $0x110] sm:$0xff]
    %v262 = vld [vmem:[%s237 + $0x120] sm:$0xff]
    %v263 = vld [vmem:[%s237 + $0x128] sm:$0xff]
    %v264 = vld [vmem:[%s237 + $0x138] sm:$0xff]
    %v265 = vld [vmem:[%s237 + $0x140] sm:$0xff]
    %v266 = vld [vmem:[%s237 + $0x150] sm:$0xff]
    %v267 = vld [vmem:[%s237 + $0x158] sm:$0xff]
    %v268 = vld [vmem:[%s237 + $0x168] sm:$0xff]
    %v269 = vld [vmem:[%s237 + $0x170] sm:$0xff]
    %v270 = vld [vmem:[%s237 + $0x1b0] sm:$0xff]
    %v271 = vld [vmem:[%s237 + $0x1b8] sm:$0xff]
    %v272 = vld [vmem:[%s237 + $0x1c8] sm:$0xff]
    %v273 = vld [vmem:[%s237 + $0x1d0] sm:$0xff]
    %v274 = vld [vmem:[%s237 + $0x1e0] sm:$0xff]
    %v275 = vld [vmem:[%s237 + $0x1e8] sm:$0xff]
    %v276 = vld [vmem:[%s237 + $0x1f8] sm:$0xff]
    %v277 = vld [vmem:[%s237 + $0x200] sm:$0xff]
    %v278 = vld [vmem:[%s237 + $0x210] sm:$0xff]
    %v279 = vld [vmem:[%s237 + $0x218] sm:$0xff]
    %v280 = vld [vmem:[%s237 + $0x228] sm:$0xff]
    %v281 = vld [vmem:[%s237 + $0x230] sm:$0xff]
    %v282 = vld [vmem:[%s237 + $0x240] sm:$0xff]
    %v283 = vld [vmem:[%s237 + $0x248] sm:$0xff]
    %v284 = vld [vmem:[%s237 + $0x258] sm:$0xff]
    %v285 = vld [vmem:[%s237 + $0x260] sm:$0xff]
    %v286 = vld [vmem:[%s237 + $0x270] sm:$0xff]
    %v287 = vld [vmem:[%s237 + $0x278] sm:$0xff]
    %v288 = vld [vmem:[%s237 + $0x288] sm:$0xff]
    %v289 = vld [vmem:[%s237 + $0x290] sm:$0xff]
    %v290 = vld [vmem:[%s237 + $0x2a0] sm:$0xff]
    %v291 = vld [vmem:[%s237 + $0x2a8] sm:$0xff]
    %v292 = vld [vmem:[%s237 + $0x2b8] sm:$0xff]
    %v293 = vld [vmem:[%s237 + $0x2c0] sm:$0xff]
    %v294 = vld [vmem:[%s237 + $0x2d0] sm:$0xff]
    %v295 = vld [vmem:[%s237 + $0x2d8] sm:$0xff]
    %v296 = vld [vmem:[%s237 + $0x2e8] sm:$0xff]
    %v297 = vld [vmem:[%s237 + $0x2f0] sm:$0xff]
    %v298 = vld [vmem:[%s237 + $0x300] sm:$0xff]
    %v299 = vld [vmem:[%s237 + $0x308] sm:$0xff]
    %v300 = vld [vmem:[%s237 + $0x318] sm:$0xff]
    %v301 = vld [vmem:[%s237 + $0x320] sm:$0xff]
    %v302 = vld [vmem:[%s237 + $0x1] sm:$0xff]
    %v303 = vld [vmem:[%s237 + $0x9] sm:$0xff]
    %v304 = vld [vmem:[%s237 + $0x19] sm:$0xff]
    %v305 = vld [vmem:[%s237 + $0x21] sm:$0xff]
    %v306 = vld [vmem:[%s237 + $0x31] sm:$0xff]
    %v307 = vld [vmem:[%s237 + $0x39] sm:$0xff]
    %v308 = vld [vmem:[%s237 + $0x49] sm:$0xff]
    %v309 = vld [vmem:[%s237 + $0x51] sm:$0xff]
    %v310 = vld [vmem:[%s237 + $0x61] sm:$0xff]
    %v311 = vld [vmem:[%s237 + $0x69] sm:$0xff]
    %v312 = vld [vmem:[%s237 + $0x79] sm:$0xff]
    %v313 = vld [vmem:[%s237 + $0x81] sm:$0xff]
    %v314 = vld [vmem:[%s237 + $0x91] sm:$0xff]
    %v315 = vld [vmem:[%s237 + $0x99] sm:$0xff]
    %v316 = vld [vmem:[%s237 + $0xa9] sm:$0xff]
    %v317 = vld [vmem:[%s237 + $0xb1] sm:$0xff]
    %v318 = vld [vmem:[%s237 + $0xc1] sm:$0xff]
    %v319 = vld [vmem:[%s237 + $0xc9] sm:$0xff]
    %v320 = vld [vmem:[%s237 + $0xd9] sm:$0xff]
    %v321 = vld [vmem:[%s237 + $0xe1] sm:$0xff]
    %v322 = vld [vmem:[%s237 + $0xf1] sm:$0xff]
    %v323 = vld [vmem:[%s237 + $0xf9] sm:$0xff]
    %v324 = vld [vmem:[%s237 + $0x109] sm:$0xff]
    %v325 = vld [vmem:[%s237 + $0x111] sm:$0xff]
    %v326 = vld [vmem:[%s237 + $0x121] sm:$0xff]
    %v327 = vld [vmem:[%s237 + $0x129] sm:$0xff]
    %v328 = vld [vmem:[%s237 + $0x139] sm:$0xff]
    %v329 = vld [vmem:[%s237 + $0x141] sm:$0xff]
    %v330 = vld [vmem:[%s237 + $0x151] sm:$0xff]
    %v331 = vld [vmem:[%s237 + $0x159] sm:$0xff]
    %v332 = vld [vmem:[%s237 + $0x169] sm:$0xff]
    %v333 = vld [vmem:[%s237 + $0x171] sm:$0xff]
    %v334 = vld [vmem:[%s237 + $0x1b1] sm:$0xff]
    %v335 = vld [vmem:[%s237 + $0x1b9] sm:$0xff]
    %v336 = vld [vmem:[%s237 + $0x1c9] sm:$0xff]
    %v337 = vld [vmem:[%s237 + $0x1d1] sm:$0xff]
    %v338 = vld [vmem:[%s237 + $0x1e1] sm:$0xff]
    %v339 = vld [vmem:[%s237 + $0x1e9] sm:$0xff]
    %v340 = vld [vmem:[%s237 + $0x1f9] sm:$0xff]
    %v341 = vld [vmem:[%s237 + $0x201] sm:$0xff]
    %v342 = vld [vmem:[%s237 + $0x211] sm:$0xff]
    %v343 = vld [vmem:[%s237 + $0x219] sm:$0xff]
    %v344 = vld [vmem:[%s237 + $0x229] sm:$0xff]
    %v345 = vld [vmem:[%s237 + $0x231] sm:$0xff]
    %v346 = vld [vmem:[%s237 + $0x241] sm:$0xff]
    %v347 = vld [vmem:[%s237 + $0x249] sm:$0xff]
    %v348 = vld [vmem:[%s237 + $0x259] sm:$0xff]
    %v349 = vld [vmem:[%s237 + $0x261] sm:$0xff]
    %v350 = vld [vmem:[%s237 + $0x271] sm:$0xff]
    %v351 = vld [vmem:[%s237 + $0x279] sm:$0xff]
    %v352 = vld [vmem:[%s237 + $0x289] sm:$0xff]
    %v353 = vld [vmem:[%s237 + $0x291] sm:$0xff]
    %v354 = vld [vmem:[%s237 + $0x2a1] sm:$0xff]
    %v355 = vld [vmem:[%s237 + $0x2a9] sm:$0xff]
    %v356 = vld [vmem:[%s237 + $0x2b9] sm:$0xff]
    %v357 = vld [vmem:[%s237 + $0x2c1] sm:$0xff]
    %v358 = vld [vmem:[%s237 + $0x2d1] sm:$0xff]
    %v359 = vld [vmem:[%s237 + $0x2d9] sm:$0xff]
    %v360 = vld [vmem:[%s237 + $0x2e9] sm:$0xff]
    %v361 = vld [vmem:[%s237 + $0x2f1] sm:$0xff]
    %v362 = vld [vmem:[%s237 + $0x301] sm:$0xff]
    %v363 = vld [vmem:[%s237 + $0x309] sm:$0xff]
    %v364 = vld [vmem:[%s237 + $0x319] sm:$0xff]
    %v365 = vld [vmem:[%s237 + $0x321] sm:$0xff]
    %v366 = vld [vmem:[%s237 + $0x2] sm:$0xff]
    %v367 = vld [vmem:[%s237 + $0xa] sm:$0xff]
    %v368 = vld [vmem:[%s237 + $0x1a] sm:$0xff]
    %v369 = vld [vmem:[%s237 + $0x22] sm:$0xff]
    %v370 = vld [vmem:[%s237 + $0x32] sm:$0xff]
    %v371 = vld [vmem:[%s237 + $0x3a] sm:$0xff]
    %v372 = vld [vmem:[%s237 + $0x4a] sm:$0xff]
    %v373 = vld [vmem:[%s237 + $0x52] sm:$0xff]
    %v374 = vld [vmem:[%s237 + $0x62] sm:$0xff]
    %v375 = vld [vmem:[%s237 + $0x6a] sm:$0xff]
    %v376 = vld [vmem:[%s237 + $0x7a] sm:$0xff]
    %v377 = vld [vmem:[%s237 + $0x82] sm:$0xff]
    %v378 = vld [vmem:[%s237 + $0x92] sm:$0xff]
    %v379 = vld [vmem:[%s237 + $0x9a] sm:$0xff]
    %v380 = vld [vmem:[%s237 + $0xaa] sm:$0xff]
    %v381 = vld [vmem:[%s237 + $0xb2] sm:$0xff]
    %v382 = vld [vmem:[%s237 + $0xc2] sm:$0xff]
    %v383 = vld [vmem:[%s237 + $0xca] sm:$0xff]
    %v384 = vld [vmem:[%s237 + $0xda] sm:$0xff]
    %v385 = vld [vmem:[%s237 + $0xe2] sm:$0xff]
    %v386 = vld [vmem:[%s237 + $0xf2] sm:$0xff]
    %v387 = vld [vmem:[%s237 + $0xfa] sm:$0xff]
    %v388 = vld [vmem:[%s237 + $0x10a] sm:$0xff]
    %v389 = vld [vmem:[%s237 + $0x112] sm:$0xff]
    %v390 = vld [vmem:[%s237 + $0x122] sm:$0xff]
    %v391 = vld [vmem:[%s237 + $0x12a] sm:$0xff]
    %v392 = vld [vmem:[%s237 + $0x13a] sm:$0xff]
    %v393 = vld [vmem:[%s237 + $0x142] sm:$0xff]
    %v394 = vld [vmem:[%s237 + $0x152] sm:$0xff]
    %v395 = vld [vmem:[%s237 + $0x15a] sm:$0xff]
    %v396 = vld [vmem:[%s237 + $0x16a] sm:$0xff]
    %v397 = vld [vmem:[%s237 + $0x172] sm:$0xff]
    %v398 = vld [vmem:[%s237 + $0x1b2] sm:$0xff]
    %v399 = vld [vmem:[%s237 + $0x1ba] sm:$0xff]
    %v400 = vld [vmem:[%s237 + $0x1ca] sm:$0xff]
    %v401 = vld [vmem:[%s237 + $0x1d2] sm:$0xff]
    %v402 = vld [vmem:[%s237 + $0x1e2] sm:$0xff]
    %v403 = vld [vmem:[%s237 + $0x1ea] sm:$0xff]
    %v404 = vld [vmem:[%s237 + $0x1fa] sm:$0xff]
    %v405 = vld [vmem:[%s237 + $0x202] sm:$0xff]
    %v406 = vld [vmem:[%s237 + $0x212] sm:$0xff]
    %v407 = vld [vmem:[%s237 + $0x21a] sm:$0xff]
    %v408 = vld [vmem:[%s237 + $0x22a] sm:$0xff]
    %v409 = vld [vmem:[%s237 + $0x232] sm:$0xff]
    %v410 = vld [vmem:[%s237 + $0x242] sm:$0xff]
    %v411 = vld [vmem:[%s237 + $0x24a] sm:$0xff]
    %v412 = vld [vmem:[%s237 + $0x25a] sm:$0xff]
    %v413 = vld [vmem:[%s237 + $0x262] sm:$0xff]
    %v414 = vld [vmem:[%s237 + $0x272] sm:$0xff]
    %v415 = vld [vmem:[%s237 + $0x27a] sm:$0xff]
    %v416 = vld [vmem:[%s237 + $0x28a] sm:$0xff]
    %v417 = vld [vmem:[%s237 + $0x292] sm:$0xff]
    %v418 = vld [vmem:[%s237 + $0x2a2] sm:$0xff]
    %v419 = vld [vmem:[%s237 + $0x2aa] sm:$0xff]
    %v420 = vld [vmem:[%s237 + $0x2ba] sm:$0xff]
    %v421 = vld [vmem:[%s237 + $0x2c2] sm:$0xff]
    %v422 = vld [vmem:[%s237 + $0x2d2] sm:$0xff]
    %v423 = vld [vmem:[%s237 + $0x2da] sm:$0xff]
    %v424 = vld [vmem:[%s237 + $0x2ea] sm:$0xff]
    %v425 = vld [vmem:[%s237 + $0x2f2] sm:$0xff]
    %v426 = vld [vmem:[%s237 + $0x302] sm:$0xff]
    %v427 = vld [vmem:[%s237 + $0x30a] sm:$0xff]
    %v428 = vld [vmem:[%s237 + $0x31a] sm:$0xff]
    %v429 = vld [vmem:[%s237 + $0x322] sm:$0xff]
    %s430 = scalar_lea.vmem %s0, 48
    %v431 = vld [vmem:[%s430] sm:$0xff]
    %v432 = vld [vmem:[%s430 + $0x8] sm:$0xff]
    %v433 = vld [vmem:[%s430 + $0x18] sm:$0xff]
    %v434 = vld [vmem:[%s430 + $0x20] sm:$0xff]
    %v435 = vld [vmem:[%s430 + $0x30] sm:$0xff]
    %v436 = vld [vmem:[%s430 + $0x38] sm:$0xff]
    %v437 = vld [vmem:[%s430 + $0x48] sm:$0xff]
    %v438 = vld [vmem:[%s430 + $0x50] sm:$0xff]
    %v439 = vld [vmem:[%s430 + $0x60] sm:$0xff]
    %v440 = vld [vmem:[%s430 + $0x68] sm:$0xff]
    %v441 = vld [vmem:[%s430 + $0x78] sm:$0xff]
    %v442 = vld [vmem:[%s430 + $0x80] sm:$0xff]
    %v443 = vld [vmem:[%s430 + $0x90] sm:$0xff]
    %v444 = vld [vmem:[%s430 + $0x98] sm:$0xff]
    %v445 = vld [vmem:[%s430 + $0xa8] sm:$0xff]
    %v446 = vld [vmem:[%s430 + $0xb0] sm:$0xff]
    %v447 = vld [vmem:[%s430 + $0xc0] sm:$0xff]
    %v448 = vld [vmem:[%s430 + $0xc8] sm:$0xff]
    %v449 = vld [vmem:[%s430 + $0xd8] sm:$0xff]
    %v450 = vld [vmem:[%s430 + $0xe0] sm:$0xff]
    %v451 = vld [vmem:[%s430 + $0xf0] sm:$0xff]
    %v452 = vld [vmem:[%s430 + $0xf8] sm:$0xff]
    %v453 = vld [vmem:[%s430 + $0x108] sm:$0xff]
    %v454 = vld [vmem:[%s430 + $0x110] sm:$0xff]
    %v455 = vld [vmem:[%s430 + $0x120] sm:$0xff]
    %v456 = vld [vmem:[%s430 + $0x128] sm:$0xff]
    %v457 = vld [vmem:[%s430 + $0x138] sm:$0xff]
    %v458 = vld [vmem:[%s430 + $0x140] sm:$0xff]
    %v459 = vld [vmem:[%s430 + $0x150] sm:$0xff]
    %v460 = vld [vmem:[%s430 + $0x158] sm:$0xff]
    %v461 = vld [vmem:[%s430 + $0x168] sm:$0xff]
    %v462 = vld [vmem:[%s430 + $0x170] sm:$0xff]
    %v463 = vld [vmem:[%s430 + $0x1b0] sm:$0xff]
    %v464 = vld [vmem:[%s430 + $0x1b8] sm:$0xff]
    %v465 = vld [vmem:[%s430 + $0x1c8] sm:$0xff]
    %v466 = vld [vmem:[%s430 + $0x1d0] sm:$0xff]
    %v467 = vld [vmem:[%s430 + $0x1e0] sm:$0xff]
    %v468 = vld [vmem:[%s430 + $0x1e8] sm:$0xff]
    %v469 = vld [vmem:[%s430 + $0x1f8] sm:$0xff]
    %v470 = vld [vmem:[%s430 + $0x200] sm:$0xff]
    %v471 = vld [vmem:[%s430 + $0x210] sm:$0xff]
    %v472 = vld [vmem:[%s430 + $0x218] sm:$0xff]
    %v473 = vld [vmem:[%s430 + $0x228] sm:$0xff]
    %v474 = vld [vmem:[%s430 + $0x230] sm:$0xff]
    %v475 = vld [vmem:[%s430 + $0x240] sm:$0xff]
    %v476 = vld [vmem:[%s430 + $0x248] sm:$0xff]
    %v477 = vld [vmem:[%s430 + $0x258] sm:$0xff]
    %v478 = vld [vmem:[%s430 + $0x260] sm:$0xff]
    %v479 = vld [vmem:[%s430 + $0x270] sm:$0xff]
    %v480 = vld [vmem:[%s430 + $0x278] sm:$0xff]
    %v481 = vld [vmem:[%s430 + $0x288] sm:$0xff]
    %v482 = vld [vmem:[%s430 + $0x290] sm:$0xff]
    %v483 = vld [vmem:[%s430 + $0x2a0] sm:$0xff]
    %v484 = vld [vmem:[%s430 + $0x2a8] sm:$0xff]
    %v485 = vld [vmem:[%s430 + $0x2b8] sm:$0xff]
    %v486 = vld [vmem:[%s430 + $0x2c0] sm:$0xff]
    %v487 = vld [vmem:[%s430 + $0x2d0] sm:$0xff]
    %v488 = vld [vmem:[%s430 + $0x2d8] sm:$0xff]
    %v489 = vld [vmem:[%s430 + $0x2e8] sm:$0xff]
    %v490 = vld [vmem:[%s430 + $0x2f0] sm:$0xff]
    %v491 = vld [vmem:[%s430 + $0x300] sm:$0xff]
    %v492 = vld [vmem:[%s430 + $0x308] sm:$0xff]
    %v493 = vld [vmem:[%s430 + $0x318] sm:$0xff]
    %v494 = vld [vmem:[%s430 + $0x320] sm:$0xff]
    %v495 = vld [vmem:[%s430 + $0x1] sm:$0xff]
    %v496 = vld [vmem:[%s430 + $0x9] sm:$0xff]
    %v497 = vld [vmem:[%s430 + $0x19] sm:$0xff]
    %v498 = vld [vmem:[%s430 + $0x21] sm:$0xff]
    %v499 = vld [vmem:[%s430 + $0x31] sm:$0xff]
    %v500 = vld [vmem:[%s430 + $0x39] sm:$0xff]
    %v501 = vld [vmem:[%s430 + $0x49] sm:$0xff]
    %v502 = vld [vmem:[%s430 + $0x51] sm:$0xff]
    %v503 = vld [vmem:[%s430 + $0x61] sm:$0xff]
    %v504 = vld [vmem:[%s430 + $0x69] sm:$0xff]
    %v505 = vld [vmem:[%s430 + $0x79] sm:$0xff]
    %v506 = vld [vmem:[%s430 + $0x81] sm:$0xff]
    %v507 = vld [vmem:[%s430 + $0x91] sm:$0xff]
    %v508 = vld [vmem:[%s430 + $0x99] sm:$0xff]
    %v509 = vld [vmem:[%s430 + $0xa9] sm:$0xff]
    %v510 = vld [vmem:[%s430 + $0xb1] sm:$0xff]
    %v511 = vld [vmem:[%s430 + $0xc1] sm:$0xff]
    %v512 = vld [vmem:[%s430 + $0xc9] sm:$0xff]
    %v513 = vld [vmem:[%s430 + $0xd9] sm:$0xff]
    %v514 = vld [vmem:[%s430 + $0xe1] sm:$0xff]
    %v515 = vld [vmem:[%s430 + $0xf1] sm:$0xff]
    %v516 = vld [vmem:[%s430 + $0xf9] sm:$0xff]
    %v517 = vld [vmem:[%s430 + $0x109] sm:$0xff]
    %v518 = vld [vmem:[%s430 + $0x111] sm:$0xff]
    %v519 = vld [vmem:[%s430 + $0x121] sm:$0xff]
    %v520 = vld [vmem:[%s430 + $0x129] sm:$0xff]
    %v521 = vld [vmem:[%s430 + $0x139] sm:$0xff]
    %v522 = vld [vmem:[%s430 + $0x141] sm:$0xff]
    %v523 = vld [vmem:[%s430 + $0x151] sm:$0xff]
    %v524 = vld [vmem:[%s430 + $0x159] sm:$0xff]
    %v525 = vld [vmem:[%s430 + $0x169] sm:$0xff]
    %v526 = vld [vmem:[%s430 + $0x171] sm:$0xff]
    %v527 = vld [vmem:[%s430 + $0x1b1] sm:$0xff]
    %v528 = vld [vmem:[%s430 + $0x1b9] sm:$0xff]
    %v529 = vld [vmem:[%s430 + $0x1c9] sm:$0xff]
    %v530 = vld [vmem:[%s430 + $0x1d1] sm:$0xff]
    %v531 = vld [vmem:[%s430 + $0x1e1] sm:$0xff]
    %v532 = vld [vmem:[%s430 + $0x1e9] sm:$0xff]
    %v533 = vld [vmem:[%s430 + $0x1f9] sm:$0xff]
    %v534 = vld [vmem:[%s430 + $0x201] sm:$0xff]
    %v535 = vld [vmem:[%s430 + $0x211] sm:$0xff]
    %v536 = vld [vmem:[%s430 + $0x219] sm:$0xff]
    %v537 = vld [vmem:[%s430 + $0x229] sm:$0xff]
    %v538 = vld [vmem:[%s430 + $0x231] sm:$0xff]
    %v539 = vld [vmem:[%s430 + $0x241] sm:$0xff]
    %v540 = vld [vmem:[%s430 + $0x249] sm:$0xff]
    %v541 = vld [vmem:[%s430 + $0x259] sm:$0xff]
    %v542 = vld [vmem:[%s430 + $0x261] sm:$0xff]
    %v543 = vld [vmem:[%s430 + $0x271] sm:$0xff]
    %v544 = vld [vmem:[%s430 + $0x279] sm:$0xff]
    %v545 = vld [vmem:[%s430 + $0x289] sm:$0xff]
    %v546 = vld [vmem:[%s430 + $0x291] sm:$0xff]
    %v547 = vld [vmem:[%s430 + $0x2a1] sm:$0xff]
    %v548 = vld [vmem:[%s430 + $0x2a9] sm:$0xff]
    %v549 = vld [vmem:[%s430 + $0x2b9] sm:$0xff]
    %v550 = vld [vmem:[%s430 + $0x2c1] sm:$0xff]
    %v551 = vld [vmem:[%s430 + $0x2d1] sm:$0xff]
    %v552 = vld [vmem:[%s430 + $0x2d9] sm:$0xff]
    %v553 = vld [vmem:[%s430 + $0x2e9] sm:$0xff]
    %v554 = vld [vmem:[%s430 + $0x2f1] sm:$0xff]
    %v555 = vld [vmem:[%s430 + $0x301] sm:$0xff]
    %v556 = vld [vmem:[%s430 + $0x309] sm:$0xff]
    %v557 = vld [vmem:[%s430 + $0x319] sm:$0xff]
    %v558 = vld [vmem:[%s430 + $0x321] sm:$0xff]
    %v559 = vld [vmem:[%s430 + $0x2] sm:$0xff]
    %v560 = vld [vmem:[%s430 + $0xa] sm:$0xff]
    %v561 = vld [vmem:[%s430 + $0x1a] sm:$0xff]
    %v562 = vld [vmem:[%s430 + $0x22] sm:$0xff]
    %v563 = vld [vmem:[%s430 + $0x32] sm:$0xff]
    %v564 = vld [vmem:[%s430 + $0x3a] sm:$0xff]
    %v565 = vld [vmem:[%s430 + $0x4a] sm:$0xff]
    %v566 = vld [vmem:[%s430 + $0x52] sm:$0xff]
    %v567 = vld [vmem:[%s430 + $0x62] sm:$0xff]
    %v568 = vld [vmem:[%s430 + $0x6a] sm:$0xff]
    %v569 = vld [vmem:[%s430 + $0x7a] sm:$0xff]
    %v570 = vld [vmem:[%s430 + $0x82] sm:$0xff]
    %v571 = vld [vmem:[%s430 + $0x92] sm:$0xff]
    %v572 = vld [vmem:[%s430 + $0x9a] sm:$0xff]
    %v573 = vld [vmem:[%s430 + $0xaa] sm:$0xff]
    %v574 = vld [vmem:[%s430 + $0xb2] sm:$0xff]
    %v575 = vld [vmem:[%s430 + $0xc2] sm:$0xff]
    %v576 = vld [vmem:[%s430 + $0xca] sm:$0xff]
    %v577 = vld [vmem:[%s430 + $0xda] sm:$0xff]
    %v578 = vld [vmem:[%s430 + $0xe2] sm:$0xff]
    %v579 = vld [vmem:[%s430 + $0xf2] sm:$0xff]
    %v580 = vld [vmem:[%s430 + $0xfa] sm:$0xff]
    %v581 = vld [vmem:[%s430 + $0x10a] sm:$0xff]
    %v582 = vld [vmem:[%s430 + $0x112] sm:$0xff]
    %v583 = vld [vmem:[%s430 + $0x122] sm:$0xff]
    %v584 = vld [vmem:[%s430 + $0x12a] sm:$0xff]
    %v585 = vld [vmem:[%s430 + $0x13a] sm:$0xff]
    %v586 = vld [vmem:[%s430 + $0x142] sm:$0xff]
    %v587 = vld [vmem:[%s430 + $0x152] sm:$0xff]
    %v588 = vld [vmem:[%s430 + $0x15a] sm:$0xff]
    %v589 = vld [vmem:[%s430 + $0x16a] sm:$0xff]
    %v590 = vld [vmem:[%s430 + $0x172] sm:$0xff]
    %v591 = vld [vmem:[%s430 + $0x1b2] sm:$0xff]
    %v592 = vld [vmem:[%s430 + $0x1ba] sm:$0xff]
    %v593 = vld [vmem:[%s430 + $0x1ca] sm:$0xff]
    %v594 = vld [vmem:[%s430 + $0x1d2] sm:$0xff]
    %v595 = vld [vmem:[%s430 + $0x1e2] sm:$0xff]
    %v596 = vld [vmem:[%s430 + $0x1ea] sm:$0xff]
    %v597 = vld [vmem:[%s430 + $0x1fa] sm:$0xff]
    %v598 = vld [vmem:[%s430 + $0x202] sm:$0xff]
    %v599 = vld [vmem:[%s430 + $0x212] sm:$0xff]
    %v600 = vld [vmem:[%s430 + $0x21a] sm:$0xff]
    %v601 = vld [vmem:[%s430 + $0x22a] sm:$0xff]
    %v602 = vld [vmem:[%s430 + $0x232] sm:$0xff]
    %v603 = vld [vmem:[%s430 + $0x242] sm:$0xff]
    %v604 = vld [vmem:[%s430 + $0x24a] sm:$0xff]
    %v605 = vld [vmem:[%s430 + $0x25a] sm:$0xff]
    %v606 = vld [vmem:[%s430 + $0x262] sm:$0xff]
    %v607 = vld [vmem:[%s430 + $0x272] sm:$0xff]
    %v608 = vld [vmem:[%s430 + $0x27a] sm:$0xff]
    %v609 = vld [vmem:[%s430 + $0x28a] sm:$0xff]
    %v610 = vld [vmem:[%s430 + $0x292] sm:$0xff]
    %v611 = vld [vmem:[%s430 + $0x2a2] sm:$0xff]
    %v612 = vld [vmem:[%s430 + $0x2aa] sm:$0xff]
    %v613 = vld [vmem:[%s430 + $0x2ba] sm:$0xff]
    %v614 = vld [vmem:[%s430 + $0x2c2] sm:$0xff]
    %v615 = vld [vmem:[%s430 + $0x2d2] sm:$0xff]
    %v616 = vld [vmem:[%s430 + $0x2da] sm:$0xff]
    %v617 = vld [vmem:[%s430 + $0x2ea] sm:$0xff]
    %v618 = vld [vmem:[%s430 + $0x2f2] sm:$0xff]
    %v619 = vld [vmem:[%s430 + $0x302] sm:$0xff]
    %v620 = vld [vmem:[%s430 + $0x30a] sm:$0xff]
    %v621 = vld [vmem:[%s430 + $0x31a] sm:$0xff]
    %v622 = vld [vmem:[%s430 + $0x322] sm:$0xff]
    %687 = vrot.lane.b32.xlu0 %v109, 4
    %v688 = vpop.permute.xlu0 %687
    %689 = vrot.lane.b32.xlu0 %v110, 4
    %v690 = vpop.permute.xlu0 %689
    %691 = vrot.lane.b32.xlu0 %v111, 4
    %v692 = vpop.permute.xlu0 %691
    %693 = vrot.lane.b32.xlu0 %v112, 4
    %v694 = vpop.permute.xlu0 %693
    %695 = vrot.lane.b32.xlu0 %v113, 4
    %v696 = vpop.permute.xlu0 %695
    %697 = vrot.lane.b32.xlu0 %v114, 4
    %v698 = vpop.permute.xlu0 %697
    %699 = vrot.lane.b32.xlu0 %v115, 4
    %v700 = vpop.permute.xlu0 %699
    %701 = vrot.lane.b32.xlu0 %v116, 4
    %v702 = vpop.permute.xlu0 %701
    %703 = vrot.lane.b32.xlu0 %v117, 4
    %v704 = vpop.permute.xlu0 %703
    %705 = vrot.lane.b32.xlu0 %v118, 4
    %v706 = vpop.permute.xlu0 %705
    %707 = vrot.lane.b32.xlu0 %v119, 4
    %v708 = vpop.permute.xlu0 %707
    %709 = vrot.lane.b32.xlu0 %v120, 4
    %v710 = vpop.permute.xlu0 %709
    %711 = vrot.lane.b32.xlu0 %v121, 4
    %v712 = vpop.permute.xlu0 %711
    %713 = vrot.lane.b32.xlu0 %v122, 4
    %v714 = vpop.permute.xlu0 %713
    %715 = vrot.lane.b32.xlu0 %v123, 4
    %v716 = vpop.permute.xlu0 %715
    %717 = vrot.lane.b32.xlu0 %v124, 4
    %v718 = vpop.permute.xlu0 %717
    %719 = vrot.lane.b32.xlu0 %v125, 4
    %v720 = vpop.permute.xlu0 %719
    %721 = vrot.lane.b32.xlu0 %v126, 4
    %v722 = vpop.permute.xlu0 %721
    %723 = vrot.lane.b32.xlu0 %v127, 4
    %v724 = vpop.permute.xlu0 %723
    %725 = vrot.lane.b32.xlu0 %v128, 4
    %v726 = vpop.permute.xlu0 %725
    %727 = vrot.lane.b32.xlu0 %v129, 4
    %v728 = vpop.permute.xlu0 %727
    %729 = vrot.lane.b32.xlu0 %v130, 4
    %v730 = vpop.permute.xlu0 %729
    %731 = vrot.lane.b32.xlu0 %v131, 4
    %v732 = vpop.permute.xlu0 %731
    %733 = vrot.lane.b32.xlu0 %v132, 4
    %v734 = vpop.permute.xlu0 %733
    %735 = vrot.lane.b32.xlu0 %v133, 4
    %v736 = vpop.permute.xlu0 %735
    %737 = vrot.lane.b32.xlu0 %v134, 4
    %v738 = vpop.permute.xlu0 %737
    %739 = vrot.lane.b32.xlu0 %v135, 4
    %v740 = vpop.permute.xlu0 %739
    %741 = vrot.lane.b32.xlu0 %v136, 4
    %v742 = vpop.permute.xlu0 %741
    %743 = vrot.lane.b32.xlu0 %v137, 4
    %v744 = vpop.permute.xlu0 %743
    %745 = vrot.lane.b32.xlu0 %v138, 4
    %v746 = vpop.permute.xlu0 %745
    %747 = vrot.lane.b32.xlu0 %v139, 4
    %v748 = vpop.permute.xlu0 %747
    %749 = vrot.lane.b32.xlu0 %v140, 4
    %v750 = vpop.permute.xlu0 %749
    %751 = vrot.lane.b32.xlu0 %v141, 4
    %v752 = vpop.permute.xlu0 %751
    %753 = vrot.lane.b32.xlu0 %v142, 4
    %v754 = vpop.permute.xlu0 %753
    %755 = vrot.lane.b32.xlu0 %v143, 4
    %v756 = vpop.permute.xlu0 %755
    %757 = vrot.lane.b32.xlu0 %v144, 4
    %v758 = vpop.permute.xlu0 %757
    %759 = vrot.lane.b32.xlu0 %v145, 4
    %v760 = vpop.permute.xlu0 %759
    %761 = vrot.lane.b32.xlu0 %v146, 4
    %v762 = vpop.permute.xlu0 %761
    %763 = vrot.lane.b32.xlu0 %v147, 4
    %v764 = vpop.permute.xlu0 %763
    %765 = vrot.lane.b32.xlu0 %v148, 4
    %v766 = vpop.permute.xlu0 %765
    %767 = vrot.lane.b32.xlu0 %v149, 4
    %v768 = vpop.permute.xlu0 %767
    %769 = vrot.lane.b32.xlu0 %v150, 4
    %v770 = vpop.permute.xlu0 %769
    %771 = vrot.lane.b32.xlu0 %v151, 4
    %v772 = vpop.permute.xlu0 %771
    %773 = vrot.lane.b32.xlu0 %v152, 4
    %v774 = vpop.permute.xlu0 %773
    %775 = vrot.lane.b32.xlu0 %v153, 4
    %v776 = vpop.permute.xlu0 %775
    %777 = vrot.lane.b32.xlu0 %v154, 4
    %v778 = vpop.permute.xlu0 %777
    %779 = vrot.lane.b32.xlu0 %v155, 4
    %v780 = vpop.permute.xlu0 %779
    %781 = vrot.lane.b32.xlu0 %v156, 4
    %v782 = vpop.permute.xlu0 %781
    %783 = vrot.lane.b32.xlu0 %v157, 4
    %v784 = vpop.permute.xlu0 %783
    %785 = vrot.lane.b32.xlu0 %v158, 4
    %v786 = vpop.permute.xlu0 %785
    %787 = vrot.lane.b32.xlu0 %v159, 4
    %v788 = vpop.permute.xlu0 %787
    %789 = vrot.lane.b32.xlu0 %v160, 4
    %v790 = vpop.permute.xlu0 %789
    %791 = vrot.lane.b32.xlu0 %v161, 4
    %v792 = vpop.permute.xlu0 %791
    %793 = vrot.lane.b32.xlu0 %v162, 4
    %v794 = vpop.permute.xlu0 %793
    %795 = vrot.lane.b32.xlu0 %v163, 4
    %v796 = vpop.permute.xlu0 %795
    %797 = vrot.lane.b32.xlu0 %v164, 4
    %v798 = vpop.permute.xlu0 %797
    %799 = vrot.lane.b32.xlu0 %v165, 4
    %v800 = vpop.permute.xlu0 %799
    %801 = vrot.lane.b32.xlu0 %v166, 4
    %v802 = vpop.permute.xlu0 %801
    %803 = vrot.lane.b32.xlu0 %v167, 4
    %v804 = vpop.permute.xlu0 %803
    %805 = vrot.lane.b32.xlu0 %v168, 4
    %v806 = vpop.permute.xlu0 %805
    %807 = vrot.lane.b32.xlu0 %v169, 4
    %v808 = vpop.permute.xlu0 %807
    %809 = vrot.lane.b32.xlu0 %v170, 4
    %v810 = vpop.permute.xlu0 %809
    %811 = vrot.lane.b32.xlu0 %v171, 4
    %v812 = vpop.permute.xlu0 %811
    %813 = vrot.lane.b32.xlu0 %v172, 4
    %v814 = vpop.permute.xlu0 %813
    %943 = vrot.lane.b32.xlu0 %v173, 8
    %v944 = vpop.permute.xlu0 %943
    %945 = vrot.lane.b32.xlu0 %v174, 8
    %v946 = vpop.permute.xlu0 %945
    %947 = vrot.lane.b32.xlu0 %v175, 8
    %v948 = vpop.permute.xlu0 %947
    %949 = vrot.lane.b32.xlu0 %v176, 8
    %v950 = vpop.permute.xlu0 %949
    %951 = vrot.lane.b32.xlu0 %v177, 8
    %v952 = vpop.permute.xlu0 %951
    %953 = vrot.lane.b32.xlu0 %v178, 8
    %v954 = vpop.permute.xlu0 %953
    %955 = vrot.lane.b32.xlu0 %v179, 8
    %v956 = vpop.permute.xlu0 %955
    %957 = vrot.lane.b32.xlu0 %v180, 8
    %v958 = vpop.permute.xlu0 %957
    %959 = vrot.lane.b32.xlu0 %v181, 8
    %v960 = vpop.permute.xlu0 %959
    %961 = vrot.lane.b32.xlu0 %v182, 8
    %v962 = vpop.permute.xlu0 %961
    %963 = vrot.lane.b32.xlu0 %v183, 8
    %v964 = vpop.permute.xlu0 %963
    %965 = vrot.lane.b32.xlu0 %v184, 8
    %v966 = vpop.permute.xlu0 %965
    %967 = vrot.lane.b32.xlu0 %v185, 8
    %v968 = vpop.permute.xlu0 %967
    %969 = vrot.lane.b32.xlu0 %v186, 8
    %v970 = vpop.permute.xlu0 %969
    %971 = vrot.lane.b32.xlu0 %v187, 8
    %v972 = vpop.permute.xlu0 %971
    %973 = vrot.lane.b32.xlu0 %v188, 8
    %v974 = vpop.permute.xlu0 %973
    %975 = vrot.lane.b32.xlu0 %v189, 8
    %v976 = vpop.permute.xlu0 %975
    %977 = vrot.lane.b32.xlu0 %v190, 8
    %v978 = vpop.permute.xlu0 %977
    %979 = vrot.lane.b32.xlu0 %v191, 8
    %v980 = vpop.permute.xlu0 %979
    %981 = vrot.lane.b32.xlu0 %v192, 8
    %v982 = vpop.permute.xlu0 %981
    %983 = vrot.lane.b32.xlu0 %v193, 8
    %v984 = vpop.permute.xlu0 %983
    %985 = vrot.lane.b32.xlu0 %v194, 8
    %v986 = vpop.permute.xlu0 %985
    %987 = vrot.lane.b32.xlu0 %v195, 8
    %v988 = vpop.permute.xlu0 %987
    %989 = vrot.lane.b32.xlu0 %v196, 8
    %v990 = vpop.permute.xlu0 %989
    %991 = vrot.lane.b32.xlu0 %v197, 8
    %v992 = vpop.permute.xlu0 %991
    %993 = vrot.lane.b32.xlu0 %v198, 8
    %v994 = vpop.permute.xlu0 %993
    %995 = vrot.lane.b32.xlu0 %v199, 8
    %v996 = vpop.permute.xlu0 %995
    %997 = vrot.lane.b32.xlu0 %v200, 8
    %v998 = vpop.permute.xlu0 %997
    %999 = vrot.lane.b32.xlu0 %v201, 8
    %v1000 = vpop.permute.xlu0 %999
    %1001 = vrot.lane.b32.xlu0 %v202, 8
    %v1002 = vpop.permute.xlu0 %1001
    %1003 = vrot.lane.b32.xlu0 %v203, 8
    %v1004 = vpop.permute.xlu0 %1003
    %1005 = vrot.lane.b32.xlu0 %v204, 8
    %v1006 = vpop.permute.xlu0 %1005
    %1007 = vrot.lane.b32.xlu0 %v205, 8
    %v1008 = vpop.permute.xlu0 %1007
    %1009 = vrot.lane.b32.xlu0 %v206, 8
    %v1010 = vpop.permute.xlu0 %1009
    %1011 = vrot.lane.b32.xlu0 %v207, 8
    %v1012 = vpop.permute.xlu0 %1011
    %1013 = vrot.lane.b32.xlu0 %v208, 8
    %v1014 = vpop.permute.xlu0 %1013
    %1015 = vrot.lane.b32.xlu0 %v209, 8
    %v1016 = vpop.permute.xlu0 %1015
    %1017 = vrot.lane.b32.xlu0 %v210, 8
    %v1018 = vpop.permute.xlu0 %1017
    %1019 = vrot.lane.b32.xlu0 %v211, 8
    %v1020 = vpop.permute.xlu0 %1019
    %1021 = vrot.lane.b32.xlu0 %v212, 8
    %v1022 = vpop.permute.xlu0 %1021
    %1023 = vrot.lane.b32.xlu0 %v213, 8
    %v1024 = vpop.permute.xlu0 %1023
    %1025 = vrot.lane.b32.xlu0 %v214, 8
    %v1026 = vpop.permute.xlu0 %1025
    %1027 = vrot.lane.b32.xlu0 %v215, 8
    %v1028 = vpop.permute.xlu0 %1027
    %1029 = vrot.lane.b32.xlu0 %v216, 8
    %v1030 = vpop.permute.xlu0 %1029
    %1031 = vrot.lane.b32.xlu0 %v217, 8
    %v1032 = vpop.permute.xlu0 %1031
    %1033 = vrot.lane.b32.xlu0 %v218, 8
    %v1034 = vpop.permute.xlu0 %1033
    %1035 = vrot.lane.b32.xlu0 %v219, 8
    %v1036 = vpop.permute.xlu0 %1035
    %1037 = vrot.lane.b32.xlu0 %v220, 8
    %v1038 = vpop.permute.xlu0 %1037
    %1039 = vrot.lane.b32.xlu0 %v221, 8
    %v1040 = vpop.permute.xlu0 %1039
    %1041 = vrot.lane.b32.xlu0 %v222, 8
    %v1042 = vpop.permute.xlu0 %1041
    %1043 = vrot.lane.b32.xlu0 %v223, 8
    %v1044 = vpop.permute.xlu0 %1043
    %1045 = vrot.lane.b32.xlu0 %v224, 8
    %v1046 = vpop.permute.xlu0 %1045
    %1047 = vrot.lane.b32.xlu0 %v225, 8
    %v1048 = vpop.permute.xlu0 %1047
    %1049 = vrot.lane.b32.xlu0 %v226, 8
    %v1050 = vpop.permute.xlu0 %1049
    %1051 = vrot.lane.b32.xlu0 %v227, 8
    %v1052 = vpop.permute.xlu0 %1051
    %1053 = vrot.lane.b32.xlu0 %v228, 8
    %v1054 = vpop.permute.xlu0 %1053
    %1055 = vrot.lane.b32.xlu0 %v229, 8
    %v1056 = vpop.permute.xlu0 %1055
    %1057 = vrot.lane.b32.xlu0 %v230, 8
    %v1058 = vpop.permute.xlu0 %1057
    %1059 = vrot.lane.b32.xlu0 %v231, 8
    %v1060 = vpop.permute.xlu0 %1059
    %1061 = vrot.lane.b32.xlu0 %v232, 8
    %v1062 = vpop.permute.xlu0 %1061
    %1063 = vrot.lane.b32.xlu0 %v233, 8
    %v1064 = vpop.permute.xlu0 %1063
    %1065 = vrot.lane.b32.xlu0 %v234, 8
    %v1066 = vpop.permute.xlu0 %1065
    %1067 = vrot.lane.b32.xlu0 %v235, 8
    %v1068 = vpop.permute.xlu0 %1067
    %1069 = vrot.lane.b32.xlu0 %v236, 8
    %v1070 = vpop.permute.xlu0 %1069
    %1199 = vrot.lane.b32.xlu0 %v238, 12
    %v1200 = vpop.permute.xlu0 %1199
    %1201 = vrot.lane.b32.xlu0 %v239, 12
    %v1202 = vpop.permute.xlu0 %1201
    %1203 = vrot.lane.b32.xlu0 %v240, 12
    %v1204 = vpop.permute.xlu0 %1203
    %1205 = vrot.lane.b32.xlu0 %v241, 12
    %v1206 = vpop.permute.xlu0 %1205
    %1207 = vrot.lane.b32.xlu0 %v242, 12
    %v1208 = vpop.permute.xlu0 %1207
    %1209 = vrot.lane.b32.xlu0 %v243, 12
    %v1210 = vpop.permute.xlu0 %1209
    %1211 = vrot.lane.b32.xlu0 %v244, 12
    %v1212 = vpop.permute.xlu0 %1211
    %1213 = vrot.lane.b32.xlu0 %v245, 12
    %v1214 = vpop.permute.xlu0 %1213
    %1215 = vrot.lane.b32.xlu0 %v246, 12
    %v1216 = vpop.permute.xlu0 %1215
    %1217 = vrot.lane.b32.xlu0 %v247, 12
    %v1218 = vpop.permute.xlu0 %1217
    %1219 = vrot.lane.b32.xlu0 %v248, 12
    %v1220 = vpop.permute.xlu0 %1219
    %1221 = vrot.lane.b32.xlu0 %v249, 12
    %v1222 = vpop.permute.xlu0 %1221
    %1223 = vrot.lane.b32.xlu0 %v250, 12
    %v1224 = vpop.permute.xlu0 %1223
    %1225 = vrot.lane.b32.xlu0 %v251, 12
    %v1226 = vpop.permute.xlu0 %1225
    %1227 = vrot.lane.b32.xlu0 %v252, 12
    %v1228 = vpop.permute.xlu0 %1227
    %1229 = vrot.lane.b32.xlu0 %v253, 12
    %v1230 = vpop.permute.xlu0 %1229
    %1231 = vrot.lane.b32.xlu0 %v254, 12
    %v1232 = vpop.permute.xlu0 %1231
    %1233 = vrot.lane.b32.xlu0 %v255, 12
    %v1234 = vpop.permute.xlu0 %1233
    %1235 = vrot.lane.b32.xlu0 %v256, 12
    %v1236 = vpop.permute.xlu0 %1235
    %1237 = vrot.lane.b32.xlu0 %v257, 12
    %v1238 = vpop.permute.xlu0 %1237
    %1239 = vrot.lane.b32.xlu0 %v258, 12
    %v1240 = vpop.permute.xlu0 %1239
    %1241 = vrot.lane.b32.xlu0 %v259, 12
    %v1242 = vpop.permute.xlu0 %1241
    %1243 = vrot.lane.b32.xlu0 %v260, 12
    %v1244 = vpop.permute.xlu0 %1243
    %1245 = vrot.lane.b32.xlu0 %v261, 12
    %v1246 = vpop.permute.xlu0 %1245
    %1247 = vrot.lane.b32.xlu0 %v262, 12
    %v1248 = vpop.permute.xlu0 %1247
    %1249 = vrot.lane.b32.xlu0 %v263, 12
    %v1250 = vpop.permute.xlu0 %1249
    %1251 = vrot.lane.b32.xlu0 %v264, 12
    %v1252 = vpop.permute.xlu0 %1251
    %1253 = vrot.lane.b32.xlu0 %v265, 12
    %v1254 = vpop.permute.xlu0 %1253
    %1255 = vrot.lane.b32.xlu0 %v266, 12
    %v1256 = vpop.permute.xlu0 %1255
    %1257 = vrot.lane.b32.xlu0 %v267, 12
    %v1258 = vpop.permute.xlu0 %1257
    %1259 = vrot.lane.b32.xlu0 %v268, 12
    %v1260 = vpop.permute.xlu0 %1259
    %1261 = vrot.lane.b32.xlu0 %v269, 12
    %v1262 = vpop.permute.xlu0 %1261
    %1263 = vrot.lane.b32.xlu0 %v270, 12
    %v1264 = vpop.permute.xlu0 %1263
    %1265 = vrot.lane.b32.xlu0 %v271, 12
    %v1266 = vpop.permute.xlu0 %1265
    %1267 = vrot.lane.b32.xlu0 %v272, 12
    %v1268 = vpop.permute.xlu0 %1267
    %1269 = vrot.lane.b32.xlu0 %v273, 12
    %v1270 = vpop.permute.xlu0 %1269
    %1271 = vrot.lane.b32.xlu0 %v274, 12
    %v1272 = vpop.permute.xlu0 %1271
    %1273 = vrot.lane.b32.xlu0 %v275, 12
    %v1274 = vpop.permute.xlu0 %1273
    %1275 = vrot.lane.b32.xlu0 %v276, 12
    %v1276 = vpop.permute.xlu0 %1275
    %1277 = vrot.lane.b32.xlu0 %v277, 12
    %v1278 = vpop.permute.xlu0 %1277
    %1279 = vrot.lane.b32.xlu0 %v278, 12
    %v1280 = vpop.permute.xlu0 %1279
    %1281 = vrot.lane.b32.xlu0 %v279, 12
    %v1282 = vpop.permute.xlu0 %1281
    %1283 = vrot.lane.b32.xlu0 %v280, 12
    %v1284 = vpop.permute.xlu0 %1283
    %1285 = vrot.lane.b32.xlu0 %v281, 12
    %v1286 = vpop.permute.xlu0 %1285
    %1287 = vrot.lane.b32.xlu0 %v282, 12
    %v1288 = vpop.permute.xlu0 %1287
    %1289 = vrot.lane.b32.xlu0 %v283, 12
    %v1290 = vpop.permute.xlu0 %1289
    %1291 = vrot.lane.b32.xlu0 %v284, 12
    %v1292 = vpop.permute.xlu0 %1291
    %1293 = vrot.lane.b32.xlu0 %v285, 12
    %v1294 = vpop.permute.xlu0 %1293
    %1295 = vrot.lane.b32.xlu0 %v286, 12
    %v1296 = vpop.permute.xlu0 %1295
    %1297 = vrot.lane.b32.xlu0 %v287, 12
    %v1298 = vpop.permute.xlu0 %1297
    %1299 = vrot.lane.b32.xlu0 %v288, 12
    %v1300 = vpop.permute.xlu0 %1299
    %1301 = vrot.lane.b32.xlu0 %v289, 12
    %v1302 = vpop.permute.xlu0 %1301
    %1303 = vrot.lane.b32.xlu0 %v290, 12
    %v1304 = vpop.permute.xlu0 %1303
    %1305 = vrot.lane.b32.xlu0 %v291, 12
    %v1306 = vpop.permute.xlu0 %1305
    %1307 = vrot.lane.b32.xlu0 %v292, 12
    %v1308 = vpop.permute.xlu0 %1307
    %1309 = vrot.lane.b32.xlu0 %v293, 12
    %v1310 = vpop.permute.xlu0 %1309
    %1311 = vrot.lane.b32.xlu0 %v294, 12
    %v1312 = vpop.permute.xlu0 %1311
    %1313 = vrot.lane.b32.xlu0 %v295, 12
    %v1314 = vpop.permute.xlu0 %1313
    %1315 = vrot.lane.b32.xlu0 %v296, 12
    %v1316 = vpop.permute.xlu0 %1315
    %1317 = vrot.lane.b32.xlu0 %v297, 12
    %v1318 = vpop.permute.xlu0 %1317
    %1319 = vrot.lane.b32.xlu0 %v298, 12
    %v1320 = vpop.permute.xlu0 %1319
    %1321 = vrot.lane.b32.xlu0 %v299, 12
    %v1322 = vpop.permute.xlu0 %1321
    %1323 = vrot.lane.b32.xlu0 %v300, 12
    %v1324 = vpop.permute.xlu0 %1323
    %1325 = vrot.lane.b32.xlu0 %v301, 12
    %v1326 = vpop.permute.xlu0 %1325
    %1455 = vrot.lane.b32.xlu0 %v302, 16
    %v1456 = vpop.permute.xlu0 %1455
    %1457 = vrot.lane.b32.xlu0 %v303, 16
    %v1458 = vpop.permute.xlu0 %1457
    %1459 = vrot.lane.b32.xlu0 %v304, 16
    %v1460 = vpop.permute.xlu0 %1459
    %1461 = vrot.lane.b32.xlu0 %v305, 16
    %v1462 = vpop.permute.xlu0 %1461
    %1463 = vrot.lane.b32.xlu0 %v306, 16
    %v1464 = vpop.permute.xlu0 %1463
    %1465 = vrot.lane.b32.xlu0 %v307, 16
    %v1466 = vpop.permute.xlu0 %1465
    %1467 = vrot.lane.b32.xlu0 %v308, 16
    %v1468 = vpop.permute.xlu0 %1467
    %1469 = vrot.lane.b32.xlu0 %v309, 16
    %v1470 = vpop.permute.xlu0 %1469
    %1471 = vrot.lane.b32.xlu0 %v310, 16
    %v1472 = vpop.permute.xlu0 %1471
    %1473 = vrot.lane.b32.xlu0 %v311, 16
    %v1474 = vpop.permute.xlu0 %1473
    %1475 = vrot.lane.b32.xlu0 %v312, 16
    %v1476 = vpop.permute.xlu0 %1475
    %1477 = vrot.lane.b32.xlu0 %v313, 16
    %v1478 = vpop.permute.xlu0 %1477
    %1479 = vrot.lane.b32.xlu0 %v314, 16
    %v1480 = vpop.permute.xlu0 %1479
    %1481 = vrot.lane.b32.xlu0 %v315, 16
    %v1482 = vpop.permute.xlu0 %1481
    %1483 = vrot.lane.b32.xlu0 %v316, 16
    %v1484 = vpop.permute.xlu0 %1483
    %1485 = vrot.lane.b32.xlu0 %v317, 16
    %v1486 = vpop.permute.xlu0 %1485
    %1487 = vrot.lane.b32.xlu0 %v318, 16
    %v1488 = vpop.permute.xlu0 %1487
    %1489 = vrot.lane.b32.xlu0 %v319, 16
    %v1490 = vpop.permute.xlu0 %1489
    %1491 = vrot.lane.b32.xlu0 %v320, 16
    %v1492 = vpop.permute.xlu0 %1491
    %1493 = vrot.lane.b32.xlu0 %v321, 16
    %v1494 = vpop.permute.xlu0 %1493
    %1495 = vrot.lane.b32.xlu0 %v322, 16
    %v1496 = vpop.permute.xlu0 %1495
    %1497 = vrot.lane.b32.xlu0 %v323, 16
    %v1498 = vpop.permute.xlu0 %1497
    %1499 = vrot.lane.b32.xlu0 %v324, 16
    %v1500 = vpop.permute.xlu0 %1499
    %1501 = vrot.lane.b32.xlu0 %v325, 16
    %v1502 = vpop.permute.xlu0 %1501
    %1503 = vrot.lane.b32.xlu0 %v326, 16
    %v1504 = vpop.permute.xlu0 %1503
    %1505 = vrot.lane.b32.xlu0 %v327, 16
    %v1506 = vpop.permute.xlu0 %1505
    %1507 = vrot.lane.b32.xlu0 %v328, 16
    %v1508 = vpop.permute.xlu0 %1507
    %1509 = vrot.lane.b32.xlu0 %v329, 16
    %v1510 = vpop.permute.xlu0 %1509
    %1511 = vrot.lane.b32.xlu0 %v330, 16
    %v1512 = vpop.permute.xlu0 %1511
    %1513 = vrot.lane.b32.xlu0 %v331, 16
    %v1514 = vpop.permute.xlu0 %1513
    %1515 = vrot.lane.b32.xlu0 %v332, 16
    %v1516 = vpop.permute.xlu0 %1515
    %1517 = vrot.lane.b32.xlu0 %v333, 16
    %v1518 = vpop.permute.xlu0 %1517
    %1519 = vrot.lane.b32.xlu0 %v334, 16
    %v1520 = vpop.permute.xlu0 %1519
    %1521 = vrot.lane.b32.xlu0 %v335, 16
    %v1522 = vpop.permute.xlu0 %1521
    %1523 = vrot.lane.b32.xlu0 %v336, 16
    %v1524 = vpop.permute.xlu0 %1523
    %1525 = vrot.lane.b32.xlu0 %v337, 16
    %v1526 = vpop.permute.xlu0 %1525
    %1527 = vrot.lane.b32.xlu0 %v338, 16
    %v1528 = vpop.permute.xlu0 %1527
    %1529 = vrot.lane.b32.xlu0 %v339, 16
    %v1530 = vpop.permute.xlu0 %1529
    %1531 = vrot.lane.b32.xlu0 %v340, 16
    %v1532 = vpop.permute.xlu0 %1531
    %1533 = vrot.lane.b32.xlu0 %v341, 16
    %v1534 = vpop.permute.xlu0 %1533
    %1535 = vrot.lane.b32.xlu0 %v342, 16
    %v1536 = vpop.permute.xlu0 %1535
    %1537 = vrot.lane.b32.xlu0 %v343, 16
    %v1538 = vpop.permute.xlu0 %1537
    %1539 = vrot.lane.b32.xlu0 %v344, 16
    %v1540 = vpop.permute.xlu0 %1539
    %1541 = vrot.lane.b32.xlu0 %v345, 16
    %v1542 = vpop.permute.xlu0 %1541
    %1543 = vrot.lane.b32.xlu0 %v346, 16
    %v1544 = vpop.permute.xlu0 %1543
    %1545 = vrot.lane.b32.xlu0 %v347, 16
    %v1546 = vpop.permute.xlu0 %1545
    %1547 = vrot.lane.b32.xlu0 %v348, 16
    %v1548 = vpop.permute.xlu0 %1547
    %1549 = vrot.lane.b32.xlu0 %v349, 16
    %v1550 = vpop.permute.xlu0 %1549
    %1551 = vrot.lane.b32.xlu0 %v350, 16
    %v1552 = vpop.permute.xlu0 %1551
    %1553 = vrot.lane.b32.xlu0 %v351, 16
    %v1554 = vpop.permute.xlu0 %1553
    %1555 = vrot.lane.b32.xlu0 %v352, 16
    %v1556 = vpop.permute.xlu0 %1555
    %1557 = vrot.lane.b32.xlu0 %v353, 16
    %v1558 = vpop.permute.xlu0 %1557
    %1559 = vrot.lane.b32.xlu0 %v354, 16
    %v1560 = vpop.permute.xlu0 %1559
    %1561 = vrot.lane.b32.xlu0 %v355, 16
    %v1562 = vpop.permute.xlu0 %1561
    %1563 = vrot.lane.b32.xlu0 %v356, 16
    %v1564 = vpop.permute.xlu0 %1563
    %1565 = vrot.lane.b32.xlu0 %v357, 16
    %v1566 = vpop.permute.xlu0 %1565
    %1567 = vrot.lane.b32.xlu0 %v358, 16
    %v1568 = vpop.permute.xlu0 %1567
    %1569 = vrot.lane.b32.xlu0 %v359, 16
    %v1570 = vpop.permute.xlu0 %1569
    %1571 = vrot.lane.b32.xlu0 %v360, 16
    %v1572 = vpop.permute.xlu0 %1571
    %1573 = vrot.lane.b32.xlu0 %v361, 16
    %v1574 = vpop.permute.xlu0 %1573
    %1575 = vrot.lane.b32.xlu0 %v362, 16
    %v1576 = vpop.permute.xlu0 %1575
    %1577 = vrot.lane.b32.xlu0 %v363, 16
    %v1578 = vpop.permute.xlu0 %1577
    %1579 = vrot.lane.b32.xlu0 %v364, 16
    %v1580 = vpop.permute.xlu0 %1579
    %1581 = vrot.lane.b32.xlu0 %v365, 16
    %v1582 = vpop.permute.xlu0 %1581
    %1711 = vrot.lane.b32.xlu0 %v366, 20
    %v1712 = vpop.permute.xlu0 %1711
    %1713 = vrot.lane.b32.xlu0 %v367, 20
    %v1714 = vpop.permute.xlu0 %1713
    %1715 = vrot.lane.b32.xlu0 %v368, 20
    %v1716 = vpop.permute.xlu0 %1715
    %1717 = vrot.lane.b32.xlu0 %v369, 20
    %v1718 = vpop.permute.xlu0 %1717
    %1719 = vrot.lane.b32.xlu0 %v370, 20
    %v1720 = vpop.permute.xlu0 %1719
    %1721 = vrot.lane.b32.xlu0 %v371, 20
    %v1722 = vpop.permute.xlu0 %1721
    %1723 = vrot.lane.b32.xlu0 %v372, 20
    %v1724 = vpop.permute.xlu0 %1723
    %1725 = vrot.lane.b32.xlu0 %v373, 20
    %v1726 = vpop.permute.xlu0 %1725
    %1727 = vrot.lane.b32.xlu0 %v374, 20
    %v1728 = vpop.permute.xlu0 %1727
    %1729 = vrot.lane.b32.xlu0 %v375, 20
    %v1730 = vpop.permute.xlu0 %1729
    %1731 = vrot.lane.b32.xlu0 %v376, 20
    %v1732 = vpop.permute.xlu0 %1731
    %1733 = vrot.lane.b32.xlu0 %v377, 20
    %v1734 = vpop.permute.xlu0 %1733
    %1735 = vrot.lane.b32.xlu0 %v378, 20
    %v1736 = vpop.permute.xlu0 %1735
    %1737 = vrot.lane.b32.xlu0 %v379, 20
    %v1738 = vpop.permute.xlu0 %1737
    %1739 = vrot.lane.b32.xlu0 %v380, 20
    %v1740 = vpop.permute.xlu0 %1739
    %1741 = vrot.lane.b32.xlu0 %v381, 20
    %v1742 = vpop.permute.xlu0 %1741
    %1743 = vrot.lane.b32.xlu0 %v382, 20
    %v1744 = vpop.permute.xlu0 %1743
    %1745 = vrot.lane.b32.xlu0 %v383, 20
    %v1746 = vpop.permute.xlu0 %1745
    %1747 = vrot.lane.b32.xlu0 %v384, 20
    %v1748 = vpop.permute.xlu0 %1747
    %1749 = vrot.lane.b32.xlu0 %v385, 20
    %v1750 = vpop.permute.xlu0 %1749
    %1751 = vrot.lane.b32.xlu0 %v386, 20
    %v1752 = vpop.permute.xlu0 %1751
    %1753 = vrot.lane.b32.xlu0 %v387, 20
    %v1754 = vpop.permute.xlu0 %1753
    %1755 = vrot.lane.b32.xlu0 %v388, 20
    %v1756 = vpop.permute.xlu0 %1755
    %1757 = vrot.lane.b32.xlu0 %v389, 20
    %v1758 = vpop.permute.xlu0 %1757
    %1759 = vrot.lane.b32.xlu0 %v390, 20
    %v1760 = vpop.permute.xlu0 %1759
    %1761 = vrot.lane.b32.xlu0 %v391, 20
    %v1762 = vpop.permute.xlu0 %1761
    %1763 = vrot.lane.b32.xlu0 %v392, 20
    %v1764 = vpop.permute.xlu0 %1763
    %1765 = vrot.lane.b32.xlu0 %v393, 20
    %v1766 = vpop.permute.xlu0 %1765
    %1767 = vrot.lane.b32.xlu0 %v394, 20
    %v1768 = vpop.permute.xlu0 %1767
    %1769 = vrot.lane.b32.xlu0 %v395, 20
    %v1770 = vpop.permute.xlu0 %1769
    %1771 = vrot.lane.b32.xlu0 %v396, 20
    %v1772 = vpop.permute.xlu0 %1771
    %1773 = vrot.lane.b32.xlu0 %v397, 20
    %v1774 = vpop.permute.xlu0 %1773
    %1775 = vrot.lane.b32.xlu0 %v398, 20
    %v1776 = vpop.permute.xlu0 %1775
    %1777 = vrot.lane.b32.xlu0 %v399, 20
    %v1778 = vpop.permute.xlu0 %1777
    %1779 = vrot.lane.b32.xlu0 %v400, 20
    %v1780 = vpop.permute.xlu0 %1779
    %1781 = vrot.lane.b32.xlu0 %v401, 20
    %v1782 = vpop.permute.xlu0 %1781
    %1783 = vrot.lane.b32.xlu0 %v402, 20
    %v1784 = vpop.permute.xlu0 %1783
    %1785 = vrot.lane.b32.xlu0 %v403, 20
    %v1786 = vpop.permute.xlu0 %1785
    %1787 = vrot.lane.b32.xlu0 %v404, 20
    %v1788 = vpop.permute.xlu0 %1787
    %1789 = vrot.lane.b32.xlu0 %v405, 20
    %v1790 = vpop.permute.xlu0 %1789
    %1791 = vrot.lane.b32.xlu0 %v406, 20
    %v1792 = vpop.permute.xlu0 %1791
    %1793 = vrot.lane.b32.xlu0 %v407, 20
    %v1794 = vpop.permute.xlu0 %1793
    %1795 = vrot.lane.b32.xlu0 %v408, 20
    %v1796 = vpop.permute.xlu0 %1795
    %1797 = vrot.lane.b32.xlu0 %v409, 20
    %v1798 = vpop.permute.xlu0 %1797
    %1799 = vrot.lane.b32.xlu0 %v410, 20
    %v1800 = vpop.permute.xlu0 %1799
    %1801 = vrot.lane.b32.xlu0 %v411, 20
    %v1802 = vpop.permute.xlu0 %1801
    %1803 = vrot.lane.b32.xlu0 %v412, 20
    %v1804 = vpop.permute.xlu0 %1803
    %1805 = vrot.lane.b32.xlu0 %v413, 20
    %v1806 = vpop.permute.xlu0 %1805
    %1807 = vrot.lane.b32.xlu0 %v414, 20
    %v1808 = vpop.permute.xlu0 %1807
    %1809 = vrot.lane.b32.xlu0 %v415, 20
    %v1810 = vpop.permute.xlu0 %1809
    %1811 = vrot.lane.b32.xlu0 %v416, 20
    %v1812 = vpop.permute.xlu0 %1811
    %1813 = vrot.lane.b32.xlu0 %v417, 20
    %v1814 = vpop.permute.xlu0 %1813
    %1815 = vrot.lane.b32.xlu0 %v418, 20
    %v1816 = vpop.permute.xlu0 %1815
    %1817 = vrot.lane.b32.xlu0 %v419, 20
    %v1818 = vpop.permute.xlu0 %1817
    %1819 = vrot.lane.b32.xlu0 %v420, 20
    %v1820 = vpop.permute.xlu0 %1819
    %1821 = vrot.lane.b32.xlu0 %v421, 20
    %v1822 = vpop.permute.xlu0 %1821
    %1823 = vrot.lane.b32.xlu0 %v422, 20
    %v1824 = vpop.permute.xlu0 %1823
    %1825 = vrot.lane.b32.xlu0 %v423, 20
    %v1826 = vpop.permute.xlu0 %1825
    %1827 = vrot.lane.b32.xlu0 %v424, 20
    %v1828 = vpop.permute.xlu0 %1827
    %1829 = vrot.lane.b32.xlu0 %v425, 20
    %v1830 = vpop.permute.xlu0 %1829
    %1831 = vrot.lane.b32.xlu0 %v426, 20
    %v1832 = vpop.permute.xlu0 %1831
    %1833 = vrot.lane.b32.xlu0 %v427, 20
    %v1834 = vpop.permute.xlu0 %1833
    %1835 = vrot.lane.b32.xlu0 %v428, 20
    %v1836 = vpop.permute.xlu0 %1835
    %1837 = vrot.lane.b32.xlu0 %v429, 20
    %v1838 = vpop.permute.xlu0 %1837
    %1967 = vrot.lane.b32.xlu0 %v431, 24
    %v1968 = vpop.permute.xlu0 %1967
    %1969 = vrot.lane.b32.xlu0 %v432, 24
    %v1970 = vpop.permute.xlu0 %1969
    %1971 = vrot.lane.b32.xlu0 %v433, 24
    %v1972 = vpop.permute.xlu0 %1971
    %1973 = vrot.lane.b32.xlu0 %v434, 24
    %v1974 = vpop.permute.xlu0 %1973
    %1975 = vrot.lane.b32.xlu0 %v435, 24
    %v1976 = vpop.permute.xlu0 %1975
    %1977 = vrot.lane.b32.xlu0 %v436, 24
    %v1978 = vpop.permute.xlu0 %1977
    %1979 = vrot.lane.b32.xlu0 %v437, 24
    %v1980 = vpop.permute.xlu0 %1979
    %1981 = vrot.lane.b32.xlu0 %v438, 24
    %v1982 = vpop.permute.xlu0 %1981
    %1983 = vrot.lane.b32.xlu0 %v439, 24
    %v1984 = vpop.permute.xlu0 %1983
    %1985 = vrot.lane.b32.xlu0 %v440, 24
    %v1986 = vpop.permute.xlu0 %1985
    %1987 = vrot.lane.b32.xlu0 %v441, 24
    %v1988 = vpop.permute.xlu0 %1987
    %1989 = vrot.lane.b32.xlu0 %v442, 24
    %v1990 = vpop.permute.xlu0 %1989
    %1991 = vrot.lane.b32.xlu0 %v443, 24
    %v1992 = vpop.permute.xlu0 %1991
    %1993 = vrot.lane.b32.xlu0 %v444, 24
    %v1994 = vpop.permute.xlu0 %1993
    %1995 = vrot.lane.b32.xlu0 %v445, 24
    %v1996 = vpop.permute.xlu0 %1995
    %1997 = vrot.lane.b32.xlu0 %v446, 24
    %v1998 = vpop.permute.xlu0 %1997
    %1999 = vrot.lane.b32.xlu0 %v447, 24
    %v2000 = vpop.permute.xlu0 %1999
    %2001 = vrot.lane.b32.xlu0 %v448, 24
    %v2002 = vpop.permute.xlu0 %2001
    %2003 = vrot.lane.b32.xlu0 %v449, 24
    %v2004 = vpop.permute.xlu0 %2003
    %2005 = vrot.lane.b32.xlu0 %v450, 24
    %v2006 = vpop.permute.xlu0 %2005
    %2007 = vrot.lane.b32.xlu0 %v451, 24
    %v2008 = vpop.permute.xlu0 %2007
    %2009 = vrot.lane.b32.xlu0 %v452, 24
    %v2010 = vpop.permute.xlu0 %2009
    %2011 = vrot.lane.b32.xlu0 %v453, 24
    %v2012 = vpop.permute.xlu0 %2011
    %2013 = vrot.lane.b32.xlu0 %v454, 24
    %v2014 = vpop.permute.xlu0 %2013
    %2015 = vrot.lane.b32.xlu0 %v455, 24
    %v2016 = vpop.permute.xlu0 %2015
    %2017 = vrot.lane.b32.xlu0 %v456, 24
    %v2018 = vpop.permute.xlu0 %2017
    %2019 = vrot.lane.b32.xlu0 %v457, 24
    %v2020 = vpop.permute.xlu0 %2019
    %2021 = vrot.lane.b32.xlu0 %v458, 24
    %v2022 = vpop.permute.xlu0 %2021
    %2023 = vrot.lane.b32.xlu0 %v459, 24
    %v2024 = vpop.permute.xlu0 %2023
    %2025 = vrot.lane.b32.xlu0 %v460, 24
    %v2026 = vpop.permute.xlu0 %2025
    %2027 = vrot.lane.b32.xlu0 %v461, 24
    %v2028 = vpop.permute.xlu0 %2027
    %2029 = vrot.lane.b32.xlu0 %v462, 24
    %v2030 = vpop.permute.xlu0 %2029
    %2031 = vrot.lane.b32.xlu0 %v463, 24
    %v2032 = vpop.permute.xlu0 %2031
    %2033 = vrot.lane.b32.xlu0 %v464, 24
    %v2034 = vpop.permute.xlu0 %2033
    %2035 = vrot.lane.b32.xlu0 %v465, 24
    %v2036 = vpop.permute.xlu0 %2035
    %2037 = vrot.lane.b32.xlu0 %v466, 24
    %v2038 = vpop.permute.xlu0 %2037
    %2039 = vrot.lane.b32.xlu0 %v467, 24
    %v2040 = vpop.permute.xlu0 %2039
    %2041 = vrot.lane.b32.xlu0 %v468, 24
    %v2042 = vpop.permute.xlu0 %2041
    %2043 = vrot.lane.b32.xlu0 %v469, 24
    %v2044 = vpop.permute.xlu0 %2043
    %2045 = vrot.lane.b32.xlu0 %v470, 24
    %v2046 = vpop.permute.xlu0 %2045
    %2047 = vrot.lane.b32.xlu0 %v471, 24
    %v2048 = vpop.permute.xlu0 %2047
    %2049 = vrot.lane.b32.xlu0 %v472, 24
    %v2050 = vpop.permute.xlu0 %2049
    %2051 = vrot.lane.b32.xlu0 %v473, 24
    %v2052 = vpop.permute.xlu0 %2051
    %2053 = vrot.lane.b32.xlu0 %v474, 24
    %v2054 = vpop.permute.xlu0 %2053
    %2055 = vrot.lane.b32.xlu0 %v475, 24
    %v2056 = vpop.permute.xlu0 %2055
    %2057 = vrot.lane.b32.xlu0 %v476, 24
    %v2058 = vpop.permute.xlu0 %2057
    %2059 = vrot.lane.b32.xlu0 %v477, 24
    %v2060 = vpop.permute.xlu0 %2059
    %2061 = vrot.lane.b32.xlu0 %v478, 24
    %v2062 = vpop.permute.xlu0 %2061
    %2063 = vrot.lane.b32.xlu0 %v479, 24
    %v2064 = vpop.permute.xlu0 %2063
    %2065 = vrot.lane.b32.xlu0 %v480, 24
    %v2066 = vpop.permute.xlu0 %2065
    %2067 = vrot.lane.b32.xlu0 %v481, 24
    %v2068 = vpop.permute.xlu0 %2067
    %2069 = vrot.lane.b32.xlu0 %v482, 24
    %v2070 = vpop.permute.xlu0 %2069
    %2071 = vrot.lane.b32.xlu0 %v483, 24
    %v2072 = vpop.permute.xlu0 %2071
    %2073 = vrot.lane.b32.xlu0 %v484, 24
    %v2074 = vpop.permute.xlu0 %2073
    %2075 = vrot.lane.b32.xlu0 %v485, 24
    %v2076 = vpop.permute.xlu0 %2075
    %2077 = vrot.lane.b32.xlu0 %v486, 24
    %v2078 = vpop.permute.xlu0 %2077
    %2079 = vrot.lane.b32.xlu0 %v487, 24
    %v2080 = vpop.permute.xlu0 %2079
    %2081 = vrot.lane.b32.xlu0 %v488, 24
    %v2082 = vpop.permute.xlu0 %2081
    %2083 = vrot.lane.b32.xlu0 %v489, 24
    %v2084 = vpop.permute.xlu0 %2083
    %2085 = vrot.lane.b32.xlu0 %v490, 24
    %v2086 = vpop.permute.xlu0 %2085
    %2087 = vrot.lane.b32.xlu0 %v491, 24
    %v2088 = vpop.permute.xlu0 %2087
    %2089 = vrot.lane.b32.xlu0 %v492, 24
    %v2090 = vpop.permute.xlu0 %2089
    %2091 = vrot.lane.b32.xlu0 %v493, 24
    %v2092 = vpop.permute.xlu0 %2091
    %2093 = vrot.lane.b32.xlu0 %v494, 24
    %v2094 = vpop.permute.xlu0 %2093
    %2223 = vrot.lane.b32.xlu0 %v495, 28
    %v2224 = vpop.permute.xlu0 %2223
    %2225 = vrot.lane.b32.xlu0 %v496, 28
    %v2226 = vpop.permute.xlu0 %2225
    %2227 = vrot.lane.b32.xlu0 %v497, 28
    %v2228 = vpop.permute.xlu0 %2227
    %2229 = vrot.lane.b32.xlu0 %v498, 28
    %v2230 = vpop.permute.xlu0 %2229
    %2231 = vrot.lane.b32.xlu0 %v499, 28
    %v2232 = vpop.permute.xlu0 %2231
    %2233 = vrot.lane.b32.xlu0 %v500, 28
    %v2234 = vpop.permute.xlu0 %2233
    %2235 = vrot.lane.b32.xlu0 %v501, 28
    %v2236 = vpop.permute.xlu0 %2235
    %2237 = vrot.lane.b32.xlu0 %v502, 28
    %v2238 = vpop.permute.xlu0 %2237
    %2239 = vrot.lane.b32.xlu0 %v503, 28
    %v2240 = vpop.permute.xlu0 %2239
    %2241 = vrot.lane.b32.xlu0 %v504, 28
    %v2242 = vpop.permute.xlu0 %2241
    %2243 = vrot.lane.b32.xlu0 %v505, 28
    %v2244 = vpop.permute.xlu0 %2243
    %2245 = vrot.lane.b32.xlu0 %v506, 28
    %v2246 = vpop.permute.xlu0 %2245
    %2247 = vrot.lane.b32.xlu0 %v507, 28
    %v2248 = vpop.permute.xlu0 %2247
    %2249 = vrot.lane.b32.xlu0 %v508, 28
    %v2250 = vpop.permute.xlu0 %2249
    %2251 = vrot.lane.b32.xlu0 %v509, 28
    %v2252 = vpop.permute.xlu0 %2251
    %2253 = vrot.lane.b32.xlu0 %v510, 28
    %v2254 = vpop.permute.xlu0 %2253
    %2255 = vrot.lane.b32.xlu0 %v511, 28
    %v2256 = vpop.permute.xlu0 %2255
    %2257 = vrot.lane.b32.xlu0 %v512, 28
    %v2258 = vpop.permute.xlu0 %2257
    %2259 = vrot.lane.b32.xlu0 %v513, 28
    %v2260 = vpop.permute.xlu0 %2259
    %2261 = vrot.lane.b32.xlu0 %v514, 28
    %v2262 = vpop.permute.xlu0 %2261
    %2263 = vrot.lane.b32.xlu0 %v515, 28
    %v2264 = vpop.permute.xlu0 %2263
    %2265 = vrot.lane.b32.xlu0 %v516, 28
    %v2266 = vpop.permute.xlu0 %2265
    %2267 = vrot.lane.b32.xlu0 %v517, 28
    %v2268 = vpop.permute.xlu0 %2267
    %2269 = vrot.lane.b32.xlu0 %v518, 28
    %v2270 = vpop.permute.xlu0 %2269
    %2271 = vrot.lane.b32.xlu0 %v519, 28
    %v2272 = vpop.permute.xlu0 %2271
    %2273 = vrot.lane.b32.xlu0 %v520, 28
    %v2274 = vpop.permute.xlu0 %2273
    %2275 = vrot.lane.b32.xlu0 %v521, 28
    %v2276 = vpop.permute.xlu0 %2275
    %2277 = vrot.lane.b32.xlu0 %v522, 28
    %v2278 = vpop.permute.xlu0 %2277
    %2279 = vrot.lane.b32.xlu0 %v523, 28
    %v2280 = vpop.permute.xlu0 %2279
    %2281 = vrot.lane.b32.xlu0 %v524, 28
    %v2282 = vpop.permute.xlu0 %2281
    %2283 = vrot.lane.b32.xlu0 %v525, 28
    %v2284 = vpop.permute.xlu0 %2283
    %2285 = vrot.lane.b32.xlu0 %v526, 28
    %v2286 = vpop.permute.xlu0 %2285
    %2287 = vrot.lane.b32.xlu0 %v527, 28
    %v2288 = vpop.permute.xlu0 %2287
    %2289 = vrot.lane.b32.xlu0 %v528, 28
    %v2290 = vpop.permute.xlu0 %2289
    %2291 = vrot.lane.b32.xlu0 %v529, 28
    %v2292 = vpop.permute.xlu0 %2291
    %2293 = vrot.lane.b32.xlu0 %v530, 28
    %v2294 = vpop.permute.xlu0 %2293
    %2295 = vrot.lane.b32.xlu0 %v531, 28
    %v2296 = vpop.permute.xlu0 %2295
    %2297 = vrot.lane.b32.xlu0 %v532, 28
    %v2298 = vpop.permute.xlu0 %2297
    %2299 = vrot.lane.b32.xlu0 %v533, 28
    %v2300 = vpop.permute.xlu0 %2299
    %2301 = vrot.lane.b32.xlu0 %v534, 28
    %v2302 = vpop.permute.xlu0 %2301
    %2303 = vrot.lane.b32.xlu0 %v535, 28
    %v2304 = vpop.permute.xlu0 %2303
    %2305 = vrot.lane.b32.xlu0 %v536, 28
    %v2306 = vpop.permute.xlu0 %2305
    %2307 = vrot.lane.b32.xlu0 %v537, 28
    %v2308 = vpop.permute.xlu0 %2307
    %2309 = vrot.lane.b32.xlu0 %v538, 28
    %v2310 = vpop.permute.xlu0 %2309
    %2311 = vrot.lane.b32.xlu0 %v539, 28
    %v2312 = vpop.permute.xlu0 %2311
    %2313 = vrot.lane.b32.xlu0 %v540, 28
    %v2314 = vpop.permute.xlu0 %2313
    %2315 = vrot.lane.b32.xlu0 %v541, 28
    %v2316 = vpop.permute.xlu0 %2315
    %2317 = vrot.lane.b32.xlu0 %v542, 28
    %v2318 = vpop.permute.xlu0 %2317
    %2319 = vrot.lane.b32.xlu0 %v543, 28
    %v2320 = vpop.permute.xlu0 %2319
    %2321 = vrot.lane.b32.xlu0 %v544, 28
    %v2322 = vpop.permute.xlu0 %2321
    %2323 = vrot.lane.b32.xlu0 %v545, 28
    %v2324 = vpop.permute.xlu0 %2323
    %2325 = vrot.lane.b32.xlu0 %v546, 28
    %v2326 = vpop.permute.xlu0 %2325
    %2327 = vrot.lane.b32.xlu0 %v547, 28
    %v2328 = vpop.permute.xlu0 %2327
    %2329 = vrot.lane.b32.xlu0 %v548, 28
    %v2330 = vpop.permute.xlu0 %2329
    %2331 = vrot.lane.b32.xlu0 %v549, 28
    %v2332 = vpop.permute.xlu0 %2331
    %2333 = vrot.lane.b32.xlu0 %v550, 28
    %v2334 = vpop.permute.xlu0 %2333
    %2335 = vrot.lane.b32.xlu0 %v551, 28
    %v2336 = vpop.permute.xlu0 %2335
    %2337 = vrot.lane.b32.xlu0 %v552, 28
    %v2338 = vpop.permute.xlu0 %2337
    %2339 = vrot.lane.b32.xlu0 %v553, 28
    %v2340 = vpop.permute.xlu0 %2339
    %2341 = vrot.lane.b32.xlu0 %v554, 28
    %v2342 = vpop.permute.xlu0 %2341
    %2343 = vrot.lane.b32.xlu0 %v555, 28
    %v2344 = vpop.permute.xlu0 %2343
    %2345 = vrot.lane.b32.xlu0 %v556, 28
    %v2346 = vpop.permute.xlu0 %2345
    %2347 = vrot.lane.b32.xlu0 %v557, 28
    %v2348 = vpop.permute.xlu0 %2347
    %2349 = vrot.lane.b32.xlu0 %v558, 28
    %v2350 = vpop.permute.xlu0 %2349
    %2479 = vrot.lane.b32.xlu0 %v559, 32
    %v2480 = vpop.permute.xlu0 %2479
    %2481 = vrot.lane.b32.xlu0 %v560, 32
    %v2482 = vpop.permute.xlu0 %2481
    %2483 = vrot.lane.b32.xlu0 %v561, 32
    %v2484 = vpop.permute.xlu0 %2483
    %2485 = vrot.lane.b32.xlu0 %v562, 32
    %v2486 = vpop.permute.xlu0 %2485
    %2487 = vrot.lane.b32.xlu0 %v563, 32
    %v2488 = vpop.permute.xlu0 %2487
    %2489 = vrot.lane.b32.xlu0 %v564, 32
    %v2490 = vpop.permute.xlu0 %2489
    %2491 = vrot.lane.b32.xlu0 %v565, 32
    %v2492 = vpop.permute.xlu0 %2491
    %2493 = vrot.lane.b32.xlu0 %v566, 32
    %v2494 = vpop.permute.xlu0 %2493
    %2495 = vrot.lane.b32.xlu0 %v567, 32
    %v2496 = vpop.permute.xlu0 %2495
    %2497 = vrot.lane.b32.xlu0 %v568, 32
    %v2498 = vpop.permute.xlu0 %2497
    %2499 = vrot.lane.b32.xlu0 %v569, 32
    %v2500 = vpop.permute.xlu0 %2499
    %2501 = vrot.lane.b32.xlu0 %v570, 32
    %v2502 = vpop.permute.xlu0 %2501
    %2503 = vrot.lane.b32.xlu0 %v571, 32
    %v2504 = vpop.permute.xlu0 %2503
    %2505 = vrot.lane.b32.xlu0 %v572, 32
    %v2506 = vpop.permute.xlu0 %2505
    %2507 = vrot.lane.b32.xlu0 %v573, 32
    %v2508 = vpop.permute.xlu0 %2507
    %2509 = vrot.lane.b32.xlu0 %v574, 32
    %v2510 = vpop.permute.xlu0 %2509
    %2511 = vrot.lane.b32.xlu0 %v575, 32
    %v2512 = vpop.permute.xlu0 %2511
    %2513 = vrot.lane.b32.xlu0 %v576, 32
    %v2514 = vpop.permute.xlu0 %2513
    %2515 = vrot.lane.b32.xlu0 %v577, 32
    %v2516 = vpop.permute.xlu0 %2515
    %2517 = vrot.lane.b32.xlu0 %v578, 32
    %v2518 = vpop.permute.xlu0 %2517
    %2519 = vrot.lane.b32.xlu0 %v579, 32
    %v2520 = vpop.permute.xlu0 %2519
    %2521 = vrot.lane.b32.xlu0 %v580, 32
    %v2522 = vpop.permute.xlu0 %2521
    %2523 = vrot.lane.b32.xlu0 %v581, 32
    %v2524 = vpop.permute.xlu0 %2523
    %2525 = vrot.lane.b32.xlu0 %v582, 32
    %v2526 = vpop.permute.xlu0 %2525
    %2527 = vrot.lane.b32.xlu0 %v583, 32
    %v2528 = vpop.permute.xlu0 %2527
    %2529 = vrot.lane.b32.xlu0 %v584, 32
    %v2530 = vpop.permute.xlu0 %2529
    %2531 = vrot.lane.b32.xlu0 %v585, 32
    %v2532 = vpop.permute.xlu0 %2531
    %2533 = vrot.lane.b32.xlu0 %v586, 32
    %v2534 = vpop.permute.xlu0 %2533
    %2535 = vrot.lane.b32.xlu0 %v587, 32
    %v2536 = vpop.permute.xlu0 %2535
    %2537 = vrot.lane.b32.xlu0 %v588, 32
    %v2538 = vpop.permute.xlu0 %2537
    %2539 = vrot.lane.b32.xlu0 %v589, 32
    %v2540 = vpop.permute.xlu0 %2539
    %2541 = vrot.lane.b32.xlu0 %v590, 32
    %v2542 = vpop.permute.xlu0 %2541
    %2543 = vrot.lane.b32.xlu0 %v591, 32
    %v2544 = vpop.permute.xlu0 %2543
    %2545 = vrot.lane.b32.xlu0 %v592, 32
    %v2546 = vpop.permute.xlu0 %2545
    %2547 = vrot.lane.b32.xlu0 %v593, 32
    %v2548 = vpop.permute.xlu0 %2547
    %2549 = vrot.lane.b32.xlu0 %v594, 32
    %v2550 = vpop.permute.xlu0 %2549
    %2551 = vrot.lane.b32.xlu0 %v595, 32
    %v2552 = vpop.permute.xlu0 %2551
    %2553 = vrot.lane.b32.xlu0 %v596, 32
    %v2554 = vpop.permute.xlu0 %2553
    %2555 = vrot.lane.b32.xlu0 %v597, 32
    %v2556 = vpop.permute.xlu0 %2555
    %2557 = vrot.lane.b32.xlu0 %v598, 32
    %v2558 = vpop.permute.xlu0 %2557
    %2559 = vrot.lane.b32.xlu0 %v599, 32
    %v2560 = vpop.permute.xlu0 %2559
    %2561 = vrot.lane.b32.xlu0 %v600, 32
    %v2562 = vpop.permute.xlu0 %2561
    %2563 = vrot.lane.b32.xlu0 %v601, 32
    %v2564 = vpop.permute.xlu0 %2563
    %2565 = vrot.lane.b32.xlu0 %v602, 32
    %v2566 = vpop.permute.xlu0 %2565
    %2567 = vrot.lane.b32.xlu0 %v603, 32
    %v2568 = vpop.permute.xlu0 %2567
    %2569 = vrot.lane.b32.xlu0 %v604, 32
    %v2570 = vpop.permute.xlu0 %2569
    %2571 = vrot.lane.b32.xlu0 %v605, 32
    %v2572 = vpop.permute.xlu0 %2571
    %2573 = vrot.lane.b32.xlu0 %v606, 32
    %v2574 = vpop.permute.xlu0 %2573
    %2575 = vrot.lane.b32.xlu0 %v607, 32
    %v2576 = vpop.permute.xlu0 %2575
    %2577 = vrot.lane.b32.xlu0 %v608, 32
    %v2578 = vpop.permute.xlu0 %2577
    %2579 = vrot.lane.b32.xlu0 %v609, 32
    %v2580 = vpop.permute.xlu0 %2579
    %2581 = vrot.lane.b32.xlu0 %v610, 32
    %v2582 = vpop.permute.xlu0 %2581
    %2583 = vrot.lane.b32.xlu0 %v611, 32
    %v2584 = vpop.permute.xlu0 %2583
    %2585 = vrot.lane.b32.xlu0 %v612, 32
    %v2586 = vpop.permute.xlu0 %2585
    %2587 = vrot.lane.b32.xlu0 %v613, 32
    %v2588 = vpop.permute.xlu0 %2587
    %2589 = vrot.lane.b32.xlu0 %v614, 32
    %v2590 = vpop.permute.xlu0 %2589
    %2591 = vrot.lane.b32.xlu0 %v615, 32
    %v2592 = vpop.permute.xlu0 %2591
    %2593 = vrot.lane.b32.xlu0 %v616, 32
    %v2594 = vpop.permute.xlu0 %2593
    %2595 = vrot.lane.b32.xlu0 %v617, 32
    %v2596 = vpop.permute.xlu0 %2595
    %2597 = vrot.lane.b32.xlu0 %v618, 32
    %v2598 = vpop.permute.xlu0 %2597
    %2599 = vrot.lane.b32.xlu0 %v619, 32
    %v2600 = vpop.permute.xlu0 %2599
    %2601 = vrot.lane.b32.xlu0 %v620, 32
    %v2602 = vpop.permute.xlu0 %2601
    %2603 = vrot.lane.b32.xlu0 %v621, 32
    %v2604 = vpop.permute.xlu0 %2603
    %2605 = vrot.lane.b32.xlu0 %v622, 32
    %v2606 = vpop.permute.xlu0 %2605
    %vm2671 = vcmask 31744
    %v2672 = vsel %vm2671, %v45, %v688
    %v2673 = vsel %vm2671, %v46, %v690
    %v2674 = vsel %vm2671, %v47, %v692
    %v2675 = vsel %vm2671, %v48, %v694
    %v2676 = vsel %vm2671, %v49, %v696
    %v2677 = vsel %vm2671, %v50, %v698
    %v2678 = vsel %vm2671, %v51, %v700
    %v2679 = vsel %vm2671, %v52, %v702
    %v2680 = vsel %vm2671, %v53, %v704
    %v2681 = vsel %vm2671, %v54, %v706
    %v2682 = vsel %vm2671, %v55, %v708
    %v2683 = vsel %vm2671, %v56, %v710
    %v2684 = vsel %vm2671, %v57, %v712
    %v2685 = vsel %vm2671, %v58, %v714
    %v2686 = vsel %vm2671, %v59, %v716
    %v2687 = vsel %vm2671, %v60, %v718
    %v2688 = vsel %vm2671, %v61, %v720
    %v2689 = vsel %vm2671, %v62, %v722
    %v2690 = vsel %vm2671, %v63, %v724
    %v2691 = vsel %vm2671, %v64, %v726
    %v2692 = vsel %vm2671, %v65, %v728
    %v2693 = vsel %vm2671, %v66, %v730
    %v2694 = vsel %vm2671, %v67, %v732
    %v2695 = vsel %vm2671, %v68, %v734
    %v2696 = vsel %vm2671, %v69, %v736
    %v2697 = vsel %vm2671, %v70, %v738
    %v2698 = vsel %vm2671, %v71, %v740
    %v2699 = vsel %vm2671, %v72, %v742
    %v2700 = vsel %vm2671, %v73, %v744
    %v2701 = vsel %vm2671, %v74, %v746
    %v2702 = vsel %vm2671, %v75, %v748
    %v2703 = vsel %vm2671, %v76, %v750
    %v2704 = vsel %vm2671, %v77, %v752
    %v2705 = vsel %vm2671, %v78, %v754
    %v2706 = vsel %vm2671, %v79, %v756
    %v2707 = vsel %vm2671, %v80, %v758
    %v2708 = vsel %vm2671, %v81, %v760
    %v2709 = vsel %vm2671, %v82, %v762
    %v2710 = vsel %vm2671, %v83, %v764
    %v2711 = vsel %vm2671, %v84, %v766
    %v2712 = vsel %vm2671, %v85, %v768
    %v2713 = vsel %vm2671, %v86, %v770
    %v2714 = vsel %vm2671, %v87, %v772
    %v2715 = vsel %vm2671, %v88, %v774
    %v2716 = vsel %vm2671, %v89, %v776
    %v2717 = vsel %vm2671, %v90, %v778
    %v2718 = vsel %vm2671, %v91, %v780
    %v2719 = vsel %vm2671, %v92, %v782
    %v2720 = vsel %vm2671, %v93, %v784
    %v2721 = vsel %vm2671, %v94, %v786
    %v2722 = vsel %vm2671, %v95, %v788
    %v2723 = vsel %vm2671, %v96, %v790
    %v2724 = vsel %vm2671, %v97, %v792
    %v2725 = vsel %vm2671, %v98, %v794
    %v2726 = vsel %vm2671, %v99, %v796
    %v2727 = vsel %vm2671, %v100, %v798
    %v2728 = vsel %vm2671, %v101, %v800
    %v2729 = vsel %vm2671, %v102, %v802
    %v2730 = vsel %vm2671, %v103, %v804
    %v2731 = vsel %vm2671, %v104, %v806
    %v2732 = vsel %vm2671, %v105, %v808
    %v2733 = vsel %vm2671, %v106, %v810
    %v2734 = vsel %vm2671, %v107, %v812
    %v2735 = vsel %vm2671, %v108, %v814
    %vm2736 = vcmask 64512
    %v2737 = vsel %vm2736, %v2672, %v944
    %v2738 = vsel %vm2736, %v2673, %v946
    %v2739 = vsel %vm2736, %v2674, %v948
    %v2740 = vsel %vm2736, %v2675, %v950
    %v2741 = vsel %vm2736, %v2676, %v952
    %v2742 = vsel %vm2736, %v2677, %v954
    %v2743 = vsel %vm2736, %v2678, %v956
    %v2744 = vsel %vm2736, %v2679, %v958
    %v2745 = vsel %vm2736, %v2680, %v960
    %v2746 = vsel %vm2736, %v2681, %v962
    %v2747 = vsel %vm2736, %v2682, %v964
    %v2748 = vsel %vm2736, %v2683, %v966
    %v2749 = vsel %vm2736, %v2684, %v968
    %v2750 = vsel %vm2736, %v2685, %v970
    %v2751 = vsel %vm2736, %v2686, %v972
    %v2752 = vsel %vm2736, %v2687, %v974
    %v2753 = vsel %vm2736, %v2688, %v976
    %v2754 = vsel %vm2736, %v2689, %v978
    %v2755 = vsel %vm2736, %v2690, %v980
    %v2756 = vsel %vm2736, %v2691, %v982
    %v2757 = vsel %vm2736, %v2692, %v984
    %v2758 = vsel %vm2736, %v2693, %v986
    %v2759 = vsel %vm2736, %v2694, %v988
    %v2760 = vsel %vm2736, %v2695, %v990
    %v2761 = vsel %vm2736, %v2696, %v992
    %v2762 = vsel %vm2736, %v2697, %v994
    %v2763 = vsel %vm2736, %v2698, %v996
    %v2764 = vsel %vm2736, %v2699, %v998
    %v2765 = vsel %vm2736, %v2700, %v1000
    %v2766 = vsel %vm2736, %v2701, %v1002
    %v2767 = vsel %vm2736, %v2702, %v1004
    %v2768 = vsel %vm2736, %v2703, %v1006
    %v2769 = vsel %vm2736, %v2704, %v1008
    %v2770 = vsel %vm2736, %v2705, %v1010
    %v2771 = vsel %vm2736, %v2706, %v1012
    %v2772 = vsel %vm2736, %v2707, %v1014
    %v2773 = vsel %vm2736, %v2708, %v1016
    %v2774 = vsel %vm2736, %v2709, %v1018
    %v2775 = vsel %vm2736, %v2710, %v1020
    %v2776 = vsel %vm2736, %v2711, %v1022
    %v2777 = vsel %vm2736, %v2712, %v1024
    %v2778 = vsel %vm2736, %v2713, %v1026
    %v2779 = vsel %vm2736, %v2714, %v1028
    %v2780 = vsel %vm2736, %v2715, %v1030
    %v2781 = vsel %vm2736, %v2716, %v1032
    %v2782 = vsel %vm2736, %v2717, %v1034
    %v2783 = vsel %vm2736, %v2718, %v1036
    %v2784 = vsel %vm2736, %v2719, %v1038
    %v2785 = vsel %vm2736, %v2720, %v1040
    %v2786 = vsel %vm2736, %v2721, %v1042
    %v2787 = vsel %vm2736, %v2722, %v1044
    %v2788 = vsel %vm2736, %v2723, %v1046
    %v2789 = vsel %vm2736, %v2724, %v1048
    %v2790 = vsel %vm2736, %v2725, %v1050
    %v2791 = vsel %vm2736, %v2726, %v1052
    %v2792 = vsel %vm2736, %v2727, %v1054
    %v2793 = vsel %vm2736, %v2728, %v1056
    %v2794 = vsel %vm2736, %v2729, %v1058
    %v2795 = vsel %vm2736, %v2730, %v1060
    %v2796 = vsel %vm2736, %v2731, %v1062
    %v2797 = vsel %vm2736, %v2732, %v1064
    %v2798 = vsel %vm2736, %v2733, %v1066
    %v2799 = vsel %vm2736, %v2734, %v1068
    %v2800 = vsel %vm2736, %v2735, %v1070
    %vm2801 = vcmask 97280
    %v2802 = vsel %vm2801, %v2737, %v1200
    %v2803 = vsel %vm2801, %v2738, %v1202
    %v2804 = vsel %vm2801, %v2739, %v1204
    %v2805 = vsel %vm2801, %v2740, %v1206
    %v2806 = vsel %vm2801, %v2741, %v1208
    %v2807 = vsel %vm2801, %v2742, %v1210
    %v2808 = vsel %vm2801, %v2743, %v1212
    %v2809 = vsel %vm2801, %v2744, %v1214
    %v2810 = vsel %vm2801, %v2745, %v1216
    %v2811 = vsel %vm2801, %v2746, %v1218
    %v2812 = vsel %vm2801, %v2747, %v1220
    %v2813 = vsel %vm2801, %v2748, %v1222
    %v2814 = vsel %vm2801, %v2749, %v1224
    %v2815 = vsel %vm2801, %v2750, %v1226
    %v2816 = vsel %vm2801, %v2751, %v1228
    %v2817 = vsel %vm2801, %v2752, %v1230
    %v2818 = vsel %vm2801, %v2753, %v1232
    %v2819 = vsel %vm2801, %v2754, %v1234
    %v2820 = vsel %vm2801, %v2755, %v1236
    %v2821 = vsel %vm2801, %v2756, %v1238
    %v2822 = vsel %vm2801, %v2757, %v1240
    %v2823 = vsel %vm2801, %v2758, %v1242
    %v2824 = vsel %vm2801, %v2759, %v1244
    %v2825 = vsel %vm2801, %v2760, %v1246
    %v2826 = vsel %vm2801, %v2761, %v1248
    %v2827 = vsel %vm2801, %v2762, %v1250
    %v2828 = vsel %vm2801, %v2763, %v1252
    %v2829 = vsel %vm2801, %v2764, %v1254
    %v2830 = vsel %vm2801, %v2765, %v1256
    %v2831 = vsel %vm2801, %v2766, %v1258
    %v2832 = vsel %vm2801, %v2767, %v1260
    %v2833 = vsel %vm2801, %v2768, %v1262
    %v2834 = vsel %vm2801, %v2769, %v1264
    %v2835 = vsel %vm2801, %v2770, %v1266
    %v2836 = vsel %vm2801, %v2771, %v1268
    %v2837 = vsel %vm2801, %v2772, %v1270
    %v2838 = vsel %vm2801, %v2773, %v1272
    %v2839 = vsel %vm2801, %v2774, %v1274
    %v2840 = vsel %vm2801, %v2775, %v1276
    %v2841 = vsel %vm2801, %v2776, %v1278
    %v2842 = vsel %vm2801, %v2777, %v1280
    %v2843 = vsel %vm2801, %v2778, %v1282
    %v2844 = vsel %vm2801, %v2779, %v1284
    %v2845 = vsel %vm2801, %v2780, %v1286
    %v2846 = vsel %vm2801, %v2781, %v1288
    %v2847 = vsel %vm2801, %v2782, %v1290
    %v2848 = vsel %vm2801, %v2783, %v1292
    %v2849 = vsel %vm2801, %v2784, %v1294
    %v2850 = vsel %vm2801, %v2785, %v1296
    %v2851 = vsel %vm2801, %v2786, %v1298
    %v2852 = vsel %vm2801, %v2787, %v1300
    %v2853 = vsel %vm2801, %v2788, %v1302
    %v2854 = vsel %vm2801, %v2789, %v1304
    %v2855 = vsel %vm2801, %v2790, %v1306
    %v2856 = vsel %vm2801, %v2791, %v1308
    %v2857 = vsel %vm2801, %v2792, %v1310
    %v2858 = vsel %vm2801, %v2793, %v1312
    %v2859 = vsel %vm2801, %v2794, %v1314
    %v2860 = vsel %vm2801, %v2795, %v1316
    %v2861 = vsel %vm2801, %v2796, %v1318
    %v2862 = vsel %vm2801, %v2797, %v1320
    %v2863 = vsel %vm2801, %v2798, %v1322
    %v2864 = vsel %vm2801, %v2799, %v1324
    %v2865 = vsel %vm2801, %v2800, %v1326
    %vm2866 = vcmask 130048
    %v2867 = vsel %vm2866, %v2802, %v1456
    %v2868 = vsel %vm2866, %v2803, %v1458
    %v2869 = vsel %vm2866, %v2804, %v1460
    %v2870 = vsel %vm2866, %v2805, %v1462
    %v2871 = vsel %vm2866, %v2806, %v1464
    %v2872 = vsel %vm2866, %v2807, %v1466
    %v2873 = vsel %vm2866, %v2808, %v1468
    %v2874 = vsel %vm2866, %v2809, %v1470
    %v2875 = vsel %vm2866, %v2810, %v1472
    %v2876 = vsel %vm2866, %v2811, %v1474
    %v2877 = vsel %vm2866, %v2812, %v1476
    %v2878 = vsel %vm2866, %v2813, %v1478
    %v2879 = vsel %vm2866, %v2814, %v1480
    %v2880 = vsel %vm2866, %v2815, %v1482
    %v2881 = vsel %vm2866, %v2816, %v1484
    %v2882 = vsel %vm2866, %v2817, %v1486
    %v2883 = vsel %vm2866, %v2818, %v1488
    %v2884 = vsel %vm2866, %v2819, %v1490
    %v2885 = vsel %vm2866, %v2820, %v1492
    %v2886 = vsel %vm2866, %v2821, %v1494
    %v2887 = vsel %vm2866, %v2822, %v1496
    %v2888 = vsel %vm2866, %v2823, %v1498
    %v2889 = vsel %vm2866, %v2824, %v1500
    %v2890 = vsel %vm2866, %v2825, %v1502
    %v2891 = vsel %vm2866, %v2826, %v1504
    %v2892 = vsel %vm2866, %v2827, %v1506
    %v2893 = vsel %vm2866, %v2828, %v1508
    %v2894 = vsel %vm2866, %v2829, %v1510
    %v2895 = vsel %vm2866, %v2830, %v1512
    %v2896 = vsel %vm2866, %v2831, %v1514
    %v2897 = vsel %vm2866, %v2832, %v1516
    %v2898 = vsel %vm2866, %v2833, %v1518
    %v2899 = vsel %vm2866, %v2834, %v1520
    %v2900 = vsel %vm2866, %v2835, %v1522
    %v2901 = vsel %vm2866, %v2836, %v1524
    %v2902 = vsel %vm2866, %v2837, %v1526
    %v2903 = vsel %vm2866, %v2838, %v1528
    %v2904 = vsel %vm2866, %v2839, %v1530
    %v2905 = vsel %vm2866, %v2840, %v1532
    %v2906 = vsel %vm2866, %v2841, %v1534
    %v2907 = vsel %vm2866, %v2842, %v1536
    %v2908 = vsel %vm2866, %v2843, %v1538
    %v2909 = vsel %vm2866, %v2844, %v1540
    %v2910 = vsel %vm2866, %v2845, %v1542
    %v2911 = vsel %vm2866, %v2846, %v1544
    %v2912 = vsel %vm2866, %v2847, %v1546
    %v2913 = vsel %vm2866, %v2848, %v1548
    %v2914 = vsel %vm2866, %v2849, %v1550
    %v2915 = vsel %vm2866, %v2850, %v1552
    %v2916 = vsel %vm2866, %v2851, %v1554
    %v2917 = vsel %vm2866, %v2852, %v1556
    %v2918 = vsel %vm2866, %v2853, %v1558
    %v2919 = vsel %vm2866, %v2854, %v1560
    %v2920 = vsel %vm2866, %v2855, %v1562
    %v2921 = vsel %vm2866, %v2856, %v1564
    %v2922 = vsel %vm2866, %v2857, %v1566
    %v2923 = vsel %vm2866, %v2858, %v1568
    %v2924 = vsel %vm2866, %v2859, %v1570
    %v2925 = vsel %vm2866, %v2860, %v1572
    %v2926 = vsel %vm2866, %v2861, %v1574
    %v2927 = vsel %vm2866, %v2862, %v1576
    %v2928 = vsel %vm2866, %v2863, %v1578
    %v2929 = vsel %vm2866, %v2864, %v1580
    %v2930 = vsel %vm2866, %v2865, %v1582
    %vm2931 = vcmask 162816
    %v2932 = vsel %vm2931, %v2867, %v1712
    %v2933 = vsel %vm2931, %v2868, %v1714
    %v2934 = vsel %vm2931, %v2869, %v1716
    %v2935 = vsel %vm2931, %v2870, %v1718
    %v2936 = vsel %vm2931, %v2871, %v1720
    %v2937 = vsel %vm2931, %v2872, %v1722
    %v2938 = vsel %vm2931, %v2873, %v1724
    %v2939 = vsel %vm2931, %v2874, %v1726
    %v2940 = vsel %vm2931, %v2875, %v1728
    %v2941 = vsel %vm2931, %v2876, %v1730
    %v2942 = vsel %vm2931, %v2877, %v1732
    %v2943 = vsel %vm2931, %v2878, %v1734
    %v2944 = vsel %vm2931, %v2879, %v1736
    %v2945 = vsel %vm2931, %v2880, %v1738
    %v2946 = vsel %vm2931, %v2881, %v1740
    %v2947 = vsel %vm2931, %v2882, %v1742
    %v2948 = vsel %vm2931, %v2883, %v1744
    %v2949 = vsel %vm2931, %v2884, %v1746
    %v2950 = vsel %vm2931, %v2885, %v1748
    %v2951 = vsel %vm2931, %v2886, %v1750
    %v2952 = vsel %vm2931, %v2887, %v1752
    %v2953 = vsel %vm2931, %v2888, %v1754
    %v2954 = vsel %vm2931, %v2889, %v1756
    %v2955 = vsel %vm2931, %v2890, %v1758
    %v2956 = vsel %vm2931, %v2891, %v1760
    %v2957 = vsel %vm2931, %v2892, %v1762
    %v2958 = vsel %vm2931, %v2893, %v1764
    %v2959 = vsel %vm2931, %v2894, %v1766
    %v2960 = vsel %vm2931, %v2895, %v1768
    %v2961 = vsel %vm2931, %v2896, %v1770
    %v2962 = vsel %vm2931, %v2897, %v1772
    %v2963 = vsel %vm2931, %v2898, %v1774
    %v2964 = vsel %vm2931, %v2899, %v1776
    %v2965 = vsel %vm2931, %v2900, %v1778
    %v2966 = vsel %vm2931, %v2901, %v1780
    %v2967 = vsel %vm2931, %v2902, %v1782
    %v2968 = vsel %vm2931, %v2903, %v1784
    %v2969 = vsel %vm2931, %v2904, %v1786
    %v2970 = vsel %vm2931, %v2905, %v1788
    %v2971 = vsel %vm2931, %v2906, %v1790
    %v2972 = vsel %vm2931, %v2907, %v1792
    %v2973 = vsel %vm2931, %v2908, %v1794
    %v2974 = vsel %vm2931, %v2909, %v1796
    %v2975 = vsel %vm2931, %v2910, %v1798
    %v2976 = vsel %vm2931, %v2911, %v1800
    %v2977 = vsel %vm2931, %v2912, %v1802
    %v2978 = vsel %vm2931, %v2913, %v1804
    %v2979 = vsel %vm2931, %v2914, %v1806
    %v2980 = vsel %vm2931, %v2915, %v1808
    %v2981 = vsel %vm2931, %v2916, %v1810
    %v2982 = vsel %vm2931, %v2917, %v1812
    %v2983 = vsel %vm2931, %v2918, %v1814
    %v2984 = vsel %vm2931, %v2919, %v1816
    %v2985 = vsel %vm2931, %v2920, %v1818
    %v2986 = vsel %vm2931, %v2921, %v1820
    %v2987 = vsel %vm2931, %v2922, %v1822
    %v2988 = vsel %vm2931, %v2923, %v1824
    %v2989 = vsel %vm2931, %v2924, %v1826
    %v2990 = vsel %vm2931, %v2925, %v1828
    %v2991 = vsel %vm2931, %v2926, %v1830
    %v2992 = vsel %vm2931, %v2927, %v1832
    %v2993 = vsel %vm2931, %v2928, %v1834
    %v2994 = vsel %vm2931, %v2929, %v1836
    %v2995 = vsel %vm2931, %v2930, %v1838
    %vm2996 = vcmask 195584
    %v2997 = vsel %vm2996, %v2932, %v1968
    %v2998 = vsel %vm2996, %v2933, %v1970
    %v2999 = vsel %vm2996, %v2934, %v1972
    %v3000 = vsel %vm2996, %v2935, %v1974
    %v3001 = vsel %vm2996, %v2936, %v1976
    %v3002 = vsel %vm2996, %v2937, %v1978
    %v3003 = vsel %vm2996, %v2938, %v1980
    %v3004 = vsel %vm2996, %v2939, %v1982
    %v3005 = vsel %vm2996, %v2940, %v1984
    %v3006 = vsel %vm2996, %v2941, %v1986
    %v3007 = vsel %vm2996, %v2942, %v1988
    %v3008 = vsel %vm2996, %v2943, %v1990
    %v3009 = vsel %vm2996, %v2944, %v1992
    %v3010 = vsel %vm2996, %v2945, %v1994
    %v3011 = vsel %vm2996, %v2946, %v1996
    %v3012 = vsel %vm2996, %v2947, %v1998
    %v3013 = vsel %vm2996, %v2948, %v2000
    %v3014 = vsel %vm2996, %v2949, %v2002
    %v3015 = vsel %vm2996, %v2950, %v2004
    %v3016 = vsel %vm2996, %v2951, %v2006
    %v3017 = vsel %vm2996, %v2952, %v2008
    %v3018 = vsel %vm2996, %v2953, %v2010
    %v3019 = vsel %vm2996, %v2954, %v2012
    %v3020 = vsel %vm2996, %v2955, %v2014
    %v3021 = vsel %vm2996, %v2956, %v2016
    %v3022 = vsel %vm2996, %v2957, %v2018
    %v3023 = vsel %vm2996, %v2958, %v2020
    %v3024 = vsel %vm2996, %v2959, %v2022
    %v3025 = vsel %vm2996, %v2960, %v2024
    %v3026 = vsel %vm2996, %v2961, %v2026
    %v3027 = vsel %vm2996, %v2962, %v2028
    %v3028 = vsel %vm2996, %v2963, %v2030
    %v3029 = vsel %vm2996, %v2964, %v2032
    %v3030 = vsel %vm2996, %v2965, %v2034
    %v3031 = vsel %vm2996, %v2966, %v2036
    %v3032 = vsel %vm2996, %v2967, %v2038
    %v3033 = vsel %vm2996, %v2968, %v2040
    %v3034 = vsel %vm2996, %v2969, %v2042
    %v3035 = vsel %vm2996, %v2970, %v2044
    %v3036 = vsel %vm2996, %v2971, %v2046
    %v3037 = vsel %vm2996, %v2972, %v2048
    %v3038 = vsel %vm2996, %v2973, %v2050
    %v3039 = vsel %vm2996, %v2974, %v2052
    %v3040 = vsel %vm2996, %v2975, %v2054
    %v3041 = vsel %vm2996, %v2976, %v2056
    %v3042 = vsel %vm2996, %v2977, %v2058
    %v3043 = vsel %vm2996, %v2978, %v2060
    %v3044 = vsel %vm2996, %v2979, %v2062
    %v3045 = vsel %vm2996, %v2980, %v2064
    %v3046 = vsel %vm2996, %v2981, %v2066
    %v3047 = vsel %vm2996, %v2982, %v2068
    %v3048 = vsel %vm2996, %v2983, %v2070
    %v3049 = vsel %vm2996, %v2984, %v2072
    %v3050 = vsel %vm2996, %v2985, %v2074
    %v3051 = vsel %vm2996, %v2986, %v2076
    %v3052 = vsel %vm2996, %v2987, %v2078
    %v3053 = vsel %vm2996, %v2988, %v2080
    %v3054 = vsel %vm2996, %v2989, %v2082
    %v3055 = vsel %vm2996, %v2990, %v2084
    %v3056 = vsel %vm2996, %v2991, %v2086
    %v3057 = vsel %vm2996, %v2992, %v2088
    %v3058 = vsel %vm2996, %v2993, %v2090
    %v3059 = vsel %vm2996, %v2994, %v2092
    %v3060 = vsel %vm2996, %v2995, %v2094
    %vm3061 = vcmask 228352
    %v3062 = vsel %vm3061, %v2997, %v2224
    %v3063 = vsel %vm3061, %v2998, %v2226
    %v3064 = vsel %vm3061, %v2999, %v2228
    %v3065 = vsel %vm3061, %v3000, %v2230
    %v3066 = vsel %vm3061, %v3001, %v2232
    %v3067 = vsel %vm3061, %v3002, %v2234
    %v3068 = vsel %vm3061, %v3003, %v2236
    %v3069 = vsel %vm3061, %v3004, %v2238
    %v3070 = vsel %vm3061, %v3005, %v2240
    %v3071 = vsel %vm3061, %v3006, %v2242
    %v3072 = vsel %vm3061, %v3007, %v2244
    %v3073 = vsel %vm3061, %v3008, %v2246
    %v3074 = vsel %vm3061, %v3009, %v2248
    %v3075 = vsel %vm3061, %v3010, %v2250
    %v3076 = vsel %vm3061, %v3011, %v2252
    %v3077 = vsel %vm3061, %v3012, %v2254
    %v3078 = vsel %vm3061, %v3013, %v2256
    %v3079 = vsel %vm3061, %v3014, %v2258
    %v3080 = vsel %vm3061, %v3015, %v2260
    %v3081 = vsel %vm3061, %v3016, %v2262
    %v3082 = vsel %vm3061, %v3017, %v2264
    %v3083 = vsel %vm3061, %v3018, %v2266
    %v3084 = vsel %vm3061, %v3019, %v2268
    %v3085 = vsel %vm3061, %v3020, %v2270
    %v3086 = vsel %vm3061, %v3021, %v2272
    %v3087 = vsel %vm3061, %v3022, %v2274
    %v3088 = vsel %vm3061, %v3023, %v2276
    %v3089 = vsel %vm3061, %v3024, %v2278
    %v3090 = vsel %vm3061, %v3025, %v2280
    %v3091 = vsel %vm3061, %v3026, %v2282
    %v3092 = vsel %vm3061, %v3027, %v2284
    %v3093 = vsel %vm3061, %v3028, %v2286
    %v3094 = vsel %vm3061, %v3029, %v2288
    %v3095 = vsel %vm3061, %v3030, %v2290
    %v3096 = vsel %vm3061, %v3031, %v2292
    %v3097 = vsel %vm3061, %v3032, %v2294
    %v3098 = vsel %vm3061, %v3033, %v2296
    %v3099 = vsel %vm3061, %v3034, %v2298
    %v3100 = vsel %vm3061, %v3035, %v2300
    %v3101 = vsel %vm3061, %v3036, %v2302
    %v3102 = vsel %vm3061, %v3037, %v2304
    %v3103 = vsel %vm3061, %v3038, %v2306
    %v3104 = vsel %vm3061, %v3039, %v2308
    %v3105 = vsel %vm3061, %v3040, %v2310
    %v3106 = vsel %vm3061, %v3041, %v2312
    %v3107 = vsel %vm3061, %v3042, %v2314
    %v3108 = vsel %vm3061, %v3043, %v2316
    %v3109 = vsel %vm3061, %v3044, %v2318
    %v3110 = vsel %vm3061, %v3045, %v2320
    %v3111 = vsel %vm3061, %v3046, %v2322
    %v3112 = vsel %vm3061, %v3047, %v2324
    %v3113 = vsel %vm3061, %v3048, %v2326
    %v3114 = vsel %vm3061, %v3049, %v2328
    %v3115 = vsel %vm3061, %v3050, %v2330
    %v3116 = vsel %vm3061, %v3051, %v2332
    %v3117 = vsel %vm3061, %v3052, %v2334
    %v3118 = vsel %vm3061, %v3053, %v2336
    %v3119 = vsel %vm3061, %v3054, %v2338
    %v3120 = vsel %vm3061, %v3055, %v2340
    %v3121 = vsel %vm3061, %v3056, %v2342
    %v3122 = vsel %vm3061, %v3057, %v2344
    %v3123 = vsel %vm3061, %v3058, %v2346
    %v3124 = vsel %vm3061, %v3059, %v2348
    %v3125 = vsel %vm3061, %v3060, %v2350
    %vm3126 = vcmask 261120
    %v3127 = vsel %vm3126, %v3062, %v2480
    %v3128 = vsel %vm3126, %v3063, %v2482
    %v3129 = vsel %vm3126, %v3064, %v2484
    %v3130 = vsel %vm3126, %v3065, %v2486
    %v3131 = vsel %vm3126, %v3066, %v2488
    %v3132 = vsel %vm3126, %v3067, %v2490
    %v3133 = vsel %vm3126, %v3068, %v2492
    %v3134 = vsel %vm3126, %v3069, %v2494
    %v3135 = vsel %vm3126, %v3070, %v2496
    %v3136 = vsel %vm3126, %v3071, %v2498
    %v3137 = vsel %vm3126, %v3072, %v2500
    %v3138 = vsel %vm3126, %v3073, %v2502
    %v3139 = vsel %vm3126, %v3074, %v2504
    %v3140 = vsel %vm3126, %v3075, %v2506
    %v3141 = vsel %vm3126, %v3076, %v2508
    %v3142 = vsel %vm3126, %v3077, %v2510
    %v3143 = vsel %vm3126, %v3078, %v2512
    %v3144 = vsel %vm3126, %v3079, %v2514
    %v3145 = vsel %vm3126, %v3080, %v2516
    %v3146 = vsel %vm3126, %v3081, %v2518
    %v3147 = vsel %vm3126, %v3082, %v2520
    %v3148 = vsel %vm3126, %v3083, %v2522
    %v3149 = vsel %vm3126, %v3084, %v2524
    %v3150 = vsel %vm3126, %v3085, %v2526
    %v3151 = vsel %vm3126, %v3086, %v2528
    %v3152 = vsel %vm3126, %v3087, %v2530
    %v3153 = vsel %vm3126, %v3088, %v2532
    %v3154 = vsel %vm3126, %v3089, %v2534
    %v3155 = vsel %vm3126, %v3090, %v2536
    %v3156 = vsel %vm3126, %v3091, %v2538
    %v3157 = vsel %vm3126, %v3092, %v2540
    %v3158 = vsel %vm3126, %v3093, %v2542
    %v3159 = vsel %vm3126, %v3094, %v2544
    %v3160 = vsel %vm3126, %v3095, %v2546
    %v3161 = vsel %vm3126, %v3096, %v2548
    %v3162 = vsel %vm3126, %v3097, %v2550
    %v3163 = vsel %vm3126, %v3098, %v2552
    %v3164 = vsel %vm3126, %v3099, %v2554
    %v3165 = vsel %vm3126, %v3100, %v2556
    %v3166 = vsel %vm3126, %v3101, %v2558
    %v3167 = vsel %vm3126, %v3102, %v2560
    %v3168 = vsel %vm3126, %v3103, %v2562
    %v3169 = vsel %vm3126, %v3104, %v2564
    %v3170 = vsel %vm3126, %v3105, %v2566
    %v3171 = vsel %vm3126, %v3106, %v2568
    %v3172 = vsel %vm3126, %v3107, %v2570
    %v3173 = vsel %vm3126, %v3108, %v2572
    %v3174 = vsel %vm3126, %v3109, %v2574
    %v3175 = vsel %vm3126, %v3110, %v2576
    %v3176 = vsel %vm3126, %v3111, %v2578
    %v3177 = vsel %vm3126, %v3112, %v2580
    %v3178 = vsel %vm3126, %v3113, %v2582
    %v3179 = vsel %vm3126, %v3114, %v2584
    %v3180 = vsel %vm3126, %v3115, %v2586
    %v3181 = vsel %vm3126, %v3116, %v2588
    %v3182 = vsel %vm3126, %v3117, %v2590
    %v3183 = vsel %vm3126, %v3118, %v2592
    %v3184 = vsel %vm3126, %v3119, %v2594
    %v3185 = vsel %vm3126, %v3120, %v2596
    %v3186 = vsel %vm3126, %v3121, %v2598
    %v3187 = vsel %vm3126, %v3122, %v2600
    %v3188 = vsel %vm3126, %v3123, %v2602
    %v3189 = vsel %vm3126, %v3124, %v2604
    %v3190 = vsel %vm3126, %v3125, %v2606
    %v3191 = vld [vmem:[%s1] sm:$0xff]
    %v3192 = vld [vmem:[%s1 + $0x8] sm:$0xff]
    %v3193 = vld [vmem:[%s1 + $0x10] sm:$0xff]
    %v3194 = vld [vmem:[%s1 + $0x18] sm:$0xff]
    %v3195 = vld [vmem:[%s1 + $0x20] sm:$0xf]
    %v3196 = vld [vmem:[%s2] sm:$0x1]
    %v3198 = vperm.slane %v3196, 0
    %vm3200 = vcmask 293888
    %v3202 = vsel %vm3200, %v3127, 0
    %v3205 = vsel %vm3200, %v3128, 0
    %v3208 = vsel %vm3200, %v3129, 0
    %v3211 = vsel %vm3200, %v3130, 0
    %v3214 = vsel %vm3200, %v3131, 0
    %v3217 = vsel %vm3200, %v3132, 0
    %v3220 = vsel %vm3200, %v3133, 0
    %v3223 = vsel %vm3200, %v3134, 0
    %v3226 = vsel %vm3200, %v3135, 0
    %v3229 = vsel %vm3200, %v3136, 0
    %v3232 = vsel %vm3200, %v3137, 0
    %v3235 = vsel %vm3200, %v3138, 0
    %v3238 = vsel %vm3200, %v3139, 0
    %v3241 = vsel %vm3200, %v3140, 0
    %v3244 = vsel %vm3200, %v3141, 0
    %v3247 = vsel %vm3200, %v3142, 0
    %v3250 = vsel %vm3200, %v3143, 0
    %v3253 = vsel %vm3200, %v3144, 0
    %v3256 = vsel %vm3200, %v3145, 0
    %v3259 = vsel %vm3200, %v3146, 0
    %v3262 = vsel %vm3200, %v3147, 0
    %v3265 = vsel %vm3200, %v3148, 0
    %v3268 = vsel %vm3200, %v3149, 0
    %v3271 = vsel %vm3200, %v3150, 0
    %v3274 = vsel %vm3200, %v3151, 0
    %v3277 = vsel %vm3200, %v3152, 0
    %v3280 = vsel %vm3200, %v3153, 0
    %v3283 = vsel %vm3200, %v3154, 0
    %v3286 = vsel %vm3200, %v3155, 0
    %v3289 = vsel %vm3200, %v3156, 0
    %v3292 = vsel %vm3200, %v3157, 0
    %v3295 = vsel %vm3200, %v3158, 0
    %v3298 = vsel %vm3200, %v3159, 0
    %v3301 = vsel %vm3200, %v3160, 0
    %v3304 = vsel %vm3200, %v3161, 0
    %v3307 = vsel %vm3200, %v3162, 0
    %v3310 = vsel %vm3200, %v3163, 0
    %v3313 = vsel %vm3200, %v3164, 0
    %v3316 = vsel %vm3200, %v3165, 0
    %v3319 = vsel %vm3200, %v3166, 0
    %v3322 = vsel %vm3200, %v3167, 0
    %v3325 = vsel %vm3200, %v3168, 0
    %v3328 = vsel %vm3200, %v3169, 0
    %v3331 = vsel %vm3200, %v3170, 0
    %v3334 = vsel %vm3200, %v3171, 0
    %v3337 = vsel %vm3200, %v3172, 0
    %v3340 = vsel %vm3200, %v3173, 0
    %v3343 = vsel %vm3200, %v3174, 0
    %v3346 = vsel %vm3200, %v3175, 0
    %v3349 = vsel %vm3200, %v3176, 0
    %v3352 = vsel %vm3200, %v3177, 0
    %v3355 = vsel %vm3200, %v3178, 0
    %v3358 = vsel %vm3200, %v3179, 0
    %v3361 = vsel %vm3200, %v3180, 0
    %v3364 = vsel %vm3200, %v3181, 0
    %v3367 = vsel %vm3200, %v3182, 0
    %v3370 = vsel %vm3200, %v3183, 0
    %v3373 = vsel %vm3200, %v3184, 0
    %v3376 = vsel %vm3200, %v3185, 0
    %v3379 = vsel %vm3200, %v3186, 0
    %v3382 = vsel %vm3200, %v3187, 0
    %v3385 = vsel %vm3200, %v3188, 0
    %v3388 = vsel %vm3200, %v3189, 0
    %v3391 = vsel %vm3200, %v3190, 0
    %vm3393 = vcmask 1043456
    %v3395 = vsel %vm3393, %v3195, 0
    %3397 = vmatpush.msra.mxu0 0.0
    %3398 = vmatpush.msra.mxu0 0.0
    %3399 = vmatpush.msra.mxu0 0.0
    %3400 = vmatpush.msra.mxu0 0.0
    %3401 = vmatpush.msra.mxu0 0.0
    %3402 = vmatpush.msra.mxu0 0.0
    %3403 = vmatpush.msra.mxu0 0.0
    %3404 = vmatpush.msra.mxu0 0.0
    %3405 = vmatpush.msra.mxu0 0.0
    %3406 = vmatpush.msra.mxu0 0.0
    %3407 = vmatpush.msra.mxu0 0.0
    %3408 = vmatpush.msra.mxu0 %v3395
    %3409 = vmatpush.msra.mxu0 %v3194
    %3410 = vmatpush.msra.mxu0 %v3193
    %3411 = vmatpush.msra.mxu0 %v3192
    %3412 = vmatpush.msra.mxu0 %v3191
    %3413 = vmatmul.f32.gmra.mxu0 %v3202
    %v3414 = vpop.f32.mrf.mxu0
    %v3415 = vadd.f32 %v3198, %v3414
    %3416 = vmatmul.f32.gmra.mxu0 %v3205
    %v3417 = vpop.f32.mrf.mxu0
    %v3418 = vadd.f32 %v3198, %v3417
    %3419 = vmatmul.f32.gmra.mxu0 %v3208
    %v3420 = vpop.f32.mrf.mxu0
    %v3421 = vadd.f32 %v3198, %v3420
    %3422 = vmatmul.f32.gmra.mxu0 %v3211
    %v3423 = vpop.f32.mrf.mxu0
    %v3424 = vadd.f32 %v3198, %v3423
    %3425 = vmatmul.f32.gmra.mxu0 %v3214
    %v3426 = vpop.f32.mrf.mxu0
    %v3427 = vadd.f32 %v3198, %v3426
    %3428 = vmatmul.f32.gmra.mxu0 %v3217
    %v3429 = vpop.f32.mrf.mxu0
    %v3430 = vadd.f32 %v3198, %v3429
    %3431 = vmatmul.f32.gmra.mxu0 %v3220
    %v3432 = vpop.f32.mrf.mxu0
    %v3433 = vadd.f32 %v3198, %v3432
    %3434 = vmatmul.f32.gmra.mxu0 %v3223
    %v3435 = vpop.f32.mrf.mxu0
    %v3436 = vadd.f32 %v3198, %v3435
    %3437 = vmatmul.f32.gmra.mxu0 %v3226
    %v3438 = vpop.f32.mrf.mxu0
    %v3439 = vadd.f32 %v3198, %v3438
    %3440 = vmatmul.f32.gmra.mxu0 %v3229
    %v3441 = vpop.f32.mrf.mxu0
    %v3442 = vadd.f32 %v3198, %v3441
    %3443 = vmatmul.f32.gmra.mxu0 %v3232
    %v3444 = vpop.f32.mrf.mxu0
    %v3445 = vadd.f32 %v3198, %v3444
    %3446 = vmatmul.f32.gmra.mxu0 %v3235
    %v3447 = vpop.f32.mrf.mxu0
    %v3448 = vadd.f32 %v3198, %v3447
    %3449 = vmatmul.f32.gmra.mxu0 %v3238
    %v3450 = vpop.f32.mrf.mxu0
    %v3451 = vadd.f32 %v3198, %v3450
    %3452 = vmatmul.f32.gmra.mxu0 %v3241
    %v3453 = vpop.f32.mrf.mxu0
    %v3454 = vadd.f32 %v3198, %v3453
    %3455 = vmatmul.f32.gmra.mxu0 %v3244
    %v3456 = vpop.f32.mrf.mxu0
    %v3457 = vadd.f32 %v3198, %v3456
    %3458 = vmatmul.f32.gmra.mxu0 %v3247
    %v3459 = vpop.f32.mrf.mxu0
    %v3460 = vadd.f32 %v3198, %v3459
    %3461 = vmatmul.f32.gmra.mxu0 %v3250
    %v3462 = vpop.f32.mrf.mxu0
    %v3463 = vadd.f32 %v3198, %v3462
    %3464 = vmatmul.f32.gmra.mxu0 %v3253
    %v3465 = vpop.f32.mrf.mxu0
    %v3466 = vadd.f32 %v3198, %v3465
    %3467 = vmatmul.f32.gmra.mxu0 %v3256
    %v3468 = vpop.f32.mrf.mxu0
    %v3469 = vadd.f32 %v3198, %v3468
    %3470 = vmatmul.f32.gmra.mxu0 %v3259
    %v3471 = vpop.f32.mrf.mxu0
    %v3472 = vadd.f32 %v3198, %v3471
    %3473 = vmatmul.f32.gmra.mxu0 %v3262
    %v3474 = vpop.f32.mrf.mxu0
    %v3475 = vadd.f32 %v3198, %v3474
    %3476 = vmatmul.f32.gmra.mxu0 %v3265
    %v3477 = vpop.f32.mrf.mxu0
    %v3478 = vadd.f32 %v3198, %v3477
    %3479 = vmatmul.f32.gmra.mxu0 %v3268
    %v3480 = vpop.f32.mrf.mxu0
    %v3481 = vadd.f32 %v3198, %v3480
    %3482 = vmatmul.f32.gmra.mxu0 %v3271
    %v3483 = vpop.f32.mrf.mxu0
    %v3484 = vadd.f32 %v3198, %v3483
    %3485 = vmatmul.f32.gmra.mxu0 %v3274
    %v3486 = vpop.f32.mrf.mxu0
    %v3487 = vadd.f32 %v3198, %v3486
    %3488 = vmatmul.f32.gmra.mxu0 %v3277
    %v3489 = vpop.f32.mrf.mxu0
    %v3490 = vadd.f32 %v3198, %v3489
    %3491 = vmatmul.f32.gmra.mxu0 %v3280
    %v3492 = vpop.f32.mrf.mxu0
    %v3493 = vadd.f32 %v3198, %v3492
    %3494 = vmatmul.f32.gmra.mxu0 %v3283
    %v3495 = vpop.f32.mrf.mxu0
    %v3496 = vadd.f32 %v3198, %v3495
    %3497 = vmatmul.f32.gmra.mxu0 %v3286
    %v3498 = vpop.f32.mrf.mxu0
    %v3499 = vadd.f32 %v3198, %v3498
    %3500 = vmatmul.f32.gmra.mxu0 %v3289
    %v3501 = vpop.f32.mrf.mxu0
    %v3502 = vadd.f32 %v3198, %v3501
    %3503 = vmatmul.f32.gmra.mxu0 %v3292
    %v3504 = vpop.f32.mrf.mxu0
    %v3505 = vadd.f32 %v3198, %v3504
    %3506 = vmatmul.f32.gmra.mxu0 %v3295
    %v3507 = vpop.f32.mrf.mxu0
    %v3508 = vadd.f32 %v3198, %v3507
    %3509 = vmatmul.f32.gmra.mxu0 %v3298
    %v3510 = vpop.f32.mrf.mxu0
    %v3511 = vadd.f32 %v3198, %v3510
    %3512 = vmatmul.f32.gmra.mxu0 %v3301
    %v3513 = vpop.f32.mrf.mxu0
    %v3514 = vadd.f32 %v3198, %v3513
    %3515 = vmatmul.f32.gmra.mxu0 %v3304
    %v3516 = vpop.f32.mrf.mxu0
    %v3517 = vadd.f32 %v3198, %v3516
    %3518 = vmatmul.f32.gmra.mxu0 %v3307
    %v3519 = vpop.f32.mrf.mxu0
    %v3520 = vadd.f32 %v3198, %v3519
    %3521 = vmatmul.f32.gmra.mxu0 %v3310
    %v3522 = vpop.f32.mrf.mxu0
    %v3523 = vadd.f32 %v3198, %v3522
    %3524 = vmatmul.f32.gmra.mxu0 %v3313
    %v3525 = vpop.f32.mrf.mxu0
    %v3526 = vadd.f32 %v3198, %v3525
    %3527 = vmatmul.f32.gmra.mxu0 %v3316
    %v3528 = vpop.f32.mrf.mxu0
    %v3529 = vadd.f32 %v3198, %v3528
    %3530 = vmatmul.f32.gmra.mxu0 %v3319
    %v3531 = vpop.f32.mrf.mxu0
    %v3532 = vadd.f32 %v3198, %v3531
    %3533 = vmatmul.f32.gmra.mxu0 %v3322
    %v3534 = vpop.f32.mrf.mxu0
    %v3535 = vadd.f32 %v3198, %v3534
    %3536 = vmatmul.f32.gmra.mxu0 %v3325
    %v3537 = vpop.f32.mrf.mxu0
    %v3538 = vadd.f32 %v3198, %v3537
    %3539 = vmatmul.f32.gmra.mxu0 %v3328
    %v3540 = vpop.f32.mrf.mxu0
    %v3541 = vadd.f32 %v3198, %v3540
    %3542 = vmatmul.f32.gmra.mxu0 %v3331
    %v3543 = vpop.f32.mrf.mxu0
    %v3544 = vadd.f32 %v3198, %v3543
    %3545 = vmatmul.f32.gmra.mxu0 %v3334
    %v3546 = vpop.f32.mrf.mxu0
    %v3547 = vadd.f32 %v3198, %v3546
    %3548 = vmatmul.f32.gmra.mxu0 %v3337
    %v3549 = vpop.f32.mrf.mxu0
    %v3550 = vadd.f32 %v3198, %v3549
    %3551 = vmatmul.f32.gmra.mxu0 %v3340
    %v3552 = vpop.f32.mrf.mxu0
    %v3553 = vadd.f32 %v3198, %v3552
    %3554 = vmatmul.f32.gmra.mxu0 %v3343
    %v3555 = vpop.f32.mrf.mxu0
    %v3556 = vadd.f32 %v3198, %v3555
    %3557 = vmatmul.f32.gmra.mxu0 %v3346
    %v3558 = vpop.f32.mrf.mxu0
    %v3559 = vadd.f32 %v3198, %v3558
    %3560 = vmatmul.f32.gmra.mxu0 %v3349
    %v3561 = vpop.f32.mrf.mxu0
    %v3562 = vadd.f32 %v3198, %v3561
    %3563 = vmatmul.f32.gmra.mxu0 %v3352
    %v3564 = vpop.f32.mrf.mxu0
    %v3565 = vadd.f32 %v3198, %v3564
    %3566 = vmatmul.f32.gmra.mxu0 %v3355
    %v3567 = vpop.f32.mrf.mxu0
    %v3568 = vadd.f32 %v3198, %v3567
    %3569 = vmatmul.f32.gmra.mxu0 %v3358
    %v3570 = vpop.f32.mrf.mxu0
    %v3571 = vadd.f32 %v3198, %v3570
    %3572 = vmatmul.f32.gmra.mxu0 %v3361
    %v3573 = vpop.f32.mrf.mxu0
    %v3574 = vadd.f32 %v3198, %v3573
    %3575 = vmatmul.f32.gmra.mxu0 %v3364
    %v3576 = vpop.f32.mrf.mxu0
    %v3577 = vadd.f32 %v3198, %v3576
    %3578 = vmatmul.f32.gmra.mxu0 %v3367
    %v3579 = vpop.f32.mrf.mxu0
    %v3580 = vadd.f32 %v3198, %v3579
    %3581 = vmatmul.f32.gmra.mxu0 %v3370
    %v3582 = vpop.f32.mrf.mxu0
    %v3583 = vadd.f32 %v3198, %v3582
    %3584 = vmatmul.f32.gmra.mxu0 %v3373
    %v3585 = vpop.f32.mrf.mxu0
    %v3586 = vadd.f32 %v3198, %v3585
    %3587 = vmatmul.f32.gmra.mxu0 %v3376
    %v3588 = vpop.f32.mrf.mxu0
    %v3589 = vadd.f32 %v3198, %v3588
    %3590 = vmatmul.f32.gmra.mxu0 %v3379
    %v3591 = vpop.f32.mrf.mxu0
    %v3592 = vadd.f32 %v3198, %v3591
    %3593 = vmatmul.f32.gmra.mxu0 %v3382
    %v3594 = vpop.f32.mrf.mxu0
    %v3595 = vadd.f32 %v3198, %v3594
    %3596 = vmatmul.f32.gmra.mxu0 %v3385
    %v3597 = vpop.f32.mrf.mxu0
    %v3598 = vadd.f32 %v3198, %v3597
    %3599 = vmatmul.f32.gmra.mxu0 %v3388
    %v3600 = vpop.f32.mrf.mxu0
    %v3601 = vadd.f32 %v3198, %v3600
    %3602 = vmatmul.f32.gmra.mxu0 %v3391
    %v3603 = vpop.f32.mrf.mxu0
    %v3604 = vadd.f32 %v3198, %v3603
    %3605 = vdwg.mxu0
    %v3606 = vld [vmem:[%s3] sm:$0x1]
    %v3607 = vld [vmem:[%s4] sm:$0x1]
    %v3608 = vsel %vm2736, %v3415, 0.0
    %v3609 = vsel %vm2736, %v3418, 0.0
    %v3610 = vadd.f32 %v3608, %v3609
    %v3611 = vsel %vm2736, %v3421, 0.0
    %v3612 = vadd.f32 %v3610, %v3611
    %v3613 = vsel %vm2736, %v3424, 0.0
    %v3614 = vadd.f32 %v3612, %v3613
    %v3615 = vsel %vm2736, %v3427, 0.0
    %v3616 = vadd.f32 %v3614, %v3615
    %v3617 = vsel %vm2736, %v3430, 0.0
    %v3618 = vadd.f32 %v3616, %v3617
    %v3619 = vsel %vm2736, %v3433, 0.0
    %v3620 = vadd.f32 %v3618, %v3619
    %v3621 = vsel %vm2736, %v3436, 0.0
    %v3622 = vadd.f32 %v3620, %v3621
    %v3623 = vsel %vm2736, %v3439, 0.0
    %v3624 = vadd.f32 %v3622, %v3623
    %v3625 = vsel %vm2736, %v3442, 0.0
    %v3626 = vadd.f32 %v3624, %v3625
    %v3627 = vsel %vm2736, %v3445, 0.0
    %v3628 = vadd.f32 %v3626, %v3627
    %v3629 = vsel %vm2736, %v3448, 0.0
    %v3630 = vadd.f32 %v3628, %v3629
    %v3631 = vsel %vm2736, %v3451, 0.0
    %v3632 = vadd.f32 %v3630, %v3631
    %v3633 = vsel %vm2736, %v3454, 0.0
    %v3634 = vadd.f32 %v3632, %v3633
    %v3635 = vsel %vm2736, %v3457, 0.0
    %v3636 = vadd.f32 %v3634, %v3635
    %v3637 = vsel %vm2736, %v3460, 0.0
    %v3638 = vadd.f32 %v3636, %v3637
    %v3639 = vsel %vm2736, %v3463, 0.0
    %v3640 = vadd.f32 %v3638, %v3639
    %v3641 = vsel %vm2736, %v3466, 0.0
    %v3642 = vadd.f32 %v3640, %v3641
    %v3643 = vsel %vm2736, %v3469, 0.0
    %v3644 = vadd.f32 %v3642, %v3643
    %v3645 = vsel %vm2736, %v3472, 0.0
    %v3646 = vadd.f32 %v3644, %v3645
    %v3647 = vsel %vm2736, %v3475, 0.0
    %v3648 = vadd.f32 %v3646, %v3647
    %v3649 = vsel %vm2736, %v3478, 0.0
    %v3650 = vadd.f32 %v3648, %v3649
    %v3651 = vsel %vm2736, %v3481, 0.0
    %v3652 = vadd.f32 %v3650, %v3651
    %v3653 = vsel %vm2736, %v3484, 0.0
    %v3654 = vadd.f32 %v3652, %v3653
    %v3655 = vsel %vm2736, %v3487, 0.0
    %v3656 = vadd.f32 %v3654, %v3655
    %v3657 = vsel %vm2736, %v3490, 0.0
    %v3658 = vadd.f32 %v3656, %v3657
    %v3659 = vsel %vm2736, %v3493, 0.0
    %v3660 = vadd.f32 %v3658, %v3659
    %v3661 = vsel %vm2736, %v3496, 0.0
    %v3662 = vadd.f32 %v3660, %v3661
    %v3663 = vsel %vm2736, %v3499, 0.0
    %v3664 = vadd.f32 %v3662, %v3663
    %v3665 = vsel %vm2736, %v3502, 0.0
    %v3666 = vadd.f32 %v3664, %v3665
    %v3667 = vsel %vm2736, %v3505, 0.0
    %v3668 = vadd.f32 %v3666, %v3667
    %v3669 = vsel %vm2736, %v3508, 0.0
    %v3670 = vadd.f32 %v3668, %v3669
    %v3671 = vrot.slane %v3670, 4
    %v3672 = vadd.f32 %v3670, %v3671
    %v3673 = vrot.slane %v3672, 2
    %v3674 = vadd.f32 %v3672, %v3673
    %v3675 = vrot.slane %v3674, 1
    %v3676 = vadd.f32 %v3674, %v3675
    %v3677 = vsel %vm2736, %v3511, 0.0
    %v3678 = vsel %vm2736, %v3514, 0.0
    %v3679 = vadd.f32 %v3677, %v3678
    %v3680 = vsel %vm2736, %v3517, 0.0
    %v3681 = vadd.f32 %v3679, %v3680
    %v3682 = vsel %vm2736, %v3520, 0.0
    %v3683 = vadd.f32 %v3681, %v3682
    %v3684 = vsel %vm2736, %v3523, 0.0
    %v3685 = vadd.f32 %v3683, %v3684
    %v3686 = vsel %vm2736, %v3526, 0.0
    %v3687 = vadd.f32 %v3685, %v3686
    %v3688 = vsel %vm2736, %v3529, 0.0
    %v3689 = vadd.f32 %v3687, %v3688
    %v3690 = vsel %vm2736, %v3532, 0.0
    %v3691 = vadd.f32 %v3689, %v3690
    %v3692 = vsel %vm2736, %v3535, 0.0
    %v3693 = vadd.f32 %v3691, %v3692
    %v3694 = vsel %vm2736, %v3538, 0.0
    %v3695 = vadd.f32 %v3693, %v3694
    %v3696 = vsel %vm2736, %v3541, 0.0
    %v3697 = vadd.f32 %v3695, %v3696
    %v3698 = vsel %vm2736, %v3544, 0.0
    %v3699 = vadd.f32 %v3697, %v3698
    %v3700 = vsel %vm2736, %v3547, 0.0
    %v3701 = vadd.f32 %v3699, %v3700
    %v3702 = vsel %vm2736, %v3550, 0.0
    %v3703 = vadd.f32 %v3701, %v3702
    %v3704 = vsel %vm2736, %v3553, 0.0
    %v3705 = vadd.f32 %v3703, %v3704
    %v3706 = vsel %vm2736, %v3556, 0.0
    %v3707 = vadd.f32 %v3705, %v3706
    %v3708 = vsel %vm2736, %v3559, 0.0
    %v3709 = vadd.f32 %v3707, %v3708
    %v3710 = vsel %vm2736, %v3562, 0.0
    %v3711 = vadd.f32 %v3709, %v3710
    %v3712 = vsel %vm2736, %v3565, 0.0
    %v3713 = vadd.f32 %v3711, %v3712
    %v3714 = vsel %vm2736, %v3568, 0.0
    %v3715 = vadd.f32 %v3713, %v3714
    %v3716 = vsel %vm2736, %v3571, 0.0
    %v3717 = vadd.f32 %v3715, %v3716
    %v3718 = vsel %vm2736, %v3574, 0.0
    %v3719 = vadd.f32 %v3717, %v3718
    %v3720 = vsel %vm2736, %v3577, 0.0
    %v3721 = vadd.f32 %v3719, %v3720
    %v3722 = vsel %vm2736, %v3580, 0.0
    %v3723 = vadd.f32 %v3721, %v3722
    %v3724 = vsel %vm2736, %v3583, 0.0
    %v3725 = vadd.f32 %v3723, %v3724
    %v3726 = vsel %vm2736, %v3586, 0.0
    %v3727 = vadd.f32 %v3725, %v3726
    %v3728 = vsel %vm2736, %v3589, 0.0
    %v3729 = vadd.f32 %v3727, %v3728
    %v3730 = vsel %vm2736, %v3592, 0.0
    %v3731 = vadd.f32 %v3729, %v3730
    %v3732 = vsel %vm2736, %v3595, 0.0
    %v3733 = vadd.f32 %v3731, %v3732
    %v3734 = vsel %vm2736, %v3598, 0.0
    %v3735 = vadd.f32 %v3733, %v3734
    %v3736 = vsel %vm2736, %v3601, 0.0
    %v3737 = vadd.f32 %v3735, %v3736
    %v3738 = vsel %vm2736, %v3604, 0.0
    %v3739 = vadd.f32 %v3737, %v3738
    %v3740 = vrot.slane %v3739, 4
    %v3741 = vadd.f32 %v3739, %v3740
    %v3742 = vrot.slane %v3741, 2
    %v3743 = vadd.f32 %v3741, %v3742
    %v3744 = vrot.slane %v3743, 1
    %v3745 = vadd.f32 %v3743, %v3744
    %v3746 = vrcp.pop 256.0
    %v3747 = vmul.f32 256.0, %v3746
    %v3748 = vsub.f32 1.0, %v3747
    %v3749 = vmul.f32 %v3746, %v3748
    %v3750 = vadd.f32 %v3746, %v3749
    %vm3751 = vweird.f32 %v3746
    %v3752 = vsel %vm3751, %v3746, %v3750
    %v3753 = vmul.f32 %v3676, %v3752
    %v3754 = vmul.f32 %v3745, %v3752
    %v3755 = vsub.f32 %v3415, %v3753
    %v3756 = vsub.f32 %v3418, %v3753
    %v3757 = vsub.f32 %v3421, %v3753
    %v3758 = vsub.f32 %v3424, %v3753
    %v3759 = vsub.f32 %v3427, %v3753
    %v3760 = vsub.f32 %v3430, %v3753
    %v3761 = vsub.f32 %v3433, %v3753
    %v3762 = vsub.f32 %v3436, %v3753
    %v3763 = vsub.f32 %v3439, %v3753
    %v3764 = vsub.f32 %v3442, %v3753
    %v3765 = vsub.f32 %v3445, %v3753
    %v3766 = vsub.f32 %v3448, %v3753
    %v3767 = vsub.f32 %v3451, %v3753
    %v3768 = vsub.f32 %v3454, %v3753
    %v3769 = vsub.f32 %v3457, %v3753
    %v3770 = vsub.f32 %v3460, %v3753
    %v3771 = vsub.f32 %v3463, %v3753
    %v3772 = vsub.f32 %v3466, %v3753
    %v3773 = vsub.f32 %v3469, %v3753
    %v3774 = vsub.f32 %v3472, %v3753
    %v3775 = vsub.f32 %v3475, %v3753
    %v3776 = vsub.f32 %v3478, %v3753
    %v3777 = vsub.f32 %v3481, %v3753
    %v3778 = vsub.f32 %v3484, %v3753
    %v3779 = vsub.f32 %v3487, %v3753
    %v3780 = vsub.f32 %v3490, %v3753
    %v3781 = vsub.f32 %v3493, %v3753
    %v3782 = vsub.f32 %v3496, %v3753
    %v3783 = vsub.f32 %v3499, %v3753
    %v3784 = vsub.f32 %v3502, %v3753
    %v3785 = vsub.f32 %v3505, %v3753
    %v3786 = vsub.f32 %v3508, %v3753
    %v3787 = vsub.f32 %v3511, %v3754
    %v3788 = vsub.f32 %v3514, %v3754
    %v3789 = vsub.f32 %v3517, %v3754
    %v3790 = vsub.f32 %v3520, %v3754
    %v3791 = vsub.f32 %v3523, %v3754
    %v3792 = vsub.f32 %v3526, %v3754
    %v3793 = vsub.f32 %v3529, %v3754
    %v3794 = vsub.f32 %v3532, %v3754
    %v3795 = vsub.f32 %v3535, %v3754
    %v3796 = vsub.f32 %v3538, %v3754
    %v3797 = vsub.f32 %v3541, %v3754
    %v3798 = vsub.f32 %v3544, %v3754
    %v3799 = vsub.f32 %v3547, %v3754
    %v3800 = vsub.f32 %v3550, %v3754
    %v3801 = vsub.f32 %v3553, %v3754
    %v3802 = vsub.f32 %v3556, %v3754
    %v3803 = vsub.f32 %v3559, %v3754
    %v3804 = vsub.f32 %v3562, %v3754
    %v3805 = vsub.f32 %v3565, %v3754
    %v3806 = vsub.f32 %v3568, %v3754
    %v3807 = vsub.f32 %v3571, %v3754
    %v3808 = vsub.f32 %v3574, %v3754
    %v3809 = vsub.f32 %v3577, %v3754
    %v3810 = vsub.f32 %v3580, %v3754
    %v3811 = vsub.f32 %v3583, %v3754
    %v3812 = vsub.f32 %v3586, %v3754
    %v3813 = vsub.f32 %v3589, %v3754
    %v3814 = vsub.f32 %v3592, %v3754
    %v3815 = vsub.f32 %v3595, %v3754
    %v3816 = vsub.f32 %v3598, %v3754
    %v3817 = vsub.f32 %v3601, %v3754
    %v3818 = vsub.f32 %v3604, %v3754
    %v3819 = vmul.f32 %v3755, %v3755
    %v3820 = vmul.f32 %v3756, %v3756
    %v3821 = vmul.f32 %v3757, %v3757
    %v3822 = vmul.f32 %v3758, %v3758
    %v3823 = vmul.f32 %v3759, %v3759
    %v3824 = vmul.f32 %v3760, %v3760
    %v3825 = vmul.f32 %v3761, %v3761
    %v3826 = vmul.f32 %v3762, %v3762
    %v3827 = vmul.f32 %v3763, %v3763
    %v3828 = vmul.f32 %v3764, %v3764
    %v3829 = vmul.f32 %v3765, %v3765
    %v3830 = vmul.f32 %v3766, %v3766
    %v3831 = vmul.f32 %v3767, %v3767
    %v3832 = vmul.f32 %v3768, %v3768
    %v3833 = vmul.f32 %v3769, %v3769
    %v3834 = vmul.f32 %v3770, %v3770
    %v3835 = vmul.f32 %v3771, %v3771
    %v3836 = vmul.f32 %v3772, %v3772
    %v3837 = vmul.f32 %v3773, %v3773
    %v3838 = vmul.f32 %v3774, %v3774
    %v3839 = vmul.f32 %v3775, %v3775
    %v3840 = vmul.f32 %v3776, %v3776
    %v3841 = vmul.f32 %v3777, %v3777
    %v3842 = vmul.f32 %v3778, %v3778
    %v3843 = vmul.f32 %v3779, %v3779
    %v3844 = vmul.f32 %v3780, %v3780
    %v3845 = vmul.f32 %v3781, %v3781
    %v3846 = vmul.f32 %v3782, %v3782
    %v3847 = vmul.f32 %v3783, %v3783
    %v3848 = vmul.f32 %v3784, %v3784
    %v3849 = vmul.f32 %v3785, %v3785
    %v3850 = vmul.f32 %v3786, %v3786
    %v3851 = vmul.f32 %v3787, %v3787
    %v3852 = vmul.f32 %v3788, %v3788
    %v3853 = vmul.f32 %v3789, %v3789
    %v3854 = vmul.f32 %v3790, %v3790
    %v3855 = vmul.f32 %v3791, %v3791
    %v3856 = vmul.f32 %v3792, %v3792
    %v3857 = vmul.f32 %v3793, %v3793
    %v3858 = vmul.f32 %v3794, %v3794
    %v3859 = vmul.f32 %v3795, %v3795
    %v3860 = vmul.f32 %v3796, %v3796
    %v3861 = vmul.f32 %v3797, %v3797
    %v3862 = vmul.f32 %v3798, %v3798
    %v3863 = vmul.f32 %v3799, %v3799
    %v3864 = vmul.f32 %v3800, %v3800
    %v3865 = vmul.f32 %v3801, %v3801
    %v3866 = vmul.f32 %v3802, %v3802
    %v3867 = vmul.f32 %v3803, %v3803
    %v3868 = vmul.f32 %v3804, %v3804
    %v3869 = vmul.f32 %v3805, %v3805
    %v3870 = vmul.f32 %v3806, %v3806
    %v3871 = vmul.f32 %v3807, %v3807
    %v3872 = vmul.f32 %v3808, %v3808
    %v3873 = vmul.f32 %v3809, %v3809
    %v3874 = vmul.f32 %v3810, %v3810
    %v3875 = vmul.f32 %v3811, %v3811
    %v3876 = vmul.f32 %v3812, %v3812
    %v3877 = vmul.f32 %v3813, %v3813
    %v3878 = vmul.f32 %v3814, %v3814
    %v3879 = vmul.f32 %v3815, %v3815
    %v3880 = vmul.f32 %v3816, %v3816
    %v3881 = vmul.f32 %v3817, %v3817
    %v3882 = vmul.f32 %v3818, %v3818
    %v3883 = vsel %vm2736, %v3819, 0.0
    %v3884 = vsel %vm2736, %v3820, 0.0
    %v3885 = vadd.f32 %v3883, %v3884
    %v3886 = vsel %vm2736, %v3821, 0.0
    %v3887 = vadd.f32 %v3885, %v3886
    %v3888 = vsel %vm2736, %v3822, 0.0
    %v3889 = vadd.f32 %v3887, %v3888
    %v3890 = vsel %vm2736, %v3823, 0.0
    %v3891 = vadd.f32 %v3889, %v3890
    %v3892 = vsel %vm2736, %v3824, 0.0
    %v3893 = vadd.f32 %v3891, %v3892
    %v3894 = vsel %vm2736, %v3825, 0.0
    %v3895 = vadd.f32 %v3893, %v3894
    %v3896 = vsel %vm2736, %v3826, 0.0
    %v3897 = vadd.f32 %v3895, %v3896
    %v3898 = vsel %vm2736, %v3827, 0.0
    %v3899 = vadd.f32 %v3897, %v3898
    %v3900 = vsel %vm2736, %v3828, 0.0
    %v3901 = vadd.f32 %v3899, %v3900
    %v3902 = vsel %vm2736, %v3829, 0.0
    %v3903 = vadd.f32 %v3901, %v3902
    %v3904 = vsel %vm2736, %v3830, 0.0
    %v3905 = vadd.f32 %v3903, %v3904
    %v3906 = vsel %vm2736, %v3831, 0.0
    %v3907 = vadd.f32 %v3905, %v3906
    %v3908 = vsel %vm2736, %v3832, 0.0
    %v3909 = vadd.f32 %v3907, %v3908
    %v3910 = vsel %vm2736, %v3833, 0.0
    %v3911 = vadd.f32 %v3909, %v3910
    %v3912 = vsel %vm2736, %v3834, 0.0
    %v3913 = vadd.f32 %v3911, %v3912
    %v3914 = vsel %vm2736, %v3835, 0.0
    %v3915 = vadd.f32 %v3913, %v3914
    %v3916 = vsel %vm2736, %v3836, 0.0
    %v3917 = vadd.f32 %v3915, %v3916
    %v3918 = vsel %vm2736, %v3837, 0.0
    %v3919 = vadd.f32 %v3917, %v3918
    %v3920 = vsel %vm2736, %v3838, 0.0
    %v3921 = vadd.f32 %v3919, %v3920
    %v3922 = vsel %vm2736, %v3839, 0.0
    %v3923 = vadd.f32 %v3921, %v3922
    %v3924 = vsel %vm2736, %v3840, 0.0
    %v3925 = vadd.f32 %v3923, %v3924
    %v3926 = vsel %vm2736, %v3841, 0.0
    %v3927 = vadd.f32 %v3925, %v3926
    %v3928 = vsel %vm2736, %v3842, 0.0
    %v3929 = vadd.f32 %v3927, %v3928
    %v3930 = vsel %vm2736, %v3843, 0.0
    %v3931 = vadd.f32 %v3929, %v3930
    %v3932 = vsel %vm2736, %v3844, 0.0
    %v3933 = vadd.f32 %v3931, %v3932
    %v3934 = vsel %vm2736, %v3845, 0.0
    %v3935 = vadd.f32 %v3933, %v3934
    %v3936 = vsel %vm2736, %v3846, 0.0
    %v3937 = vadd.f32 %v3935, %v3936
    %v3938 = vsel %vm2736, %v3847, 0.0
    %v3939 = vadd.f32 %v3937, %v3938
    %v3940 = vsel %vm2736, %v3848, 0.0
    %v3941 = vadd.f32 %v3939, %v3940
    %v3942 = vsel %vm2736, %v3849, 0.0
    %v3943 = vadd.f32 %v3941, %v3942
    %v3944 = vsel %vm2736, %v3850, 0.0
    %v3945 = vadd.f32 %v3943, %v3944
    %v3946 = vrot.slane %v3945, 4
    %v3947 = vadd.f32 %v3945, %v3946
    %v3948 = vrot.slane %v3947, 2
    %v3949 = vadd.f32 %v3947, %v3948
    %v3950 = vrot.slane %v3949, 1
    %v3951 = vadd.f32 %v3949, %v3950
    %v3952 = vsel %vm2736, %v3851, 0.0
    %v3953 = vsel %vm2736, %v3852, 0.0
    %v3954 = vadd.f32 %v3952, %v3953
    %v3955 = vsel %vm2736, %v3853, 0.0
    %v3956 = vadd.f32 %v3954, %v3955
    %v3957 = vsel %vm2736, %v3854, 0.0
    %v3958 = vadd.f32 %v3956, %v3957
    %v3959 = vsel %vm2736, %v3855, 0.0
    %v3960 = vadd.f32 %v3958, %v3959
    %v3961 = vsel %vm2736, %v3856, 0.0
    %v3962 = vadd.f32 %v3960, %v3961
    %v3963 = vsel %vm2736, %v3857, 0.0
    %v3964 = vadd.f32 %v3962, %v3963
    %v3965 = vsel %vm2736, %v3858, 0.0
    %v3966 = vadd.f32 %v3964, %v3965
    %v3967 = vsel %vm2736, %v3859, 0.0
    %v3968 = vadd.f32 %v3966, %v3967
    %v3969 = vsel %vm2736, %v3860, 0.0
    %v3970 = vadd.f32 %v3968, %v3969
    %v3971 = vsel %vm2736, %v3861, 0.0
    %v3972 = vadd.f32 %v3970, %v3971
    %v3973 = vsel %vm2736, %v3862, 0.0
    %v3974 = vadd.f32 %v3972, %v3973
    %v3975 = vsel %vm2736, %v3863, 0.0
    %v3976 = vadd.f32 %v3974, %v3975
    %v3977 = vsel %vm2736, %v3864, 0.0
    %v3978 = vadd.f32 %v3976, %v3977
    %v3979 = vsel %vm2736, %v3865, 0.0
    %v3980 = vadd.f32 %v3978, %v3979
    %v3981 = vsel %vm2736, %v3866, 0.0
    %v3982 = vadd.f32 %v3980, %v3981
    %v3983 = vsel %vm2736, %v3867, 0.0
    %v3984 = vadd.f32 %v3982, %v3983
    %v3985 = vsel %vm2736, %v3868, 0.0
    %v3986 = vadd.f32 %v3984, %v3985
    %v3987 = vsel %vm2736, %v3869, 0.0
    %v3988 = vadd.f32 %v3986, %v3987
    %v3989 = vsel %vm2736, %v3870, 0.0
    %v3990 = vadd.f32 %v3988, %v3989
    %v3991 = vsel %vm2736, %v3871, 0.0
    %v3992 = vadd.f32 %v3990, %v3991
    %v3993 = vsel %vm2736, %v3872, 0.0
    %v3994 = vadd.f32 %v3992, %v3993
    %v3995 = vsel %vm2736, %v3873, 0.0
    %v3996 = vadd.f32 %v3994, %v3995
    %v3997 = vsel %vm2736, %v3874, 0.0
    %v3998 = vadd.f32 %v3996, %v3997
    %v3999 = vsel %vm2736, %v3875, 0.0
    %v4000 = vadd.f32 %v3998, %v3999
    %v4001 = vsel %vm2736, %v3876, 0.0
    %v4002 = vadd.f32 %v4000, %v4001
    %v4003 = vsel %vm2736, %v3877, 0.0
    %v4004 = vadd.f32 %v4002, %v4003
    %v4005 = vsel %vm2736, %v3878, 0.0
    %v4006 = vadd.f32 %v4004, %v4005
    %v4007 = vsel %vm2736, %v3879, 0.0
    %v4008 = vadd.f32 %v4006, %v4007
    %v4009 = vsel %vm2736, %v3880, 0.0
    %v4010 = vadd.f32 %v4008, %v4009
    %v4011 = vsel %vm2736, %v3881, 0.0
    %v4012 = vadd.f32 %v4010, %v4011
    %v4013 = vsel %vm2736, %v3882, 0.0
    %v4014 = vadd.f32 %v4012, %v4013
    %v4015 = vrot.slane %v4014, 4
    %v4016 = vadd.f32 %v4014, %v4015
    %v4017 = vrot.slane %v4016, 2
    %v4018 = vadd.f32 %v4016, %v4017
    %v4019 = vrot.slane %v4018, 1
    %v4020 = vadd.f32 %v4018, %v4019
    %v4021 = vmul.f32 %v3951, %v3752
    %v4022 = vmul.f32 %v4020, %v3752
    %v4023 = vadd.f32 %v4021, 1e-05
    %v4024 = vadd.f32 %v4022, 1e-05
    %v4025 = vrsqrt.pop %v4023
    %v4026 = vmul.f32 %v4025, %v4023
    %v4027 = vmul.f32 %v4026, %v4025
    %v4028 = vmul.f32 0.5, %v4027
    %v4029 = vsub.f32 1.5, %v4028
    %v4030 = vmul.f32 %v4025, %v4029
    %vm4031 = vweird.f32 %v4023
    %vm4032 = vweird.f32 %v4025
    %vm4033 = vmor %vm4031, %vm4032
    %v4034 = vsel %vm4033, %v4025, %v4030
    %v4035 = vrsqrt.pop %v4024
    %v4036 = vmul.f32 %v4035, %v4024
    %v4037 = vmul.f32 %v4036, %v4035
    %v4038 = vmul.f32 0.5, %v4037
    %v4039 = vsub.f32 1.5, %v4038
    %v4040 = vmul.f32 %v4035, %v4039
    %vm4041 = vweird.f32 %v4024
    %vm4042 = vweird.f32 %v4035
    %vm4043 = vmor %vm4041, %vm4042
    %v4044 = vsel %vm4043, %v4035, %v4040
    %v4045 = vmul.f32 %v3755, %v4034
    %v4046 = vmul.f32 %v3756, %v4034
    %v4047 = vmul.f32 %v3757, %v4034
    %v4048 = vmul.f32 %v3758, %v4034
    %v4049 = vmul.f32 %v3759, %v4034
    %v4050 = vmul.f32 %v3760, %v4034
    %v4051 = vmul.f32 %v3761, %v4034
    %v4052 = vmul.f32 %v3762, %v4034
    %v4053 = vmul.f32 %v3763, %v4034
    %v4054 = vmul.f32 %v3764, %v4034
    %v4055 = vmul.f32 %v3765, %v4034
    %v4056 = vmul.f32 %v3766, %v4034
    %v4057 = vmul.f32 %v3767, %v4034
    %v4058 = vmul.f32 %v3768, %v4034
    %v4059 = vmul.f32 %v3769, %v4034
    %v4060 = vmul.f32 %v3770, %v4034
    %v4061 = vmul.f32 %v3771, %v4034
    %v4062 = vmul.f32 %v3772, %v4034
    %v4063 = vmul.f32 %v3773, %v4034
    %v4064 = vmul.f32 %v3774, %v4034
    %v4065 = vmul.f32 %v3775, %v4034
    %v4066 = vmul.f32 %v3776, %v4034
    %v4067 = vmul.f32 %v3777, %v4034
    %v4068 = vmul.f32 %v3778, %v4034
    %v4069 = vmul.f32 %v3779, %v4034
    %v4070 = vmul.f32 %v3780, %v4034
    %v4071 = vmul.f32 %v3781, %v4034
    %v4072 = vmul.f32 %v3782, %v4034
    %v4073 = vmul.f32 %v3783, %v4034
    %v4074 = vmul.f32 %v3784, %v4034
    %v4075 = vmul.f32 %v3785, %v4034
    %v4076 = vmul.f32 %v3786, %v4034
    %v4077 = vmul.f32 %v3787, %v4044
    %v4078 = vmul.f32 %v3788, %v4044
    %v4079 = vmul.f32 %v3789, %v4044
    %v4080 = vmul.f32 %v3790, %v4044
    %v4081 = vmul.f32 %v3791, %v4044
    %v4082 = vmul.f32 %v3792, %v4044
    %v4083 = vmul.f32 %v3793, %v4044
    %v4084 = vmul.f32 %v3794, %v4044
    %v4085 = vmul.f32 %v3795, %v4044
    %v4086 = vmul.f32 %v3796, %v4044
    %v4087 = vmul.f32 %v3797, %v4044
    %v4088 = vmul.f32 %v3798, %v4044
    %v4089 = vmul.f32 %v3799, %v4044
    %v4090 = vmul.f32 %v3800, %v4044
    %v4091 = vmul.f32 %v3801, %v4044
    %v4092 = vmul.f32 %v3802, %v4044
    %v4093 = vmul.f32 %v3803, %v4044
    %v4094 = vmul.f32 %v3804, %v4044
    %v4095 = vmul.f32 %v3805, %v4044
    %v4096 = vmul.f32 %v3806, %v4044
    %v4097 = vmul.f32 %v3807, %v4044
    %v4098 = vmul.f32 %v3808, %v4044
    %v4099 = vmul.f32 %v3809, %v4044
    %v4100 = vmul.f32 %v3810, %v4044
    %v4101 = vmul.f32 %v3811, %v4044
    %v4102 = vmul.f32 %v3812, %v4044
    %v4103 = vmul.f32 %v3813, %v4044
    %v4104 = vmul.f32 %v3814, %v4044
    %v4105 = vmul.f32 %v3815, %v4044
    %v4106 = vmul.f32 %v3816, %v4044
    %v4107 = vmul.f32 %v3817, %v4044
    %v4108 = vmul.f32 %v3818, %v4044
    %v4110 = vperm.slane %v3606, 0
    %v4112 = vmul.f32 %v4045, %v4110
    %v4113 = vmul.f32 %v4046, %v4110
    %v4114 = vmul.f32 %v4047, %v4110
    %v4115 = vmul.f32 %v4048, %v4110
    %v4116 = vmul.f32 %v4049, %v4110
    %v4117 = vmul.f32 %v4050, %v4110
    %v4118 = vmul.f32 %v4051, %v4110
    %v4119 = vmul.f32 %v4052, %v4110
    %v4120 = vmul.f32 %v4053, %v4110
    %v4121 = vmul.f32 %v4054, %v4110
    %v4122 = vmul.f32 %v4055, %v4110
    %v4123 = vmul.f32 %v4056, %v4110
    %v4124 = vmul.f32 %v4057, %v4110
    %v4125 = vmul.f32 %v4058, %v4110
    %v4126 = vmul.f32 %v4059, %v4110
    %v4127 = vmul.f32 %v4060, %v4110
    %v4128 = vmul.f32 %v4061, %v4110
    %v4129 = vmul.f32 %v4062, %v4110
    %v4130 = vmul.f32 %v4063, %v4110
    %v4131 = vmul.f32 %v4064, %v4110
    %v4132 = vmul.f32 %v4065, %v4110
    %v4133 = vmul.f32 %v4066, %v4110
    %v4134 = vmul.f32 %v4067, %v4110
    %v4135 = vmul.f32 %v4068, %v4110
    %v4136 = vmul.f32 %v4069, %v4110
    %v4137 = vmul.f32 %v4070, %v4110
    %v4138 = vmul.f32 %v4071, %v4110
    %v4139 = vmul.f32 %v4072, %v4110
    %v4140 = vmul.f32 %v4073, %v4110
    %v4141 = vmul.f32 %v4074, %v4110
    %v4142 = vmul.f32 %v4075, %v4110
    %v4143 = vmul.f32 %v4076, %v4110
    %v4144 = vmul.f32 %v4077, %v4110
    %v4145 = vmul.f32 %v4078, %v4110
    %v4146 = vmul.f32 %v4079, %v4110
    %v4147 = vmul.f32 %v4080, %v4110
    %v4148 = vmul.f32 %v4081, %v4110
    %v4149 = vmul.f32 %v4082, %v4110
    %v4150 = vmul.f32 %v4083, %v4110
    %v4151 = vmul.f32 %v4084, %v4110
    %v4152 = vmul.f32 %v4085, %v4110
    %v4153 = vmul.f32 %v4086, %v4110
    %v4154 = vmul.f32 %v4087, %v4110
    %v4155 = vmul.f32 %v4088, %v4110
    %v4156 = vmul.f32 %v4089, %v4110
    %v4157 = vmul.f32 %v4090, %v4110
    %v4158 = vmul.f32 %v4091, %v4110
    %v4159 = vmul.f32 %v4092, %v4110
    %v4160 = vmul.f32 %v4093, %v4110
    %v4161 = vmul.f32 %v4094, %v4110
    %v4162 = vmul.f32 %v4095, %v4110
    %v4163 = vmul.f32 %v4096, %v4110
    %v4164 = vmul.f32 %v4097, %v4110
    %v4165 = vmul.f32 %v4098, %v4110
    %v4166 = vmul.f32 %v4099, %v4110
    %v4167 = vmul.f32 %v4100, %v4110
    %v4168 = vmul.f32 %v4101, %v4110
    %v4169 = vmul.f32 %v4102, %v4110
    %v4170 = vmul.f32 %v4103, %v4110
    %v4171 = vmul.f32 %v4104, %v4110
    %v4172 = vmul.f32 %v4105, %v4110
    %v4173 = vmul.f32 %v4106, %v4110
    %v4174 = vmul.f32 %v4107, %v4110
    %v4175 = vmul.f32 %v4108, %v4110
    %v4177 = vperm.slane %v3607, 0
    %v4179 = vadd.f32 %v4112, %v4177
    %v4180 = vadd.f32 %v4113, %v4177
    %v4181 = vadd.f32 %v4114, %v4177
    %v4182 = vadd.f32 %v4115, %v4177
    %v4183 = vadd.f32 %v4116, %v4177
    %v4184 = vadd.f32 %v4117, %v4177
    %v4185 = vadd.f32 %v4118, %v4177
    %v4186 = vadd.f32 %v4119, %v4177
    %v4187 = vadd.f32 %v4120, %v4177
    %v4188 = vadd.f32 %v4121, %v4177
    %v4189 = vadd.f32 %v4122, %v4177
    %v4190 = vadd.f32 %v4123, %v4177
    %v4191 = vadd.f32 %v4124, %v4177
    %v4192 = vadd.f32 %v4125, %v4177
    %v4193 = vadd.f32 %v4126, %v4177
    %v4194 = vadd.f32 %v4127, %v4177
    %v4195 = vadd.f32 %v4128, %v4177
    %v4196 = vadd.f32 %v4129, %v4177
    %v4197 = vadd.f32 %v4130, %v4177
    %v4198 = vadd.f32 %v4131, %v4177
    %v4199 = vadd.f32 %v4132, %v4177
    %v4200 = vadd.f32 %v4133, %v4177
    %v4201 = vadd.f32 %v4134, %v4177
    %v4202 = vadd.f32 %v4135, %v4177
    %v4203 = vadd.f32 %v4136, %v4177
    %v4204 = vadd.f32 %v4137, %v4177
    %v4205 = vadd.f32 %v4138, %v4177
    %v4206 = vadd.f32 %v4139, %v4177
    %v4207 = vadd.f32 %v4140, %v4177
    %v4208 = vadd.f32 %v4141, %v4177
    %v4209 = vadd.f32 %v4142, %v4177
    %v4210 = vadd.f32 %v4143, %v4177
    %v4211 = vadd.f32 %v4144, %v4177
    %v4212 = vadd.f32 %v4145, %v4177
    %v4213 = vadd.f32 %v4146, %v4177
    %v4214 = vadd.f32 %v4147, %v4177
    %v4215 = vadd.f32 %v4148, %v4177
    %v4216 = vadd.f32 %v4149, %v4177
    %v4217 = vadd.f32 %v4150, %v4177
    %v4218 = vadd.f32 %v4151, %v4177
    %v4219 = vadd.f32 %v4152, %v4177
    %v4220 = vadd.f32 %v4153, %v4177
    %v4221 = vadd.f32 %v4154, %v4177
    %v4222 = vadd.f32 %v4155, %v4177
    %v4223 = vadd.f32 %v4156, %v4177
    %v4224 = vadd.f32 %v4157, %v4177
    %v4225 = vadd.f32 %v4158, %v4177
    %v4226 = vadd.f32 %v4159, %v4177
    %v4227 = vadd.f32 %v4160, %v4177
    %v4228 = vadd.f32 %v4161, %v4177
    %v4229 = vadd.f32 %v4162, %v4177
    %v4230 = vadd.f32 %v4163, %v4177
    %v4231 = vadd.f32 %v4164, %v4177
    %v4232 = vadd.f32 %v4165, %v4177
    %v4233 = vadd.f32 %v4166, %v4177
    %v4234 = vadd.f32 %v4167, %v4177
    %v4235 = vadd.f32 %v4168, %v4177
    %v4236 = vadd.f32 %v4169, %v4177
    %v4237 = vadd.f32 %v4170, %v4177
    %v4238 = vadd.f32 %v4171, %v4177
    %v4239 = vadd.f32 %v4172, %v4177
    %v4240 = vadd.f32 %v4173, %v4177
    %v4241 = vadd.f32 %v4174, %v4177
    %v4242 = vadd.f32 %v4175, %v4177
    %v4243 = vmax.f32 %v4179, 0.0
    %v4244 = vmax.f32 %v4180, 0.0
    %v4245 = vmax.f32 %v4181, 0.0
    %v4246 = vmax.f32 %v4182, 0.0
    %v4247 = vmax.f32 %v4183, 0.0
    %v4248 = vmax.f32 %v4184, 0.0
    %v4249 = vmax.f32 %v4185, 0.0
    %v4250 = vmax.f32 %v4186, 0.0
    %v4251 = vmax.f32 %v4187, 0.0
    %v4252 = vmax.f32 %v4188, 0.0
    %v4253 = vmax.f32 %v4189, 0.0
    %v4254 = vmax.f32 %v4190, 0.0
    %v4255 = vmax.f32 %v4191, 0.0
    %v4256 = vmax.f32 %v4192, 0.0
    %v4257 = vmax.f32 %v4193, 0.0
    %v4258 = vmax.f32 %v4194, 0.0
    %v4259 = vmax.f32 %v4195, 0.0
    %v4260 = vmax.f32 %v4196, 0.0
    %v4261 = vmax.f32 %v4197, 0.0
    %v4262 = vmax.f32 %v4198, 0.0
    %v4263 = vmax.f32 %v4199, 0.0
    %v4264 = vmax.f32 %v4200, 0.0
    %v4265 = vmax.f32 %v4201, 0.0
    %v4266 = vmax.f32 %v4202, 0.0
    %v4267 = vmax.f32 %v4203, 0.0
    %v4268 = vmax.f32 %v4204, 0.0
    %v4269 = vmax.f32 %v4205, 0.0
    %v4270 = vmax.f32 %v4206, 0.0
    %v4271 = vmax.f32 %v4207, 0.0
    %v4272 = vmax.f32 %v4208, 0.0
    %v4273 = vmax.f32 %v4209, 0.0
    %v4274 = vmax.f32 %v4210, 0.0
    %v4275 = vmax.f32 %v4211, 0.0
    %v4276 = vmax.f32 %v4212, 0.0
    %v4277 = vmax.f32 %v4213, 0.0
    %v4278 = vmax.f32 %v4214, 0.0
    %v4279 = vmax.f32 %v4215, 0.0
    %v4280 = vmax.f32 %v4216, 0.0
    %v4281 = vmax.f32 %v4217, 0.0
    %v4282 = vmax.f32 %v4218, 0.0
    %v4283 = vmax.f32 %v4219, 0.0
    %v4284 = vmax.f32 %v4220, 0.0
    %v4285 = vmax.f32 %v4221, 0.0
    %v4286 = vmax.f32 %v4222, 0.0
    %v4287 = vmax.f32 %v4223, 0.0
    %v4288 = vmax.f32 %v4224, 0.0
    %v4289 = vmax.f32 %v4225, 0.0
    %v4290 = vmax.f32 %v4226, 0.0
    %v4291 = vmax.f32 %v4227, 0.0
    %v4292 = vmax.f32 %v4228, 0.0
    %v4293 = vmax.f32 %v4229, 0.0
    %v4294 = vmax.f32 %v4230, 0.0
    %v4295 = vmax.f32 %v4231, 0.0
    %v4296 = vmax.f32 %v4232, 0.0
    %v4297 = vmax.f32 %v4233, 0.0
    %v4298 = vmax.f32 %v4234, 0.0
    %v4299 = vmax.f32 %v4235, 0.0
    %v4300 = vmax.f32 %v4236, 0.0
    %v4301 = vmax.f32 %v4237, 0.0
    %v4302 = vmax.f32 %v4238, 0.0
    %v4303 = vmax.f32 %v4239, 0.0
    %v4304 = vmax.f32 %v4240, 0.0
    %v4305 = vmax.f32 %v4241, 0.0
    %v4306 = vmax.f32 %v4242, 0.0
    %4307 = vst.msk [vmem:[#allocation2] sm:$0xff] %vm2736, 0.0
    %4308 = vst.msk [vmem:[#allocation2 + $0x8] sm:$0xff] %vm2736, 0.0
    %vm4309 = vcmask 58368
    %4310 = vst.msk [vmem:[#allocation2 + $0x10] sm:$0x3] %vm4309, 0.0
    %4311 = vst.msk [vmem:[#allocation2 + $0x1b0] sm:$0xff] %vm2736, 0.0
    %4312 = vst.msk [vmem:[#allocation2 + $0x1b8] sm:$0xff] %vm2736, 0.0
    %4313 = vst.msk [vmem:[#allocation2 + $0x1c0] sm:$0x3] %vm4309, 0.0
    %s4314 = scalar_lea.vmem [#allocation2], 408
    %4315 = vst.msk [vmem:[%s4314] sm:$0xff] %vm2736, 0.0
    %4316 = vst.msk [vmem:[%s4314 + $0x8] sm:$0xff] %vm2736, 0.0
    %4317 = vst.msk [vmem:[%s4314 + $0x10] sm:$0x3] %vm4309, 0.0
    %4318 = vst.msk [vmem:[%s4314 + $0x1b0] sm:$0xff] %vm2736, 0.0
    %4319 = vst.msk [vmem:[%s4314 + $0x1b8] sm:$0xff] %vm2736, 0.0
    %4320 = vst.msk [vmem:[%s4314 + $0x1c0] sm:$0x3] %vm4309, 0.0
    %s4321 = scalar_lea.vmem [#allocation2], 24
    %vm4322 = vcmask 57344
    %4323 = vst.msk [vmem:[%s4321] sm:$0x1] %vm4322, 0.0
    %4324 = vst.msk [vmem:[%s4321 + $0x18] sm:$0x1] %vm4322, 0.0
    %4325 = vst.msk [vmem:[%s4321 + $0x30] sm:$0x1] %vm4322, 0.0
    %4326 = vst.msk [vmem:[%s4321 + $0x48] sm:$0x1] %vm4322, 0.0
    %4327 = vst.msk [vmem:[%s4321 + $0x60] sm:$0x1] %vm4322, 0.0
    %4328 = vst.msk [vmem:[%s4321 + $0x78] sm:$0x1] %vm4322, 0.0
    %4329 = vst.msk [vmem:[%s4321 + $0x90] sm:$0x1] %vm4322, 0.0
    %4330 = vst.msk [vmem:[%s4321 + $0xa8] sm:$0x1] %vm4322, 0.0
    %4331 = vst.msk [vmem:[%s4321 + $0xc0] sm:$0x1] %vm4322, 0.0
    %4332 = vst.msk [vmem:[%s4321 + $0xd8] sm:$0x1] %vm4322, 0.0
    %4333 = vst.msk [vmem:[%s4321 + $0xf0] sm:$0x1] %vm4322, 0.0
    %4334 = vst.msk [vmem:[%s4321 + $0x108] sm:$0x1] %vm4322, 0.0
    %4335 = vst.msk [vmem:[%s4321 + $0x120] sm:$0x1] %vm4322, 0.0
    %4336 = vst.msk [vmem:[%s4321 + $0x138] sm:$0x1] %vm4322, 0.0
    %4337 = vst.msk [vmem:[%s4321 + $0x150] sm:$0x1] %vm4322, 0.0
    %4338 = vst.msk [vmem:[%s4321 + $0x168] sm:$0x1] %vm4322, 0.0
    %4339 = vst.msk [vmem:[%s4321 + $0x1b0] sm:$0x1] %vm4322, 0.0
    %4340 = vst.msk [vmem:[%s4321 + $0x1c8] sm:$0x1] %vm4322, 0.0
    %4341 = vst.msk [vmem:[%s4321 + $0x1e0] sm:$0x1] %vm4322, 0.0
    %4342 = vst.msk [vmem:[%s4321 + $0x1f8] sm:$0x1] %vm4322, 0.0
    %4343 = vst.msk [vmem:[%s4321 + $0x210] sm:$0x1] %vm4322, 0.0
    %4344 = vst.msk [vmem:[%s4321 + $0x228] sm:$0x1] %vm4322, 0.0
    %4345 = vst.msk [vmem:[%s4321 + $0x240] sm:$0x1] %vm4322, 0.0
    %4346 = vst.msk [vmem:[%s4321 + $0x258] sm:$0x1] %vm4322, 0.0
    %4347 = vst.msk [vmem:[%s4321 + $0x270] sm:$0x1] %vm4322, 0.0
    %4348 = vst.msk [vmem:[%s4321 + $0x288] sm:$0x1] %vm4322, 0.0
    %4349 = vst.msk [vmem:[%s4321 + $0x2a0] sm:$0x1] %vm4322, 0.0
    %4350 = vst.msk [vmem:[%s4321 + $0x2b8] sm:$0x1] %vm4322, 0.0
    %4351 = vst.msk [vmem:[%s4321 + $0x2d0] sm:$0x1] %vm4322, 0.0
    %4352 = vst.msk [vmem:[%s4321 + $0x2e8] sm:$0x1] %vm4322, 0.0
    %4353 = vst.msk [vmem:[%s4321 + $0x300] sm:$0x1] %vm4322, 0.0
    %4354 = vst.msk [vmem:[%s4321 + $0x318] sm:$0x1] %vm4322, 0.0
    %4355 = vst.msk [vmem:[%s4321 + $0x11] sm:$0x1] %vm4322, 0.0
    %4356 = vst.msk [vmem:[%s4321 + $0x29] sm:$0x1] %vm4322, 0.0
    %4357 = vst.msk [vmem:[%s4321 + $0x41] sm:$0x1] %vm4322, 0.0
    %4358 = vst.msk [vmem:[%s4321 + $0x59] sm:$0x1] %vm4322, 0.0
    %4359 = vst.msk [vmem:[%s4321 + $0x71] sm:$0x1] %vm4322, 0.0
    %4360 = vst.msk [vmem:[%s4321 + $0x89] sm:$0x1] %vm4322, 0.0
    %4361 = vst.msk [vmem:[%s4321 + $0xa1] sm:$0x1] %vm4322, 0.0
    %4362 = vst.msk [vmem:[%s4321 + $0xb9] sm:$0x1] %vm4322, 0.0
    %4363 = vst.msk [vmem:[%s4321 + $0xd1] sm:$0x1] %vm4322, 0.0
    %4364 = vst.msk [vmem:[%s4321 + $0xe9] sm:$0x1] %vm4322, 0.0
    %4365 = vst.msk [vmem:[%s4321 + $0x101] sm:$0x1] %vm4322, 0.0
    %4366 = vst.msk [vmem:[%s4321 + $0x119] sm:$0x1] %vm4322, 0.0
    %4367 = vst.msk [vmem:[%s4321 + $0x131] sm:$0x1] %vm4322, 0.0
    %4368 = vst.msk [vmem:[%s4321 + $0x149] sm:$0x1] %vm4322, 0.0
    %4369 = vst.msk [vmem:[%s4321 + $0x161] sm:$0x1] %vm4322, 0.0
    %4370 = vst.msk [vmem:[%s4321 + $0x179] sm:$0x1] %vm4322, 0.0
    %4371 = vst.msk [vmem:[%s4321 + $0x1c1] sm:$0x1] %vm4322, 0.0
    %4372 = vst.msk [vmem:[%s4321 + $0x1d9] sm:$0x1] %vm4322, 0.0
    %4373 = vst.msk [vmem:[%s4321 + $0x1f1] sm:$0x1] %vm4322, 0.0
    %4374 = vst.msk [vmem:[%s4321 + $0x209] sm:$0x1] %vm4322, 0.0
    %4375 = vst.msk [vmem:[%s4321 + $0x221] sm:$0x1] %vm4322, 0.0
    %4376 = vst.msk [vmem:[%s4321 + $0x239] sm:$0x1] %vm4322, 0.0
    %4377 = vst.msk [vmem:[%s4321 + $0x251] sm:$0x1] %vm4322, 0.0
    %4378 = vst.msk [vmem:[%s4321 + $0x269] sm:$0x1] %vm4322, 0.0
    %4379 = vst.msk [vmem:[%s4321 + $0x281] sm:$0x1] %vm4322, 0.0
    %4380 = vst.msk [vmem:[%s4321 + $0x299] sm:$0x1] %vm4322, 0.0
    %4381 = vst.msk [vmem:[%s4321 + $0x2b1] sm:$0x1] %vm4322, 0.0
    %4382 = vst.msk [vmem:[%s4321 + $0x2c9] sm:$0x1] %vm4322, 0.0
    %4383 = vst.msk [vmem:[%s4321 + $0x2e1] sm:$0x1] %vm4322, 0.0
    %4384 = vst.msk [vmem:[%s4321 + $0x2f9] sm:$0x1] %vm4322, 0.0
    %4385 = vst.msk [vmem:[%s4321 + $0x311] sm:$0x1] %vm4322, 0.0
    %4386 = vst.msk [vmem:[%s4321 + $0x329] sm:$0x1] %vm4322, 0.0
    %4387 = vst.msk [vmem:[%s4321 + $0x1] sm:$0xff] %vm2736, %v4243
    %4388 = vst.msk [vmem:[%s4321 + $0x9] sm:$0xff] %vm2736, %v4244
    %4389 = vst.msk [vmem:[%s4321 + $0x19] sm:$0xff] %vm2736, %v4245
    %4390 = vst.msk [vmem:[%s4321 + $0x21] sm:$0xff] %vm2736, %v4246
    %4391 = vst.msk [vmem:[%s4321 + $0x31] sm:$0xff] %vm2736, %v4247
    %4392 = vst.msk [vmem:[%s4321 + $0x39] sm:$0xff] %vm2736, %v4248
    %4393 = vst.msk [vmem:[%s4321 + $0x49] sm:$0xff] %vm2736, %v4249
    %4394 = vst.msk [vmem:[%s4321 + $0x51] sm:$0xff] %vm2736, %v4250
    %4395 = vst.msk [vmem:[%s4321 + $0x61] sm:$0xff] %vm2736, %v4251
    %4396 = vst.msk [vmem:[%s4321 + $0x69] sm:$0xff] %vm2736, %v4252
    %4397 = vst.msk [vmem:[%s4321 + $0x79] sm:$0xff] %vm2736, %v4253
    %4398 = vst.msk [vmem:[%s4321 + $0x81] sm:$0xff] %vm2736, %v4254
    %4399 = vst.msk [vmem:[%s4321 + $0x91] sm:$0xff] %vm2736, %v4255
    %4400 = vst.msk [vmem:[%s4321 + $0x99] sm:$0xff] %vm2736, %v4256
    %4401 = vst.msk [vmem:[%s4321 + $0xa9] sm:$0xff] %vm2736, %v4257
    %4402 = vst.msk [vmem:[%s4321 + $0xb1] sm:$0xff] %vm2736, %v4258
    %4403 = vst.msk [vmem:[%s4321 + $0xc1] sm:$0xff] %vm2736, %v4259
    %4404 = vst.msk [vmem:[%s4321 + $0xc9] sm:$0xff] %vm2736, %v4260
    %4405 = vst.msk [vmem:[%s4321 + $0xd9] sm:$0xff] %vm2736, %v4261
    %4406 = vst.msk [vmem:[%s4321 + $0xe1] sm:$0xff] %vm2736, %v4262
    %4407 = vst.msk [vmem:[%s4321 + $0xf1] sm:$0xff] %vm2736, %v4263
    %4408 = vst.msk [vmem:[%s4321 + $0xf9] sm:$0xff] %vm2736, %v4264
    %4409 = vst.msk [vmem:[%s4321 + $0x109] sm:$0xff] %vm2736, %v4265
    %4410 = vst.msk [vmem:[%s4321 + $0x111] sm:$0xff] %vm2736, %v4266
    %4411 = vst.msk [vmem:[%s4321 + $0x121] sm:$0xff] %vm2736, %v4267
    %4412 = vst.msk [vmem:[%s4321 + $0x129] sm:$0xff] %vm2736, %v4268
    %4413 = vst.msk [vmem:[%s4321 + $0x139] sm:$0xff] %vm2736, %v4269
    %4414 = vst.msk [vmem:[%s4321 + $0x141] sm:$0xff] %vm2736, %v4270
    %4415 = vst.msk [vmem:[%s4321 + $0x151] sm:$0xff] %vm2736, %v4271
    %4416 = vst.msk [vmem:[%s4321 + $0x159] sm:$0xff] %vm2736, %v4272
    %4417 = vst.msk [vmem:[%s4321 + $0x169] sm:$0xff] %vm2736, %v4273
    %4418 = vst.msk [vmem:[%s4321 + $0x171] sm:$0xff] %vm2736, %v4274
    %4419 = vst.msk [vmem:[%s4321 + $0x1b1] sm:$0xff] %vm2736, %v4275
    %4420 = vst.msk [vmem:[%s4321 + $0x1b9] sm:$0xff] %vm2736, %v4276
    %4421 = vst.msk [vmem:[%s4321 + $0x1c9] sm:$0xff] %vm2736, %v4277
    %4422 = vst.msk [vmem:[%s4321 + $0x1d1] sm:$0xff] %vm2736, %v4278
    %4423 = vst.msk [vmem:[%s4321 + $0x1e1] sm:$0xff] %vm2736, %v4279
    %4424 = vst.msk [vmem:[%s4321 + $0x1e9] sm:$0xff] %vm2736, %v4280
    %4425 = vst.msk [vmem:[%s4321 + $0x1f9] sm:$0xff] %vm2736, %v4281
    %4426 = vst.msk [vmem:[%s4321 + $0x201] sm:$0xff] %vm2736, %v4282
    %4427 = vst.msk [vmem:[%s4321 + $0x211] sm:$0xff] %vm2736, %v4283
    %4428 = vst.msk [vmem:[%s4321 + $0x219] sm:$0xff] %vm2736, %v4284
    %4429 = vst.msk [vmem:[%s4321 + $0x229] sm:$0xff] %vm2736, %v4285
    %4430 = vst.msk [vmem:[%s4321 + $0x231] sm:$0xff] %vm2736, %v4286
    %4431 = vst.msk [vmem:[%s4321 + $0x241] sm:$0xff] %vm2736, %v4287
    %4432 = vst.msk [vmem:[%s4321 + $0x249] sm:$0xff] %vm2736, %v4288
    %4433 = vst.msk [vmem:[%s4321 + $0x259] sm:$0xff] %vm2736, %v4289
    %4434 = vst.msk [vmem:[%s4321 + $0x261] sm:$0xff] %vm2736, %v4290
    %4435 = vst.msk [vmem:[%s4321 + $0x271] sm:$0xff] %vm2736, %v4291
    %4436 = vst.msk [vmem:[%s4321 + $0x279] sm:$0xff] %vm2736, %v4292
    %4437 = vst.msk [vmem:[%s4321 + $0x289] sm:$0xff] %vm2736, %v4293
    %4438 = vst.msk [vmem:[%s4321 + $0x291] sm:$0xff] %vm2736, %v4294
    %4439 = vst.msk [vmem:[%s4321 + $0x2a1] sm:$0xff] %vm2736, %v4295
    %4440 = vst.msk [vmem:[%s4321 + $0x2a9] sm:$0xff] %vm2736, %v4296
    %4441 = vst.msk [vmem:[%s4321 + $0x2b9] sm:$0xff] %vm2736, %v4297
    %4442 = vst.msk [vmem:[%s4321 + $0x2c1] sm:$0xff] %vm2736, %v4298
    %4443 = vst.msk [vmem:[%s4321 + $0x2d1] sm:$0xff] %vm2736, %v4299
    %4444 = vst.msk [vmem:[%s4321 + $0x2d9] sm:$0xff] %vm2736, %v4300
    %4445 = vst.msk [vmem:[%s4321 + $0x2e9] sm:$0xff] %vm2736, %v4301
    %4446 = vst.msk [vmem:[%s4321 + $0x2f1] sm:$0xff] %vm2736, %v4302
    %4447 = vst.msk [vmem:[%s4321 + $0x301] sm:$0xff] %vm2736, %v4303
    %4448 = vst.msk [vmem:[%s4321 + $0x309] sm:$0xff] %vm2736, %v4304
    %4449 = vst.msk [vmem:[%s4321 + $0x319] sm:$0xff] %vm2736, %v4305
    %4450 = vst.msk [vmem:[%s4321 + $0x321] sm:$0xff] %vm2736, %v4306
    %v4451 = vld [vmem:[#allocation2] sm:$0xff]
    %v4452 = vld [vmem:[#allocation2 + $0x8] sm:$0xff]
    %v4453 = vld [vmem:[#allocation2 + $0x18] sm:$0xff]
    %v4454 = vld [vmem:[#allocation2 + $0x20] sm:$0xff]
    %v4455 = vld [vmem:[#allocation2 + $0x30] sm:$0xff]
    %v4456 = vld [vmem:[#allocation2 + $0x38] sm:$0xff]
    %v4457 = vld [vmem:[#allocation2 + $0x48] sm:$0xff]
    %v4458 = vld [vmem:[#allocation2 + $0x50] sm:$0xff]
    %v4459 = vld [vmem:[#allocation2 + $0x60] sm:$0xff]
    %v4460 = vld [vmem:[#allocation2 + $0x68] sm:$0xff]
    %v4461 = vld [vmem:[#allocation2 + $0x78] sm:$0xff]
    %v4462 = vld [vmem:[#allocation2 + $0x80] sm:$0xff]
    %v4463 = vld [vmem:[#allocation2 + $0x90] sm:$0xff]
    %v4464 = vld [vmem:[#allocation2 + $0x98] sm:$0xff]
    %v4465 = vld [vmem:[#allocation2 + $0xa8] sm:$0xff]
    %v4466 = vld [vmem:[#allocation2 + $0xb0] sm:$0xff]
    %v4467 = vld [vmem:[#allocation2 + $0xc0] sm:$0xff]
    %v4468 = vld [vmem:[#allocation2 + $0xc8] sm:$0xff]
    %v4469 = vld [vmem:[#allocation2 + $0xd8] sm:$0xff]
    %v4470 = vld [vmem:[#allocation2 + $0xe0] sm:$0xff]
    %v4471 = vld [vmem:[#allocation2 + $0xf0] sm:$0xff]
    %v4472 = vld [vmem:[#allocation2 + $0xf8] sm:$0xff]
    %v4473 = vld [vmem:[#allocation2 + $0x108] sm:$0xff]
    %v4474 = vld [vmem:[#allocation2 + $0x110] sm:$0xff]
    %v4475 = vld [vmem:[#allocation2 + $0x120] sm:$0xff]
    %v4476 = vld [vmem:[#allocation2 + $0x128] sm:$0xff]
    %v4477 = vld [vmem:[#allocation2 + $0x138] sm:$0xff]
    %v4478 = vld [vmem:[#allocation2 + $0x140] sm:$0xff]
    %v4479 = vld [vmem:[#allocation2 + $0x150] sm:$0xff]
    %v4480 = vld [vmem:[#allocation2 + $0x158] sm:$0xff]
    %v4481 = vld [vmem:[#allocation2 + $0x168] sm:$0xff]
    %v4482 = vld [vmem:[#allocation2 + $0x170] sm:$0xff]
    %v4483 = vld [vmem:[#allocation2 + $0x1b0] sm:$0xff]
    %v4484 = vld [vmem:[#allocation2 + $0x1b8] sm:$0xff]
    %v4485 = vld [vmem:[#allocation2 + $0x1c8] sm:$0xff]
    %v4486 = vld [vmem:[#allocation2 + $0x1d0] sm:$0xff]
    %v4487 = vld [vmem:[#allocation2 + $0x1e0] sm:$0xff]
    %v4488 = vld [vmem:[#allocation2 + $0x1e8] sm:$0xff]
    %v4489 = vld [vmem:[#allocation2 + $0x1f8] sm:$0xff]
    %v4490 = vld [vmem:[#allocation2 + $0x200] sm:$0xff]
    %v4491 = vld [vmem:[#allocation2 + $0x210] sm:$0xff]
    %v4492 = vld [vmem:[#allocation2 + $0x218] sm:$0xff]
    %v4493 = vld [vmem:[#allocation2 + $0x228] sm:$0xff]
    %v4494 = vld [vmem:[#allocation2 + $0x230] sm:$0xff]
    %v4495 = vld [vmem:[#allocation2 + $0x240] sm:$0xff]
    %v4496 = vld [vmem:[#allocation2 + $0x248] sm:$0xff]
    %v4497 = vld [vmem:[#allocation2 + $0x258] sm:$0xff]
    %v4498 = vld [vmem:[#allocation2 + $0x260] sm:$0xff]
    %v4499 = vld [vmem:[#allocation2 + $0x270] sm:$0xff]
    %v4500 = vld [vmem:[#allocation2 + $0x278] sm:$0xff]
    %v4501 = vld [vmem:[#allocation2 + $0x288] sm:$0xff]
    %v4502 = vld [vmem:[#allocation2 + $0x290] sm:$0xff]
    %v4503 = vld [vmem:[#allocation2 + $0x2a0] sm:$0xff]
    %v4504 = vld [vmem:[#allocation2 + $0x2a8] sm:$0xff]
    %v4505 = vld [vmem:[#allocation2 + $0x2b8] sm:$0xff]
    %v4506 = vld [vmem:[#allocation2 + $0x2c0] sm:$0xff]
    %v4507 = vld [vmem:[#allocation2 + $0x2d0] sm:$0xff]
    %v4508 = vld [vmem:[#allocation2 + $0x2d8] sm:$0xff]
    %v4509 = vld [vmem:[#allocation2 + $0x2e8] sm:$0xff]
    %v4510 = vld [vmem:[#allocation2 + $0x2f0] sm:$0xff]
    %v4511 = vld [vmem:[#allocation2 + $0x300] sm:$0xff]
    %v4512 = vld [vmem:[#allocation2 + $0x308] sm:$0xff]
    %v4513 = vld [vmem:[#allocation2 + $0x318] sm:$0xff]
    %v4514 = vld [vmem:[#allocation2 + $0x320] sm:$0xff]
    %v4515 = vld [vmem:[#allocation2 + $0x1] sm:$0xff]
    %v4516 = vld [vmem:[#allocation2 + $0x9] sm:$0xff]
    %v4517 = vld [vmem:[#allocation2 + $0x19] sm:$0xff]
    %v4518 = vld [vmem:[#allocation2 + $0x21] sm:$0xff]
    %v4519 = vld [vmem:[#allocation2 + $0x31] sm:$0xff]
    %v4520 = vld [vmem:[#allocation2 + $0x39] sm:$0xff]
    %v4521 = vld [vmem:[#allocation2 + $0x49] sm:$0xff]
    %v4522 = vld [vmem:[#allocation2 + $0x51] sm:$0xff]
    %v4523 = vld [vmem:[#allocation2 + $0x61] sm:$0xff]
    %v4524 = vld [vmem:[#allocation2 + $0x69] sm:$0xff]
    %v4525 = vld [vmem:[#allocation2 + $0x79] sm:$0xff]
    %v4526 = vld [vmem:[#allocation2 + $0x81] sm:$0xff]
    %v4527 = vld [vmem:[#allocation2 + $0x91] sm:$0xff]
    %v4528 = vld [vmem:[#allocation2 + $0x99] sm:$0xff]
    %v4529 = vld [vmem:[#allocation2 + $0xa9] sm:$0xff]
    %v4530 = vld [vmem:[#allocation2 + $0xb1] sm:$0xff]
    %v4531 = vld [vmem:[#allocation2 + $0xc1] sm:$0xff]
    %v4532 = vld [vmem:[#allocation2 + $0xc9] sm:$0xff]
    %v4533 = vld [vmem:[#allocation2 + $0xd9] sm:$0xff]
    %v4534 = vld [vmem:[#allocation2 + $0xe1] sm:$0xff]
    %v4535 = vld [vmem:[#allocation2 + $0xf1] sm:$0xff]
    %v4536 = vld [vmem:[#allocation2 + $0xf9] sm:$0xff]
    %v4537 = vld [vmem:[#allocation2 + $0x109] sm:$0xff]
    %v4538 = vld [vmem:[#allocation2 + $0x111] sm:$0xff]
    %v4539 = vld [vmem:[#allocation2 + $0x121] sm:$0xff]
    %v4540 = vld [vmem:[#allocation2 + $0x129] sm:$0xff]
    %v4541 = vld [vmem:[#allocation2 + $0x139] sm:$0xff]
    %v4542 = vld [vmem:[#allocation2 + $0x141] sm:$0xff]
    %v4543 = vld [vmem:[#allocation2 + $0x151] sm:$0xff]
    %v4544 = vld [vmem:[#allocation2 + $0x159] sm:$0xff]
    %v4545 = vld [vmem:[#allocation2 + $0x169] sm:$0xff]
    %v4546 = vld [vmem:[#allocation2 + $0x171] sm:$0xff]
    %v4547 = vld [vmem:[#allocation2 + $0x1b1] sm:$0xff]
    %v4548 = vld [vmem:[#allocation2 + $0x1b9] sm:$0xff]
    %v4549 = vld [vmem:[#allocation2 + $0x1c9] sm:$0xff]
    %v4550 = vld [vmem:[#allocation2 + $0x1d1] sm:$0xff]
    %v4551 = vld [vmem:[#allocation2 + $0x1e1] sm:$0xff]
    %v4552 = vld [vmem:[#allocation2 + $0x1e9] sm:$0xff]
    %v4553 = vld [vmem:[#allocation2 + $0x1f9] sm:$0xff]
    %v4554 = vld [vmem:[#allocation2 + $0x201] sm:$0xff]
    %v4555 = vld [vmem:[#allocation2 + $0x211] sm:$0xff]
    %v4556 = vld [vmem:[#allocation2 + $0x219] sm:$0xff]
    %v4557 = vld [vmem:[#allocation2 + $0x229] sm:$0xff]
    %v4558 = vld [vmem:[#allocation2 + $0x231] sm:$0xff]
    %v4559 = vld [vmem:[#allocation2 + $0x241] sm:$0xff]
    %v4560 = vld [vmem:[#allocation2 + $0x249] sm:$0xff]
    %v4561 = vld [vmem:[#allocation2 + $0x259] sm:$0xff]
    %v4562 = vld [vmem:[#allocation2 + $0x261] sm:$0xff]
    %v4563 = vld [vmem:[#allocation2 + $0x271] sm:$0xff]
    %v4564 = vld [vmem:[#allocation2 + $0x279] sm:$0xff]
    %v4565 = vld [vmem:[#allocation2 + $0x289] sm:$0xff]
    %v4566 = vld [vmem:[#allocation2 + $0x291] sm:$0xff]
    %v4567 = vld [vmem:[#allocation2 + $0x2a1] sm:$0xff]
    %v4568 = vld [vmem:[#allocation2 + $0x2a9] sm:$0xff]
    %v4569 = vld [vmem:[#allocation2 + $0x2b9] sm:$0xff]
    %v4570 = vld [vmem:[#allocation2 + $0x2c1] sm:$0xff]
    %v4571 = vld [vmem:[#allocation2 + $0x2d1] sm:$0xff]
    %v4572 = vld [vmem:[#allocation2 + $0x2d9] sm:$0xff]
    %v4573 = vld [vmem:[#allocation2 + $0x2e9] sm:$0xff]
    %v4574 = vld [vmem:[#allocation2 + $0x2f1] sm:$0xff]
    %v4575 = vld [vmem:[#allocation2 + $0x301] sm:$0xff]
    %v4576 = vld [vmem:[#allocation2 + $0x309] sm:$0xff]
    %v4577 = vld [vmem:[#allocation2 + $0x319] sm:$0xff]
    %v4578 = vld [vmem:[#allocation2 + $0x321] sm:$0xff]
    %v4579 = vld [vmem:[#allocation2 + $0x2] sm:$0xff]
    %v4580 = vld [vmem:[#allocation2 + $0xa] sm:$0xff]
    %v4581 = vld [vmem:[#allocation2 + $0x1a] sm:$0xff]
    %v4582 = vld [vmem:[#allocation2 + $0x22] sm:$0xff]
    %v4583 = vld [vmem:[#allocation2 + $0x32] sm:$0xff]
    %v4584 = vld [vmem:[#allocation2 + $0x3a] sm:$0xff]
    %v4585 = vld [vmem:[#allocation2 + $0x4a] sm:$0xff]
    %v4586 = vld [vmem:[#allocation2 + $0x52] sm:$0xff]
    %v4587 = vld [vmem:[#allocation2 + $0x62] sm:$0xff]
    %v4588 = vld [vmem:[#allocation2 + $0x6a] sm:$0xff]
    %v4589 = vld [vmem:[#allocation2 + $0x7a] sm:$0xff]
    %v4590 = vld [vmem:[#allocation2 + $0x82] sm:$0xff]
    %v4591 = vld [vmem:[#allocation2 + $0x92] sm:$0xff]
    %v4592 = vld [vmem:[#allocation2 + $0x9a] sm:$0xff]
    %v4593 = vld [vmem:[#allocation2 + $0xaa] sm:$0xff]
    %v4594 = vld [vmem:[#allocation2 + $0xb2] sm:$0xff]
    %v4595 = vld [vmem:[#allocation2 + $0xc2] sm:$0xff]
    %v4596 = vld [vmem:[#allocation2 + $0xca] sm:$0xff]
    %v4597 = vld [vmem:[#allocation2 + $0xda] sm:$0xff]
    %v4598 = vld [vmem:[#allocation2 + $0xe2] sm:$0xff]
    %v4599 = vld [vmem:[#allocation2 + $0xf2] sm:$0xff]
    %v4600 = vld [vmem:[#allocation2 + $0xfa] sm:$0xff]
    %v4601 = vld [vmem:[#allocation2 + $0x10a] sm:$0xff]
    %v4602 = vld [vmem:[#allocation2 + $0x112] sm:$0xff]
    %v4603 = vld [vmem:[#allocation2 + $0x122] sm:$0xff]
    %v4604 = vld [vmem:[#allocation2 + $0x12a] sm:$0xff]
    %v4605 = vld [vmem:[#allocation2 + $0x13a] sm:$0xff]
    %v4606 = vld [vmem:[#allocation2 + $0x142] sm:$0xff]
    %v4607 = vld [vmem:[#allocation2 + $0x152] sm:$0xff]
    %v4608 = vld [vmem:[#allocation2 + $0x15a] sm:$0xff]
    %v4609 = vld [vmem:[#allocation2 + $0x16a] sm:$0xff]
    %v4610 = vld [vmem:[#allocation2 + $0x172] sm:$0xff]
    %v4611 = vld [vmem:[#allocation2 + $0x1b2] sm:$0xff]
    %v4612 = vld [vmem:[#allocation2 + $0x1ba] sm:$0xff]
    %v4613 = vld [vmem:[#allocation2 + $0x1ca] sm:$0xff]
    %v4614 = vld [vmem:[#allocation2 + $0x1d2] sm:$0xff]
    %v4615 = vld [vmem:[#allocation2 + $0x1e2] sm:$0xff]
    %v4616 = vld [vmem:[#allocation2 + $0x1ea] sm:$0xff]
    %v4617 = vld [vmem:[#allocation2 + $0x1fa] sm:$0xff]
    %v4618 = vld [vmem:[#allocation2 + $0x202] sm:$0xff]
    %v4619 = vld [vmem:[#allocation2 + $0x212] sm:$0xff]
    %v4620 = vld [vmem:[#allocation2 + $0x21a] sm:$0xff]
    %v4621 = vld [vmem:[#allocation2 + $0x22a] sm:$0xff]
    %v4622 = vld [vmem:[#allocation2 + $0x232] sm:$0xff]
    %v4623 = vld [vmem:[#allocation2 + $0x242] sm:$0xff]
    %v4624 = vld [vmem:[#allocation2 + $0x24a] sm:$0xff]
    %v4625 = vld [vmem:[#allocation2 + $0x25a] sm:$0xff]
    %v4626 = vld [vmem:[#allocation2 + $0x262] sm:$0xff]
    %v4627 = vld [vmem:[#allocation2 + $0x272] sm:$0xff]
    %v4628 = vld [vmem:[#allocation2 + $0x27a] sm:$0xff]
    %v4629 = vld [vmem:[#allocation2 + $0x28a] sm:$0xff]
    %v4630 = vld [vmem:[#allocation2 + $0x292] sm:$0xff]
    %v4631 = vld [vmem:[#allocation2 + $0x2a2] sm:$0xff]
    %v4632 = vld [vmem:[#allocation2 + $0x2aa] sm:$0xff]
    %v4633 = vld [vmem:[#allocation2 + $0x2ba] sm:$0xff]
    %v4634 = vld [vmem:[#allocation2 + $0x2c2] sm:$0xff]
    %v4635 = vld [vmem:[#allocation2 + $0x2d2] sm:$0xff]
    %v4636 = vld [vmem:[#allocation2 + $0x2da] sm:$0xff]
    %v4637 = vld [vmem:[#allocation2 + $0x2ea] sm:$0xff]
    %v4638 = vld [vmem:[#allocation2 + $0x2f2] sm:$0xff]
    %v4639 = vld [vmem:[#allocation2 + $0x302] sm:$0xff]
    %v4640 = vld [vmem:[#allocation2 + $0x30a] sm:$0xff]
    %v4641 = vld [vmem:[#allocation2 + $0x31a] sm:$0xff]
    %v4642 = vld [vmem:[#allocation2 + $0x322] sm:$0xff]
    %v4643 = vld [vmem:[%s4321] sm:$0xff]
    %v4644 = vld [vmem:[%s4321 + $0x8] sm:$0xff]
    %v4645 = vld [vmem:[%s4321 + $0x18] sm:$0xff]
    %v4646 = vld [vmem:[%s4321 + $0x20] sm:$0xff]
    %v4647 = vld [vmem:[%s4321 + $0x30] sm:$0xff]
    %v4648 = vld [vmem:[%s4321 + $0x38] sm:$0xff]
    %v4649 = vld [vmem:[%s4321 + $0x48] sm:$0xff]
    %v4650 = vld [vmem:[%s4321 + $0x50] sm:$0xff]
    %v4651 = vld [vmem:[%s4321 + $0x60] sm:$0xff]
    %v4652 = vld [vmem:[%s4321 + $0x68] sm:$0xff]
    %v4653 = vld [vmem:[%s4321 + $0x78] sm:$0xff]
    %v4654 = vld [vmem:[%s4321 + $0x80] sm:$0xff]
    %v4655 = vld [vmem:[%s4321 + $0x90] sm:$0xff]
    %v4656 = vld [vmem:[%s4321 + $0x98] sm:$0xff]
    %v4657 = vld [vmem:[%s4321 + $0xa8] sm:$0xff]
    %v4658 = vld [vmem:[%s4321 + $0xb0] sm:$0xff]
    %v4659 = vld [vmem:[%s4321 + $0xc0] sm:$0xff]
    %v4660 = vld [vmem:[%s4321 + $0xc8] sm:$0xff]
    %v4661 = vld [vmem:[%s4321 + $0xd8] sm:$0xff]
    %v4662 = vld [vmem:[%s4321 + $0xe0] sm:$0xff]
    %v4663 = vld [vmem:[%s4321 + $0xf0] sm:$0xff]
    %v4664 = vld [vmem:[%s4321 + $0xf8] sm:$0xff]
    %v4665 = vld [vmem:[%s4321 + $0x108] sm:$0xff]
    %v4666 = vld [vmem:[%s4321 + $0x110] sm:$0xff]
    %v4667 = vld [vmem:[%s4321 + $0x120] sm:$0xff]
    %v4668 = vld [vmem:[%s4321 + $0x128] sm:$0xff]
    %v4669 = vld [vmem:[%s4321 + $0x138] sm:$0xff]
    %v4670 = vld [vmem:[%s4321 + $0x140] sm:$0xff]
    %v4671 = vld [vmem:[%s4321 + $0x150] sm:$0xff]
    %v4672 = vld [vmem:[%s4321 + $0x158] sm:$0xff]
    %v4673 = vld [vmem:[%s4321 + $0x168] sm:$0xff]
    %v4674 = vld [vmem:[%s4321 + $0x170] sm:$0xff]
    %v4675 = vld [vmem:[%s4321 + $0x1b0] sm:$0xff]
    %v4676 = vld [vmem:[%s4321 + $0x1b8] sm:$0xff]
    %v4677 = vld [vmem:[%s4321 + $0x1c8] sm:$0xff]
    %v4678 = vld [vmem:[%s4321 + $0x1d0] sm:$0xff]
    %v4679 = vld [vmem:[%s4321 + $0x1e0] sm:$0xff]
    %v4680 = vld [vmem:[%s4321 + $0x1e8] sm:$0xff]
    %v4681 = vld [vmem:[%s4321 + $0x1f8] sm:$0xff]
    %v4682 = vld [vmem:[%s4321 + $0x200] sm:$0xff]
    %v4683 = vld [vmem:[%s4321 + $0x210] sm:$0xff]
    %v4684 = vld [vmem:[%s4321 + $0x218] sm:$0xff]
    %v4685 = vld [vmem:[%s4321 + $0x228] sm:$0xff]
    %v4686 = vld [vmem:[%s4321 + $0x230] sm:$0xff]
    %v4687 = vld [vmem:[%s4321 + $0x240] sm:$0xff]
    %v4688 = vld [vmem:[%s4321 + $0x248] sm:$0xff]
    %v4689 = vld [vmem:[%s4321 + $0x258] sm:$0xff]
    %v4690 = vld [vmem:[%s4321 + $0x260] sm:$0xff]
    %v4691 = vld [vmem:[%s4321 + $0x270] sm:$0xff]
    %v4692 = vld [vmem:[%s4321 + $0x278] sm:$0xff]
    %v4693 = vld [vmem:[%s4321 + $0x288] sm:$0xff]
    %v4694 = vld [vmem:[%s4321 + $0x290] sm:$0xff]
    %v4695 = vld [vmem:[%s4321 + $0x2a0] sm:$0xff]
    %v4696 = vld [vmem:[%s4321 + $0x2a8] sm:$0xff]
    %v4697 = vld [vmem:[%s4321 + $0x2b8] sm:$0xff]
    %v4698 = vld [vmem:[%s4321 + $0x2c0] sm:$0xff]
    %v4699 = vld [vmem:[%s4321 + $0x2d0] sm:$0xff]
    %v4700 = vld [vmem:[%s4321 + $0x2d8] sm:$0xff]
    %v4701 = vld [vmem:[%s4321 + $0x2e8] sm:$0xff]
    %v4702 = vld [vmem:[%s4321 + $0x2f0] sm:$0xff]
    %v4703 = vld [vmem:[%s4321 + $0x300] sm:$0xff]
    %v4704 = vld [vmem:[%s4321 + $0x308] sm:$0xff]
    %v4705 = vld [vmem:[%s4321 + $0x318] sm:$0xff]
    %v4706 = vld [vmem:[%s4321 + $0x320] sm:$0xff]
    %v4707 = vld [vmem:[%s4321 + $0x1] sm:$0xff]
    %v4708 = vld [vmem:[%s4321 + $0x9] sm:$0xff]
    %v4709 = vld [vmem:[%s4321 + $0x19] sm:$0xff]
    %v4710 = vld [vmem:[%s4321 + $0x21] sm:$0xff]
    %v4711 = vld [vmem:[%s4321 + $0x31] sm:$0xff]
    %v4712 = vld [vmem:[%s4321 + $0x39] sm:$0xff]
    %v4713 = vld [vmem:[%s4321 + $0x49] sm:$0xff]
    %v4714 = vld [vmem:[%s4321 + $0x51] sm:$0xff]
    %v4715 = vld [vmem:[%s4321 + $0x61] sm:$0xff]
    %v4716 = vld [vmem:[%s4321 + $0x69] sm:$0xff]
    %v4717 = vld [vmem:[%s4321 + $0x79] sm:$0xff]
    %v4718 = vld [vmem:[%s4321 + $0x81] sm:$0xff]
    %v4719 = vld [vmem:[%s4321 + $0x91] sm:$0xff]
    %v4720 = vld [vmem:[%s4321 + $0x99] sm:$0xff]
    %v4721 = vld [vmem:[%s4321 + $0xa9] sm:$0xff]
    %v4722 = vld [vmem:[%s4321 + $0xb1] sm:$0xff]
    %v4723 = vld [vmem:[%s4321 + $0xc1] sm:$0xff]
    %v4724 = vld [vmem:[%s4321 + $0xc9] sm:$0xff]
    %v4725 = vld [vmem:[%s4321 + $0xd9] sm:$0xff]
    %v4726 = vld [vmem:[%s4321 + $0xe1] sm:$0xff]
    %v4727 = vld [vmem:[%s4321 + $0xf1] sm:$0xff]
    %v4728 = vld [vmem:[%s4321 + $0xf9] sm:$0xff]
    %v4729 = vld [vmem:[%s4321 + $0x109] sm:$0xff]
    %v4730 = vld [vmem:[%s4321 + $0x111] sm:$0xff]
    %v4731 = vld [vmem:[%s4321 + $0x121] sm:$0xff]
    %v4732 = vld [vmem:[%s4321 + $0x129] sm:$0xff]
    %v4733 = vld [vmem:[%s4321 + $0x139] sm:$0xff]
    %v4734 = vld [vmem:[%s4321 + $0x141] sm:$0xff]
    %v4735 = vld [vmem:[%s4321 + $0x151] sm:$0xff]
    %v4736 = vld [vmem:[%s4321 + $0x159] sm:$0xff]
    %v4737 = vld [vmem:[%s4321 + $0x169] sm:$0xff]
    %v4738 = vld [vmem:[%s4321 + $0x171] sm:$0xff]
    %v4739 = vld [vmem:[%s4321 + $0x1b1] sm:$0xff]
    %v4740 = vld [vmem:[%s4321 + $0x1b9] sm:$0xff]
    %v4741 = vld [vmem:[%s4321 + $0x1c9] sm:$0xff]
    %v4742 = vld [vmem:[%s4321 + $0x1d1] sm:$0xff]
    %v4743 = vld [vmem:[%s4321 + $0x1e1] sm:$0xff]
    %v4744 = vld [vmem:[%s4321 + $0x1e9] sm:$0xff]
    %v4745 = vld [vmem:[%s4321 + $0x1f9] sm:$0xff]
    %v4746 = vld [vmem:[%s4321 + $0x201] sm:$0xff]
    %v4747 = vld [vmem:[%s4321 + $0x211] sm:$0xff]
    %v4748 = vld [vmem:[%s4321 + $0x219] sm:$0xff]
    %v4749 = vld [vmem:[%s4321 + $0x229] sm:$0xff]
    %v4750 = vld [vmem:[%s4321 + $0x231] sm:$0xff]
    %v4751 = vld [vmem:[%s4321 + $0x241] sm:$0xff]
    %v4752 = vld [vmem:[%s4321 + $0x249] sm:$0xff]
    %v4753 = vld [vmem:[%s4321 + $0x259] sm:$0xff]
    %v4754 = vld [vmem:[%s4321 + $0x261] sm:$0xff]
    %v4755 = vld [vmem:[%s4321 + $0x271] sm:$0xff]
    %v4756 = vld [vmem:[%s4321 + $0x279] sm:$0xff]
    %v4757 = vld [vmem:[%s4321 + $0x289] sm:$0xff]
    %v4758 = vld [vmem:[%s4321 + $0x291] sm:$0xff]
    %v4759 = vld [vmem:[%s4321 + $0x2a1] sm:$0xff]
    %v4760 = vld [vmem:[%s4321 + $0x2a9] sm:$0xff]
    %v4761 = vld [vmem:[%s4321 + $0x2b9] sm:$0xff]
    %v4762 = vld [vmem:[%s4321 + $0x2c1] sm:$0xff]
    %v4763 = vld [vmem:[%s4321 + $0x2d1] sm:$0xff]
    %v4764 = vld [vmem:[%s4321 + $0x2d9] sm:$0xff]
    %v4765 = vld [vmem:[%s4321 + $0x2e9] sm:$0xff]
    %v4766 = vld [vmem:[%s4321 + $0x2f1] sm:$0xff]
    %v4767 = vld [vmem:[%s4321 + $0x301] sm:$0xff]
    %v4768 = vld [vmem:[%s4321 + $0x309] sm:$0xff]
    %v4769 = vld [vmem:[%s4321 + $0x319] sm:$0xff]
    %v4770 = vld [vmem:[%s4321 + $0x321] sm:$0xff]
    %v4771 = vld [vmem:[%s4321 + $0x2] sm:$0xff]
    %v4772 = vld [vmem:[%s4321 + $0xa] sm:$0xff]
    %v4773 = vld [vmem:[%s4321 + $0x1a] sm:$0xff]
    %v4774 = vld [vmem:[%s4321 + $0x22] sm:$0xff]
    %v4775 = vld [vmem:[%s4321 + $0x32] sm:$0xff]
    %v4776 = vld [vmem:[%s4321 + $0x3a] sm:$0xff]
    %v4777 = vld [vmem:[%s4321 + $0x4a] sm:$0xff]
    %v4778 = vld [vmem:[%s4321 + $0x52] sm:$0xff]
    %v4779 = vld [vmem:[%s4321 + $0x62] sm:$0xff]
    %v4780 = vld [vmem:[%s4321 + $0x6a] sm:$0xff]
    %v4781 = vld [vmem:[%s4321 + $0x7a] sm:$0xff]
    %v4782 = vld [vmem:[%s4321 + $0x82] sm:$0xff]
    %v4783 = vld [vmem:[%s4321 + $0x92] sm:$0xff]
    %v4784 = vld [vmem:[%s4321 + $0x9a] sm:$0xff]
    %v4785 = vld [vmem:[%s4321 + $0xaa] sm:$0xff]
    %v4786 = vld [vmem:[%s4321 + $0xb2] sm:$0xff]
    %v4787 = vld [vmem:[%s4321 + $0xc2] sm:$0xff]
    %v4788 = vld [vmem:[%s4321 + $0xca] sm:$0xff]
    %v4789 = vld [vmem:[%s4321 + $0xda] sm:$0xff]
    %v4790 = vld [vmem:[%s4321 + $0xe2] sm:$0xff]
    %v4791 = vld [vmem:[%s4321 + $0xf2] sm:$0xff]
    %v4792 = vld [vmem:[%s4321 + $0xfa] sm:$0xff]
    %v4793 = vld [vmem:[%s4321 + $0x10a] sm:$0xff]
    %v4794 = vld [vmem:[%s4321 + $0x112] sm:$0xff]
    %v4795 = vld [vmem:[%s4321 + $0x122] sm:$0xff]
    %v4796 = vld [vmem:[%s4321 + $0x12a] sm:$0xff]
    %v4797 = vld [vmem:[%s4321 + $0x13a] sm:$0xff]
    %v4798 = vld [vmem:[%s4321 + $0x142] sm:$0xff]
    %v4799 = vld [vmem:[%s4321 + $0x152] sm:$0xff]
    %v4800 = vld [vmem:[%s4321 + $0x15a] sm:$0xff]
    %v4801 = vld [vmem:[%s4321 + $0x16a] sm:$0xff]
    %v4802 = vld [vmem:[%s4321 + $0x172] sm:$0xff]
    %v4803 = vld [vmem:[%s4321 + $0x1b2] sm:$0xff]
    %v4804 = vld [vmem:[%s4321 + $0x1ba] sm:$0xff]
    %v4805 = vld [vmem:[%s4321 + $0x1ca] sm:$0xff]
    %v4806 = vld [vmem:[%s4321 + $0x1d2] sm:$0xff]
    %v4807 = vld [vmem:[%s4321 + $0x1e2] sm:$0xff]
    %v4808 = vld [vmem:[%s4321 + $0x1ea] sm:$0xff]
    %v4809 = vld [vmem:[%s4321 + $0x1fa] sm:$0xff]
    %v4810 = vld [vmem:[%s4321 + $0x202] sm:$0xff]
    %v4811 = vld [vmem:[%s4321 + $0x212] sm:$0xff]
    %v4812 = vld [vmem:[%s4321 + $0x21a] sm:$0xff]
    %v4813 = vld [vmem:[%s4321 + $0x22a] sm:$0xff]
    %v4814 = vld [vmem:[%s4321 + $0x232] sm:$0xff]
    %v4815 = vld [vmem:[%s4321 + $0x242] sm:$0xff]
    %v4816 = vld [vmem:[%s4321 + $0x24a] sm:$0xff]
    %v4817 = vld [vmem:[%s4321 + $0x25a] sm:$0xff]
    %v4818 = vld [vmem:[%s4321 + $0x262] sm:$0xff]
    %v4819 = vld [vmem:[%s4321 + $0x272] sm:$0xff]
    %v4820 = vld [vmem:[%s4321 + $0x27a] sm:$0xff]
    %v4821 = vld [vmem:[%s4321 + $0x28a] sm:$0xff]
    %v4822 = vld [vmem:[%s4321 + $0x292] sm:$0xff]
    %v4823 = vld [vmem:[%s4321 + $0x2a2] sm:$0xff]
    %v4824 = vld [vmem:[%s4321 + $0x2aa] sm:$0xff]
    %v4825 = vld [vmem:[%s4321 + $0x2ba] sm:$0xff]
    %v4826 = vld [vmem:[%s4321 + $0x2c2] sm:$0xff]
    %v4827 = vld [vmem:[%s4321 + $0x2d2] sm:$0xff]
    %v4828 = vld [vmem:[%s4321 + $0x2da] sm:$0xff]
    %v4829 = vld [vmem:[%s4321 + $0x2ea] sm:$0xff]
    %v4830 = vld [vmem:[%s4321 + $0x2f2] sm:$0xff]
    %v4831 = vld [vmem:[%s4321 + $0x302] sm:$0xff]
    %v4832 = vld [vmem:[%s4321 + $0x30a] sm:$0xff]
    %v4833 = vld [vmem:[%s4321 + $0x31a] sm:$0xff]
    %v4834 = vld [vmem:[%s4321 + $0x322] sm:$0xff]
    %s4835 = scalar_lea.vmem [#allocation2], 48
    %v4836 = vld [vmem:[%s4835] sm:$0xff]
    %v4837 = vld [vmem:[%s4835 + $0x8] sm:$0xff]
    %v4838 = vld [vmem:[%s4835 + $0x18] sm:$0xff]
    %v4839 = vld [vmem:[%s4835 + $0x20] sm:$0xff]
    %v4840 = vld [vmem:[%s4835 + $0x30] sm:$0xff]
    %v4841 = vld [vmem:[%s4835 + $0x38] sm:$0xff]
    %v4842 = vld [vmem:[%s4835 + $0x48] sm:$0xff]
    %v4843 = vld [vmem:[%s4835 + $0x50] sm:$0xff]
    %v4844 = vld [vmem:[%s4835 + $0x60] sm:$0xff]
    %v4845 = vld [vmem:[%s4835 + $0x68] sm:$0xff]
    %v4846 = vld [vmem:[%s4835 + $0x78] sm:$0xff]
    %v4847 = vld [vmem:[%s4835 + $0x80] sm:$0xff]
    %v4848 = vld [vmem:[%s4835 + $0x90] sm:$0xff]
    %v4849 = vld [vmem:[%s4835 + $0x98] sm:$0xff]
    %v4850 = vld [vmem:[%s4835 + $0xa8] sm:$0xff]
    %v4851 = vld [vmem:[%s4835 + $0xb0] sm:$0xff]
    %v4852 = vld [vmem:[%s4835 + $0xc0] sm:$0xff]
    %v4853 = vld [vmem:[%s4835 + $0xc8] sm:$0xff]
    %v4854 = vld [vmem:[%s4835 + $0xd8] sm:$0xff]
    %v4855 = vld [vmem:[%s4835 + $0xe0] sm:$0xff]
    %v4856 = vld [vmem:[%s4835 + $0xf0] sm:$0xff]
    %v4857 = vld [vmem:[%s4835 + $0xf8] sm:$0xff]
    %v4858 = vld [vmem:[%s4835 + $0x108] sm:$0xff]
    %v4859 = vld [vmem:[%s4835 + $0x110] sm:$0xff]
    %v4860 = vld [vmem:[%s4835 + $0x120] sm:$0xff]
    %v4861 = vld [vmem:[%s4835 + $0x128] sm:$0xff]
    %v4862 = vld [vmem:[%s4835 + $0x138] sm:$0xff]
    %v4863 = vld [vmem:[%s4835 + $0x140] sm:$0xff]
    %v4864 = vld [vmem:[%s4835 + $0x150] sm:$0xff]
    %v4865 = vld [vmem:[%s4835 + $0x158] sm:$0xff]
    %v4866 = vld [vmem:[%s4835 + $0x168] sm:$0xff]
    %v4867 = vld [vmem:[%s4835 + $0x170] sm:$0xff]
    %v4868 = vld [vmem:[%s4835 + $0x1b0] sm:$0xff]
    %v4869 = vld [vmem:[%s4835 + $0x1b8] sm:$0xff]
    %v4870 = vld [vmem:[%s4835 + $0x1c8] sm:$0xff]
    %v4871 = vld [vmem:[%s4835 + $0x1d0] sm:$0xff]
    %v4872 = vld [vmem:[%s4835 + $0x1e0] sm:$0xff]
    %v4873 = vld [vmem:[%s4835 + $0x1e8] sm:$0xff]
    %v4874 = vld [vmem:[%s4835 + $0x1f8] sm:$0xff]
    %v4875 = vld [vmem:[%s4835 + $0x200] sm:$0xff]
    %v4876 = vld [vmem:[%s4835 + $0x210] sm:$0xff]
    %v4877 = vld [vmem:[%s4835 + $0x218] sm:$0xff]
    %v4878 = vld [vmem:[%s4835 + $0x228] sm:$0xff]
    %v4879 = vld [vmem:[%s4835 + $0x230] sm:$0xff]
    %v4880 = vld [vmem:[%s4835 + $0x240] sm:$0xff]
    %v4881 = vld [vmem:[%s4835 + $0x248] sm:$0xff]
    %v4882 = vld [vmem:[%s4835 + $0x258] sm:$0xff]
    %v4883 = vld [vmem:[%s4835 + $0x260] sm:$0xff]
    %v4884 = vld [vmem:[%s4835 + $0x270] sm:$0xff]
    %v4885 = vld [vmem:[%s4835 + $0x278] sm:$0xff]
    %v4886 = vld [vmem:[%s4835 + $0x288] sm:$0xff]
    %v4887 = vld [vmem:[%s4835 + $0x290] sm:$0xff]
    %v4888 = vld [vmem:[%s4835 + $0x2a0] sm:$0xff]
    %v4889 = vld [vmem:[%s4835 + $0x2a8] sm:$0xff]
    %v4890 = vld [vmem:[%s4835 + $0x2b8] sm:$0xff]
    %v4891 = vld [vmem:[%s4835 + $0x2c0] sm:$0xff]
    %v4892 = vld [vmem:[%s4835 + $0x2d0] sm:$0xff]
    %v4893 = vld [vmem:[%s4835 + $0x2d8] sm:$0xff]
    %v4894 = vld [vmem:[%s4835 + $0x2e8] sm:$0xff]
    %v4895 = vld [vmem:[%s4835 + $0x2f0] sm:$0xff]
    %v4896 = vld [vmem:[%s4835 + $0x300] sm:$0xff]
    %v4897 = vld [vmem:[%s4835 + $0x308] sm:$0xff]
    %v4898 = vld [vmem:[%s4835 + $0x318] sm:$0xff]
    %v4899 = vld [vmem:[%s4835 + $0x320] sm:$0xff]
    %v4900 = vld [vmem:[%s4835 + $0x1] sm:$0xff]
    %v4901 = vld [vmem:[%s4835 + $0x9] sm:$0xff]
    %v4902 = vld [vmem:[%s4835 + $0x19] sm:$0xff]
    %v4903 = vld [vmem:[%s4835 + $0x21] sm:$0xff]
    %v4904 = vld [vmem:[%s4835 + $0x31] sm:$0xff]
    %v4905 = vld [vmem:[%s4835 + $0x39] sm:$0xff]
    %v4906 = vld [vmem:[%s4835 + $0x49] sm:$0xff]
    %v4907 = vld [vmem:[%s4835 + $0x51] sm:$0xff]
    %v4908 = vld [vmem:[%s4835 + $0x61] sm:$0xff]
    %v4909 = vld [vmem:[%s4835 + $0x69] sm:$0xff]
    %v4910 = vld [vmem:[%s4835 + $0x79] sm:$0xff]
    %v4911 = vld [vmem:[%s4835 + $0x81] sm:$0xff]
    %v4912 = vld [vmem:[%s4835 + $0x91] sm:$0xff]
    %v4913 = vld [vmem:[%s4835 + $0x99] sm:$0xff]
    %v4914 = vld [vmem:[%s4835 + $0xa9] sm:$0xff]
    %v4915 = vld [vmem:[%s4835 + $0xb1] sm:$0xff]
    %v4916 = vld [vmem:[%s4835 + $0xc1] sm:$0xff]
    %v4917 = vld [vmem:[%s4835 + $0xc9] sm:$0xff]
    %v4918 = vld [vmem:[%s4835 + $0xd9] sm:$0xff]
    %v4919 = vld [vmem:[%s4835 + $0xe1] sm:$0xff]
    %v4920 = vld [vmem:[%s4835 + $0xf1] sm:$0xff]
    %v4921 = vld [vmem:[%s4835 + $0xf9] sm:$0xff]
    %v4922 = vld [vmem:[%s4835 + $0x109] sm:$0xff]
    %v4923 = vld [vmem:[%s4835 + $0x111] sm:$0xff]
    %v4924 = vld [vmem:[%s4835 + $0x121] sm:$0xff]
    %v4925 = vld [vmem:[%s4835 + $0x129] sm:$0xff]
    %v4926 = vld [vmem:[%s4835 + $0x139] sm:$0xff]
    %v4927 = vld [vmem:[%s4835 + $0x141] sm:$0xff]
    %v4928 = vld [vmem:[%s4835 + $0x151] sm:$0xff]
    %v4929 = vld [vmem:[%s4835 + $0x159] sm:$0xff]
    %v4930 = vld [vmem:[%s4835 + $0x169] sm:$0xff]
    %v4931 = vld [vmem:[%s4835 + $0x171] sm:$0xff]
    %v4932 = vld [vmem:[%s4835 + $0x1b1] sm:$0xff]
    %v4933 = vld [vmem:[%s4835 + $0x1b9] sm:$0xff]
    %v4934 = vld [vmem:[%s4835 + $0x1c9] sm:$0xff]
    %v4935 = vld [vmem:[%s4835 + $0x1d1] sm:$0xff]
    %v4936 = vld [vmem:[%s4835 + $0x1e1] sm:$0xff]
    %v4937 = vld [vmem:[%s4835 + $0x1e9] sm:$0xff]
    %v4938 = vld [vmem:[%s4835 + $0x1f9] sm:$0xff]
    %v4939 = vld [vmem:[%s4835 + $0x201] sm:$0xff]
    %v4940 = vld [vmem:[%s4835 + $0x211] sm:$0xff]
    %v4941 = vld [vmem:[%s4835 + $0x219] sm:$0xff]
    %v4942 = vld [vmem:[%s4835 + $0x229] sm:$0xff]
    %v4943 = vld [vmem:[%s4835 + $0x231] sm:$0xff]
    %v4944 = vld [vmem:[%s4835 + $0x241] sm:$0xff]
    %v4945 = vld [vmem:[%s4835 + $0x249] sm:$0xff]
    %v4946 = vld [vmem:[%s4835 + $0x259] sm:$0xff]
    %v4947 = vld [vmem:[%s4835 + $0x261] sm:$0xff]
    %v4948 = vld [vmem:[%s4835 + $0x271] sm:$0xff]
    %v4949 = vld [vmem:[%s4835 + $0x279] sm:$0xff]
    %v4950 = vld [vmem:[%s4835 + $0x289] sm:$0xff]
    %v4951 = vld [vmem:[%s4835 + $0x291] sm:$0xff]
    %v4952 = vld [vmem:[%s4835 + $0x2a1] sm:$0xff]
    %v4953 = vld [vmem:[%s4835 + $0x2a9] sm:$0xff]
    %v4954 = vld [vmem:[%s4835 + $0x2b9] sm:$0xff]
    %v4955 = vld [vmem:[%s4835 + $0x2c1] sm:$0xff]
    %v4956 = vld [vmem:[%s4835 + $0x2d1] sm:$0xff]
    %v4957 = vld [vmem:[%s4835 + $0x2d9] sm:$0xff]
    %v4958 = vld [vmem:[%s4835 + $0x2e9] sm:$0xff]
    %v4959 = vld [vmem:[%s4835 + $0x2f1] sm:$0xff]
    %v4960 = vld [vmem:[%s4835 + $0x301] sm:$0xff]
    %v4961 = vld [vmem:[%s4835 + $0x309] sm:$0xff]
    %v4962 = vld [vmem:[%s4835 + $0x319] sm:$0xff]
    %v4963 = vld [vmem:[%s4835 + $0x321] sm:$0xff]
    %v4964 = vld [vmem:[%s4835 + $0x2] sm:$0xff]
    %v4965 = vld [vmem:[%s4835 + $0xa] sm:$0xff]
    %v4966 = vld [vmem:[%s4835 + $0x1a] sm:$0xff]
    %v4967 = vld [vmem:[%s4835 + $0x22] sm:$0xff]
    %v4968 = vld [vmem:[%s4835 + $0x32] sm:$0xff]
    %v4969 = vld [vmem:[%s4835 + $0x3a] sm:$0xff]
    %v4970 = vld [vmem:[%s4835 + $0x4a] sm:$0xff]
    %v4971 = vld [vmem:[%s4835 + $0x52] sm:$0xff]
    %v4972 = vld [vmem:[%s4835 + $0x62] sm:$0xff]
    %v4973 = vld [vmem:[%s4835 + $0x6a] sm:$0xff]
    %v4974 = vld [vmem:[%s4835 + $0x7a] sm:$0xff]
    %v4975 = vld [vmem:[%s4835 + $0x82] sm:$0xff]
    %v4976 = vld [vmem:[%s4835 + $0x92] sm:$0xff]
    %v4977 = vld [vmem:[%s4835 + $0x9a] sm:$0xff]
    %v4978 = vld [vmem:[%s4835 + $0xaa] sm:$0xff]
    %v4979 = vld [vmem:[%s4835 + $0xb2] sm:$0xff]
    %v4980 = vld [vmem:[%s4835 + $0xc2] sm:$0xff]
    %v4981 = vld [vmem:[%s4835 + $0xca] sm:$0xff]
    %v4982 = vld [vmem:[%s4835 + $0xda] sm:$0xff]
    %v4983 = vld [vmem:[%s4835 + $0xe2] sm:$0xff]
    %v4984 = vld [vmem:[%s4835 + $0xf2] sm:$0xff]
    %v4985 = vld [vmem:[%s4835 + $0xfa] sm:$0xff]
    %v4986 = vld [vmem:[%s4835 + $0x10a] sm:$0xff]
    %v4987 = vld [vmem:[%s4835 + $0x112] sm:$0xff]
    %v4988 = vld [vmem:[%s4835 + $0x122] sm:$0xff]
    %v4989 = vld [vmem:[%s4835 + $0x12a] sm:$0xff]
    %v4990 = vld [vmem:[%s4835 + $0x13a] sm:$0xff]
    %v4991 = vld [vmem:[%s4835 + $0x142] sm:$0xff]
    %v4992 = vld [vmem:[%s4835 + $0x152] sm:$0xff]
    %v4993 = vld [vmem:[%s4835 + $0x15a] sm:$0xff]
    %v4994 = vld [vmem:[%s4835 + $0x16a] sm:$0xff]
    %v4995 = vld [vmem:[%s4835 + $0x172] sm:$0xff]
    %v4996 = vld [vmem:[%s4835 + $0x1b2] sm:$0xff]
    %v4997 = vld [vmem:[%s4835 + $0x1ba] sm:$0xff]
    %v4998 = vld [vmem:[%s4835 + $0x1ca] sm:$0xff]
    %v4999 = vld [vmem:[%s4835 + $0x1d2] sm:$0xff]
    %v5000 = vld [vmem:[%s4835 + $0x1e2] sm:$0xff]
    %v5001 = vld [vmem:[%s4835 + $0x1ea] sm:$0xff]
    %v5002 = vld [vmem:[%s4835 + $0x1fa] sm:$0xff]
    %v5003 = vld [vmem:[%s4835 + $0x202] sm:$0xff]
    %v5004 = vld [vmem:[%s4835 + $0x212] sm:$0xff]
    %v5005 = vld [vmem:[%s4835 + $0x21a] sm:$0xff]
    %v5006 = vld [vmem:[%s4835 + $0x22a] sm:$0xff]
    %v5007 = vld [vmem:[%s4835 + $0x232] sm:$0xff]
    %v5008 = vld [vmem:[%s4835 + $0x242] sm:$0xff]
    %v5009 = vld [vmem:[%s4835 + $0x24a] sm:$0xff]
    %v5010 = vld [vmem:[%s4835 + $0x25a] sm:$0xff]
    %v5011 = vld [vmem:[%s4835 + $0x262] sm:$0xff]
    %v5012 = vld [vmem:[%s4835 + $0x272] sm:$0xff]
    %v5013 = vld [vmem:[%s4835 + $0x27a] sm:$0xff]
    %v5014 = vld [vmem:[%s4835 + $0x28a] sm:$0xff]
    %v5015 = vld [vmem:[%s4835 + $0x292] sm:$0xff]
    %v5016 = vld [vmem:[%s4835 + $0x2a2] sm:$0xff]
    %v5017 = vld [vmem:[%s4835 + $0x2aa] sm:$0xff]
    %v5018 = vld [vmem:[%s4835 + $0x2ba] sm:$0xff]
    %v5019 = vld [vmem:[%s4835 + $0x2c2] sm:$0xff]
    %v5020 = vld [vmem:[%s4835 + $0x2d2] sm:$0xff]
    %v5021 = vld [vmem:[%s4835 + $0x2da] sm:$0xff]
    %v5022 = vld [vmem:[%s4835 + $0x2ea] sm:$0xff]
    %v5023 = vld [vmem:[%s4835 + $0x2f2] sm:$0xff]
    %v5024 = vld [vmem:[%s4835 + $0x302] sm:$0xff]
    %v5025 = vld [vmem:[%s4835 + $0x30a] sm:$0xff]
    %v5026 = vld [vmem:[%s4835 + $0x31a] sm:$0xff]
    %v5027 = vld [vmem:[%s4835 + $0x322] sm:$0xff]
    %5092 = vrot.lane.b32.xlu0 %v4515, 8
    %v5093 = vpop.permute.xlu0 %5092
    %5094 = vrot.lane.b32.xlu0 %v4516, 8
    %v5095 = vpop.permute.xlu0 %5094
    %5096 = vrot.lane.b32.xlu0 %v4517, 8
    %v5097 = vpop.permute.xlu0 %5096
    %5098 = vrot.lane.b32.xlu0 %v4518, 8
    %v5099 = vpop.permute.xlu0 %5098
    %5100 = vrot.lane.b32.xlu0 %v4519, 8
    %v5101 = vpop.permute.xlu0 %5100
    %5102 = vrot.lane.b32.xlu0 %v4520, 8
    %v5103 = vpop.permute.xlu0 %5102
    %5104 = vrot.lane.b32.xlu0 %v4521, 8
    %v5105 = vpop.permute.xlu0 %5104
    %5106 = vrot.lane.b32.xlu0 %v4522, 8
    %v5107 = vpop.permute.xlu0 %5106
    %5108 = vrot.lane.b32.xlu0 %v4523, 8
    %v5109 = vpop.permute.xlu0 %5108
    %5110 = vrot.lane.b32.xlu0 %v4524, 8
    %v5111 = vpop.permute.xlu0 %5110
    %5112 = vrot.lane.b32.xlu0 %v4525, 8
    %v5113 = vpop.permute.xlu0 %5112
    %5114 = vrot.lane.b32.xlu0 %v4526, 8
    %v5115 = vpop.permute.xlu0 %5114
    %5116 = vrot.lane.b32.xlu0 %v4527, 8
    %v5117 = vpop.permute.xlu0 %5116
    %5118 = vrot.lane.b32.xlu0 %v4528, 8
    %v5119 = vpop.permute.xlu0 %5118
    %5120 = vrot.lane.b32.xlu0 %v4529, 8
    %v5121 = vpop.permute.xlu0 %5120
    %5122 = vrot.lane.b32.xlu0 %v4530, 8
    %v5123 = vpop.permute.xlu0 %5122
    %5124 = vrot.lane.b32.xlu0 %v4531, 8
    %v5125 = vpop.permute.xlu0 %5124
    %5126 = vrot.lane.b32.xlu0 %v4532, 8
    %v5127 = vpop.permute.xlu0 %5126
    %5128 = vrot.lane.b32.xlu0 %v4533, 8
    %v5129 = vpop.permute.xlu0 %5128
    %5130 = vrot.lane.b32.xlu0 %v4534, 8
    %v5131 = vpop.permute.xlu0 %5130
    %5132 = vrot.lane.b32.xlu0 %v4535, 8
    %v5133 = vpop.permute.xlu0 %5132
    %5134 = vrot.lane.b32.xlu0 %v4536, 8
    %v5135 = vpop.permute.xlu0 %5134
    %5136 = vrot.lane.b32.xlu0 %v4537, 8
    %v5137 = vpop.permute.xlu0 %5136
    %5138 = vrot.lane.b32.xlu0 %v4538, 8
    %v5139 = vpop.permute.xlu0 %5138
    %5140 = vrot.lane.b32.xlu0 %v4539, 8
    %v5141 = vpop.permute.xlu0 %5140
    %5142 = vrot.lane.b32.xlu0 %v4540, 8
    %v5143 = vpop.permute.xlu0 %5142
    %5144 = vrot.lane.b32.xlu0 %v4541, 8
    %v5145 = vpop.permute.xlu0 %5144
    %5146 = vrot.lane.b32.xlu0 %v4542, 8
    %v5147 = vpop.permute.xlu0 %5146
    %5148 = vrot.lane.b32.xlu0 %v4543, 8
    %v5149 = vpop.permute.xlu0 %5148
    %5150 = vrot.lane.b32.xlu0 %v4544, 8
    %v5151 = vpop.permute.xlu0 %5150
    %5152 = vrot.lane.b32.xlu0 %v4545, 8
    %v5153 = vpop.permute.xlu0 %5152
    %5154 = vrot.lane.b32.xlu0 %v4546, 8
    %v5155 = vpop.permute.xlu0 %5154
    %5156 = vrot.lane.b32.xlu0 %v4547, 8
    %v5157 = vpop.permute.xlu0 %5156
    %5158 = vrot.lane.b32.xlu0 %v4548, 8
    %v5159 = vpop.permute.xlu0 %5158
    %5160 = vrot.lane.b32.xlu0 %v4549, 8
    %v5161 = vpop.permute.xlu0 %5160
    %5162 = vrot.lane.b32.xlu0 %v4550, 8
    %v5163 = vpop.permute.xlu0 %5162
    %5164 = vrot.lane.b32.xlu0 %v4551, 8
    %v5165 = vpop.permute.xlu0 %5164
    %5166 = vrot.lane.b32.xlu0 %v4552, 8
    %v5167 = vpop.permute.xlu0 %5166
    %5168 = vrot.lane.b32.xlu0 %v4553, 8
    %v5169 = vpop.permute.xlu0 %5168
    %5170 = vrot.lane.b32.xlu0 %v4554, 8
    %v5171 = vpop.permute.xlu0 %5170
    %5172 = vrot.lane.b32.xlu0 %v4555, 8
    %v5173 = vpop.permute.xlu0 %5172
    %5174 = vrot.lane.b32.xlu0 %v4556, 8
    %v5175 = vpop.permute.xlu0 %5174
    %5176 = vrot.lane.b32.xlu0 %v4557, 8
    %v5177 = vpop.permute.xlu0 %5176
    %5178 = vrot.lane.b32.xlu0 %v4558, 8
    %v5179 = vpop.permute.xlu0 %5178
    %5180 = vrot.lane.b32.xlu0 %v4559, 8
    %v5181 = vpop.permute.xlu0 %5180
    %5182 = vrot.lane.b32.xlu0 %v4560, 8
    %v5183 = vpop.permute.xlu0 %5182
    %5184 = vrot.lane.b32.xlu0 %v4561, 8
    %v5185 = vpop.permute.xlu0 %5184
    %5186 = vrot.lane.b32.xlu0 %v4562, 8
    %v5187 = vpop.permute.xlu0 %5186
    %5188 = vrot.lane.b32.xlu0 %v4563, 8
    %v5189 = vpop.permute.xlu0 %5188
    %5190 = vrot.lane.b32.xlu0 %v4564, 8
    %v5191 = vpop.permute.xlu0 %5190
    %5192 = vrot.lane.b32.xlu0 %v4565, 8
    %v5193 = vpop.permute.xlu0 %5192
    %5194 = vrot.lane.b32.xlu0 %v4566, 8
    %v5195 = vpop.permute.xlu0 %5194
    %5196 = vrot.lane.b32.xlu0 %v4567, 8
    %v5197 = vpop.permute.xlu0 %5196
    %5198 = vrot.lane.b32.xlu0 %v4568, 8
    %v5199 = vpop.permute.xlu0 %5198
    %5200 = vrot.lane.b32.xlu0 %v4569, 8
    %v5201 = vpop.permute.xlu0 %5200
    %5202 = vrot.lane.b32.xlu0 %v4570, 8
    %v5203 = vpop.permute.xlu0 %5202
    %5204 = vrot.lane.b32.xlu0 %v4571, 8
    %v5205 = vpop.permute.xlu0 %5204
    %5206 = vrot.lane.b32.xlu0 %v4572, 8
    %v5207 = vpop.permute.xlu0 %5206
    %5208 = vrot.lane.b32.xlu0 %v4573, 8
    %v5209 = vpop.permute.xlu0 %5208
    %5210 = vrot.lane.b32.xlu0 %v4574, 8
    %v5211 = vpop.permute.xlu0 %5210
    %5212 = vrot.lane.b32.xlu0 %v4575, 8
    %v5213 = vpop.permute.xlu0 %5212
    %5214 = vrot.lane.b32.xlu0 %v4576, 8
    %v5215 = vpop.permute.xlu0 %5214
    %5216 = vrot.lane.b32.xlu0 %v4577, 8
    %v5217 = vpop.permute.xlu0 %5216
    %5218 = vrot.lane.b32.xlu0 %v4578, 8
    %v5219 = vpop.permute.xlu0 %5218
    %5348 = vrot.lane.b32.xlu0 %v4579, 16
    %v5349 = vpop.permute.xlu0 %5348
    %5350 = vrot.lane.b32.xlu0 %v4580, 16
    %v5351 = vpop.permute.xlu0 %5350
    %5352 = vrot.lane.b32.xlu0 %v4581, 16
    %v5353 = vpop.permute.xlu0 %5352
    %5354 = vrot.lane.b32.xlu0 %v4582, 16
    %v5355 = vpop.permute.xlu0 %5354
    %5356 = vrot.lane.b32.xlu0 %v4583, 16
    %v5357 = vpop.permute.xlu0 %5356
    %5358 = vrot.lane.b32.xlu0 %v4584, 16
    %v5359 = vpop.permute.xlu0 %5358
    %5360 = vrot.lane.b32.xlu0 %v4585, 16
    %v5361 = vpop.permute.xlu0 %5360
    %5362 = vrot.lane.b32.xlu0 %v4586, 16
    %v5363 = vpop.permute.xlu0 %5362
    %5364 = vrot.lane.b32.xlu0 %v4587, 16
    %v5365 = vpop.permute.xlu0 %5364
    %5366 = vrot.lane.b32.xlu0 %v4588, 16
    %v5367 = vpop.permute.xlu0 %5366
    %5368 = vrot.lane.b32.xlu0 %v4589, 16
    %v5369 = vpop.permute.xlu0 %5368
    %5370 = vrot.lane.b32.xlu0 %v4590, 16
    %v5371 = vpop.permute.xlu0 %5370
    %5372 = vrot.lane.b32.xlu0 %v4591, 16
    %v5373 = vpop.permute.xlu0 %5372
    %5374 = vrot.lane.b32.xlu0 %v4592, 16
    %v5375 = vpop.permute.xlu0 %5374
    %5376 = vrot.lane.b32.xlu0 %v4593, 16
    %v5377 = vpop.permute.xlu0 %5376
    %5378 = vrot.lane.b32.xlu0 %v4594, 16
    %v5379 = vpop.permute.xlu0 %5378
    %5380 = vrot.lane.b32.xlu0 %v4595, 16
    %v5381 = vpop.permute.xlu0 %5380
    %5382 = vrot.lane.b32.xlu0 %v4596, 16
    %v5383 = vpop.permute.xlu0 %5382
    %5384 = vrot.lane.b32.xlu0 %v4597, 16
    %v5385 = vpop.permute.xlu0 %5384
    %5386 = vrot.lane.b32.xlu0 %v4598, 16
    %v5387 = vpop.permute.xlu0 %5386
    %5388 = vrot.lane.b32.xlu0 %v4599, 16
    %v5389 = vpop.permute.xlu0 %5388
    %5390 = vrot.lane.b32.xlu0 %v4600, 16
    %v5391 = vpop.permute.xlu0 %5390
    %5392 = vrot.lane.b32.xlu0 %v4601, 16
    %v5393 = vpop.permute.xlu0 %5392
    %5394 = vrot.lane.b32.xlu0 %v4602, 16
    %v5395 = vpop.permute.xlu0 %5394
    %5396 = vrot.lane.b32.xlu0 %v4603, 16
    %v5397 = vpop.permute.xlu0 %5396
    %5398 = vrot.lane.b32.xlu0 %v4604, 16
    %v5399 = vpop.permute.xlu0 %5398
    %5400 = vrot.lane.b32.xlu0 %v4605, 16
    %v5401 = vpop.permute.xlu0 %5400
    %5402 = vrot.lane.b32.xlu0 %v4606, 16
    %v5403 = vpop.permute.xlu0 %5402
    %5404 = vrot.lane.b32.xlu0 %v4607, 16
    %v5405 = vpop.permute.xlu0 %5404
    %5406 = vrot.lane.b32.xlu0 %v4608, 16
    %v5407 = vpop.permute.xlu0 %5406
    %5408 = vrot.lane.b32.xlu0 %v4609, 16
    %v5409 = vpop.permute.xlu0 %5408
    %5410 = vrot.lane.b32.xlu0 %v4610, 16
    %v5411 = vpop.permute.xlu0 %5410
    %5412 = vrot.lane.b32.xlu0 %v4611, 16
    %v5413 = vpop.permute.xlu0 %5412
    %5414 = vrot.lane.b32.xlu0 %v4612, 16
    %v5415 = vpop.permute.xlu0 %5414
    %5416 = vrot.lane.b32.xlu0 %v4613, 16
    %v5417 = vpop.permute.xlu0 %5416
    %5418 = vrot.lane.b32.xlu0 %v4614, 16
    %v5419 = vpop.permute.xlu0 %5418
    %5420 = vrot.lane.b32.xlu0 %v4615, 16
    %v5421 = vpop.permute.xlu0 %5420
    %5422 = vrot.lane.b32.xlu0 %v4616, 16
    %v5423 = vpop.permute.xlu0 %5422
    %5424 = vrot.lane.b32.xlu0 %v4617, 16
    %v5425 = vpop.permute.xlu0 %5424
    %5426 = vrot.lane.b32.xlu0 %v4618, 16
    %v5427 = vpop.permute.xlu0 %5426
    %5428 = vrot.lane.b32.xlu0 %v4619, 16
    %v5429 = vpop.permute.xlu0 %5428
    %5430 = vrot.lane.b32.xlu0 %v4620, 16
    %v5431 = vpop.permute.xlu0 %5430
    %5432 = vrot.lane.b32.xlu0 %v4621, 16
    %v5433 = vpop.permute.xlu0 %5432
    %5434 = vrot.lane.b32.xlu0 %v4622, 16
    %v5435 = vpop.permute.xlu0 %5434
    %5436 = vrot.lane.b32.xlu0 %v4623, 16
    %v5437 = vpop.permute.xlu0 %5436
    %5438 = vrot.lane.b32.xlu0 %v4624, 16
    %v5439 = vpop.permute.xlu0 %5438
    %5440 = vrot.lane.b32.xlu0 %v4625, 16
    %v5441 = vpop.permute.xlu0 %5440
    %5442 = vrot.lane.b32.xlu0 %v4626, 16
    %v5443 = vpop.permute.xlu0 %5442
    %5444 = vrot.lane.b32.xlu0 %v4627, 16
    %v5445 = vpop.permute.xlu0 %5444
    %5446 = vrot.lane.b32.xlu0 %v4628, 16
    %v5447 = vpop.permute.xlu0 %5446
    %5448 = vrot.lane.b32.xlu0 %v4629, 16
    %v5449 = vpop.permute.xlu0 %5448
    %5450 = vrot.lane.b32.xlu0 %v4630, 16
    %v5451 = vpop.permute.xlu0 %5450
    %5452 = vrot.lane.b32.xlu0 %v4631, 16
    %v5453 = vpop.permute.xlu0 %5452
    %5454 = vrot.lane.b32.xlu0 %v4632, 16
    %v5455 = vpop.permute.xlu0 %5454
    %5456 = vrot.lane.b32.xlu0 %v4633, 16
    %v5457 = vpop.permute.xlu0 %5456
    %5458 = vrot.lane.b32.xlu0 %v4634, 16
    %v5459 = vpop.permute.xlu0 %5458
    %5460 = vrot.lane.b32.xlu0 %v4635, 16
    %v5461 = vpop.permute.xlu0 %5460
    %5462 = vrot.lane.b32.xlu0 %v4636, 16
    %v5463 = vpop.permute.xlu0 %5462
    %5464 = vrot.lane.b32.xlu0 %v4637, 16
    %v5465 = vpop.permute.xlu0 %5464
    %5466 = vrot.lane.b32.xlu0 %v4638, 16
    %v5467 = vpop.permute.xlu0 %5466
    %5468 = vrot.lane.b32.xlu0 %v4639, 16
    %v5469 = vpop.permute.xlu0 %5468
    %5470 = vrot.lane.b32.xlu0 %v4640, 16
    %v5471 = vpop.permute.xlu0 %5470
    %5472 = vrot.lane.b32.xlu0 %v4641, 16
    %v5473 = vpop.permute.xlu0 %5472
    %5474 = vrot.lane.b32.xlu0 %v4642, 16
    %v5475 = vpop.permute.xlu0 %5474
    %5604 = vrot.lane.b32.xlu0 %v4643, 24
    %v5605 = vpop.permute.xlu0 %5604
    %5606 = vrot.lane.b32.xlu0 %v4644, 24
    %v5607 = vpop.permute.xlu0 %5606
    %5608 = vrot.lane.b32.xlu0 %v4645, 24
    %v5609 = vpop.permute.xlu0 %5608
    %5610 = vrot.lane.b32.xlu0 %v4646, 24
    %v5611 = vpop.permute.xlu0 %5610
    %5612 = vrot.lane.b32.xlu0 %v4647, 24
    %v5613 = vpop.permute.xlu0 %5612
    %5614 = vrot.lane.b32.xlu0 %v4648, 24
    %v5615 = vpop.permute.xlu0 %5614
    %5616 = vrot.lane.b32.xlu0 %v4649, 24
    %v5617 = vpop.permute.xlu0 %5616
    %5618 = vrot.lane.b32.xlu0 %v4650, 24
    %v5619 = vpop.permute.xlu0 %5618
    %5620 = vrot.lane.b32.xlu0 %v4651, 24
    %v5621 = vpop.permute.xlu0 %5620
    %5622 = vrot.lane.b32.xlu0 %v4652, 24
    %v5623 = vpop.permute.xlu0 %5622
    %5624 = vrot.lane.b32.xlu0 %v4653, 24
    %v5625 = vpop.permute.xlu0 %5624
    %5626 = vrot.lane.b32.xlu0 %v4654, 24
    %v5627 = vpop.permute.xlu0 %5626
    %5628 = vrot.lane.b32.xlu0 %v4655, 24
    %v5629 = vpop.permute.xlu0 %5628
    %5630 = vrot.lane.b32.xlu0 %v4656, 24
    %v5631 = vpop.permute.xlu0 %5630
    %5632 = vrot.lane.b32.xlu0 %v4657, 24
    %v5633 = vpop.permute.xlu0 %5632
    %5634 = vrot.lane.b32.xlu0 %v4658, 24
    %v5635 = vpop.permute.xlu0 %5634
    %5636 = vrot.lane.b32.xlu0 %v4659, 24
    %v5637 = vpop.permute.xlu0 %5636
    %5638 = vrot.lane.b32.xlu0 %v4660, 24
    %v5639 = vpop.permute.xlu0 %5638
    %5640 = vrot.lane.b32.xlu0 %v4661, 24
    %v5641 = vpop.permute.xlu0 %5640
    %5642 = vrot.lane.b32.xlu0 %v4662, 24
    %v5643 = vpop.permute.xlu0 %5642
    %5644 = vrot.lane.b32.xlu0 %v4663, 24
    %v5645 = vpop.permute.xlu0 %5644
    %5646 = vrot.lane.b32.xlu0 %v4664, 24
    %v5647 = vpop.permute.xlu0 %5646
    %5648 = vrot.lane.b32.xlu0 %v4665, 24
    %v5649 = vpop.permute.xlu0 %5648
    %5650 = vrot.lane.b32.xlu0 %v4666, 24
    %v5651 = vpop.permute.xlu0 %5650
    %5652 = vrot.lane.b32.xlu0 %v4667, 24
    %v5653 = vpop.permute.xlu0 %5652
    %5654 = vrot.lane.b32.xlu0 %v4668, 24
    %v5655 = vpop.permute.xlu0 %5654
    %5656 = vrot.lane.b32.xlu0 %v4669, 24
    %v5657 = vpop.permute.xlu0 %5656
    %5658 = vrot.lane.b32.xlu0 %v4670, 24
    %v5659 = vpop.permute.xlu0 %5658
    %5660 = vrot.lane.b32.xlu0 %v4671, 24
    %v5661 = vpop.permute.xlu0 %5660
    %5662 = vrot.lane.b32.xlu0 %v4672, 24
    %v5663 = vpop.permute.xlu0 %5662
    %5664 = vrot.lane.b32.xlu0 %v4673, 24
    %v5665 = vpop.permute.xlu0 %5664
    %5666 = vrot.lane.b32.xlu0 %v4674, 24
    %v5667 = vpop.permute.xlu0 %5666
    %5668 = vrot.lane.b32.xlu0 %v4675, 24
    %v5669 = vpop.permute.xlu0 %5668
    %5670 = vrot.lane.b32.xlu0 %v4676, 24
    %v5671 = vpop.permute.xlu0 %5670
    %5672 = vrot.lane.b32.xlu0 %v4677, 24
    %v5673 = vpop.permute.xlu0 %5672
    %5674 = vrot.lane.b32.xlu0 %v4678, 24
    %v5675 = vpop.permute.xlu0 %5674
    %5676 = vrot.lane.b32.xlu0 %v4679, 24
    %v5677 = vpop.permute.xlu0 %5676
    %5678 = vrot.lane.b32.xlu0 %v4680, 24
    %v5679 = vpop.permute.xlu0 %5678
    %5680 = vrot.lane.b32.xlu0 %v4681, 24
    %v5681 = vpop.permute.xlu0 %5680
    %5682 = vrot.lane.b32.xlu0 %v4682, 24
    %v5683 = vpop.permute.xlu0 %5682
    %5684 = vrot.lane.b32.xlu0 %v4683, 24
    %v5685 = vpop.permute.xlu0 %5684
    %5686 = vrot.lane.b32.xlu0 %v4684, 24
    %v5687 = vpop.permute.xlu0 %5686
    %5688 = vrot.lane.b32.xlu0 %v4685, 24
    %v5689 = vpop.permute.xlu0 %5688
    %5690 = vrot.lane.b32.xlu0 %v4686, 24
    %v5691 = vpop.permute.xlu0 %5690
    %5692 = vrot.lane.b32.xlu0 %v4687, 24
    %v5693 = vpop.permute.xlu0 %5692
    %5694 = vrot.lane.b32.xlu0 %v4688, 24
    %v5695 = vpop.permute.xlu0 %5694
    %5696 = vrot.lane.b32.xlu0 %v4689, 24
    %v5697 = vpop.permute.xlu0 %5696
    %5698 = vrot.lane.b32.xlu0 %v4690, 24
    %v5699 = vpop.permute.xlu0 %5698
    %5700 = vrot.lane.b32.xlu0 %v4691, 24
    %v5701 = vpop.permute.xlu0 %5700
    %5702 = vrot.lane.b32.xlu0 %v4692, 24
    %v5703 = vpop.permute.xlu0 %5702
    %5704 = vrot.lane.b32.xlu0 %v4693, 24
    %v5705 = vpop.permute.xlu0 %5704
    %5706 = vrot.lane.b32.xlu0 %v4694, 24
    %v5707 = vpop.permute.xlu0 %5706
    %5708 = vrot.lane.b32.xlu0 %v4695, 24
    %v5709 = vpop.permute.xlu0 %5708
    %5710 = vrot.lane.b32.xlu0 %v4696, 24
    %v5711 = vpop.permute.xlu0 %5710
    %5712 = vrot.lane.b32.xlu0 %v4697, 24
    %v5713 = vpop.permute.xlu0 %5712
    %5714 = vrot.lane.b32.xlu0 %v4698, 24
    %v5715 = vpop.permute.xlu0 %5714
    %5716 = vrot.lane.b32.xlu0 %v4699, 24
    %v5717 = vpop.permute.xlu0 %5716
    %5718 = vrot.lane.b32.xlu0 %v4700, 24
    %v5719 = vpop.permute.xlu0 %5718
    %5720 = vrot.lane.b32.xlu0 %v4701, 24
    %v5721 = vpop.permute.xlu0 %5720
    %5722 = vrot.lane.b32.xlu0 %v4702, 24
    %v5723 = vpop.permute.xlu0 %5722
    %5724 = vrot.lane.b32.xlu0 %v4703, 24
    %v5725 = vpop.permute.xlu0 %5724
    %5726 = vrot.lane.b32.xlu0 %v4704, 24
    %v5727 = vpop.permute.xlu0 %5726
    %5728 = vrot.lane.b32.xlu0 %v4705, 24
    %v5729 = vpop.permute.xlu0 %5728
    %5730 = vrot.lane.b32.xlu0 %v4706, 24
    %v5731 = vpop.permute.xlu0 %5730
    %5860 = vrot.lane.b32.xlu0 %v4707, 32
    %v5861 = vpop.permute.xlu0 %5860
    %5862 = vrot.lane.b32.xlu0 %v4708, 32
    %v5863 = vpop.permute.xlu0 %5862
    %5864 = vrot.lane.b32.xlu0 %v4709, 32
    %v5865 = vpop.permute.xlu0 %5864
    %5866 = vrot.lane.b32.xlu0 %v4710, 32
    %v5867 = vpop.permute.xlu0 %5866
    %5868 = vrot.lane.b32.xlu0 %v4711, 32
    %v5869 = vpop.permute.xlu0 %5868
    %5870 = vrot.lane.b32.xlu0 %v4712, 32
    %v5871 = vpop.permute.xlu0 %5870
    %5872 = vrot.lane.b32.xlu0 %v4713, 32
    %v5873 = vpop.permute.xlu0 %5872
    %5874 = vrot.lane.b32.xlu0 %v4714, 32
    %v5875 = vpop.permute.xlu0 %5874
    %5876 = vrot.lane.b32.xlu0 %v4715, 32
    %v5877 = vpop.permute.xlu0 %5876
    %5878 = vrot.lane.b32.xlu0 %v4716, 32
    %v5879 = vpop.permute.xlu0 %5878
    %5880 = vrot.lane.b32.xlu0 %v4717, 32
    %v5881 = vpop.permute.xlu0 %5880
    %5882 = vrot.lane.b32.xlu0 %v4718, 32
    %v5883 = vpop.permute.xlu0 %5882
    %5884 = vrot.lane.b32.xlu0 %v4719, 32
    %v5885 = vpop.permute.xlu0 %5884
    %5886 = vrot.lane.b32.xlu0 %v4720, 32
    %v5887 = vpop.permute.xlu0 %5886
    %5888 = vrot.lane.b32.xlu0 %v4721, 32
    %v5889 = vpop.permute.xlu0 %5888
    %5890 = vrot.lane.b32.xlu0 %v4722, 32
    %v5891 = vpop.permute.xlu0 %5890
    %5892 = vrot.lane.b32.xlu0 %v4723, 32
    %v5893 = vpop.permute.xlu0 %5892
    %5894 = vrot.lane.b32.xlu0 %v4724, 32
    %v5895 = vpop.permute.xlu0 %5894
    %5896 = vrot.lane.b32.xlu0 %v4725, 32
    %v5897 = vpop.permute.xlu0 %5896
    %5898 = vrot.lane.b32.xlu0 %v4726, 32
    %v5899 = vpop.permute.xlu0 %5898
    %5900 = vrot.lane.b32.xlu0 %v4727, 32
    %v5901 = vpop.permute.xlu0 %5900
    %5902 = vrot.lane.b32.xlu0 %v4728, 32
    %v5903 = vpop.permute.xlu0 %5902
    %5904 = vrot.lane.b32.xlu0 %v4729, 32
    %v5905 = vpop.permute.xlu0 %5904
    %5906 = vrot.lane.b32.xlu0 %v4730, 32
    %v5907 = vpop.permute.xlu0 %5906
    %5908 = vrot.lane.b32.xlu0 %v4731, 32
    %v5909 = vpop.permute.xlu0 %5908
    %5910 = vrot.lane.b32.xlu0 %v4732, 32
    %v5911 = vpop.permute.xlu0 %5910
    %5912 = vrot.lane.b32.xlu0 %v4733, 32
    %v5913 = vpop.permute.xlu0 %5912
    %5914 = vrot.lane.b32.xlu0 %v4734, 32
    %v5915 = vpop.permute.xlu0 %5914
    %5916 = vrot.lane.b32.xlu0 %v4735, 32
    %v5917 = vpop.permute.xlu0 %5916
    %5918 = vrot.lane.b32.xlu0 %v4736, 32
    %v5919 = vpop.permute.xlu0 %5918
    %5920 = vrot.lane.b32.xlu0 %v4737, 32
    %v5921 = vpop.permute.xlu0 %5920
    %5922 = vrot.lane.b32.xlu0 %v4738, 32
    %v5923 = vpop.permute.xlu0 %5922
    %5924 = vrot.lane.b32.xlu0 %v4739, 32
    %v5925 = vpop.permute.xlu0 %5924
    %5926 = vrot.lane.b32.xlu0 %v4740, 32
    %v5927 = vpop.permute.xlu0 %5926
    %5928 = vrot.lane.b32.xlu0 %v4741, 32
    %v5929 = vpop.permute.xlu0 %5928
    %5930 = vrot.lane.b32.xlu0 %v4742, 32
    %v5931 = vpop.permute.xlu0 %5930
    %5932 = vrot.lane.b32.xlu0 %v4743, 32
    %v5933 = vpop.permute.xlu0 %5932
    %5934 = vrot.lane.b32.xlu0 %v4744, 32
    %v5935 = vpop.permute.xlu0 %5934
    %5936 = vrot.lane.b32.xlu0 %v4745, 32
    %v5937 = vpop.permute.xlu0 %5936
    %5938 = vrot.lane.b32.xlu0 %v4746, 32
    %v5939 = vpop.permute.xlu0 %5938
    %5940 = vrot.lane.b32.xlu0 %v4747, 32
    %v5941 = vpop.permute.xlu0 %5940
    %5942 = vrot.lane.b32.xlu0 %v4748, 32
    %v5943 = vpop.permute.xlu0 %5942
    %5944 = vrot.lane.b32.xlu0 %v4749, 32
    %v5945 = vpop.permute.xlu0 %5944
    %5946 = vrot.lane.b32.xlu0 %v4750, 32
    %v5947 = vpop.permute.xlu0 %5946
    %5948 = vrot.lane.b32.xlu0 %v4751, 32
    %v5949 = vpop.permute.xlu0 %5948
    %5950 = vrot.lane.b32.xlu0 %v4752, 32
    %v5951 = vpop.permute.xlu0 %5950
    %5952 = vrot.lane.b32.xlu0 %v4753, 32
    %v5953 = vpop.permute.xlu0 %5952
    %5954 = vrot.lane.b32.xlu0 %v4754, 32
    %v5955 = vpop.permute.xlu0 %5954
    %5956 = vrot.lane.b32.xlu0 %v4755, 32
    %v5957 = vpop.permute.xlu0 %5956
    %5958 = vrot.lane.b32.xlu0 %v4756, 32
    %v5959 = vpop.permute.xlu0 %5958
    %5960 = vrot.lane.b32.xlu0 %v4757, 32
    %v5961 = vpop.permute.xlu0 %5960
    %5962 = vrot.lane.b32.xlu0 %v4758, 32
    %v5963 = vpop.permute.xlu0 %5962
    %5964 = vrot.lane.b32.xlu0 %v4759, 32
    %v5965 = vpop.permute.xlu0 %5964
    %5966 = vrot.lane.b32.xlu0 %v4760, 32
    %v5967 = vpop.permute.xlu0 %5966
    %5968 = vrot.lane.b32.xlu0 %v4761, 32
    %v5969 = vpop.permute.xlu0 %5968
    %5970 = vrot.lane.b32.xlu0 %v4762, 32
    %v5971 = vpop.permute.xlu0 %5970
    %5972 = vrot.lane.b32.xlu0 %v4763, 32
    %v5973 = vpop.permute.xlu0 %5972
    %5974 = vrot.lane.b32.xlu0 %v4764, 32
    %v5975 = vpop.permute.xlu0 %5974
    %5976 = vrot.lane.b32.xlu0 %v4765, 32
    %v5977 = vpop.permute.xlu0 %5976
    %5978 = vrot.lane.b32.xlu0 %v4766, 32
    %v5979 = vpop.permute.xlu0 %5978
    %5980 = vrot.lane.b32.xlu0 %v4767, 32
    %v5981 = vpop.permute.xlu0 %5980
    %5982 = vrot.lane.b32.xlu0 %v4768, 32
    %v5983 = vpop.permute.xlu0 %5982
    %5984 = vrot.lane.b32.xlu0 %v4769, 32
    %v5985 = vpop.permute.xlu0 %5984
    %5986 = vrot.lane.b32.xlu0 %v4770, 32
    %v5987 = vpop.permute.xlu0 %5986
    %6116 = vrot.lane.b32.xlu0 %v4771, 40
    %v6117 = vpop.permute.xlu0 %6116
    %6118 = vrot.lane.b32.xlu0 %v4772, 40
    %v6119 = vpop.permute.xlu0 %6118
    %6120 = vrot.lane.b32.xlu0 %v4773, 40
    %v6121 = vpop.permute.xlu0 %6120
    %6122 = vrot.lane.b32.xlu0 %v4774, 40
    %v6123 = vpop.permute.xlu0 %6122
    %6124 = vrot.lane.b32.xlu0 %v4775, 40
    %v6125 = vpop.permute.xlu0 %6124
    %6126 = vrot.lane.b32.xlu0 %v4776, 40
    %v6127 = vpop.permute.xlu0 %6126
    %6128 = vrot.lane.b32.xlu0 %v4777, 40
    %v6129 = vpop.permute.xlu0 %6128
    %6130 = vrot.lane.b32.xlu0 %v4778, 40
    %v6131 = vpop.permute.xlu0 %6130
    %6132 = vrot.lane.b32.xlu0 %v4779, 40
    %v6133 = vpop.permute.xlu0 %6132
    %6134 = vrot.lane.b32.xlu0 %v4780, 40
    %v6135 = vpop.permute.xlu0 %6134
    %6136 = vrot.lane.b32.xlu0 %v4781, 40
    %v6137 = vpop.permute.xlu0 %6136
    %6138 = vrot.lane.b32.xlu0 %v4782, 40
    %v6139 = vpop.permute.xlu0 %6138
    %6140 = vrot.lane.b32.xlu0 %v4783, 40
    %v6141 = vpop.permute.xlu0 %6140
    %6142 = vrot.lane.b32.xlu0 %v4784, 40
    %v6143 = vpop.permute.xlu0 %6142
    %6144 = vrot.lane.b32.xlu0 %v4785, 40
    %v6145 = vpop.permute.xlu0 %6144
    %6146 = vrot.lane.b32.xlu0 %v4786, 40
    %v6147 = vpop.permute.xlu0 %6146
    %6148 = vrot.lane.b32.xlu0 %v4787, 40
    %v6149 = vpop.permute.xlu0 %6148
    %6150 = vrot.lane.b32.xlu0 %v4788, 40
    %v6151 = vpop.permute.xlu0 %6150
    %6152 = vrot.lane.b32.xlu0 %v4789, 40
    %v6153 = vpop.permute.xlu0 %6152
    %6154 = vrot.lane.b32.xlu0 %v4790, 40
    %v6155 = vpop.permute.xlu0 %6154
    %6156 = vrot.lane.b32.xlu0 %v4791, 40
    %v6157 = vpop.permute.xlu0 %6156
    %6158 = vrot.lane.b32.xlu0 %v4792, 40
    %v6159 = vpop.permute.xlu0 %6158
    %6160 = vrot.lane.b32.xlu0 %v4793, 40
    %v6161 = vpop.permute.xlu0 %6160
    %6162 = vrot.lane.b32.xlu0 %v4794, 40
    %v6163 = vpop.permute.xlu0 %6162
    %6164 = vrot.lane.b32.xlu0 %v4795, 40
    %v6165 = vpop.permute.xlu0 %6164
    %6166 = vrot.lane.b32.xlu0 %v4796, 40
    %v6167 = vpop.permute.xlu0 %6166
    %6168 = vrot.lane.b32.xlu0 %v4797, 40
    %v6169 = vpop.permute.xlu0 %6168
    %6170 = vrot.lane.b32.xlu0 %v4798, 40
    %v6171 = vpop.permute.xlu0 %6170
    %6172 = vrot.lane.b32.xlu0 %v4799, 40
    %v6173 = vpop.permute.xlu0 %6172
    %6174 = vrot.lane.b32.xlu0 %v4800, 40
    %v6175 = vpop.permute.xlu0 %6174
    %6176 = vrot.lane.b32.xlu0 %v4801, 40
    %v6177 = vpop.permute.xlu0 %6176
    %6178 = vrot.lane.b32.xlu0 %v4802, 40
    %v6179 = vpop.permute.xlu0 %6178
    %6180 = vrot.lane.b32.xlu0 %v4803, 40
    %v6181 = vpop.permute.xlu0 %6180
    %6182 = vrot.lane.b32.xlu0 %v4804, 40
    %v6183 = vpop.permute.xlu0 %6182
    %6184 = vrot.lane.b32.xlu0 %v4805, 40
    %v6185 = vpop.permute.xlu0 %6184
    %6186 = vrot.lane.b32.xlu0 %v4806, 40
    %v6187 = vpop.permute.xlu0 %6186
    %6188 = vrot.lane.b32.xlu0 %v4807, 40
    %v6189 = vpop.permute.xlu0 %6188
    %6190 = vrot.lane.b32.xlu0 %v4808, 40
    %v6191 = vpop.permute.xlu0 %6190
    %6192 = vrot.lane.b32.xlu0 %v4809, 40
    %v6193 = vpop.permute.xlu0 %6192
    %6194 = vrot.lane.b32.xlu0 %v4810, 40
    %v6195 = vpop.permute.xlu0 %6194
    %6196 = vrot.lane.b32.xlu0 %v4811, 40
    %v6197 = vpop.permute.xlu0 %6196
    %6198 = vrot.lane.b32.xlu0 %v4812, 40
    %v6199 = vpop.permute.xlu0 %6198
    %6200 = vrot.lane.b32.xlu0 %v4813, 40
    %v6201 = vpop.permute.xlu0 %6200
    %6202 = vrot.lane.b32.xlu0 %v4814, 40
    %v6203 = vpop.permute.xlu0 %6202
    %6204 = vrot.lane.b32.xlu0 %v4815, 40
    %v6205 = vpop.permute.xlu0 %6204
    %6206 = vrot.lane.b32.xlu0 %v4816, 40
    %v6207 = vpop.permute.xlu0 %6206
    %6208 = vrot.lane.b32.xlu0 %v4817, 40
    %v6209 = vpop.permute.xlu0 %6208
    %6210 = vrot.lane.b32.xlu0 %v4818, 40
    %v6211 = vpop.permute.xlu0 %6210
    %6212 = vrot.lane.b32.xlu0 %v4819, 40
    %v6213 = vpop.permute.xlu0 %6212
    %6214 = vrot.lane.b32.xlu0 %v4820, 40
    %v6215 = vpop.permute.xlu0 %6214
    %6216 = vrot.lane.b32.xlu0 %v4821, 40
    %v6217 = vpop.permute.xlu0 %6216
    %6218 = vrot.lane.b32.xlu0 %v4822, 40
    %v6219 = vpop.permute.xlu0 %6218
    %6220 = vrot.lane.b32.xlu0 %v4823, 40
    %v6221 = vpop.permute.xlu0 %6220
    %6222 = vrot.lane.b32.xlu0 %v4824, 40
    %v6223 = vpop.permute.xlu0 %6222
    %6224 = vrot.lane.b32.xlu0 %v4825, 40
    %v6225 = vpop.permute.xlu0 %6224
    %6226 = vrot.lane.b32.xlu0 %v4826, 40
    %v6227 = vpop.permute.xlu0 %6226
    %6228 = vrot.lane.b32.xlu0 %v4827, 40
    %v6229 = vpop.permute.xlu0 %6228
    %6230 = vrot.lane.b32.xlu0 %v4828, 40
    %v6231 = vpop.permute.xlu0 %6230
    %6232 = vrot.lane.b32.xlu0 %v4829, 40
    %v6233 = vpop.permute.xlu0 %6232
    %6234 = vrot.lane.b32.xlu0 %v4830, 40
    %v6235 = vpop.permute.xlu0 %6234
    %6236 = vrot.lane.b32.xlu0 %v4831, 40
    %v6237 = vpop.permute.xlu0 %6236
    %6238 = vrot.lane.b32.xlu0 %v4832, 40
    %v6239 = vpop.permute.xlu0 %6238
    %6240 = vrot.lane.b32.xlu0 %v4833, 40
    %v6241 = vpop.permute.xlu0 %6240
    %6242 = vrot.lane.b32.xlu0 %v4834, 40
    %v6243 = vpop.permute.xlu0 %6242
    %6372 = vrot.lane.b32.xlu0 %v4836, 48
    %v6373 = vpop.permute.xlu0 %6372
    %6374 = vrot.lane.b32.xlu0 %v4837, 48
    %v6375 = vpop.permute.xlu0 %6374
    %6376 = vrot.lane.b32.xlu0 %v4838, 48
    %v6377 = vpop.permute.xlu0 %6376
    %6378 = vrot.lane.b32.xlu0 %v4839, 48
    %v6379 = vpop.permute.xlu0 %6378
    %6380 = vrot.lane.b32.xlu0 %v4840, 48
    %v6381 = vpop.permute.xlu0 %6380
    %6382 = vrot.lane.b32.xlu0 %v4841, 48
    %v6383 = vpop.permute.xlu0 %6382
    %6384 = vrot.lane.b32.xlu0 %v4842, 48
    %v6385 = vpop.permute.xlu0 %6384
    %6386 = vrot.lane.b32.xlu0 %v4843, 48
    %v6387 = vpop.permute.xlu0 %6386
    %6388 = vrot.lane.b32.xlu0 %v4844, 48
    %v6389 = vpop.permute.xlu0 %6388
    %6390 = vrot.lane.b32.xlu0 %v4845, 48
    %v6391 = vpop.permute.xlu0 %6390
    %6392 = vrot.lane.b32.xlu0 %v4846, 48
    %v6393 = vpop.permute.xlu0 %6392
    %6394 = vrot.lane.b32.xlu0 %v4847, 48
    %v6395 = vpop.permute.xlu0 %6394
    %6396 = vrot.lane.b32.xlu0 %v4848, 48
    %v6397 = vpop.permute.xlu0 %6396
    %6398 = vrot.lane.b32.xlu0 %v4849, 48
    %v6399 = vpop.permute.xlu0 %6398
    %6400 = vrot.lane.b32.xlu0 %v4850, 48
    %v6401 = vpop.permute.xlu0 %6400
    %6402 = vrot.lane.b32.xlu0 %v4851, 48
    %v6403 = vpop.permute.xlu0 %6402
    %6404 = vrot.lane.b32.xlu0 %v4852, 48
    %v6405 = vpop.permute.xlu0 %6404
    %6406 = vrot.lane.b32.xlu0 %v4853, 48
    %v6407 = vpop.permute.xlu0 %6406
    %6408 = vrot.lane.b32.xlu0 %v4854, 48
    %v6409 = vpop.permute.xlu0 %6408
    %6410 = vrot.lane.b32.xlu0 %v4855, 48
    %v6411 = vpop.permute.xlu0 %6410
    %6412 = vrot.lane.b32.xlu0 %v4856, 48
    %v6413 = vpop.permute.xlu0 %6412
    %6414 = vrot.lane.b32.xlu0 %v4857, 48
    %v6415 = vpop.permute.xlu0 %6414
    %6416 = vrot.lane.b32.xlu0 %v4858, 48
    %v6417 = vpop.permute.xlu0 %6416
    %6418 = vrot.lane.b32.xlu0 %v4859, 48
    %v6419 = vpop.permute.xlu0 %6418
    %6420 = vrot.lane.b32.xlu0 %v4860, 48
    %v6421 = vpop.permute.xlu0 %6420
    %6422 = vrot.lane.b32.xlu0 %v4861, 48
    %v6423 = vpop.permute.xlu0 %6422
    %6424 = vrot.lane.b32.xlu0 %v4862, 48
    %v6425 = vpop.permute.xlu0 %6424
    %6426 = vrot.lane.b32.xlu0 %v4863, 48
    %v6427 = vpop.permute.xlu0 %6426
    %6428 = vrot.lane.b32.xlu0 %v4864, 48
    %v6429 = vpop.permute.xlu0 %6428
    %6430 = vrot.lane.b32.xlu0 %v4865, 48
    %v6431 = vpop.permute.xlu0 %6430
    %6432 = vrot.lane.b32.xlu0 %v4866, 48
    %v6433 = vpop.permute.xlu0 %6432
    %6434 = vrot.lane.b32.xlu0 %v4867, 48
    %v6435 = vpop.permute.xlu0 %6434
    %6436 = vrot.lane.b32.xlu0 %v4868, 48
    %v6437 = vpop.permute.xlu0 %6436
    %6438 = vrot.lane.b32.xlu0 %v4869, 48
    %v6439 = vpop.permute.xlu0 %6438
    %6440 = vrot.lane.b32.xlu0 %v4870, 48
    %v6441 = vpop.permute.xlu0 %6440
    %6442 = vrot.lane.b32.xlu0 %v4871, 48
    %v6443 = vpop.permute.xlu0 %6442
    %6444 = vrot.lane.b32.xlu0 %v4872, 48
    %v6445 = vpop.permute.xlu0 %6444
    %6446 = vrot.lane.b32.xlu0 %v4873, 48
    %v6447 = vpop.permute.xlu0 %6446
    %6448 = vrot.lane.b32.xlu0 %v4874, 48
    %v6449 = vpop.permute.xlu0 %6448
    %6450 = vrot.lane.b32.xlu0 %v4875, 48
    %v6451 = vpop.permute.xlu0 %6450
    %6452 = vrot.lane.b32.xlu0 %v4876, 48
    %v6453 = vpop.permute.xlu0 %6452
    %6454 = vrot.lane.b32.xlu0 %v4877, 48
    %v6455 = vpop.permute.xlu0 %6454
    %6456 = vrot.lane.b32.xlu0 %v4878, 48
    %v6457 = vpop.permute.xlu0 %6456
    %6458 = vrot.lane.b32.xlu0 %v4879, 48
    %v6459 = vpop.permute.xlu0 %6458
    %6460 = vrot.lane.b32.xlu0 %v4880, 48
    %v6461 = vpop.permute.xlu0 %6460
    %6462 = vrot.lane.b32.xlu0 %v4881, 48
    %v6463 = vpop.permute.xlu0 %6462
    %6464 = vrot.lane.b32.xlu0 %v4882, 48
    %v6465 = vpop.permute.xlu0 %6464
    %6466 = vrot.lane.b32.xlu0 %v4883, 48
    %v6467 = vpop.permute.xlu0 %6466
    %6468 = vrot.lane.b32.xlu0 %v4884, 48
    %v6469 = vpop.permute.xlu0 %6468
    %6470 = vrot.lane.b32.xlu0 %v4885, 48
    %v6471 = vpop.permute.xlu0 %6470
    %6472 = vrot.lane.b32.xlu0 %v4886, 48
    %v6473 = vpop.permute.xlu0 %6472
    %6474 = vrot.lane.b32.xlu0 %v4887, 48
    %v6475 = vpop.permute.xlu0 %6474
    %6476 = vrot.lane.b32.xlu0 %v4888, 48
    %v6477 = vpop.permute.xlu0 %6476
    %6478 = vrot.lane.b32.xlu0 %v4889, 48
    %v6479 = vpop.permute.xlu0 %6478
    %6480 = vrot.lane.b32.xlu0 %v4890, 48
    %v6481 = vpop.permute.xlu0 %6480
    %6482 = vrot.lane.b32.xlu0 %v4891, 48
    %v6483 = vpop.permute.xlu0 %6482
    %6484 = vrot.lane.b32.xlu0 %v4892, 48
    %v6485 = vpop.permute.xlu0 %6484
    %6486 = vrot.lane.b32.xlu0 %v4893, 48
    %v6487 = vpop.permute.xlu0 %6486
    %6488 = vrot.lane.b32.xlu0 %v4894, 48
    %v6489 = vpop.permute.xlu0 %6488
    %6490 = vrot.lane.b32.xlu0 %v4895, 48
    %v6491 = vpop.permute.xlu0 %6490
    %6492 = vrot.lane.b32.xlu0 %v4896, 48
    %v6493 = vpop.permute.xlu0 %6492
    %6494 = vrot.lane.b32.xlu0 %v4897, 48
    %v6495 = vpop.permute.xlu0 %6494
    %6496 = vrot.lane.b32.xlu0 %v4898, 48
    %v6497 = vpop.permute.xlu0 %6496
    %6498 = vrot.lane.b32.xlu0 %v4899, 48
    %v6499 = vpop.permute.xlu0 %6498
    %6628 = vrot.lane.b32.xlu0 %v4900, 56
    %v6629 = vpop.permute.xlu0 %6628
    %6630 = vrot.lane.b32.xlu0 %v4901, 56
    %v6631 = vpop.permute.xlu0 %6630
    %6632 = vrot.lane.b32.xlu0 %v4902, 56
    %v6633 = vpop.permute.xlu0 %6632
    %6634 = vrot.lane.b32.xlu0 %v4903, 56
    %v6635 = vpop.permute.xlu0 %6634
    %6636 = vrot.lane.b32.xlu0 %v4904, 56
    %v6637 = vpop.permute.xlu0 %6636
    %6638 = vrot.lane.b32.xlu0 %v4905, 56
    %v6639 = vpop.permute.xlu0 %6638
    %6640 = vrot.lane.b32.xlu0 %v4906, 56
    %v6641 = vpop.permute.xlu0 %6640
    %6642 = vrot.lane.b32.xlu0 %v4907, 56
    %v6643 = vpop.permute.xlu0 %6642
    %6644 = vrot.lane.b32.xlu0 %v4908, 56
    %v6645 = vpop.permute.xlu0 %6644
    %6646 = vrot.lane.b32.xlu0 %v4909, 56
    %v6647 = vpop.permute.xlu0 %6646
    %6648 = vrot.lane.b32.xlu0 %v4910, 56
    %v6649 = vpop.permute.xlu0 %6648
    %6650 = vrot.lane.b32.xlu0 %v4911, 56
    %v6651 = vpop.permute.xlu0 %6650
    %6652 = vrot.lane.b32.xlu0 %v4912, 56
    %v6653 = vpop.permute.xlu0 %6652
    %6654 = vrot.lane.b32.xlu0 %v4913, 56
    %v6655 = vpop.permute.xlu0 %6654
    %6656 = vrot.lane.b32.xlu0 %v4914, 56
    %v6657 = vpop.permute.xlu0 %6656
    %6658 = vrot.lane.b32.xlu0 %v4915, 56
    %v6659 = vpop.permute.xlu0 %6658
    %6660 = vrot.lane.b32.xlu0 %v4916, 56
    %v6661 = vpop.permute.xlu0 %6660
    %6662 = vrot.lane.b32.xlu0 %v4917, 56
    %v6663 = vpop.permute.xlu0 %6662
    %6664 = vrot.lane.b32.xlu0 %v4918, 56
    %v6665 = vpop.permute.xlu0 %6664
    %6666 = vrot.lane.b32.xlu0 %v4919, 56
    %v6667 = vpop.permute.xlu0 %6666
    %6668 = vrot.lane.b32.xlu0 %v4920, 56
    %v6669 = vpop.permute.xlu0 %6668
    %6670 = vrot.lane.b32.xlu0 %v4921, 56
    %v6671 = vpop.permute.xlu0 %6670
    %6672 = vrot.lane.b32.xlu0 %v4922, 56
    %v6673 = vpop.permute.xlu0 %6672
    %6674 = vrot.lane.b32.xlu0 %v4923, 56
    %v6675 = vpop.permute.xlu0 %6674
    %6676 = vrot.lane.b32.xlu0 %v4924, 56
    %v6677 = vpop.permute.xlu0 %6676
    %6678 = vrot.lane.b32.xlu0 %v4925, 56
    %v6679 = vpop.permute.xlu0 %6678
    %6680 = vrot.lane.b32.xlu0 %v4926, 56
    %v6681 = vpop.permute.xlu0 %6680
    %6682 = vrot.lane.b32.xlu0 %v4927, 56
    %v6683 = vpop.permute.xlu0 %6682
    %6684 = vrot.lane.b32.xlu0 %v4928, 56
    %v6685 = vpop.permute.xlu0 %6684
    %6686 = vrot.lane.b32.xlu0 %v4929, 56
    %v6687 = vpop.permute.xlu0 %6686
    %6688 = vrot.lane.b32.xlu0 %v4930, 56
    %v6689 = vpop.permute.xlu0 %6688
    %6690 = vrot.lane.b32.xlu0 %v4931, 56
    %v6691 = vpop.permute.xlu0 %6690
    %6692 = vrot.lane.b32.xlu0 %v4932, 56
    %v6693 = vpop.permute.xlu0 %6692
    %6694 = vrot.lane.b32.xlu0 %v4933, 56
    %v6695 = vpop.permute.xlu0 %6694
    %6696 = vrot.lane.b32.xlu0 %v4934, 56
    %v6697 = vpop.permute.xlu0 %6696
    %6698 = vrot.lane.b32.xlu0 %v4935, 56
    %v6699 = vpop.permute.xlu0 %6698
    %6700 = vrot.lane.b32.xlu0 %v4936, 56
    %v6701 = vpop.permute.xlu0 %6700
    %6702 = vrot.lane.b32.xlu0 %v4937, 56
    %v6703 = vpop.permute.xlu0 %6702
    %6704 = vrot.lane.b32.xlu0 %v4938, 56
    %v6705 = vpop.permute.xlu0 %6704
    %6706 = vrot.lane.b32.xlu0 %v4939, 56
    %v6707 = vpop.permute.xlu0 %6706
    %6708 = vrot.lane.b32.xlu0 %v4940, 56
    %v6709 = vpop.permute.xlu0 %6708
    %6710 = vrot.lane.b32.xlu0 %v4941, 56
    %v6711 = vpop.permute.xlu0 %6710
    %6712 = vrot.lane.b32.xlu0 %v4942, 56
    %v6713 = vpop.permute.xlu0 %6712
    %6714 = vrot.lane.b32.xlu0 %v4943, 56
    %v6715 = vpop.permute.xlu0 %6714
    %6716 = vrot.lane.b32.xlu0 %v4944, 56
    %v6717 = vpop.permute.xlu0 %6716
    %6718 = vrot.lane.b32.xlu0 %v4945, 56
    %v6719 = vpop.permute.xlu0 %6718
    %6720 = vrot.lane.b32.xlu0 %v4946, 56
    %v6721 = vpop.permute.xlu0 %6720
    %6722 = vrot.lane.b32.xlu0 %v4947, 56
    %v6723 = vpop.permute.xlu0 %6722
    %6724 = vrot.lane.b32.xlu0 %v4948, 56
    %v6725 = vpop.permute.xlu0 %6724
    %6726 = vrot.lane.b32.xlu0 %v4949, 56
    %v6727 = vpop.permute.xlu0 %6726
    %6728 = vrot.lane.b32.xlu0 %v4950, 56
    %v6729 = vpop.permute.xlu0 %6728
    %6730 = vrot.lane.b32.xlu0 %v4951, 56
    %v6731 = vpop.permute.xlu0 %6730
    %6732 = vrot.lane.b32.xlu0 %v4952, 56
    %v6733 = vpop.permute.xlu0 %6732
    %6734 = vrot.lane.b32.xlu0 %v4953, 56
    %v6735 = vpop.permute.xlu0 %6734
    %6736 = vrot.lane.b32.xlu0 %v4954, 56
    %v6737 = vpop.permute.xlu0 %6736
    %6738 = vrot.lane.b32.xlu0 %v4955, 56
    %v6739 = vpop.permute.xlu0 %6738
    %6740 = vrot.lane.b32.xlu0 %v4956, 56
    %v6741 = vpop.permute.xlu0 %6740
    %6742 = vrot.lane.b32.xlu0 %v4957, 56
    %v6743 = vpop.permute.xlu0 %6742
    %6744 = vrot.lane.b32.xlu0 %v4958, 56
    %v6745 = vpop.permute.xlu0 %6744
    %6746 = vrot.lane.b32.xlu0 %v4959, 56
    %v6747 = vpop.permute.xlu0 %6746
    %6748 = vrot.lane.b32.xlu0 %v4960, 56
    %v6749 = vpop.permute.xlu0 %6748
    %6750 = vrot.lane.b32.xlu0 %v4961, 56
    %v6751 = vpop.permute.xlu0 %6750
    %6752 = vrot.lane.b32.xlu0 %v4962, 56
    %v6753 = vpop.permute.xlu0 %6752
    %6754 = vrot.lane.b32.xlu0 %v4963, 56
    %v6755 = vpop.permute.xlu0 %6754
    %6884 = vrot.lane.b32.xlu0 %v4964, 64
    %v6885 = vpop.permute.xlu0 %6884
    %6886 = vrot.lane.b32.xlu0 %v4965, 64
    %v6887 = vpop.permute.xlu0 %6886
    %6888 = vrot.lane.b32.xlu0 %v4966, 64
    %v6889 = vpop.permute.xlu0 %6888
    %6890 = vrot.lane.b32.xlu0 %v4967, 64
    %v6891 = vpop.permute.xlu0 %6890
    %6892 = vrot.lane.b32.xlu0 %v4968, 64
    %v6893 = vpop.permute.xlu0 %6892
    %6894 = vrot.lane.b32.xlu0 %v4969, 64
    %v6895 = vpop.permute.xlu0 %6894
    %6896 = vrot.lane.b32.xlu0 %v4970, 64
    %v6897 = vpop.permute.xlu0 %6896
    %6898 = vrot.lane.b32.xlu0 %v4971, 64
    %v6899 = vpop.permute.xlu0 %6898
    %6900 = vrot.lane.b32.xlu0 %v4972, 64
    %v6901 = vpop.permute.xlu0 %6900
    %6902 = vrot.lane.b32.xlu0 %v4973, 64
    %v6903 = vpop.permute.xlu0 %6902
    %6904 = vrot.lane.b32.xlu0 %v4974, 64
    %v6905 = vpop.permute.xlu0 %6904
    %6906 = vrot.lane.b32.xlu0 %v4975, 64
    %v6907 = vpop.permute.xlu0 %6906
    %6908 = vrot.lane.b32.xlu0 %v4976, 64
    %v6909 = vpop.permute.xlu0 %6908
    %6910 = vrot.lane.b32.xlu0 %v4977, 64
    %v6911 = vpop.permute.xlu0 %6910
    %6912 = vrot.lane.b32.xlu0 %v4978, 64
    %v6913 = vpop.permute.xlu0 %6912
    %6914 = vrot.lane.b32.xlu0 %v4979, 64
    %v6915 = vpop.permute.xlu0 %6914
    %6916 = vrot.lane.b32.xlu0 %v4980, 64
    %v6917 = vpop.permute.xlu0 %6916
    %6918 = vrot.lane.b32.xlu0 %v4981, 64
    %v6919 = vpop.permute.xlu0 %6918
    %6920 = vrot.lane.b32.xlu0 %v4982, 64
    %v6921 = vpop.permute.xlu0 %6920
    %6922 = vrot.lane.b32.xlu0 %v4983, 64
    %v6923 = vpop.permute.xlu0 %6922
    %6924 = vrot.lane.b32.xlu0 %v4984, 64
    %v6925 = vpop.permute.xlu0 %6924
    %6926 = vrot.lane.b32.xlu0 %v4985, 64
    %v6927 = vpop.permute.xlu0 %6926
    %6928 = vrot.lane.b32.xlu0 %v4986, 64
    %v6929 = vpop.permute.xlu0 %6928
    %6930 = vrot.lane.b32.xlu0 %v4987, 64
    %v6931 = vpop.permute.xlu0 %6930
    %6932 = vrot.lane.b32.xlu0 %v4988, 64
    %v6933 = vpop.permute.xlu0 %6932
    %6934 = vrot.lane.b32.xlu0 %v4989, 64
    %v6935 = vpop.permute.xlu0 %6934
    %6936 = vrot.lane.b32.xlu0 %v4990, 64
    %v6937 = vpop.permute.xlu0 %6936
    %6938 = vrot.lane.b32.xlu0 %v4991, 64
    %v6939 = vpop.permute.xlu0 %6938
    %6940 = vrot.lane.b32.xlu0 %v4992, 64
    %v6941 = vpop.permute.xlu0 %6940
    %6942 = vrot.lane.b32.xlu0 %v4993, 64
    %v6943 = vpop.permute.xlu0 %6942
    %6944 = vrot.lane.b32.xlu0 %v4994, 64
    %v6945 = vpop.permute.xlu0 %6944
    %6946 = vrot.lane.b32.xlu0 %v4995, 64
    %v6947 = vpop.permute.xlu0 %6946
    %6948 = vrot.lane.b32.xlu0 %v4996, 64
    %v6949 = vpop.permute.xlu0 %6948
    %6950 = vrot.lane.b32.xlu0 %v4997, 64
    %v6951 = vpop.permute.xlu0 %6950
    %6952 = vrot.lane.b32.xlu0 %v4998, 64
    %v6953 = vpop.permute.xlu0 %6952
    %6954 = vrot.lane.b32.xlu0 %v4999, 64
    %v6955 = vpop.permute.xlu0 %6954
    %6956 = vrot.lane.b32.xlu0 %v5000, 64
    %v6957 = vpop.permute.xlu0 %6956
    %6958 = vrot.lane.b32.xlu0 %v5001, 64
    %v6959 = vpop.permute.xlu0 %6958
    %6960 = vrot.lane.b32.xlu0 %v5002, 64
    %v6961 = vpop.permute.xlu0 %6960
    %6962 = vrot.lane.b32.xlu0 %v5003, 64
    %v6963 = vpop.permute.xlu0 %6962
    %6964 = vrot.lane.b32.xlu0 %v5004, 64
    %v6965 = vpop.permute.xlu0 %6964
    %6966 = vrot.lane.b32.xlu0 %v5005, 64
    %v6967 = vpop.permute.xlu0 %6966
    %6968 = vrot.lane.b32.xlu0 %v5006, 64
    %v6969 = vpop.permute.xlu0 %6968
    %6970 = vrot.lane.b32.xlu0 %v5007, 64
    %v6971 = vpop.permute.xlu0 %6970
    %6972 = vrot.lane.b32.xlu0 %v5008, 64
    %v6973 = vpop.permute.xlu0 %6972
    %6974 = vrot.lane.b32.xlu0 %v5009, 64
    %v6975 = vpop.permute.xlu0 %6974
    %6976 = vrot.lane.b32.xlu0 %v5010, 64
    %v6977 = vpop.permute.xlu0 %6976
    %6978 = vrot.lane.b32.xlu0 %v5011, 64
    %v6979 = vpop.permute.xlu0 %6978
    %6980 = vrot.lane.b32.xlu0 %v5012, 64
    %v6981 = vpop.permute.xlu0 %6980
    %6982 = vrot.lane.b32.xlu0 %v5013, 64
    %v6983 = vpop.permute.xlu0 %6982
    %6984 = vrot.lane.b32.xlu0 %v5014, 64
    %v6985 = vpop.permute.xlu0 %6984
    %6986 = vrot.lane.b32.xlu0 %v5015, 64
    %v6987 = vpop.permute.xlu0 %6986
    %6988 = vrot.lane.b32.xlu0 %v5016, 64
    %v6989 = vpop.permute.xlu0 %6988
    %6990 = vrot.lane.b32.xlu0 %v5017, 64
    %v6991 = vpop.permute.xlu0 %6990
    %6992 = vrot.lane.b32.xlu0 %v5018, 64
    %v6993 = vpop.permute.xlu0 %6992
    %6994 = vrot.lane.b32.xlu0 %v5019, 64
    %v6995 = vpop.permute.xlu0 %6994
    %6996 = vrot.lane.b32.xlu0 %v5020, 64
    %v6997 = vpop.permute.xlu0 %6996
    %6998 = vrot.lane.b32.xlu0 %v5021, 64
    %v6999 = vpop.permute.xlu0 %6998
    %7000 = vrot.lane.b32.xlu0 %v5022, 64
    %v7001 = vpop.permute.xlu0 %7000
    %7002 = vrot.lane.b32.xlu0 %v5023, 64
    %v7003 = vpop.permute.xlu0 %7002
    %7004 = vrot.lane.b32.xlu0 %v5024, 64
    %v7005 = vpop.permute.xlu0 %7004
    %7006 = vrot.lane.b32.xlu0 %v5025, 64
    %v7007 = vpop.permute.xlu0 %7006
    %7008 = vrot.lane.b32.xlu0 %v5026, 64
    %v7009 = vpop.permute.xlu0 %7008
    %7010 = vrot.lane.b32.xlu0 %v5027, 64
    %v7011 = vpop.permute.xlu0 %7010
    %v7076 = vsel %vm2736, %v4451, %v5093
    %v7077 = vsel %vm2736, %v4452, %v5095
    %v7078 = vsel %vm2736, %v4453, %v5097
    %v7079 = vsel %vm2736, %v4454, %v5099
    %v7080 = vsel %vm2736, %v4455, %v5101
    %v7081 = vsel %vm2736, %v4456, %v5103
    %v7082 = vsel %vm2736, %v4457, %v5105
    %v7083 = vsel %vm2736, %v4458, %v5107
    %v7084 = vsel %vm2736, %v4459, %v5109
    %v7085 = vsel %vm2736, %v4460, %v5111
    %v7086 = vsel %vm2736, %v4461, %v5113
    %v7087 = vsel %vm2736, %v4462, %v5115
    %v7088 = vsel %vm2736, %v4463, %v5117
    %v7089 = vsel %vm2736, %v4464, %v5119
    %v7090 = vsel %vm2736, %v4465, %v5121
    %v7091 = vsel %vm2736, %v4466, %v5123
    %v7092 = vsel %vm2736, %v4467, %v5125
    %v7093 = vsel %vm2736, %v4468, %v5127
    %v7094 = vsel %vm2736, %v4469, %v5129
    %v7095 = vsel %vm2736, %v4470, %v5131
    %v7096 = vsel %vm2736, %v4471, %v5133
    %v7097 = vsel %vm2736, %v4472, %v5135
    %v7098 = vsel %vm2736, %v4473, %v5137
    %v7099 = vsel %vm2736, %v4474, %v5139
    %v7100 = vsel %vm2736, %v4475, %v5141
    %v7101 = vsel %vm2736, %v4476, %v5143
    %v7102 = vsel %vm2736, %v4477, %v5145
    %v7103 = vsel %vm2736, %v4478, %v5147
    %v7104 = vsel %vm2736, %v4479, %v5149
    %v7105 = vsel %vm2736, %v4480, %v5151
    %v7106 = vsel %vm2736, %v4481, %v5153
    %v7107 = vsel %vm2736, %v4482, %v5155
    %v7108 = vsel %vm2736, %v4483, %v5157
    %v7109 = vsel %vm2736, %v4484, %v5159
    %v7110 = vsel %vm2736, %v4485, %v5161
    %v7111 = vsel %vm2736, %v4486, %v5163
    %v7112 = vsel %vm2736, %v4487, %v5165
    %v7113 = vsel %vm2736, %v4488, %v5167
    %v7114 = vsel %vm2736, %v4489, %v5169
    %v7115 = vsel %vm2736, %v4490, %v5171
    %v7116 = vsel %vm2736, %v4491, %v5173
    %v7117 = vsel %vm2736, %v4492, %v5175
    %v7118 = vsel %vm2736, %v4493, %v5177
    %v7119 = vsel %vm2736, %v4494, %v5179
    %v7120 = vsel %vm2736, %v4495, %v5181
    %v7121 = vsel %vm2736, %v4496, %v5183
    %v7122 = vsel %vm2736, %v4497, %v5185
    %v7123 = vsel %vm2736, %v4498, %v5187
    %v7124 = vsel %vm2736, %v4499, %v5189
    %v7125 = vsel %vm2736, %v4500, %v5191
    %v7126 = vsel %vm2736, %v4501, %v5193
    %v7127 = vsel %vm2736, %v4502, %v5195
    %v7128 = vsel %vm2736, %v4503, %v5197
    %v7129 = vsel %vm2736, %v4504, %v5199
    %v7130 = vsel %vm2736, %v4505, %v5201
    %v7131 = vsel %vm2736, %v4506, %v5203
    %v7132 = vsel %vm2736, %v4507, %v5205
    %v7133 = vsel %vm2736, %v4508, %v5207
    %v7134 = vsel %vm2736, %v4509, %v5209
    %v7135 = vsel %vm2736, %v4510, %v5211
    %v7136 = vsel %vm2736, %v4511, %v5213
    %v7137 = vsel %vm2736, %v4512, %v5215
    %v7138 = vsel %vm2736, %v4513, %v5217
    %v7139 = vsel %vm2736, %v4514, %v5219
    %v7140 = vsel %vm2866, %v7076, %v5349
    %v7141 = vsel %vm2866, %v7077, %v5351
    %v7142 = vsel %vm2866, %v7078, %v5353
    %v7143 = vsel %vm2866, %v7079, %v5355
    %v7144 = vsel %vm2866, %v7080, %v5357
    %v7145 = vsel %vm2866, %v7081, %v5359
    %v7146 = vsel %vm2866, %v7082, %v5361
    %v7147 = vsel %vm2866, %v7083, %v5363
    %v7148 = vsel %vm2866, %v7084, %v5365
    %v7149 = vsel %vm2866, %v7085, %v5367
    %v7150 = vsel %vm2866, %v7086, %v5369
    %v7151 = vsel %vm2866, %v7087, %v5371
    %v7152 = vsel %vm2866, %v7088, %v5373
    %v7153 = vsel %vm2866, %v7089, %v5375
    %v7154 = vsel %vm2866, %v7090, %v5377
    %v7155 = vsel %vm2866, %v7091, %v5379
    %v7156 = vsel %vm2866, %v7092, %v5381
    %v7157 = vsel %vm2866, %v7093, %v5383
    %v7158 = vsel %vm2866, %v7094, %v5385
    %v7159 = vsel %vm2866, %v7095, %v5387
    %v7160 = vsel %vm2866, %v7096, %v5389
    %v7161 = vsel %vm2866, %v7097, %v5391
    %v7162 = vsel %vm2866, %v7098, %v5393
    %v7163 = vsel %vm2866, %v7099, %v5395
    %v7164 = vsel %vm2866, %v7100, %v5397
    %v7165 = vsel %vm2866, %v7101, %v5399
    %v7166 = vsel %vm2866, %v7102, %v5401
    %v7167 = vsel %vm2866, %v7103, %v5403
    %v7168 = vsel %vm2866, %v7104, %v5405
    %v7169 = vsel %vm2866, %v7105, %v5407
    %v7170 = vsel %vm2866, %v7106, %v5409
    %v7171 = vsel %vm2866, %v7107, %v5411
    %v7172 = vsel %vm2866, %v7108, %v5413
    %v7173 = vsel %vm2866, %v7109, %v5415
    %v7174 = vsel %vm2866, %v7110, %v5417
    %v7175 = vsel %vm2866, %v7111, %v5419
    %v7176 = vsel %vm2866, %v7112, %v5421
    %v7177 = vsel %vm2866, %v7113, %v5423
    %v7178 = vsel %vm2866, %v7114, %v5425
    %v7179 = vsel %vm2866, %v7115, %v5427
    %v7180 = vsel %vm2866, %v7116, %v5429
    %v7181 = vsel %vm2866, %v7117, %v5431
    %v7182 = vsel %vm2866, %v7118, %v5433
    %v7183 = vsel %vm2866, %v7119, %v5435
    %v7184 = vsel %vm2866, %v7120, %v5437
    %v7185 = vsel %vm2866, %v7121, %v5439
    %v7186 = vsel %vm2866, %v7122, %v5441
    %v7187 = vsel %vm2866, %v7123, %v5443
    %v7188 = vsel %vm2866, %v7124, %v5445
    %v7189 = vsel %vm2866, %v7125, %v5447
    %v7190 = vsel %vm2866, %v7126, %v5449
    %v7191 = vsel %vm2866, %v7127, %v5451
    %v7192 = vsel %vm2866, %v7128, %v5453
    %v7193 = vsel %vm2866, %v7129, %v5455
    %v7194 = vsel %vm2866, %v7130, %v5457
    %v7195 = vsel %vm2866, %v7131, %v5459
    %v7196 = vsel %vm2866, %v7132, %v5461
    %v7197 = vsel %vm2866, %v7133, %v5463
    %v7198 = vsel %vm2866, %v7134, %v5465
    %v7199 = vsel %vm2866, %v7135, %v5467
    %v7200 = vsel %vm2866, %v7136, %v5469
    %v7201 = vsel %vm2866, %v7137, %v5471
    %v7202 = vsel %vm2866, %v7138, %v5473
    %v7203 = vsel %vm2866, %v7139, %v5475
    %v7204 = vsel %vm2996, %v7140, %v5605
    %v7205 = vsel %vm2996, %v7141, %v5607
    %v7206 = vsel %vm2996, %v7142, %v5609
    %v7207 = vsel %vm2996, %v7143, %v5611
    %v7208 = vsel %vm2996, %v7144, %v5613
    %v7209 = vsel %vm2996, %v7145, %v5615
    %v7210 = vsel %vm2996, %v7146, %v5617
    %v7211 = vsel %vm2996, %v7147, %v5619
    %v7212 = vsel %vm2996, %v7148, %v5621
    %v7213 = vsel %vm2996, %v7149, %v5623
    %v7214 = vsel %vm2996, %v7150, %v5625
    %v7215 = vsel %vm2996, %v7151, %v5627
    %v7216 = vsel %vm2996, %v7152, %v5629
    %v7217 = vsel %vm2996, %v7153, %v5631
    %v7218 = vsel %vm2996, %v7154, %v5633
    %v7219 = vsel %vm2996, %v7155, %v5635
    %v7220 = vsel %vm2996, %v7156, %v5637
    %v7221 = vsel %vm2996, %v7157, %v5639
    %v7222 = vsel %vm2996, %v7158, %v5641
    %v7223 = vsel %vm2996, %v7159, %v5643
    %v7224 = vsel %vm2996, %v7160, %v5645
    %v7225 = vsel %vm2996, %v7161, %v5647
    %v7226 = vsel %vm2996, %v7162, %v5649
    %v7227 = vsel %vm2996, %v7163, %v5651
    %v7228 = vsel %vm2996, %v7164, %v5653
    %v7229 = vsel %vm2996, %v7165, %v5655
    %v7230 = vsel %vm2996, %v7166, %v5657
    %v7231 = vsel %vm2996, %v7167, %v5659
    %v7232 = vsel %vm2996, %v7168, %v5661
    %v7233 = vsel %vm2996, %v7169, %v5663
    %v7234 = vsel %vm2996, %v7170, %v5665
    %v7235 = vsel %vm2996, %v7171, %v5667
    %v7236 = vsel %vm2996, %v7172, %v5669
    %v7237 = vsel %vm2996, %v7173, %v5671
    %v7238 = vsel %vm2996, %v7174, %v5673
    %v7239 = vsel %vm2996, %v7175, %v5675
    %v7240 = vsel %vm2996, %v7176, %v5677
    %v7241 = vsel %vm2996, %v7177, %v5679
    %v7242 = vsel %vm2996, %v7178, %v5681
    %v7243 = vsel %vm2996, %v7179, %v5683
    %v7244 = vsel %vm2996, %v7180, %v5685
    %v7245 = vsel %vm2996, %v7181, %v5687
    %v7246 = vsel %vm2996, %v7182, %v5689
    %v7247 = vsel %vm2996, %v7183, %v5691
    %v7248 = vsel %vm2996, %v7184, %v5693
    %v7249 = vsel %vm2996, %v7185, %v5695
    %v7250 = vsel %vm2996, %v7186, %v5697
    %v7251 = vsel %vm2996, %v7187, %v5699
    %v7252 = vsel %vm2996, %v7188, %v5701
    %v7253 = vsel %vm2996, %v7189, %v5703
    %v7254 = vsel %vm2996, %v7190, %v5705
    %v7255 = vsel %vm2996, %v7191, %v5707
    %v7256 = vsel %vm2996, %v7192, %v5709
    %v7257 = vsel %vm2996, %v7193, %v5711
    %v7258 = vsel %vm2996, %v7194, %v5713
    %v7259 = vsel %vm2996, %v7195, %v5715
    %v7260 = vsel %vm2996, %v7196, %v5717
    %v7261 = vsel %vm2996, %v7197, %v5719
    %v7262 = vsel %vm2996, %v7198, %v5721
    %v7263 = vsel %vm2996, %v7199, %v5723
    %v7264 = vsel %vm2996, %v7200, %v5725
    %v7265 = vsel %vm2996, %v7201, %v5727
    %v7266 = vsel %vm2996, %v7202, %v5729
    %v7267 = vsel %vm2996, %v7203, %v5731
    %v7268 = vsel %vm3126, %v7204, %v5861
    %v7269 = vsel %vm3126, %v7205, %v5863
    %v7270 = vsel %vm3126, %v7206, %v5865
    %v7271 = vsel %vm3126, %v7207, %v5867
    %v7272 = vsel %vm3126, %v7208, %v5869
    %v7273 = vsel %vm3126, %v7209, %v5871
    %v7274 = vsel %vm3126, %v7210, %v5873
    %v7275 = vsel %vm3126, %v7211, %v5875
    %v7276 = vsel %vm3126, %v7212, %v5877
    %v7277 = vsel %vm3126, %v7213, %v5879
    %v7278 = vsel %vm3126, %v7214, %v5881
    %v7279 = vsel %vm3126, %v7215, %v5883
    %v7280 = vsel %vm3126, %v7216, %v5885
    %v7281 = vsel %vm3126, %v7217, %v5887
    %v7282 = vsel %vm3126, %v7218, %v5889
    %v7283 = vsel %vm3126, %v7219, %v5891
    %v7284 = vsel %vm3126, %v7220, %v5893
    %v7285 = vsel %vm3126, %v7221, %v5895
    %v7286 = vsel %vm3126, %v7222, %v5897
    %v7287 = vsel %vm3126, %v7223, %v5899
    %v7288 = vsel %vm3126, %v7224, %v5901
    %v7289 = vsel %vm3126, %v7225, %v5903
    %v7290 = vsel %vm3126, %v7226, %v5905
    %v7291 = vsel %vm3126, %v7227, %v5907
    %v7292 = vsel %vm3126, %v7228, %v5909
    %v7293 = vsel %vm3126, %v7229, %v5911
    %v7294 = vsel %vm3126, %v7230, %v5913
    %v7295 = vsel %vm3126, %v7231, %v5915
    %v7296 = vsel %vm3126, %v7232, %v5917
    %v7297 = vsel %vm3126, %v7233, %v5919
    %v7298 = vsel %vm3126, %v7234, %v5921
    %v7299 = vsel %vm3126, %v7235, %v5923
    %v7300 = vsel %vm3126, %v7236, %v5925
    %v7301 = vsel %vm3126, %v7237, %v5927
    %v7302 = vsel %vm3126, %v7238, %v5929
    %v7303 = vsel %vm3126, %v7239, %v5931
    %v7304 = vsel %vm3126, %v7240, %v5933
    %v7305 = vsel %vm3126, %v7241, %v5935
    %v7306 = vsel %vm3126, %v7242, %v5937
    %v7307 = vsel %vm3126, %v7243, %v5939
    %v7308 = vsel %vm3126, %v7244, %v5941
    %v7309 = vsel %vm3126, %v7245, %v5943
    %v7310 = vsel %vm3126, %v7246, %v5945
    %v7311 = vsel %vm3126, %v7247, %v5947
    %v7312 = vsel %vm3126, %v7248, %v5949
    %v7313 = vsel %vm3126, %v7249, %v5951
    %v7314 = vsel %vm3126, %v7250, %v5953
    %v7315 = vsel %vm3126, %v7251, %v5955
    %v7316 = vsel %vm3126, %v7252, %v5957
    %v7317 = vsel %vm3126, %v7253, %v5959
    %v7318 = vsel %vm3126, %v7254, %v5961
    %v7319 = vsel %vm3126, %v7255, %v5963
    %v7320 = vsel %vm3126, %v7256, %v5965
    %v7321 = vsel %vm3126, %v7257, %v5967
    %v7322 = vsel %vm3126, %v7258, %v5969
    %v7323 = vsel %vm3126, %v7259, %v5971
    %v7324 = vsel %vm3126, %v7260, %v5973
    %v7325 = vsel %vm3126, %v7261, %v5975
    %v7326 = vsel %vm3126, %v7262, %v5977
    %v7327 = vsel %vm3126, %v7263, %v5979
    %v7328 = vsel %vm3126, %v7264, %v5981
    %v7329 = vsel %vm3126, %v7265, %v5983
    %v7330 = vsel %vm3126, %v7266, %v5985
    %v7331 = vsel %vm3126, %v7267, %v5987
    %vm7332 = vcmask 326656
    %v7333 = vsel %vm7332, %v7268, %v6117
    %v7334 = vsel %vm7332, %v7269, %v6119
    %v7335 = vsel %vm7332, %v7270, %v6121
    %v7336 = vsel %vm7332, %v7271, %v6123
    %v7337 = vsel %vm7332, %v7272, %v6125
    %v7338 = vsel %vm7332, %v7273, %v6127
    %v7339 = vsel %vm7332, %v7274, %v6129
    %v7340 = vsel %vm7332, %v7275, %v6131
    %v7341 = vsel %vm7332, %v7276, %v6133
    %v7342 = vsel %vm7332, %v7277, %v6135
    %v7343 = vsel %vm7332, %v7278, %v6137
    %v7344 = vsel %vm7332, %v7279, %v6139
    %v7345 = vsel %vm7332, %v7280, %v6141
    %v7346 = vsel %vm7332, %v7281, %v6143
    %v7347 = vsel %vm7332, %v7282, %v6145
    %v7348 = vsel %vm7332, %v7283, %v6147
    %v7349 = vsel %vm7332, %v7284, %v6149
    %v7350 = vsel %vm7332, %v7285, %v6151
    %v7351 = vsel %vm7332, %v7286, %v6153
    %v7352 = vsel %vm7332, %v7287, %v6155
    %v7353 = vsel %vm7332, %v7288, %v6157
    %v7354 = vsel %vm7332, %v7289, %v6159
    %v7355 = vsel %vm7332, %v7290, %v6161
    %v7356 = vsel %vm7332, %v7291, %v6163
    %v7357 = vsel %vm7332, %v7292, %v6165
    %v7358 = vsel %vm7332, %v7293, %v6167
    %v7359 = vsel %vm7332, %v7294, %v6169
    %v7360 = vsel %vm7332, %v7295, %v6171
    %v7361 = vsel %vm7332, %v7296, %v6173
    %v7362 = vsel %vm7332, %v7297, %v6175
    %v7363 = vsel %vm7332, %v7298, %v6177
    %v7364 = vsel %vm7332, %v7299, %v6179
    %v7365 = vsel %vm7332, %v7300, %v6181
    %v7366 = vsel %vm7332, %v7301, %v6183
    %v7367 = vsel %vm7332, %v7302, %v6185
    %v7368 = vsel %vm7332, %v7303, %v6187
    %v7369 = vsel %vm7332, %v7304, %v6189
    %v7370 = vsel %vm7332, %v7305, %v6191
    %v7371 = vsel %vm7332, %v7306, %v6193
    %v7372 = vsel %vm7332, %v7307, %v6195
    %v7373 = vsel %vm7332, %v7308, %v6197
    %v7374 = vsel %vm7332, %v7309, %v6199
    %v7375 = vsel %vm7332, %v7310, %v6201
    %v7376 = vsel %vm7332, %v7311, %v6203
    %v7377 = vsel %vm7332, %v7312, %v6205
    %v7378 = vsel %vm7332, %v7313, %v6207
    %v7379 = vsel %vm7332, %v7314, %v6209
    %v7380 = vsel %vm7332, %v7315, %v6211
    %v7381 = vsel %vm7332, %v7316, %v6213
    %v7382 = vsel %vm7332, %v7317, %v6215
    %v7383 = vsel %vm7332, %v7318, %v6217
    %v7384 = vsel %vm7332, %v7319, %v6219
    %v7385 = vsel %vm7332, %v7320, %v6221
    %v7386 = vsel %vm7332, %v7321, %v6223
    %v7387 = vsel %vm7332, %v7322, %v6225
    %v7388 = vsel %vm7332, %v7323, %v6227
    %v7389 = vsel %vm7332, %v7324, %v6229
    %v7390 = vsel %vm7332, %v7325, %v6231
    %v7391 = vsel %vm7332, %v7326, %v6233
    %v7392 = vsel %vm7332, %v7327, %v6235
    %v7393 = vsel %vm7332, %v7328, %v6237
    %v7394 = vsel %vm7332, %v7329, %v6239
    %v7395 = vsel %vm7332, %v7330, %v6241
    %v7396 = vsel %vm7332, %v7331, %v6243
    %vm7397 = vcmask 392192
    %v7398 = vsel %vm7397, %v7333, %v6373
    %v7399 = vsel %vm7397, %v7334, %v6375
    %v7400 = vsel %vm7397, %v7335, %v6377
    %v7401 = vsel %vm7397, %v7336, %v6379
    %v7402 = vsel %vm7397, %v7337, %v6381
    %v7403 = vsel %vm7397, %v7338, %v6383
    %v7404 = vsel %vm7397, %v7339, %v6385
    %v7405 = vsel %vm7397, %v7340, %v6387
    %v7406 = vsel %vm7397, %v7341, %v6389
    %v7407 = vsel %vm7397, %v7342, %v6391
    %v7408 = vsel %vm7397, %v7343, %v6393
    %v7409 = vsel %vm7397, %v7344, %v6395
    %v7410 = vsel %vm7397, %v7345, %v6397
    %v7411 = vsel %vm7397, %v7346, %v6399
    %v7412 = vsel %vm7397, %v7347, %v6401
    %v7413 = vsel %vm7397, %v7348, %v6403
    %v7414 = vsel %vm7397, %v7349, %v6405
    %v7415 = vsel %vm7397, %v7350, %v6407
    %v7416 = vsel %vm7397, %v7351, %v6409
    %v7417 = vsel %vm7397, %v7352, %v6411
    %v7418 = vsel %vm7397, %v7353, %v6413
    %v7419 = vsel %vm7397, %v7354, %v6415
    %v7420 = vsel %vm7397, %v7355, %v6417
    %v7421 = vsel %vm7397, %v7356, %v6419
    %v7422 = vsel %vm7397, %v7357, %v6421
    %v7423 = vsel %vm7397, %v7358, %v6423
    %v7424 = vsel %vm7397, %v7359, %v6425
    %v7425 = vsel %vm7397, %v7360, %v6427
    %v7426 = vsel %vm7397, %v7361, %v6429
    %v7427 = vsel %vm7397, %v7362, %v6431
    %v7428 = vsel %vm7397, %v7363, %v6433
    %v7429 = vsel %vm7397, %v7364, %v6435
    %v7430 = vsel %vm7397, %v7365, %v6437
    %v7431 = vsel %vm7397, %v7366, %v6439
    %v7432 = vsel %vm7397, %v7367, %v6441
    %v7433 = vsel %vm7397, %v7368, %v6443
    %v7434 = vsel %vm7397, %v7369, %v6445
    %v7435 = vsel %vm7397, %v7370, %v6447
    %v7436 = vsel %vm7397, %v7371, %v6449
    %v7437 = vsel %vm7397, %v7372, %v6451
    %v7438 = vsel %vm7397, %v7373, %v6453
    %v7439 = vsel %vm7397, %v7374, %v6455
    %v7440 = vsel %vm7397, %v7375, %v6457
    %v7441 = vsel %vm7397, %v7376, %v6459
    %v7442 = vsel %vm7397, %v7377, %v6461
    %v7443 = vsel %vm7397, %v7378, %v6463
    %v7444 = vsel %vm7397, %v7379, %v6465
    %v7445 = vsel %vm7397, %v7380, %v6467
    %v7446 = vsel %vm7397, %v7381, %v6469
    %v7447 = vsel %vm7397, %v7382, %v6471
    %v7448 = vsel %vm7397, %v7383, %v6473
    %v7449 = vsel %vm7397, %v7384, %v6475
    %v7450 = vsel %vm7397, %v7385, %v6477
    %v7451 = vsel %vm7397, %v7386, %v6479
    %v7452 = vsel %vm7397, %v7387, %v6481
    %v7453 = vsel %vm7397, %v7388, %v6483
    %v7454 = vsel %vm7397, %v7389, %v6485
    %v7455 = vsel %vm7397, %v7390, %v6487
    %v7456 = vsel %vm7397, %v7391, %v6489
    %v7457 = vsel %vm7397, %v7392, %v6491
    %v7458 = vsel %vm7397, %v7393, %v6493
    %v7459 = vsel %vm7397, %v7394, %v6495
    %v7460 = vsel %vm7397, %v7395, %v6497
    %v7461 = vsel %vm7397, %v7396, %v6499
    %vm7462 = vcmask 457728
    %v7463 = vsel %vm7462, %v7398, %v6629
    %v7464 = vsel %vm7462, %v7399, %v6631
    %v7465 = vsel %vm7462, %v7400, %v6633
    %v7466 = vsel %vm7462, %v7401, %v6635
    %v7467 = vsel %vm7462, %v7402, %v6637
    %v7468 = vsel %vm7462, %v7403, %v6639
    %v7469 = vsel %vm7462, %v7404, %v6641
    %v7470 = vsel %vm7462, %v7405, %v6643
    %v7471 = vsel %vm7462, %v7406, %v6645
    %v7472 = vsel %vm7462, %v7407, %v6647
    %v7473 = vsel %vm7462, %v7408, %v6649
    %v7474 = vsel %vm7462, %v7409, %v6651
    %v7475 = vsel %vm7462, %v7410, %v6653
    %v7476 = vsel %vm7462, %v7411, %v6655
    %v7477 = vsel %vm7462, %v7412, %v6657
    %v7478 = vsel %vm7462, %v7413, %v6659
    %v7479 = vsel %vm7462, %v7414, %v6661
    %v7480 = vsel %vm7462, %v7415, %v6663
    %v7481 = vsel %vm7462, %v7416, %v6665
    %v7482 = vsel %vm7462, %v7417, %v6667
    %v7483 = vsel %vm7462, %v7418, %v6669
    %v7484 = vsel %vm7462, %v7419, %v6671
    %v7485 = vsel %vm7462, %v7420, %v6673
    %v7486 = vsel %vm7462, %v7421, %v6675
    %v7487 = vsel %vm7462, %v7422, %v6677
    %v7488 = vsel %vm7462, %v7423, %v6679
    %v7489 = vsel %vm7462, %v7424, %v6681
    %v7490 = vsel %vm7462, %v7425, %v6683
    %v7491 = vsel %vm7462, %v7426, %v6685
    %v7492 = vsel %vm7462, %v7427, %v6687
    %v7493 = vsel %vm7462, %v7428, %v6689
    %v7494 = vsel %vm7462, %v7429, %v6691
    %v7495 = vsel %vm7462, %v7430, %v6693
    %v7496 = vsel %vm7462, %v7431, %v6695
    %v7497 = vsel %vm7462, %v7432, %v6697
    %v7498 = vsel %vm7462, %v7433, %v6699
    %v7499 = vsel %vm7462, %v7434, %v6701
    %v7500 = vsel %vm7462, %v7435, %v6703
    %v7501 = vsel %vm7462, %v7436, %v6705
    %v7502 = vsel %vm7462, %v7437, %v6707
    %v7503 = vsel %vm7462, %v7438, %v6709
    %v7504 = vsel %vm7462, %v7439, %v6711
    %v7505 = vsel %vm7462, %v7440, %v6713
    %v7506 = vsel %vm7462, %v7441, %v6715
    %v7507 = vsel %vm7462, %v7442, %v6717
    %v7508 = vsel %vm7462, %v7443, %v6719
    %v7509 = vsel %vm7462, %v7444, %v6721
    %v7510 = vsel %vm7462, %v7445, %v6723
    %v7511 = vsel %vm7462, %v7446, %v6725
    %v7512 = vsel %vm7462, %v7447, %v6727
    %v7513 = vsel %vm7462, %v7448, %v6729
    %v7514 = vsel %vm7462, %v7449, %v6731
    %v7515 = vsel %vm7462, %v7450, %v6733
    %v7516 = vsel %vm7462, %v7451, %v6735
    %v7517 = vsel %vm7462, %v7452, %v6737
    %v7518 = vsel %vm7462, %v7453, %v6739
    %v7519 = vsel %vm7462, %v7454, %v6741
    %v7520 = vsel %vm7462, %v7455, %v6743
    %v7521 = vsel %vm7462, %v7456, %v6745
    %v7522 = vsel %vm7462, %v7457, %v6747
    %v7523 = vsel %vm7462, %v7458, %v6749
    %v7524 = vsel %vm7462, %v7459, %v6751
    %v7525 = vsel %vm7462, %v7460, %v6753
    %v7526 = vsel %vm7462, %v7461, %v6755
    %vm7527 = vcmask 523264
    %v7528 = vsel %vm7527, %v7463, %v6885
    %v7529 = vsel %vm7527, %v7464, %v6887
    %v7530 = vsel %vm7527, %v7465, %v6889
    %v7531 = vsel %vm7527, %v7466, %v6891
    %v7532 = vsel %vm7527, %v7467, %v6893
    %v7533 = vsel %vm7527, %v7468, %v6895
    %v7534 = vsel %vm7527, %v7469, %v6897
    %v7535 = vsel %vm7527, %v7470, %v6899
    %v7536 = vsel %vm7527, %v7471, %v6901
    %v7537 = vsel %vm7527, %v7472, %v6903
    %v7538 = vsel %vm7527, %v7473, %v6905
    %v7539 = vsel %vm7527, %v7474, %v6907
    %v7540 = vsel %vm7527, %v7475, %v6909
    %v7541 = vsel %vm7527, %v7476, %v6911
    %v7542 = vsel %vm7527, %v7477, %v6913
    %v7543 = vsel %vm7527, %v7478, %v6915
    %v7544 = vsel %vm7527, %v7479, %v6917
    %v7545 = vsel %vm7527, %v7480, %v6919
    %v7546 = vsel %vm7527, %v7481, %v6921
    %v7547 = vsel %vm7527, %v7482, %v6923
    %v7548 = vsel %vm7527, %v7483, %v6925
    %v7549 = vsel %vm7527, %v7484, %v6927
    %v7550 = vsel %vm7527, %v7485, %v6929
    %v7551 = vsel %vm7527, %v7486, %v6931
    %v7552 = vsel %vm7527, %v7487, %v6933
    %v7553 = vsel %vm7527, %v7488, %v6935
    %v7554 = vsel %vm7527, %v7489, %v6937
    %v7555 = vsel %vm7527, %v7490, %v6939
    %v7556 = vsel %vm7527, %v7491, %v6941
    %v7557 = vsel %vm7527, %v7492, %v6943
    %v7558 = vsel %vm7527, %v7493, %v6945
    %v7559 = vsel %vm7527, %v7494, %v6947
    %v7560 = vsel %vm7527, %v7495, %v6949
    %v7561 = vsel %vm7527, %v7496, %v6951
    %v7562 = vsel %vm7527, %v7497, %v6953
    %v7563 = vsel %vm7527, %v7498, %v6955
    %v7564 = vsel %vm7527, %v7499, %v6957
    %v7565 = vsel %vm7527, %v7500, %v6959
    %v7566 = vsel %vm7527, %v7501, %v6961
    %v7567 = vsel %vm7527, %v7502, %v6963
    %v7568 = vsel %vm7527, %v7503, %v6965
    %v7569 = vsel %vm7527, %v7504, %v6967
    %v7570 = vsel %vm7527, %v7505, %v6969
    %v7571 = vsel %vm7527, %v7506, %v6971
    %v7572 = vsel %vm7527, %v7507, %v6973
    %v7573 = vsel %vm7527, %v7508, %v6975
    %v7574 = vsel %vm7527, %v7509, %v6977
    %v7575 = vsel %vm7527, %v7510, %v6979
    %v7576 = vsel %vm7527, %v7511, %v6981
    %v7577 = vsel %vm7527, %v7512, %v6983
    %v7578 = vsel %vm7527, %v7513, %v6985
    %v7579 = vsel %vm7527, %v7514, %v6987
    %v7580 = vsel %vm7527, %v7515, %v6989
    %v7581 = vsel %vm7527, %v7516, %v6991
    %v7582 = vsel %vm7527, %v7517, %v6993
    %v7583 = vsel %vm7527, %v7518, %v6995
    %v7584 = vsel %vm7527, %v7519, %v6997
    %v7585 = vsel %vm7527, %v7520, %v6999
    %v7586 = vsel %vm7527, %v7521, %v7001
    %v7587 = vsel %vm7527, %v7522, %v7003
    %v7588 = vsel %vm7527, %v7523, %v7005
    %v7589 = vsel %vm7527, %v7524, %v7007
    %v7590 = vsel %vm7527, %v7525, %v7009
    %v7591 = vsel %vm7527, %v7526, %v7011
    %v7592 = vld [vmem:[%s5] sm:$0xff]
    %v7593 = vld [vmem:[%s5 + $0x8] sm:$0xff]
    %v7594 = vld [vmem:[%s5 + $0x10] sm:$0xff]
    %v7595 = vld [vmem:[%s5 + $0x18] sm:$0xff]
    %v7596 = vld [vmem:[%s5 + $0x20] sm:$0xff]
    %v7597 = vld [vmem:[%s5 + $0x28] sm:$0xff]
    %v7598 = vld [vmem:[%s5 + $0x30] sm:$0xff]
    %v7599 = vld [vmem:[%s5 + $0x38] sm:$0xff]
    %v7600 = vld [vmem:[%s5 + $0x40] sm:$0xff]
    %v7601 = vld [vmem:[%s6] sm:$0x1]
    %v7603 = vperm.slane %v7601, 0
    %vm7605 = vcmask 588800
    %v7607 = vsel %vm7605, %v7528, 0
    %v7610 = vsel %vm7605, %v7529, 0
    %v7613 = vsel %vm7605, %v7530, 0
    %v7616 = vsel %vm7605, %v7531, 0
    %v7619 = vsel %vm7605, %v7532, 0
    %v7622 = vsel %vm7605, %v7533, 0
    %v7625 = vsel %vm7605, %v7534, 0
    %v7628 = vsel %vm7605, %v7535, 0
    %v7631 = vsel %vm7605, %v7536, 0
    %v7634 = vsel %vm7605, %v7537, 0
    %v7637 = vsel %vm7605, %v7538, 0
    %v7640 = vsel %vm7605, %v7539, 0
    %v7643 = vsel %vm7605, %v7540, 0
    %v7646 = vsel %vm7605, %v7541, 0
    %v7649 = vsel %vm7605, %v7542, 0
    %v7652 = vsel %vm7605, %v7543, 0
    %v7655 = vsel %vm7605, %v7544, 0
    %v7658 = vsel %vm7605, %v7545, 0
    %v7661 = vsel %vm7605, %v7546, 0
    %v7664 = vsel %vm7605, %v7547, 0
    %v7667 = vsel %vm7605, %v7548, 0
    %v7670 = vsel %vm7605, %v7549, 0
    %v7673 = vsel %vm7605, %v7550, 0
    %v7676 = vsel %vm7605, %v7551, 0
    %v7679 = vsel %vm7605, %v7552, 0
    %v7682 = vsel %vm7605, %v7553, 0
    %v7685 = vsel %vm7605, %v7554, 0
    %v7688 = vsel %vm7605, %v7555, 0
    %v7691 = vsel %vm7605, %v7556, 0
    %v7694 = vsel %vm7605, %v7557, 0
    %v7697 = vsel %vm7605, %v7558, 0
    %v7700 = vsel %vm7605, %v7559, 0
    %v7703 = vsel %vm7605, %v7560, 0
    %v7706 = vsel %vm7605, %v7561, 0
    %v7709 = vsel %vm7605, %v7562, 0
    %v7712 = vsel %vm7605, %v7563, 0
    %v7715 = vsel %vm7605, %v7564, 0
    %v7718 = vsel %vm7605, %v7565, 0
    %v7721 = vsel %vm7605, %v7566, 0
    %v7724 = vsel %vm7605, %v7567, 0
    %v7727 = vsel %vm7605, %v7568, 0
    %v7730 = vsel %vm7605, %v7569, 0
    %v7733 = vsel %vm7605, %v7570, 0
    %v7736 = vsel %vm7605, %v7571, 0
    %v7739 = vsel %vm7605, %v7572, 0
    %v7742 = vsel %vm7605, %v7573, 0
    %v7745 = vsel %vm7605, %v7574, 0
    %v7748 = vsel %vm7605, %v7575, 0
    %v7751 = vsel %vm7605, %v7576, 0
    %v7754 = vsel %vm7605, %v7577, 0
    %v7757 = vsel %vm7605, %v7578, 0
    %v7760 = vsel %vm7605, %v7579, 0
    %v7763 = vsel %vm7605, %v7580, 0
    %v7766 = vsel %vm7605, %v7581, 0
    %v7769 = vsel %vm7605, %v7582, 0
    %v7772 = vsel %vm7605, %v7583, 0
    %v7775 = vsel %vm7605, %v7584, 0
    %v7778 = vsel %vm7605, %v7585, 0
    %v7781 = vsel %vm7605, %v7586, 0
    %v7784 = vsel %vm7605, %v7587, 0
    %v7787 = vsel %vm7605, %v7588, 0
    %v7790 = vsel %vm7605, %v7589, 0
    %v7793 = vsel %vm7605, %v7590, 0
    %v7796 = vsel %vm7605, %v7591, 0
    %7798 = vmatpush.msra.mxu0 0.0
    %7799 = vmatpush.msra.mxu0 0.0
    %7800 = vmatpush.msra.mxu0 0.0
    %7801 = vmatpush.msra.mxu0 0.0
    %7802 = vmatpush.msra.mxu0 0.0
    %7803 = vmatpush.msra.mxu0 0.0
    %7804 = vmatpush.msra.mxu0 0.0
    %7805 = vmatpush.msra.mxu0 %v7600
    %7806 = vmatpush.msra.mxu0 %v7599
    %7807 = vmatpush.msra.mxu0 %v7598
    %7808 = vmatpush.msra.mxu0 %v7597
    %7809 = vmatpush.msra.mxu0 %v7596
    %7810 = vmatpush.msra.mxu0 %v7595
    %7811 = vmatpush.msra.mxu0 %v7594
    %7812 = vmatpush.msra.mxu0 %v7593
    %7813 = vmatpush.msra.mxu0 %v7592
    %7814 = vmatmul.f32.gmra.mxu0 %v7607
    %v7815 = vpop.f32.mrf.mxu0
    %v7816 = vadd.f32 %v7603, %v7815
    %7817 = vmatmul.f32.gmra.mxu0 %v7610
    %v7818 = vpop.f32.mrf.mxu0
    %v7819 = vadd.f32 %v7603, %v7818
    %7820 = vmatmul.f32.gmra.mxu0 %v7613
    %v7821 = vpop.f32.mrf.mxu0
    %v7822 = vadd.f32 %v7603, %v7821
    %7823 = vmatmul.f32.gmra.mxu0 %v7616
    %v7824 = vpop.f32.mrf.mxu0
    %v7825 = vadd.f32 %v7603, %v7824
    %7826 = vmatmul.f32.gmra.mxu0 %v7619
    %v7827 = vpop.f32.mrf.mxu0
    %v7828 = vadd.f32 %v7603, %v7827
    %7829 = vmatmul.f32.gmra.mxu0 %v7622
    %v7830 = vpop.f32.mrf.mxu0
    %v7831 = vadd.f32 %v7603, %v7830
    %7832 = vmatmul.f32.gmra.mxu0 %v7625
    %v7833 = vpop.f32.mrf.mxu0
    %v7834 = vadd.f32 %v7603, %v7833
    %7835 = vmatmul.f32.gmra.mxu0 %v7628
    %v7836 = vpop.f32.mrf.mxu0
    %v7837 = vadd.f32 %v7603, %v7836
    %7838 = vmatmul.f32.gmra.mxu0 %v7631
    %v7839 = vpop.f32.mrf.mxu0
    %v7840 = vadd.f32 %v7603, %v7839
    %7841 = vmatmul.f32.gmra.mxu0 %v7634
    %v7842 = vpop.f32.mrf.mxu0
    %v7843 = vadd.f32 %v7603, %v7842
    %7844 = vmatmul.f32.gmra.mxu0 %v7637
    %v7845 = vpop.f32.mrf.mxu0
    %v7846 = vadd.f32 %v7603, %v7845
    %7847 = vmatmul.f32.gmra.mxu0 %v7640
    %v7848 = vpop.f32.mrf.mxu0
    %v7849 = vadd.f32 %v7603, %v7848
    %7850 = vmatmul.f32.gmra.mxu0 %v7643
    %v7851 = vpop.f32.mrf.mxu0
    %v7852 = vadd.f32 %v7603, %v7851
    %7853 = vmatmul.f32.gmra.mxu0 %v7646
    %v7854 = vpop.f32.mrf.mxu0
    %v7855 = vadd.f32 %v7603, %v7854
    %7856 = vmatmul.f32.gmra.mxu0 %v7649
    %v7857 = vpop.f32.mrf.mxu0
    %v7858 = vadd.f32 %v7603, %v7857
    %7859 = vmatmul.f32.gmra.mxu0 %v7652
    %v7860 = vpop.f32.mrf.mxu0
    %v7861 = vadd.f32 %v7603, %v7860
    %7862 = vmatmul.f32.gmra.mxu0 %v7655
    %v7863 = vpop.f32.mrf.mxu0
    %v7864 = vadd.f32 %v7603, %v7863
    %7865 = vmatmul.f32.gmra.mxu0 %v7658
    %v7866 = vpop.f32.mrf.mxu0
    %v7867 = vadd.f32 %v7603, %v7866
    %7868 = vmatmul.f32.gmra.mxu0 %v7661
    %v7869 = vpop.f32.mrf.mxu0
    %v7870 = vadd.f32 %v7603, %v7869
    %7871 = vmatmul.f32.gmra.mxu0 %v7664
    %v7872 = vpop.f32.mrf.mxu0
    %v7873 = vadd.f32 %v7603, %v7872
    %7874 = vmatmul.f32.gmra.mxu0 %v7667
    %v7875 = vpop.f32.mrf.mxu0
    %v7876 = vadd.f32 %v7603, %v7875
    %7877 = vmatmul.f32.gmra.mxu0 %v7670
    %v7878 = vpop.f32.mrf.mxu0
    %v7879 = vadd.f32 %v7603, %v7878
    %7880 = vmatmul.f32.gmra.mxu0 %v7673
    %v7881 = vpop.f32.mrf.mxu0
    %v7882 = vadd.f32 %v7603, %v7881
    %7883 = vmatmul.f32.gmra.mxu0 %v7676
    %v7884 = vpop.f32.mrf.mxu0
    %v7885 = vadd.f32 %v7603, %v7884
    %7886 = vmatmul.f32.gmra.mxu0 %v7679
    %v7887 = vpop.f32.mrf.mxu0
    %v7888 = vadd.f32 %v7603, %v7887
    %7889 = vmatmul.f32.gmra.mxu0 %v7682
    %v7890 = vpop.f32.mrf.mxu0
    %v7891 = vadd.f32 %v7603, %v7890
    %7892 = vmatmul.f32.gmra.mxu0 %v7685
    %v7893 = vpop.f32.mrf.mxu0
    %v7894 = vadd.f32 %v7603, %v7893
    %7895 = vmatmul.f32.gmra.mxu0 %v7688
    %v7896 = vpop.f32.mrf.mxu0
    %v7897 = vadd.f32 %v7603, %v7896
    %7898 = vmatmul.f32.gmra.mxu0 %v7691
    %v7899 = vpop.f32.mrf.mxu0
    %v7900 = vadd.f32 %v7603, %v7899
    %7901 = vmatmul.f32.gmra.mxu0 %v7694
    %v7902 = vpop.f32.mrf.mxu0
    %v7903 = vadd.f32 %v7603, %v7902
    %7904 = vmatmul.f32.gmra.mxu0 %v7697
    %v7905 = vpop.f32.mrf.mxu0
    %v7906 = vadd.f32 %v7603, %v7905
    %7907 = vmatmul.f32.gmra.mxu0 %v7700
    %v7908 = vpop.f32.mrf.mxu0
    %v7909 = vadd.f32 %v7603, %v7908
    %7910 = vmatmul.f32.gmra.mxu0 %v7703
    %v7911 = vpop.f32.mrf.mxu0
    %v7912 = vadd.f32 %v7603, %v7911
    %7913 = vmatmul.f32.gmra.mxu0 %v7706
    %v7914 = vpop.f32.mrf.mxu0
    %v7915 = vadd.f32 %v7603, %v7914
    %7916 = vmatmul.f32.gmra.mxu0 %v7709
    %v7917 = vpop.f32.mrf.mxu0
    %v7918 = vadd.f32 %v7603, %v7917
    %7919 = vmatmul.f32.gmra.mxu0 %v7712
    %v7920 = vpop.f32.mrf.mxu0
    %v7921 = vadd.f32 %v7603, %v7920
    %7922 = vmatmul.f32.gmra.mxu0 %v7715
    %v7923 = vpop.f32.mrf.mxu0
    %v7924 = vadd.f32 %v7603, %v7923
    %7925 = vmatmul.f32.gmra.mxu0 %v7718
    %v7926 = vpop.f32.mrf.mxu0
    %v7927 = vadd.f32 %v7603, %v7926
    %7928 = vmatmul.f32.gmra.mxu0 %v7721
    %v7929 = vpop.f32.mrf.mxu0
    %v7930 = vadd.f32 %v7603, %v7929
    %7931 = vmatmul.f32.gmra.mxu0 %v7724
    %v7932 = vpop.f32.mrf.mxu0
    %v7933 = vadd.f32 %v7603, %v7932
    %7934 = vmatmul.f32.gmra.mxu0 %v7727
    %v7935 = vpop.f32.mrf.mxu0
    %v7936 = vadd.f32 %v7603, %v7935
    %7937 = vmatmul.f32.gmra.mxu0 %v7730
    %v7938 = vpop.f32.mrf.mxu0
    %v7939 = vadd.f32 %v7603, %v7938
    %7940 = vmatmul.f32.gmra.mxu0 %v7733
    %v7941 = vpop.f32.mrf.mxu0
    %v7942 = vadd.f32 %v7603, %v7941
    %7943 = vmatmul.f32.gmra.mxu0 %v7736
    %v7944 = vpop.f32.mrf.mxu0
    %v7945 = vadd.f32 %v7603, %v7944
    %7946 = vmatmul.f32.gmra.mxu0 %v7739
    %v7947 = vpop.f32.mrf.mxu0
    %v7948 = vadd.f32 %v7603, %v7947
    %7949 = vmatmul.f32.gmra.mxu0 %v7742
    %v7950 = vpop.f32.mrf.mxu0
    %v7951 = vadd.f32 %v7603, %v7950
    %7952 = vmatmul.f32.gmra.mxu0 %v7745
    %v7953 = vpop.f32.mrf.mxu0
    %v7954 = vadd.f32 %v7603, %v7953
    %7955 = vmatmul.f32.gmra.mxu0 %v7748
    %v7956 = vpop.f32.mrf.mxu0
    %v7957 = vadd.f32 %v7603, %v7956
    %7958 = vmatmul.f32.gmra.mxu0 %v7751
    %v7959 = vpop.f32.mrf.mxu0
    %v7960 = vadd.f32 %v7603, %v7959
    %7961 = vmatmul.f32.gmra.mxu0 %v7754
    %v7962 = vpop.f32.mrf.mxu0
    %v7963 = vadd.f32 %v7603, %v7962
    %7964 = vmatmul.f32.gmra.mxu0 %v7757
    %v7965 = vpop.f32.mrf.mxu0
    %v7966 = vadd.f32 %v7603, %v7965
    %7967 = vmatmul.f32.gmra.mxu0 %v7760
    %v7968 = vpop.f32.mrf.mxu0
    %v7969 = vadd.f32 %v7603, %v7968
    %7970 = vmatmul.f32.gmra.mxu0 %v7763
    %v7971 = vpop.f32.mrf.mxu0
    %v7972 = vadd.f32 %v7603, %v7971
    %7973 = vmatmul.f32.gmra.mxu0 %v7766
    %v7974 = vpop.f32.mrf.mxu0
    %v7975 = vadd.f32 %v7603, %v7974
    %7976 = vmatmul.f32.gmra.mxu0 %v7769
    %v7977 = vpop.f32.mrf.mxu0
    %v7978 = vadd.f32 %v7603, %v7977
    %7979 = vmatmul.f32.gmra.mxu0 %v7772
    %v7980 = vpop.f32.mrf.mxu0
    %v7981 = vadd.f32 %v7603, %v7980
    %7982 = vmatmul.f32.gmra.mxu0 %v7775
    %v7983 = vpop.f32.mrf.mxu0
    %v7984 = vadd.f32 %v7603, %v7983
    %7985 = vmatmul.f32.gmra.mxu0 %v7778
    %v7986 = vpop.f32.mrf.mxu0
    %v7987 = vadd.f32 %v7603, %v7986
    %7988 = vmatmul.f32.gmra.mxu0 %v7781
    %v7989 = vpop.f32.mrf.mxu0
    %v7990 = vadd.f32 %v7603, %v7989
    %7991 = vmatmul.f32.gmra.mxu0 %v7784
    %v7992 = vpop.f32.mrf.mxu0
    %v7993 = vadd.f32 %v7603, %v7992
    %7994 = vmatmul.f32.gmra.mxu0 %v7787
    %v7995 = vpop.f32.mrf.mxu0
    %v7996 = vadd.f32 %v7603, %v7995
    %7997 = vmatmul.f32.gmra.mxu0 %v7790
    %v7998 = vpop.f32.mrf.mxu0
    %v7999 = vadd.f32 %v7603, %v7998
    %8000 = vmatmul.f32.gmra.mxu0 %v7793
    %v8001 = vpop.f32.mrf.mxu0
    %v8002 = vadd.f32 %v7603, %v8001
    %8003 = vmatmul.f32.gmra.mxu0 %v7796
    %v8004 = vpop.f32.mrf.mxu0
    %v8005 = vadd.f32 %v7603, %v8004
    %8006 = vdwg.mxu0
    %v8007 = vld [vmem:[%s7] sm:$0x1]
    %v8008 = vld [vmem:[%s8] sm:$0x1]
    %v8009 = vsel %vm2736, %v7816, 0.0
    %v8010 = vsel %vm2736, %v7819, 0.0
    %v8011 = vadd.f32 %v8009, %v8010
    %v8012 = vsel %vm2736, %v7822, 0.0
    %v8013 = vadd.f32 %v8011, %v8012
    %v8014 = vsel %vm2736, %v7825, 0.0
    %v8015 = vadd.f32 %v8013, %v8014
    %v8016 = vsel %vm2736, %v7828, 0.0
    %v8017 = vadd.f32 %v8015, %v8016
    %v8018 = vsel %vm2736, %v7831, 0.0
    %v8019 = vadd.f32 %v8017, %v8018
    %v8020 = vsel %vm2736, %v7834, 0.0
    %v8021 = vadd.f32 %v8019, %v8020
    %v8022 = vsel %vm2736, %v7837, 0.0
    %v8023 = vadd.f32 %v8021, %v8022
    %v8024 = vsel %vm2736, %v7840, 0.0
    %v8025 = vadd.f32 %v8023, %v8024
    %v8026 = vsel %vm2736, %v7843, 0.0
    %v8027 = vadd.f32 %v8025, %v8026
    %v8028 = vsel %vm2736, %v7846, 0.0
    %v8029 = vadd.f32 %v8027, %v8028
    %v8030 = vsel %vm2736, %v7849, 0.0
    %v8031 = vadd.f32 %v8029, %v8030
    %v8032 = vsel %vm2736, %v7852, 0.0
    %v8033 = vadd.f32 %v8031, %v8032
    %v8034 = vsel %vm2736, %v7855, 0.0
    %v8035 = vadd.f32 %v8033, %v8034
    %v8036 = vsel %vm2736, %v7858, 0.0
    %v8037 = vadd.f32 %v8035, %v8036
    %v8038 = vsel %vm2736, %v7861, 0.0
    %v8039 = vadd.f32 %v8037, %v8038
    %v8040 = vsel %vm2736, %v7864, 0.0
    %v8041 = vadd.f32 %v8039, %v8040
    %v8042 = vsel %vm2736, %v7867, 0.0
    %v8043 = vadd.f32 %v8041, %v8042
    %v8044 = vsel %vm2736, %v7870, 0.0
    %v8045 = vadd.f32 %v8043, %v8044
    %v8046 = vsel %vm2736, %v7873, 0.0
    %v8047 = vadd.f32 %v8045, %v8046
    %v8048 = vsel %vm2736, %v7876, 0.0
    %v8049 = vadd.f32 %v8047, %v8048
    %v8050 = vsel %vm2736, %v7879, 0.0
    %v8051 = vadd.f32 %v8049, %v8050
    %v8052 = vsel %vm2736, %v7882, 0.0
    %v8053 = vadd.f32 %v8051, %v8052
    %v8054 = vsel %vm2736, %v7885, 0.0
    %v8055 = vadd.f32 %v8053, %v8054
    %v8056 = vsel %vm2736, %v7888, 0.0
    %v8057 = vadd.f32 %v8055, %v8056
    %v8058 = vsel %vm2736, %v7891, 0.0
    %v8059 = vadd.f32 %v8057, %v8058
    %v8060 = vsel %vm2736, %v7894, 0.0
    %v8061 = vadd.f32 %v8059, %v8060
    %v8062 = vsel %vm2736, %v7897, 0.0
    %v8063 = vadd.f32 %v8061, %v8062
    %v8064 = vsel %vm2736, %v7900, 0.0
    %v8065 = vadd.f32 %v8063, %v8064
    %v8066 = vsel %vm2736, %v7903, 0.0
    %v8067 = vadd.f32 %v8065, %v8066
    %v8068 = vsel %vm2736, %v7906, 0.0
    %v8069 = vadd.f32 %v8067, %v8068
    %v8070 = vsel %vm2736, %v7909, 0.0
    %v8071 = vadd.f32 %v8069, %v8070
    %v8072 = vrot.slane %v8071, 4
    %v8073 = vadd.f32 %v8071, %v8072
    %v8074 = vrot.slane %v8073, 2
    %v8075 = vadd.f32 %v8073, %v8074
    %v8076 = vrot.slane %v8075, 1
    %v8077 = vadd.f32 %v8075, %v8076
    %v8078 = vsel %vm2736, %v7912, 0.0
    %v8079 = vsel %vm2736, %v7915, 0.0
    %v8080 = vadd.f32 %v8078, %v8079
    %v8081 = vsel %vm2736, %v7918, 0.0
    %v8082 = vadd.f32 %v8080, %v8081
    %v8083 = vsel %vm2736, %v7921, 0.0
    %v8084 = vadd.f32 %v8082, %v8083
    %v8085 = vsel %vm2736, %v7924, 0.0
    %v8086 = vadd.f32 %v8084, %v8085
    %v8087 = vsel %vm2736, %v7927, 0.0
    %v8088 = vadd.f32 %v8086, %v8087
    %v8089 = vsel %vm2736, %v7930, 0.0
    %v8090 = vadd.f32 %v8088, %v8089
    %v8091 = vsel %vm2736, %v7933, 0.0
    %v8092 = vadd.f32 %v8090, %v8091
    %v8093 = vsel %vm2736, %v7936, 0.0
    %v8094 = vadd.f32 %v8092, %v8093
    %v8095 = vsel %vm2736, %v7939, 0.0
    %v8096 = vadd.f32 %v8094, %v8095
    %v8097 = vsel %vm2736, %v7942, 0.0
    %v8098 = vadd.f32 %v8096, %v8097
    %v8099 = vsel %vm2736, %v7945, 0.0
    %v8100 = vadd.f32 %v8098, %v8099
    %v8101 = vsel %vm2736, %v7948, 0.0
    %v8102 = vadd.f32 %v8100, %v8101
    %v8103 = vsel %vm2736, %v7951, 0.0
    %v8104 = vadd.f32 %v8102, %v8103
    %v8105 = vsel %vm2736, %v7954, 0.0
    %v8106 = vadd.f32 %v8104, %v8105
    %v8107 = vsel %vm2736, %v7957, 0.0
    %v8108 = vadd.f32 %v8106, %v8107
    %v8109 = vsel %vm2736, %v7960, 0.0
    %v8110 = vadd.f32 %v8108, %v8109
    %v8111 = vsel %vm2736, %v7963, 0.0
    %v8112 = vadd.f32 %v8110, %v8111
    %v8113 = vsel %vm2736, %v7966, 0.0
    %v8114 = vadd.f32 %v8112, %v8113
    %v8115 = vsel %vm2736, %v7969, 0.0
    %v8116 = vadd.f32 %v8114, %v8115
    %v8117 = vsel %vm2736, %v7972, 0.0
    %v8118 = vadd.f32 %v8116, %v8117
    %v8119 = vsel %vm2736, %v7975, 0.0
    %v8120 = vadd.f32 %v8118, %v8119
    %v8121 = vsel %vm2736, %v7978, 0.0
    %v8122 = vadd.f32 %v8120, %v8121
    %v8123 = vsel %vm2736, %v7981, 0.0
    %v8124 = vadd.f32 %v8122, %v8123
    %v8125 = vsel %vm2736, %v7984, 0.0
    %v8126 = vadd.f32 %v8124, %v8125
    %v8127 = vsel %vm2736, %v7987, 0.0
    %v8128 = vadd.f32 %v8126, %v8127
    %v8129 = vsel %vm2736, %v7990, 0.0
    %v8130 = vadd.f32 %v8128, %v8129
    %v8131 = vsel %vm2736, %v7993, 0.0
    %v8132 = vadd.f32 %v8130, %v8131
    %v8133 = vsel %vm2736, %v7996, 0.0
    %v8134 = vadd.f32 %v8132, %v8133
    %v8135 = vsel %vm2736, %v7999, 0.0
    %v8136 = vadd.f32 %v8134, %v8135
    %v8137 = vsel %vm2736, %v8002, 0.0
    %v8138 = vadd.f32 %v8136, %v8137
    %v8139 = vsel %vm2736, %v8005, 0.0
    %v8140 = vadd.f32 %v8138, %v8139
    %v8141 = vrot.slane %v8140, 4
    %v8142 = vadd.f32 %v8140, %v8141
    %v8143 = vrot.slane %v8142, 2
    %v8144 = vadd.f32 %v8142, %v8143
    %v8145 = vrot.slane %v8144, 1
    %v8146 = vadd.f32 %v8144, %v8145
    %v8147 = vmul.f32 %v8077, %v3752
    %v8148 = vmul.f32 %v8146, %v3752
    %v8149 = vsub.f32 %v7816, %v8147
    %v8150 = vsub.f32 %v7819, %v8147
    %v8151 = vsub.f32 %v7822, %v8147
    %v8152 = vsub.f32 %v7825, %v8147
    %v8153 = vsub.f32 %v7828, %v8147
    %v8154 = vsub.f32 %v7831, %v8147
    %v8155 = vsub.f32 %v7834, %v8147
    %v8156 = vsub.f32 %v7837, %v8147
    %v8157 = vsub.f32 %v7840, %v8147
    %v8158 = vsub.f32 %v7843, %v8147
    %v8159 = vsub.f32 %v7846, %v8147
    %v8160 = vsub.f32 %v7849, %v8147
    %v8161 = vsub.f32 %v7852, %v8147
    %v8162 = vsub.f32 %v7855, %v8147
    %v8163 = vsub.f32 %v7858, %v8147
    %v8164 = vsub.f32 %v7861, %v8147
    %v8165 = vsub.f32 %v7864, %v8147
    %v8166 = vsub.f32 %v7867, %v8147
    %v8167 = vsub.f32 %v7870, %v8147
    %v8168 = vsub.f32 %v7873, %v8147
    %v8169 = vsub.f32 %v7876, %v8147
    %v8170 = vsub.f32 %v7879, %v8147
    %v8171 = vsub.f32 %v7882, %v8147
    %v8172 = vsub.f32 %v7885, %v8147
    %v8173 = vsub.f32 %v7888, %v8147
    %v8174 = vsub.f32 %v7891, %v8147
    %v8175 = vsub.f32 %v7894, %v8147
    %v8176 = vsub.f32 %v7897, %v8147
    %v8177 = vsub.f32 %v7900, %v8147
    %v8178 = vsub.f32 %v7903, %v8147
    %v8179 = vsub.f32 %v7906, %v8147
    %v8180 = vsub.f32 %v7909, %v8147
    %v8181 = vsub.f32 %v7912, %v8148
    %v8182 = vsub.f32 %v7915, %v8148
    %v8183 = vsub.f32 %v7918, %v8148
    %v8184 = vsub.f32 %v7921, %v8148
    %v8185 = vsub.f32 %v7924, %v8148
    %v8186 = vsub.f32 %v7927, %v8148
    %v8187 = vsub.f32 %v7930, %v8148
    %v8188 = vsub.f32 %v7933, %v8148
    %v8189 = vsub.f32 %v7936, %v8148
    %v8190 = vsub.f32 %v7939, %v8148
    %v8191 = vsub.f32 %v7942, %v8148
    %v8192 = vsub.f32 %v7945, %v8148
    %v8193 = vsub.f32 %v7948, %v8148
    %v8194 = vsub.f32 %v7951, %v8148
    %v8195 = vsub.f32 %v7954, %v8148
    %v8196 = vsub.f32 %v7957, %v8148
    %v8197 = vsub.f32 %v7960, %v8148
    %v8198 = vsub.f32 %v7963, %v8148
    %v8199 = vsub.f32 %v7966, %v8148
    %v8200 = vsub.f32 %v7969, %v8148
    %v8201 = vsub.f32 %v7972, %v8148
    %v8202 = vsub.f32 %v7975, %v8148
    %v8203 = vsub.f32 %v7978, %v8148
    %v8204 = vsub.f32 %v7981, %v8148
    %v8205 = vsub.f32 %v7984, %v8148
    %v8206 = vsub.f32 %v7987, %v8148
    %v8207 = vsub.f32 %v7990, %v8148
    %v8208 = vsub.f32 %v7993, %v8148
    %v8209 = vsub.f32 %v7996, %v8148
    %v8210 = vsub.f32 %v7999, %v8148
    %v8211 = vsub.f32 %v8002, %v8148
    %v8212 = vsub.f32 %v8005, %v8148
    %v8213 = vmul.f32 %v8149, %v8149
    %v8214 = vmul.f32 %v8150, %v8150
    %v8215 = vmul.f32 %v8151, %v8151
    %v8216 = vmul.f32 %v8152, %v8152
    %v8217 = vmul.f32 %v8153, %v8153
    %v8218 = vmul.f32 %v8154, %v8154
    %v8219 = vmul.f32 %v8155, %v8155
    %v8220 = vmul.f32 %v8156, %v8156
    %v8221 = vmul.f32 %v8157, %v8157
    %v8222 = vmul.f32 %v8158, %v8158
    %v8223 = vmul.f32 %v8159, %v8159
    %v8224 = vmul.f32 %v8160, %v8160
    %v8225 = vmul.f32 %v8161, %v8161
    %v8226 = vmul.f32 %v8162, %v8162
    %v8227 = vmul.f32 %v8163, %v8163
    %v8228 = vmul.f32 %v8164, %v8164
    %v8229 = vmul.f32 %v8165, %v8165
    %v8230 = vmul.f32 %v8166, %v8166
    %v8231 = vmul.f32 %v8167, %v8167
    %v8232 = vmul.f32 %v8168, %v8168
    %v8233 = vmul.f32 %v8169, %v8169
    %v8234 = vmul.f32 %v8170, %v8170
    %v8235 = vmul.f32 %v8171, %v8171
    %v8236 = vmul.f32 %v8172, %v8172
    %v8237 = vmul.f32 %v8173, %v8173
    %v8238 = vmul.f32 %v8174, %v8174
    %v8239 = vmul.f32 %v8175, %v8175
    %v8240 = vmul.f32 %v8176, %v8176
    %v8241 = vmul.f32 %v8177, %v8177
    %v8242 = vmul.f32 %v8178, %v8178
    %v8243 = vmul.f32 %v8179, %v8179
    %v8244 = vmul.f32 %v8180, %v8180
    %v8245 = vmul.f32 %v8181, %v8181
    %v8246 = vmul.f32 %v8182, %v8182
    %v8247 = vmul.f32 %v8183, %v8183
    %v8248 = vmul.f32 %v8184, %v8184
    %v8249 = vmul.f32 %v8185, %v8185
    %v8250 = vmul.f32 %v8186, %v8186
    %v8251 = vmul.f32 %v8187, %v8187
    %v8252 = vmul.f32 %v8188, %v8188
    %v8253 = vmul.f32 %v8189, %v8189
    %v8254 = vmul.f32 %v8190, %v8190
    %v8255 = vmul.f32 %v8191, %v8191
    %v8256 = vmul.f32 %v8192, %v8192
    %v8257 = vmul.f32 %v8193, %v8193
    %v8258 = vmul.f32 %v8194, %v8194
    %v8259 = vmul.f32 %v8195, %v8195
    %v8260 = vmul.f32 %v8196, %v8196
    %v8261 = vmul.f32 %v8197, %v8197
    %v8262 = vmul.f32 %v8198, %v8198
    %v8263 = vmul.f32 %v8199, %v8199
    %v8264 = vmul.f32 %v8200, %v8200
    %v8265 = vmul.f32 %v8201, %v8201
    %v8266 = vmul.f32 %v8202, %v8202
    %v8267 = vmul.f32 %v8203, %v8203
    %v8268 = vmul.f32 %v8204, %v8204
    %v8269 = vmul.f32 %v8205, %v8205
    %v8270 = vmul.f32 %v8206, %v8206
    %v8271 = vmul.f32 %v8207, %v8207
    %v8272 = vmul.f32 %v8208, %v8208
    %v8273 = vmul.f32 %v8209, %v8209
    %v8274 = vmul.f32 %v8210, %v8210
    %v8275 = vmul.f32 %v8211, %v8211
    %v8276 = vmul.f32 %v8212, %v8212
    %v8277 = vsel %vm2736, %v8213, 0.0
    %v8278 = vsel %vm2736, %v8214, 0.0
    %v8279 = vadd.f32 %v8277, %v8278
    %v8280 = vsel %vm2736, %v8215, 0.0
    %v8281 = vadd.f32 %v8279, %v8280
    %v8282 = vsel %vm2736, %v8216, 0.0
    %v8283 = vadd.f32 %v8281, %v8282
    %v8284 = vsel %vm2736, %v8217, 0.0
    %v8285 = vadd.f32 %v8283, %v8284
    %v8286 = vsel %vm2736, %v8218, 0.0
    %v8287 = vadd.f32 %v8285, %v8286
    %v8288 = vsel %vm2736, %v8219, 0.0
    %v8289 = vadd.f32 %v8287, %v8288
    %v8290 = vsel %vm2736, %v8220, 0.0
    %v8291 = vadd.f32 %v8289, %v8290
    %v8292 = vsel %vm2736, %v8221, 0.0
    %v8293 = vadd.f32 %v8291, %v8292
    %v8294 = vsel %vm2736, %v8222, 0.0
    %v8295 = vadd.f32 %v8293, %v8294
    %v8296 = vsel %vm2736, %v8223, 0.0
    %v8297 = vadd.f32 %v8295, %v8296
    %v8298 = vsel %vm2736, %v8224, 0.0
    %v8299 = vadd.f32 %v8297, %v8298
    %v8300 = vsel %vm2736, %v8225, 0.0
    %v8301 = vadd.f32 %v8299, %v8300
    %v8302 = vsel %vm2736, %v8226, 0.0
    %v8303 = vadd.f32 %v8301, %v8302
    %v8304 = vsel %vm2736, %v8227, 0.0
    %v8305 = vadd.f32 %v8303, %v8304
    %v8306 = vsel %vm2736, %v8228, 0.0
    %v8307 = vadd.f32 %v8305, %v8306
    %v8308 = vsel %vm2736, %v8229, 0.0
    %v8309 = vadd.f32 %v8307, %v8308
    %v8310 = vsel %vm2736, %v8230, 0.0
    %v8311 = vadd.f32 %v8309, %v8310
    %v8312 = vsel %vm2736, %v8231, 0.0
    %v8313 = vadd.f32 %v8311, %v8312
    %v8314 = vsel %vm2736, %v8232, 0.0
    %v8315 = vadd.f32 %v8313, %v8314
    %v8316 = vsel %vm2736, %v8233, 0.0
    %v8317 = vadd.f32 %v8315, %v8316
    %v8318 = vsel %vm2736, %v8234, 0.0
    %v8319 = vadd.f32 %v8317, %v8318
    %v8320 = vsel %vm2736, %v8235, 0.0
    %v8321 = vadd.f32 %v8319, %v8320
    %v8322 = vsel %vm2736, %v8236, 0.0
    %v8323 = vadd.f32 %v8321, %v8322
    %v8324 = vsel %vm2736, %v8237, 0.0
    %v8325 = vadd.f32 %v8323, %v8324
    %v8326 = vsel %vm2736, %v8238, 0.0
    %v8327 = vadd.f32 %v8325, %v8326
    %v8328 = vsel %vm2736, %v8239, 0.0
    %v8329 = vadd.f32 %v8327, %v8328
    %v8330 = vsel %vm2736, %v8240, 0.0
    %v8331 = vadd.f32 %v8329, %v8330
    %v8332 = vsel %vm2736, %v8241, 0.0
    %v8333 = vadd.f32 %v8331, %v8332
    %v8334 = vsel %vm2736, %v8242, 0.0
    %v8335 = vadd.f32 %v8333, %v8334
    %v8336 = vsel %vm2736, %v8243, 0.0
    %v8337 = vadd.f32 %v8335, %v8336
    %v8338 = vsel %vm2736, %v8244, 0.0
    %v8339 = vadd.f32 %v8337, %v8338
    %v8340 = vrot.slane %v8339, 4
    %v8341 = vadd.f32 %v8339, %v8340
    %v8342 = vrot.slane %v8341, 2
    %v8343 = vadd.f32 %v8341, %v8342
    %v8344 = vrot.slane %v8343, 1
    %v8345 = vadd.f32 %v8343, %v8344
    %v8346 = vsel %vm2736, %v8245, 0.0
    %v8347 = vsel %vm2736, %v8246, 0.0
    %v8348 = vadd.f32 %v8346, %v8347
    %v8349 = vsel %vm2736, %v8247, 0.0
    %v8350 = vadd.f32 %v8348, %v8349
    %v8351 = vsel %vm2736, %v8248, 0.0
    %v8352 = vadd.f32 %v8350, %v8351
    %v8353 = vsel %vm2736, %v8249, 0.0
    %v8354 = vadd.f32 %v8352, %v8353
    %v8355 = vsel %vm2736, %v8250, 0.0
    %v8356 = vadd.f32 %v8354, %v8355
    %v8357 = vsel %vm2736, %v8251, 0.0
    %v8358 = vadd.f32 %v8356, %v8357
    %v8359 = vsel %vm2736, %v8252, 0.0
    %v8360 = vadd.f32 %v8358, %v8359
    %v8361 = vsel %vm2736, %v8253, 0.0
    %v8362 = vadd.f32 %v8360, %v8361
    %v8363 = vsel %vm2736, %v8254, 0.0
    %v8364 = vadd.f32 %v8362, %v8363
    %v8365 = vsel %vm2736, %v8255, 0.0
    %v8366 = vadd.f32 %v8364, %v8365
    %v8367 = vsel %vm2736, %v8256, 0.0
    %v8368 = vadd.f32 %v8366, %v8367
    %v8369 = vsel %vm2736, %v8257, 0.0
    %v8370 = vadd.f32 %v8368, %v8369
    %v8371 = vsel %vm2736, %v8258, 0.0
    %v8372 = vadd.f32 %v8370, %v8371
    %v8373 = vsel %vm2736, %v8259, 0.0
    %v8374 = vadd.f32 %v8372, %v8373
    %v8375 = vsel %vm2736, %v8260, 0.0
    %v8376 = vadd.f32 %v8374, %v8375
    %v8377 = vsel %vm2736, %v8261, 0.0
    %v8378 = vadd.f32 %v8376, %v8377
    %v8379 = vsel %vm2736, %v8262, 0.0
    %v8380 = vadd.f32 %v8378, %v8379
    %v8381 = vsel %vm2736, %v8263, 0.0
    %v8382 = vadd.f32 %v8380, %v8381
    %v8383 = vsel %vm2736, %v8264, 0.0
    %v8384 = vadd.f32 %v8382, %v8383
    %v8385 = vsel %vm2736, %v8265, 0.0
    %v8386 = vadd.f32 %v8384, %v8385
    %v8387 = vsel %vm2736, %v8266, 0.0
    %v8388 = vadd.f32 %v8386, %v8387
    %v8389 = vsel %vm2736, %v8267, 0.0
    %v8390 = vadd.f32 %v8388, %v8389
    %v8391 = vsel %vm2736, %v8268, 0.0
    %v8392 = vadd.f32 %v8390, %v8391
    %v8393 = vsel %vm2736, %v8269, 0.0
    %v8394 = vadd.f32 %v8392, %v8393
    %v8395 = vsel %vm2736, %v8270, 0.0
    %v8396 = vadd.f32 %v8394, %v8395
    %v8397 = vsel %vm2736, %v8271, 0.0
    %v8398 = vadd.f32 %v8396, %v8397
    %v8399 = vsel %vm2736, %v8272, 0.0
    %v8400 = vadd.f32 %v8398, %v8399
    %v8401 = vsel %vm2736, %v8273, 0.0
    %v8402 = vadd.f32 %v8400, %v8401
    %v8403 = vsel %vm2736, %v8274, 0.0
    %v8404 = vadd.f32 %v8402, %v8403
    %v8405 = vsel %vm2736, %v8275, 0.0
    %v8406 = vadd.f32 %v8404, %v8405
    %v8407 = vsel %vm2736, %v8276, 0.0
    %v8408 = vadd.f32 %v8406, %v8407
    %v8409 = vrot.slane %v8408, 4
    %v8410 = vadd.f32 %v8408, %v8409
    %v8411 = vrot.slane %v8410, 2
    %v8412 = vadd.f32 %v8410, %v8411
    %v8413 = vrot.slane %v8412, 1
    %v8414 = vadd.f32 %v8412, %v8413
    %v8415 = vmul.f32 %v8345, %v3752
    %v8416 = vmul.f32 %v8414, %v3752
    %v8417 = vadd.f32 %v8415, 1e-05
    %v8418 = vadd.f32 %v8416, 1e-05
    %v8419 = vrsqrt.pop %v8417
    %v8420 = vmul.f32 %v8419, %v8417
    %v8421 = vmul.f32 %v8420, %v8419
    %v8422 = vmul.f32 0.5, %v8421
    %v8423 = vsub.f32 1.5, %v8422
    %v8424 = vmul.f32 %v8419, %v8423
    %vm8425 = vweird.f32 %v8417
    %vm8426 = vweird.f32 %v8419
    %vm8427 = vmor %vm8425, %vm8426
    %v8428 = vsel %vm8427, %v8419, %v8424
    %v8429 = vrsqrt.pop %v8418
    %v8430 = vmul.f32 %v8429, %v8418
    %v8431 = vmul.f32 %v8430, %v8429
    %v8432 = vmul.f32 0.5, %v8431
    %v8433 = vsub.f32 1.5, %v8432
    %v8434 = vmul.f32 %v8429, %v8433
    %vm8435 = vweird.f32 %v8418
    %vm8436 = vweird.f32 %v8429
    %vm8437 = vmor %vm8435, %vm8436
    %v8438 = vsel %vm8437, %v8429, %v8434
    %v8439 = vmul.f32 %v8149, %v8428
    %v8440 = vmul.f32 %v8150, %v8428
    %v8441 = vmul.f32 %v8151, %v8428
    %v8442 = vmul.f32 %v8152, %v8428
    %v8443 = vmul.f32 %v8153, %v8428
    %v8444 = vmul.f32 %v8154, %v8428
    %v8445 = vmul.f32 %v8155, %v8428
    %v8446 = vmul.f32 %v8156, %v8428
    %v8447 = vmul.f32 %v8157, %v8428
    %v8448 = vmul.f32 %v8158, %v8428
    %v8449 = vmul.f32 %v8159, %v8428
    %v8450 = vmul.f32 %v8160, %v8428
    %v8451 = vmul.f32 %v8161, %v8428
    %v8452 = vmul.f32 %v8162, %v8428
    %v8453 = vmul.f32 %v8163, %v8428
    %v8454 = vmul.f32 %v8164, %v8428
    %v8455 = vmul.f32 %v8165, %v8428
    %v8456 = vmul.f32 %v8166, %v8428
    %v8457 = vmul.f32 %v8167, %v8428
    %v8458 = vmul.f32 %v8168, %v8428
    %v8459 = vmul.f32 %v8169, %v8428
    %v8460 = vmul.f32 %v8170, %v8428
    %v8461 = vmul.f32 %v8171, %v8428
    %v8462 = vmul.f32 %v8172, %v8428
    %v8463 = vmul.f32 %v8173, %v8428
    %v8464 = vmul.f32 %v8174, %v8428
    %v8465 = vmul.f32 %v8175, %v8428
    %v8466 = vmul.f32 %v8176, %v8428
    %v8467 = vmul.f32 %v8177, %v8428
    %v8468 = vmul.f32 %v8178, %v8428
    %v8469 = vmul.f32 %v8179, %v8428
    %v8470 = vmul.f32 %v8180, %v8428
    %v8471 = vmul.f32 %v8181, %v8438
    %v8472 = vmul.f32 %v8182, %v8438
    %v8473 = vmul.f32 %v8183, %v8438
    %v8474 = vmul.f32 %v8184, %v8438
    %v8475 = vmul.f32 %v8185, %v8438
    %v8476 = vmul.f32 %v8186, %v8438
    %v8477 = vmul.f32 %v8187, %v8438
    %v8478 = vmul.f32 %v8188, %v8438
    %v8479 = vmul.f32 %v8189, %v8438
    %v8480 = vmul.f32 %v8190, %v8438
    %v8481 = vmul.f32 %v8191, %v8438
    %v8482 = vmul.f32 %v8192, %v8438
    %v8483 = vmul.f32 %v8193, %v8438
    %v8484 = vmul.f32 %v8194, %v8438
    %v8485 = vmul.f32 %v8195, %v8438
    %v8486 = vmul.f32 %v8196, %v8438
    %v8487 = vmul.f32 %v8197, %v8438
    %v8488 = vmul.f32 %v8198, %v8438
    %v8489 = vmul.f32 %v8199, %v8438
    %v8490 = vmul.f32 %v8200, %v8438
    %v8491 = vmul.f32 %v8201, %v8438
    %v8492 = vmul.f32 %v8202, %v8438
    %v8493 = vmul.f32 %v8203, %v8438
    %v8494 = vmul.f32 %v8204, %v8438
    %v8495 = vmul.f32 %v8205, %v8438
    %v8496 = vmul.f32 %v8206, %v8438
    %v8497 = vmul.f32 %v8207, %v8438
    %v8498 = vmul.f32 %v8208, %v8438
    %v8499 = vmul.f32 %v8209, %v8438
    %v8500 = vmul.f32 %v8210, %v8438
    %v8501 = vmul.f32 %v8211, %v8438
    %v8502 = vmul.f32 %v8212, %v8438
    %v8504 = vperm.slane %v8007, 0
    %v8506 = vmul.f32 %v8439, %v8504
    %v8507 = vmul.f32 %v8440, %v8504
    %v8508 = vmul.f32 %v8441, %v8504
    %v8509 = vmul.f32 %v8442, %v8504
    %v8510 = vmul.f32 %v8443, %v8504
    %v8511 = vmul.f32 %v8444, %v8504
    %v8512 = vmul.f32 %v8445, %v8504
    %v8513 = vmul.f32 %v8446, %v8504
    %v8514 = vmul.f32 %v8447, %v8504
    %v8515 = vmul.f32 %v8448, %v8504
    %v8516 = vmul.f32 %v8449, %v8504
    %v8517 = vmul.f32 %v8450, %v8504
    %v8518 = vmul.f32 %v8451, %v8504
    %v8519 = vmul.f32 %v8452, %v8504
    %v8520 = vmul.f32 %v8453, %v8504
    %v8521 = vmul.f32 %v8454, %v8504
    %v8522 = vmul.f32 %v8455, %v8504
    %v8523 = vmul.f32 %v8456, %v8504
    %v8524 = vmul.f32 %v8457, %v8504
    %v8525 = vmul.f32 %v8458, %v8504
    %v8526 = vmul.f32 %v8459, %v8504
    %v8527 = vmul.f32 %v8460, %v8504
    %v8528 = vmul.f32 %v8461, %v8504
    %v8529 = vmul.f32 %v8462, %v8504
    %v8530 = vmul.f32 %v8463, %v8504
    %v8531 = vmul.f32 %v8464, %v8504
    %v8532 = vmul.f32 %v8465, %v8504
    %v8533 = vmul.f32 %v8466, %v8504
    %v8534 = vmul.f32 %v8467, %v8504
    %v8535 = vmul.f32 %v8468, %v8504
    %v8536 = vmul.f32 %v8469, %v8504
    %v8537 = vmul.f32 %v8470, %v8504
    %v8538 = vmul.f32 %v8471, %v8504
    %v8539 = vmul.f32 %v8472, %v8504
    %v8540 = vmul.f32 %v8473, %v8504
    %v8541 = vmul.f32 %v8474, %v8504
    %v8542 = vmul.f32 %v8475, %v8504
    %v8543 = vmul.f32 %v8476, %v8504
    %v8544 = vmul.f32 %v8477, %v8504
    %v8545 = vmul.f32 %v8478, %v8504
    %v8546 = vmul.f32 %v8479, %v8504
    %v8547 = vmul.f32 %v8480, %v8504
    %v8548 = vmul.f32 %v8481, %v8504
    %v8549 = vmul.f32 %v8482, %v8504
    %v8550 = vmul.f32 %v8483, %v8504
    %v8551 = vmul.f32 %v8484, %v8504
    %v8552 = vmul.f32 %v8485, %v8504
    %v8553 = vmul.f32 %v8486, %v8504
    %v8554 = vmul.f32 %v8487, %v8504
    %v8555 = vmul.f32 %v8488, %v8504
    %v8556 = vmul.f32 %v8489, %v8504
    %v8557 = vmul.f32 %v8490, %v8504
    %v8558 = vmul.f32 %v8491, %v8504
    %v8559 = vmul.f32 %v8492, %v8504
    %v8560 = vmul.f32 %v8493, %v8504
    %v8561 = vmul.f32 %v8494, %v8504
    %v8562 = vmul.f32 %v8495, %v8504
    %v8563 = vmul.f32 %v8496, %v8504
    %v8564 = vmul.f32 %v8497, %v8504
    %v8565 = vmul.f32 %v8498, %v8504
    %v8566 = vmul.f32 %v8499, %v8504
    %v8567 = vmul.f32 %v8500, %v8504
    %v8568 = vmul.f32 %v8501, %v8504
    %v8569 = vmul.f32 %v8502, %v8504
    %v8571 = vperm.slane %v8008, 0
    %v8573 = vadd.f32 %v8506, %v8571
    %v8574 = vadd.f32 %v8507, %v8571
    %v8575 = vadd.f32 %v8508, %v8571
    %v8576 = vadd.f32 %v8509, %v8571
    %v8577 = vadd.f32 %v8510, %v8571
    %v8578 = vadd.f32 %v8511, %v8571
    %v8579 = vadd.f32 %v8512, %v8571
    %v8580 = vadd.f32 %v8513, %v8571
    %v8581 = vadd.f32 %v8514, %v8571
    %v8582 = vadd.f32 %v8515, %v8571
    %v8583 = vadd.f32 %v8516, %v8571
    %v8584 = vadd.f32 %v8517, %v8571
    %v8585 = vadd.f32 %v8518, %v8571
    %v8586 = vadd.f32 %v8519, %v8571
    %v8587 = vadd.f32 %v8520, %v8571
    %v8588 = vadd.f32 %v8521, %v8571
    %v8589 = vadd.f32 %v8522, %v8571
    %v8590 = vadd.f32 %v8523, %v8571
    %v8591 = vadd.f32 %v8524, %v8571
    %v8592 = vadd.f32 %v8525, %v8571
    %v8593 = vadd.f32 %v8526, %v8571
    %v8594 = vadd.f32 %v8527, %v8571
    %v8595 = vadd.f32 %v8528, %v8571
    %v8596 = vadd.f32 %v8529, %v8571
    %v8597 = vadd.f32 %v8530, %v8571
    %v8598 = vadd.f32 %v8531, %v8571
    %v8599 = vadd.f32 %v8532, %v8571
    %v8600 = vadd.f32 %v8533, %v8571
    %v8601 = vadd.f32 %v8534, %v8571
    %v8602 = vadd.f32 %v8535, %v8571
    %v8603 = vadd.f32 %v8536, %v8571
    %v8604 = vadd.f32 %v8537, %v8571
    %v8605 = vadd.f32 %v8538, %v8571
    %v8606 = vadd.f32 %v8539, %v8571
    %v8607 = vadd.f32 %v8540, %v8571
    %v8608 = vadd.f32 %v8541, %v8571
    %v8609 = vadd.f32 %v8542, %v8571
    %v8610 = vadd.f32 %v8543, %v8571
    %v8611 = vadd.f32 %v8544, %v8571
    %v8612 = vadd.f32 %v8545, %v8571
    %v8613 = vadd.f32 %v8546, %v8571
    %v8614 = vadd.f32 %v8547, %v8571
    %v8615 = vadd.f32 %v8548, %v8571
    %v8616 = vadd.f32 %v8549, %v8571
    %v8617 = vadd.f32 %v8550, %v8571
    %v8618 = vadd.f32 %v8551, %v8571
    %v8619 = vadd.f32 %v8552, %v8571
    %v8620 = vadd.f32 %v8553, %v8571
    %v8621 = vadd.f32 %v8554, %v8571
    %v8622 = vadd.f32 %v8555, %v8571
    %v8623 = vadd.f32 %v8556, %v8571
    %v8624 = vadd.f32 %v8557, %v8571
    %v8625 = vadd.f32 %v8558, %v8571
    %v8626 = vadd.f32 %v8559, %v8571
    %v8627 = vadd.f32 %v8560, %v8571
    %v8628 = vadd.f32 %v8561, %v8571
    %v8629 = vadd.f32 %v8562, %v8571
    %v8630 = vadd.f32 %v8563, %v8571
    %v8631 = vadd.f32 %v8564, %v8571
    %v8632 = vadd.f32 %v8565, %v8571
    %v8633 = vadd.f32 %v8566, %v8571
    %v8634 = vadd.f32 %v8567, %v8571
    %v8635 = vadd.f32 %v8568, %v8571
    %v8636 = vadd.f32 %v8569, %v8571
    %v8637 = vld [vmem:[%s237 + $0x1] sm:$0xff]
    %v8638 = vld [vmem:[%s237 + $0x9] sm:$0xff]
    %v8639 = vld [vmem:[%s237 + $0x19] sm:$0xff]
    %v8640 = vld [vmem:[%s237 + $0x21] sm:$0xff]
    %v8641 = vld [vmem:[%s237 + $0x31] sm:$0xff]
    %v8642 = vld [vmem:[%s237 + $0x39] sm:$0xff]
    %v8643 = vld [vmem:[%s237 + $0x49] sm:$0xff]
    %v8644 = vld [vmem:[%s237 + $0x51] sm:$0xff]
    %v8645 = vld [vmem:[%s237 + $0x61] sm:$0xff]
    %v8646 = vld [vmem:[%s237 + $0x69] sm:$0xff]
    %v8647 = vld [vmem:[%s237 + $0x79] sm:$0xff]
    %v8648 = vld [vmem:[%s237 + $0x81] sm:$0xff]
    %v8649 = vld [vmem:[%s237 + $0x91] sm:$0xff]
    %v8650 = vld [vmem:[%s237 + $0x99] sm:$0xff]
    %v8651 = vld [vmem:[%s237 + $0xa9] sm:$0xff]
    %v8652 = vld [vmem:[%s237 + $0xb1] sm:$0xff]
    %v8653 = vld [vmem:[%s237 + $0xc1] sm:$0xff]
    %v8654 = vld [vmem:[%s237 + $0xc9] sm:$0xff]
    %v8655 = vld [vmem:[%s237 + $0xd9] sm:$0xff]
    %v8656 = vld [vmem:[%s237 + $0xe1] sm:$0xff]
    %v8657 = vld [vmem:[%s237 + $0xf1] sm:$0xff]
    %v8658 = vld [vmem:[%s237 + $0xf9] sm:$0xff]
    %v8659 = vld [vmem:[%s237 + $0x109] sm:$0xff]
    %v8660 = vld [vmem:[%s237 + $0x111] sm:$0xff]
    %v8661 = vld [vmem:[%s237 + $0x121] sm:$0xff]
    %v8662 = vld [vmem:[%s237 + $0x129] sm:$0xff]
    %v8663 = vld [vmem:[%s237 + $0x139] sm:$0xff]
    %v8664 = vld [vmem:[%s237 + $0x141] sm:$0xff]
    %v8665 = vld [vmem:[%s237 + $0x151] sm:$0xff]
    %v8666 = vld [vmem:[%s237 + $0x159] sm:$0xff]
    %v8667 = vld [vmem:[%s237 + $0x169] sm:$0xff]
    %v8668 = vld [vmem:[%s237 + $0x171] sm:$0xff]
    %v8669 = vld [vmem:[%s237 + $0x1b1] sm:$0xff]
    %v8670 = vld [vmem:[%s237 + $0x1b9] sm:$0xff]
    %v8671 = vld [vmem:[%s237 + $0x1c9] sm:$0xff]
    %v8672 = vld [vmem:[%s237 + $0x1d1] sm:$0xff]
    %v8673 = vld [vmem:[%s237 + $0x1e1] sm:$0xff]
    %v8674 = vld [vmem:[%s237 + $0x1e9] sm:$0xff]
    %v8675 = vld [vmem:[%s237 + $0x1f9] sm:$0xff]
    %v8676 = vld [vmem:[%s237 + $0x201] sm:$0xff]
    %v8677 = vld [vmem:[%s237 + $0x211] sm:$0xff]
    %v8678 = vld [vmem:[%s237 + $0x219] sm:$0xff]
    %v8679 = vld [vmem:[%s237 + $0x229] sm:$0xff]
    %v8680 = vld [vmem:[%s237 + $0x231] sm:$0xff]
    %v8681 = vld [vmem:[%s237 + $0x241] sm:$0xff]
    %v8682 = vld [vmem:[%s237 + $0x249] sm:$0xff]
    %v8683 = vld [vmem:[%s237 + $0x259] sm:$0xff]
    %v8684 = vld [vmem:[%s237 + $0x261] sm:$0xff]
    %v8685 = vld [vmem:[%s237 + $0x271] sm:$0xff]
    %v8686 = vld [vmem:[%s237 + $0x279] sm:$0xff]
    %v8687 = vld [vmem:[%s237 + $0x289] sm:$0xff]
    %v8688 = vld [vmem:[%s237 + $0x291] sm:$0xff]
    %v8689 = vld [vmem:[%s237 + $0x2a1] sm:$0xff]
    %v8690 = vld [vmem:[%s237 + $0x2a9] sm:$0xff]
    %v8691 = vld [vmem:[%s237 + $0x2b9] sm:$0xff]
    %v8692 = vld [vmem:[%s237 + $0x2c1] sm:$0xff]
    %v8693 = vld [vmem:[%s237 + $0x2d1] sm:$0xff]
    %v8694 = vld [vmem:[%s237 + $0x2d9] sm:$0xff]
    %v8695 = vld [vmem:[%s237 + $0x2e9] sm:$0xff]
    %v8696 = vld [vmem:[%s237 + $0x2f1] sm:$0xff]
    %v8697 = vld [vmem:[%s237 + $0x301] sm:$0xff]
    %v8698 = vld [vmem:[%s237 + $0x309] sm:$0xff]
    %v8699 = vld [vmem:[%s237 + $0x319] sm:$0xff]
    %v8700 = vld [vmem:[%s237 + $0x321] sm:$0xff]
    %v8701 = vld [vmem:[%s9] sm:$0xf]
    %v8702 = vld [vmem:[%s10] sm:$0x1]
    %v8704 = vperm.slane %v8702, 0
    %v8707 = vsel %vm2671, %v8637, 0
    %v8710 = vsel %vm2671, %v8638, 0
    %v8713 = vsel %vm2671, %v8639, 0
    %v8716 = vsel %vm2671, %v8640, 0
    %v8719 = vsel %vm2671, %v8641, 0
    %v8722 = vsel %vm2671, %v8642, 0
    %v8725 = vsel %vm2671, %v8643, 0
    %v8728 = vsel %vm2671, %v8644, 0
    %v8731 = vsel %vm2671, %v8645, 0
    %v8734 = vsel %vm2671, %v8646, 0
    %v8737 = vsel %vm2671, %v8647, 0
    %v8740 = vsel %vm2671, %v8648, 0
    %v8743 = vsel %vm2671, %v8649, 0
    %v8746 = vsel %vm2671, %v8650, 0
    %v8749 = vsel %vm2671, %v8651, 0
    %v8752 = vsel %vm2671, %v8652, 0
    %v8755 = vsel %vm2671, %v8653, 0
    %v8758 = vsel %vm2671, %v8654, 0
    %v8761 = vsel %vm2671, %v8655, 0
    %v8764 = vsel %vm2671, %v8656, 0
    %v8767 = vsel %vm2671, %v8657, 0
    %v8770 = vsel %vm2671, %v8658, 0
    %v8773 = vsel %vm2671, %v8659, 0
    %v8776 = vsel %vm2671, %v8660, 0
    %v8779 = vsel %vm2671, %v8661, 0
    %v8782 = vsel %vm2671, %v8662, 0
    %v8785 = vsel %vm2671, %v8663, 0
    %v8788 = vsel %vm2671, %v8664, 0
    %v8791 = vsel %vm2671, %v8665, 0
    %v8794 = vsel %vm2671, %v8666, 0
    %v8797 = vsel %vm2671, %v8667, 0
    %v8800 = vsel %vm2671, %v8668, 0
    %v8803 = vsel %vm2671, %v8669, 0
    %v8806 = vsel %vm2671, %v8670, 0
    %v8809 = vsel %vm2671, %v8671, 0
    %v8812 = vsel %vm2671, %v8672, 0
    %v8815 = vsel %vm2671, %v8673, 0
    %v8818 = vsel %vm2671, %v8674, 0
    %v8821 = vsel %vm2671, %v8675, 0
    %v8824 = vsel %vm2671, %v8676, 0
    %v8827 = vsel %vm2671, %v8677, 0
    %v8830 = vsel %vm2671, %v8678, 0
    %v8833 = vsel %vm2671, %v8679, 0
    %v8836 = vsel %vm2671, %v8680, 0
    %v8839 = vsel %vm2671, %v8681, 0
    %v8842 = vsel %vm2671, %v8682, 0
    %v8845 = vsel %vm2671, %v8683, 0
    %v8848 = vsel %vm2671, %v8684, 0
    %v8851 = vsel %vm2671, %v8685, 0
    %v8854 = vsel %vm2671, %v8686, 0
    %v8857 = vsel %vm2671, %v8687, 0
    %v8860 = vsel %vm2671, %v8688, 0
    %v8863 = vsel %vm2671, %v8689, 0
    %v8866 = vsel %vm2671, %v8690, 0
    %v8869 = vsel %vm2671, %v8691, 0
    %v8872 = vsel %vm2671, %v8692, 0
    %v8875 = vsel %vm2671, %v8693, 0
    %v8878 = vsel %vm2671, %v8694, 0
    %v8881 = vsel %vm2671, %v8695, 0
    %v8884 = vsel %vm2671, %v8696, 0
    %v8887 = vsel %vm2671, %v8697, 0
    %v8890 = vsel %vm2671, %v8698, 0
    %v8893 = vsel %vm2671, %v8699, 0
    %v8896 = vsel %vm2671, %v8700, 0
    %v8899 = vsel %vm3393, %v8701, 0
    %8901 = vmatpush.msra.mxu0 0.0
    %8902 = vmatpush.msra.mxu0 0.0
    %8903 = vmatpush.msra.mxu0 0.0
    %8904 = vmatpush.msra.mxu0 0.0
    %8905 = vmatpush.msra.mxu0 0.0
    %8906 = vmatpush.msra.mxu0 0.0
    %8907 = vmatpush.msra.mxu0 0.0
    %8908 = vmatpush.msra.mxu0 0.0
    %8909 = vmatpush.msra.mxu0 0.0
    %8910 = vmatpush.msra.mxu0 0.0
    %8911 = vmatpush.msra.mxu0 0.0
    %8912 = vmatpush.msra.mxu0 0.0
    %8913 = vmatpush.msra.mxu0 0.0
    %8914 = vmatpush.msra.mxu0 0.0
    %8915 = vmatpush.msra.mxu0 0.0
    %8916 = vmatpush.msra.mxu0 %v8899
    %8917 = vmatmul.f32.gmra.mxu0 %v8707
    %v8918 = vpop.f32.mrf.mxu0
    %v8919 = vadd.f32 %v8704, %v8918
    %8920 = vmatmul.f32.gmra.mxu0 %v8710
    %v8921 = vpop.f32.mrf.mxu0
    %v8922 = vadd.f32 %v8704, %v8921
    %8923 = vmatmul.f32.gmra.mxu0 %v8713
    %v8924 = vpop.f32.mrf.mxu0
    %v8925 = vadd.f32 %v8704, %v8924
    %8926 = vmatmul.f32.gmra.mxu0 %v8716
    %v8927 = vpop.f32.mrf.mxu0
    %v8928 = vadd.f32 %v8704, %v8927
    %8929 = vmatmul.f32.gmra.mxu0 %v8719
    %v8930 = vpop.f32.mrf.mxu0
    %v8931 = vadd.f32 %v8704, %v8930
    %8932 = vmatmul.f32.gmra.mxu0 %v8722
    %v8933 = vpop.f32.mrf.mxu0
    %v8934 = vadd.f32 %v8704, %v8933
    %8935 = vmatmul.f32.gmra.mxu0 %v8725
    %v8936 = vpop.f32.mrf.mxu0
    %v8937 = vadd.f32 %v8704, %v8936
    %8938 = vmatmul.f32.gmra.mxu0 %v8728
    %v8939 = vpop.f32.mrf.mxu0
    %v8940 = vadd.f32 %v8704, %v8939
    %8941 = vmatmul.f32.gmra.mxu0 %v8731
    %v8942 = vpop.f32.mrf.mxu0
    %v8943 = vadd.f32 %v8704, %v8942
    %8944 = vmatmul.f32.gmra.mxu0 %v8734
    %v8945 = vpop.f32.mrf.mxu0
    %v8946 = vadd.f32 %v8704, %v8945
    %8947 = vmatmul.f32.gmra.mxu0 %v8737
    %v8948 = vpop.f32.mrf.mxu0
    %v8949 = vadd.f32 %v8704, %v8948
    %8950 = vmatmul.f32.gmra.mxu0 %v8740
    %v8951 = vpop.f32.mrf.mxu0
    %v8952 = vadd.f32 %v8704, %v8951
    %8953 = vmatmul.f32.gmra.mxu0 %v8743
    %v8954 = vpop.f32.mrf.mxu0
    %v8955 = vadd.f32 %v8704, %v8954
    %8956 = vmatmul.f32.gmra.mxu0 %v8746
    %v8957 = vpop.f32.mrf.mxu0
    %v8958 = vadd.f32 %v8704, %v8957
    %8959 = vmatmul.f32.gmra.mxu0 %v8749
    %v8960 = vpop.f32.mrf.mxu0
    %v8961 = vadd.f32 %v8704, %v8960
    %8962 = vmatmul.f32.gmra.mxu0 %v8752
    %v8963 = vpop.f32.mrf.mxu0
    %v8964 = vadd.f32 %v8704, %v8963
    %8965 = vmatmul.f32.gmra.mxu0 %v8755
    %v8966 = vpop.f32.mrf.mxu0
    %v8967 = vadd.f32 %v8704, %v8966
    %8968 = vmatmul.f32.gmra.mxu0 %v8758
    %v8969 = vpop.f32.mrf.mxu0
    %v8970 = vadd.f32 %v8704, %v8969
    %8971 = vmatmul.f32.gmra.mxu0 %v8761
    %v8972 = vpop.f32.mrf.mxu0
    %v8973 = vadd.f32 %v8704, %v8972
    %8974 = vmatmul.f32.gmra.mxu0 %v8764
    %v8975 = vpop.f32.mrf.mxu0
    %v8976 = vadd.f32 %v8704, %v8975
    %8977 = vmatmul.f32.gmra.mxu0 %v8767
    %v8978 = vpop.f32.mrf.mxu0
    %v8979 = vadd.f32 %v8704, %v8978
    %8980 = vmatmul.f32.gmra.mxu0 %v8770
    %v8981 = vpop.f32.mrf.mxu0
    %v8982 = vadd.f32 %v8704, %v8981
    %8983 = vmatmul.f32.gmra.mxu0 %v8773
    %v8984 = vpop.f32.mrf.mxu0
    %v8985 = vadd.f32 %v8704, %v8984
    %8986 = vmatmul.f32.gmra.mxu0 %v8776
    %v8987 = vpop.f32.mrf.mxu0
    %v8988 = vadd.f32 %v8704, %v8987
    %8989 = vmatmul.f32.gmra.mxu0 %v8779
    %v8990 = vpop.f32.mrf.mxu0
    %v8991 = vadd.f32 %v8704, %v8990
    %8992 = vmatmul.f32.gmra.mxu0 %v8782
    %v8993 = vpop.f32.mrf.mxu0
    %v8994 = vadd.f32 %v8704, %v8993
    %8995 = vmatmul.f32.gmra.mxu0 %v8785
    %v8996 = vpop.f32.mrf.mxu0
    %v8997 = vadd.f32 %v8704, %v8996
    %8998 = vmatmul.f32.gmra.mxu0 %v8788
    %v8999 = vpop.f32.mrf.mxu0
    %v9000 = vadd.f32 %v8704, %v8999
    %9001 = vmatmul.f32.gmra.mxu0 %v8791
    %v9002 = vpop.f32.mrf.mxu0
    %v9003 = vadd.f32 %v8704, %v9002
    %9004 = vmatmul.f32.gmra.mxu0 %v8794
    %v9005 = vpop.f32.mrf.mxu0
    %v9006 = vadd.f32 %v8704, %v9005
    %9007 = vmatmul.f32.gmra.mxu0 %v8797
    %v9008 = vpop.f32.mrf.mxu0
    %v9009 = vadd.f32 %v8704, %v9008
    %9010 = vmatmul.f32.gmra.mxu0 %v8800
    %v9011 = vpop.f32.mrf.mxu0
    %v9012 = vadd.f32 %v8704, %v9011
    %9013 = vmatmul.f32.gmra.mxu0 %v8803
    %v9014 = vpop.f32.mrf.mxu0
    %v9015 = vadd.f32 %v8704, %v9014
    %9016 = vmatmul.f32.gmra.mxu0 %v8806
    %v9017 = vpop.f32.mrf.mxu0
    %v9018 = vadd.f32 %v8704, %v9017
    %9019 = vmatmul.f32.gmra.mxu0 %v8809
    %v9020 = vpop.f32.mrf.mxu0
    %v9021 = vadd.f32 %v8704, %v9020
    %9022 = vmatmul.f32.gmra.mxu0 %v8812
    %v9023 = vpop.f32.mrf.mxu0
    %v9024 = vadd.f32 %v8704, %v9023
    %9025 = vmatmul.f32.gmra.mxu0 %v8815
    %v9026 = vpop.f32.mrf.mxu0
    %v9027 = vadd.f32 %v8704, %v9026
    %9028 = vmatmul.f32.gmra.mxu0 %v8818
    %v9029 = vpop.f32.mrf.mxu0
    %v9030 = vadd.f32 %v8704, %v9029
    %9031 = vmatmul.f32.gmra.mxu0 %v8821
    %v9032 = vpop.f32.mrf.mxu0
    %v9033 = vadd.f32 %v8704, %v9032
    %9034 = vmatmul.f32.gmra.mxu0 %v8824
    %v9035 = vpop.f32.mrf.mxu0
    %v9036 = vadd.f32 %v8704, %v9035
    %9037 = vmatmul.f32.gmra.mxu0 %v8827
    %v9038 = vpop.f32.mrf.mxu0
    %v9039 = vadd.f32 %v8704, %v9038
    %9040 = vmatmul.f32.gmra.mxu0 %v8830
    %v9041 = vpop.f32.mrf.mxu0
    %v9042 = vadd.f32 %v8704, %v9041
    %9043 = vmatmul.f32.gmra.mxu0 %v8833
    %v9044 = vpop.f32.mrf.mxu0
    %v9045 = vadd.f32 %v8704, %v9044
    %9046 = vmatmul.f32.gmra.mxu0 %v8836
    %v9047 = vpop.f32.mrf.mxu0
    %v9048 = vadd.f32 %v8704, %v9047
    %9049 = vmatmul.f32.gmra.mxu0 %v8839
    %v9050 = vpop.f32.mrf.mxu0
    %v9051 = vadd.f32 %v8704, %v9050
    %9052 = vmatmul.f32.gmra.mxu0 %v8842
    %v9053 = vpop.f32.mrf.mxu0
    %v9054 = vadd.f32 %v8704, %v9053
    %9055 = vmatmul.f32.gmra.mxu0 %v8845
    %v9056 = vpop.f32.mrf.mxu0
    %v9057 = vadd.f32 %v8704, %v9056
    %9058 = vmatmul.f32.gmra.mxu0 %v8848
    %v9059 = vpop.f32.mrf.mxu0
    %v9060 = vadd.f32 %v8704, %v9059
    %9061 = vmatmul.f32.gmra.mxu0 %v8851
    %v9062 = vpop.f32.mrf.mxu0
    %v9063 = vadd.f32 %v8704, %v9062
    %9064 = vmatmul.f32.gmra.mxu0 %v8854
    %v9065 = vpop.f32.mrf.mxu0
    %v9066 = vadd.f32 %v8704, %v9065
    %9067 = vmatmul.f32.gmra.mxu0 %v8857
    %v9068 = vpop.f32.mrf.mxu0
    %v9069 = vadd.f32 %v8704, %v9068
    %9070 = vmatmul.f32.gmra.mxu0 %v8860
    %v9071 = vpop.f32.mrf.mxu0
    %v9072 = vadd.f32 %v8704, %v9071
    %9073 = vmatmul.f32.gmra.mxu0 %v8863
    %v9074 = vpop.f32.mrf.mxu0
    %v9075 = vadd.f32 %v8704, %v9074
    %9076 = vmatmul.f32.gmra.mxu0 %v8866
    %v9077 = vpop.f32.mrf.mxu0
    %v9078 = vadd.f32 %v8704, %v9077
    %9079 = vmatmul.f32.gmra.mxu0 %v8869
    %v9080 = vpop.f32.mrf.mxu0
    %v9081 = vadd.f32 %v8704, %v9080
    %9082 = vmatmul.f32.gmra.mxu0 %v8872
    %v9083 = vpop.f32.mrf.mxu0
    %v9084 = vadd.f32 %v8704, %v9083
    %9085 = vmatmul.f32.gmra.mxu0 %v8875
    %v9086 = vpop.f32.mrf.mxu0
    %v9087 = vadd.f32 %v8704, %v9086
    %9088 = vmatmul.f32.gmra.mxu0 %v8878
    %v9089 = vpop.f32.mrf.mxu0
    %v9090 = vadd.f32 %v8704, %v9089
    %9091 = vmatmul.f32.gmra.mxu0 %v8881
    %v9092 = vpop.f32.mrf.mxu0
    %v9093 = vadd.f32 %v8704, %v9092
    %9094 = vmatmul.f32.gmra.mxu0 %v8884
    %v9095 = vpop.f32.mrf.mxu0
    %v9096 = vadd.f32 %v8704, %v9095
    %9097 = vmatmul.f32.gmra.mxu0 %v8887
    %v9098 = vpop.f32.mrf.mxu0
    %v9099 = vadd.f32 %v8704, %v9098
    %9100 = vmatmul.f32.gmra.mxu0 %v8890
    %v9101 = vpop.f32.mrf.mxu0
    %v9102 = vadd.f32 %v8704, %v9101
    %9103 = vmatmul.f32.gmra.mxu0 %v8893
    %v9104 = vpop.f32.mrf.mxu0
    %v9105 = vadd.f32 %v8704, %v9104
    %9106 = vmatmul.f32.gmra.mxu0 %v8896
    %v9107 = vpop.f32.mrf.mxu0
    %v9108 = vadd.f32 %v8704, %v9107
    %9109 = vdwg.mxu0
    %v9110 = vld [vmem:[%s11] sm:$0x1]
    %v9111 = vld [vmem:[%s12] sm:$0x1]
    %v9112 = vsel %vm2736, %v8919, 0.0
    %v9113 = vsel %vm2736, %v8922, 0.0
    %v9114 = vadd.f32 %v9112, %v9113
    %v9115 = vsel %vm2736, %v8925, 0.0
    %v9116 = vadd.f32 %v9114, %v9115
    %v9117 = vsel %vm2736, %v8928, 0.0
    %v9118 = vadd.f32 %v9116, %v9117
    %v9119 = vsel %vm2736, %v8931, 0.0
    %v9120 = vadd.f32 %v9118, %v9119
    %v9121 = vsel %vm2736, %v8934, 0.0
    %v9122 = vadd.f32 %v9120, %v9121
    %v9123 = vsel %vm2736, %v8937, 0.0
    %v9124 = vadd.f32 %v9122, %v9123
    %v9125 = vsel %vm2736, %v8940, 0.0
    %v9126 = vadd.f32 %v9124, %v9125
    %v9127 = vsel %vm2736, %v8943, 0.0
    %v9128 = vadd.f32 %v9126, %v9127
    %v9129 = vsel %vm2736, %v8946, 0.0
    %v9130 = vadd.f32 %v9128, %v9129
    %v9131 = vsel %vm2736, %v8949, 0.0
    %v9132 = vadd.f32 %v9130, %v9131
    %v9133 = vsel %vm2736, %v8952, 0.0
    %v9134 = vadd.f32 %v9132, %v9133
    %v9135 = vsel %vm2736, %v8955, 0.0
    %v9136 = vadd.f32 %v9134, %v9135
    %v9137 = vsel %vm2736, %v8958, 0.0
    %v9138 = vadd.f32 %v9136, %v9137
    %v9139 = vsel %vm2736, %v8961, 0.0
    %v9140 = vadd.f32 %v9138, %v9139
    %v9141 = vsel %vm2736, %v8964, 0.0
    %v9142 = vadd.f32 %v9140, %v9141
    %v9143 = vsel %vm2736, %v8967, 0.0
    %v9144 = vadd.f32 %v9142, %v9143
    %v9145 = vsel %vm2736, %v8970, 0.0
    %v9146 = vadd.f32 %v9144, %v9145
    %v9147 = vsel %vm2736, %v8973, 0.0
    %v9148 = vadd.f32 %v9146, %v9147
    %v9149 = vsel %vm2736, %v8976, 0.0
    %v9150 = vadd.f32 %v9148, %v9149
    %v9151 = vsel %vm2736, %v8979, 0.0
    %v9152 = vadd.f32 %v9150, %v9151
    %v9153 = vsel %vm2736, %v8982, 0.0
    %v9154 = vadd.f32 %v9152, %v9153
    %v9155 = vsel %vm2736, %v8985, 0.0
    %v9156 = vadd.f32 %v9154, %v9155
    %v9157 = vsel %vm2736, %v8988, 0.0
    %v9158 = vadd.f32 %v9156, %v9157
    %v9159 = vsel %vm2736, %v8991, 0.0
    %v9160 = vadd.f32 %v9158, %v9159
    %v9161 = vsel %vm2736, %v8994, 0.0
    %v9162 = vadd.f32 %v9160, %v9161
    %v9163 = vsel %vm2736, %v8997, 0.0
    %v9164 = vadd.f32 %v9162, %v9163
    %v9165 = vsel %vm2736, %v9000, 0.0
    %v9166 = vadd.f32 %v9164, %v9165
    %v9167 = vsel %vm2736, %v9003, 0.0
    %v9168 = vadd.f32 %v9166, %v9167
    %v9169 = vsel %vm2736, %v9006, 0.0
    %v9170 = vadd.f32 %v9168, %v9169
    %v9171 = vsel %vm2736, %v9009, 0.0
    %v9172 = vadd.f32 %v9170, %v9171
    %v9173 = vsel %vm2736, %v9012, 0.0
    %v9174 = vadd.f32 %v9172, %v9173
    %v9175 = vrot.slane %v9174, 4
    %v9176 = vadd.f32 %v9174, %v9175
    %v9177 = vrot.slane %v9176, 2
    %v9178 = vadd.f32 %v9176, %v9177
    %v9179 = vrot.slane %v9178, 1
    %v9180 = vadd.f32 %v9178, %v9179
    %v9181 = vsel %vm2736, %v9015, 0.0
    %v9182 = vsel %vm2736, %v9018, 0.0
    %v9183 = vadd.f32 %v9181, %v9182
    %v9184 = vsel %vm2736, %v9021, 0.0
    %v9185 = vadd.f32 %v9183, %v9184
    %v9186 = vsel %vm2736, %v9024, 0.0
    %v9187 = vadd.f32 %v9185, %v9186
    %v9188 = vsel %vm2736, %v9027, 0.0
    %v9189 = vadd.f32 %v9187, %v9188
    %v9190 = vsel %vm2736, %v9030, 0.0
    %v9191 = vadd.f32 %v9189, %v9190
    %v9192 = vsel %vm2736, %v9033, 0.0
    %v9193 = vadd.f32 %v9191, %v9192
    %v9194 = vsel %vm2736, %v9036, 0.0
    %v9195 = vadd.f32 %v9193, %v9194
    %v9196 = vsel %vm2736, %v9039, 0.0
    %v9197 = vadd.f32 %v9195, %v9196
    %v9198 = vsel %vm2736, %v9042, 0.0
    %v9199 = vadd.f32 %v9197, %v9198
    %v9200 = vsel %vm2736, %v9045, 0.0
    %v9201 = vadd.f32 %v9199, %v9200
    %v9202 = vsel %vm2736, %v9048, 0.0
    %v9203 = vadd.f32 %v9201, %v9202
    %v9204 = vsel %vm2736, %v9051, 0.0
    %v9205 = vadd.f32 %v9203, %v9204
    %v9206 = vsel %vm2736, %v9054, 0.0
    %v9207 = vadd.f32 %v9205, %v9206
    %v9208 = vsel %vm2736, %v9057, 0.0
    %v9209 = vadd.f32 %v9207, %v9208
    %v9210 = vsel %vm2736, %v9060, 0.0
    %v9211 = vadd.f32 %v9209, %v9210
    %v9212 = vsel %vm2736, %v9063, 0.0
    %v9213 = vadd.f32 %v9211, %v9212
    %v9214 = vsel %vm2736, %v9066, 0.0
    %v9215 = vadd.f32 %v9213, %v9214
    %v9216 = vsel %vm2736, %v9069, 0.0
    %v9217 = vadd.f32 %v9215, %v9216
    %v9218 = vsel %vm2736, %v9072, 0.0
    %v9219 = vadd.f32 %v9217, %v9218
    %v9220 = vsel %vm2736, %v9075, 0.0
    %v9221 = vadd.f32 %v9219, %v9220
    %v9222 = vsel %vm2736, %v9078, 0.0
    %v9223 = vadd.f32 %v9221, %v9222
    %v9224 = vsel %vm2736, %v9081, 0.0
    %v9225 = vadd.f32 %v9223, %v9224
    %v9226 = vsel %vm2736, %v9084, 0.0
    %v9227 = vadd.f32 %v9225, %v9226
    %v9228 = vsel %vm2736, %v9087, 0.0
    %v9229 = vadd.f32 %v9227, %v9228
    %v9230 = vsel %vm2736, %v9090, 0.0
    %v9231 = vadd.f32 %v9229, %v9230
    %v9232 = vsel %vm2736, %v9093, 0.0
    %v9233 = vadd.f32 %v9231, %v9232
    %v9234 = vsel %vm2736, %v9096, 0.0
    %v9235 = vadd.f32 %v9233, %v9234
    %v9236 = vsel %vm2736, %v9099, 0.0
    %v9237 = vadd.f32 %v9235, %v9236
    %v9238 = vsel %vm2736, %v9102, 0.0
    %v9239 = vadd.f32 %v9237, %v9238
    %v9240 = vsel %vm2736, %v9105, 0.0
    %v9241 = vadd.f32 %v9239, %v9240
    %v9242 = vsel %vm2736, %v9108, 0.0
    %v9243 = vadd.f32 %v9241, %v9242
    %v9244 = vrot.slane %v9243, 4
    %v9245 = vadd.f32 %v9243, %v9244
    %v9246 = vrot.slane %v9245, 2
    %v9247 = vadd.f32 %v9245, %v9246
    %v9248 = vrot.slane %v9247, 1
    %v9249 = vadd.f32 %v9247, %v9248
    %v9250 = vmul.f32 %v9180, %v3752
    %v9251 = vmul.f32 %v9249, %v3752
    %v9252 = vsub.f32 %v8919, %v9250
    %v9253 = vsub.f32 %v8922, %v9250
    %v9254 = vsub.f32 %v8925, %v9250
    %v9255 = vsub.f32 %v8928, %v9250
    %v9256 = vsub.f32 %v8931, %v9250
    %v9257 = vsub.f32 %v8934, %v9250
    %v9258 = vsub.f32 %v8937, %v9250
    %v9259 = vsub.f32 %v8940, %v9250
    %v9260 = vsub.f32 %v8943, %v9250
    %v9261 = vsub.f32 %v8946, %v9250
    %v9262 = vsub.f32 %v8949, %v9250
    %v9263 = vsub.f32 %v8952, %v9250
    %v9264 = vsub.f32 %v8955, %v9250
    %v9265 = vsub.f32 %v8958, %v9250
    %v9266 = vsub.f32 %v8961, %v9250
    %v9267 = vsub.f32 %v8964, %v9250
    %v9268 = vsub.f32 %v8967, %v9250
    %v9269 = vsub.f32 %v8970, %v9250
    %v9270 = vsub.f32 %v8973, %v9250
    %v9271 = vsub.f32 %v8976, %v9250
    %v9272 = vsub.f32 %v8979, %v9250
    %v9273 = vsub.f32 %v8982, %v9250
    %v9274 = vsub.f32 %v8985, %v9250
    %v9275 = vsub.f32 %v8988, %v9250
    %v9276 = vsub.f32 %v8991, %v9250
    %v9277 = vsub.f32 %v8994, %v9250
    %v9278 = vsub.f32 %v8997, %v9250
    %v9279 = vsub.f32 %v9000, %v9250
    %v9280 = vsub.f32 %v9003, %v9250
    %v9281 = vsub.f32 %v9006, %v9250
    %v9282 = vsub.f32 %v9009, %v9250
    %v9283 = vsub.f32 %v9012, %v9250
    %v9284 = vsub.f32 %v9015, %v9251
    %v9285 = vsub.f32 %v9018, %v9251
    %v9286 = vsub.f32 %v9021, %v9251
    %v9287 = vsub.f32 %v9024, %v9251
    %v9288 = vsub.f32 %v9027, %v9251
    %v9289 = vsub.f32 %v9030, %v9251
    %v9290 = vsub.f32 %v9033, %v9251
    %v9291 = vsub.f32 %v9036, %v9251
    %v9292 = vsub.f32 %v9039, %v9251
    %v9293 = vsub.f32 %v9042, %v9251
    %v9294 = vsub.f32 %v9045, %v9251
    %v9295 = vsub.f32 %v9048, %v9251
    %v9296 = vsub.f32 %v9051, %v9251
    %v9297 = vsub.f32 %v9054, %v9251
    %v9298 = vsub.f32 %v9057, %v9251
    %v9299 = vsub.f32 %v9060, %v9251
    %v9300 = vsub.f32 %v9063, %v9251
    %v9301 = vsub.f32 %v9066, %v9251
    %v9302 = vsub.f32 %v9069, %v9251
    %v9303 = vsub.f32 %v9072, %v9251
    %v9304 = vsub.f32 %v9075, %v9251
    %v9305 = vsub.f32 %v9078, %v9251
    %v9306 = vsub.f32 %v9081, %v9251
    %v9307 = vsub.f32 %v9084, %v9251
    %v9308 = vsub.f32 %v9087, %v9251
    %v9309 = vsub.f32 %v9090, %v9251
    %v9310 = vsub.f32 %v9093, %v9251
    %v9311 = vsub.f32 %v9096, %v9251
    %v9312 = vsub.f32 %v9099, %v9251
    %v9313 = vsub.f32 %v9102, %v9251
    %v9314 = vsub.f32 %v9105, %v9251
    %v9315 = vsub.f32 %v9108, %v9251
    %v9316 = vmul.f32 %v9252, %v9252
    %v9317 = vmul.f32 %v9253, %v9253
    %v9318 = vmul.f32 %v9254, %v9254
    %v9319 = vmul.f32 %v9255, %v9255
    %v9320 = vmul.f32 %v9256, %v9256
    %v9321 = vmul.f32 %v9257, %v9257
    %v9322 = vmul.f32 %v9258, %v9258
    %v9323 = vmul.f32 %v9259, %v9259
    %v9324 = vmul.f32 %v9260, %v9260
    %v9325 = vmul.f32 %v9261, %v9261
    %v9326 = vmul.f32 %v9262, %v9262
    %v9327 = vmul.f32 %v9263, %v9263
    %v9328 = vmul.f32 %v9264, %v9264
    %v9329 = vmul.f32 %v9265, %v9265
    %v9330 = vmul.f32 %v9266, %v9266
    %v9331 = vmul.f32 %v9267, %v9267
    %v9332 = vmul.f32 %v9268, %v9268
    %v9333 = vmul.f32 %v9269, %v9269
    %v9334 = vmul.f32 %v9270, %v9270
    %v9335 = vmul.f32 %v9271, %v9271
    %v9336 = vmul.f32 %v9272, %v9272
    %v9337 = vmul.f32 %v9273, %v9273
    %v9338 = vmul.f32 %v9274, %v9274
    %v9339 = vmul.f32 %v9275, %v9275
    %v9340 = vmul.f32 %v9276, %v9276
    %v9341 = vmul.f32 %v9277, %v9277
    %v9342 = vmul.f32 %v9278, %v9278
    %v9343 = vmul.f32 %v9279, %v9279
    %v9344 = vmul.f32 %v9280, %v9280
    %v9345 = vmul.f32 %v9281, %v9281
    %v9346 = vmul.f32 %v9282, %v9282
    %v9347 = vmul.f32 %v9283, %v9283
    %v9348 = vmul.f32 %v9284, %v9284
    %v9349 = vmul.f32 %v9285, %v9285
    %v9350 = vmul.f32 %v9286, %v9286
    %v9351 = vmul.f32 %v9287, %v9287
    %v9352 = vmul.f32 %v9288, %v9288
    %v9353 = vmul.f32 %v9289, %v9289
    %v9354 = vmul.f32 %v9290, %v9290
    %v9355 = vmul.f32 %v9291, %v9291
    %v9356 = vmul.f32 %v9292, %v9292
    %v9357 = vmul.f32 %v9293, %v9293
    %v9358 = vmul.f32 %v9294, %v9294
    %v9359 = vmul.f32 %v9295, %v9295
    %v9360 = vmul.f32 %v9296, %v9296
    %v9361 = vmul.f32 %v9297, %v9297
    %v9362 = vmul.f32 %v9298, %v9298
    %v9363 = vmul.f32 %v9299, %v9299
    %v9364 = vmul.f32 %v9300, %v9300
    %v9365 = vmul.f32 %v9301, %v9301
    %v9366 = vmul.f32 %v9302, %v9302
    %v9367 = vmul.f32 %v9303, %v9303
    %v9368 = vmul.f32 %v9304, %v9304
    %v9369 = vmul.f32 %v9305, %v9305
    %v9370 = vmul.f32 %v9306, %v9306
    %v9371 = vmul.f32 %v9307, %v9307
    %v9372 = vmul.f32 %v9308, %v9308
    %v9373 = vmul.f32 %v9309, %v9309
    %v9374 = vmul.f32 %v9310, %v9310
    %v9375 = vmul.f32 %v9311, %v9311
    %v9376 = vmul.f32 %v9312, %v9312
    %v9377 = vmul.f32 %v9313, %v9313
    %v9378 = vmul.f32 %v9314, %v9314
    %v9379 = vmul.f32 %v9315, %v9315
    %v9380 = vsel %vm2736, %v9316, 0.0
    %v9381 = vsel %vm2736, %v9317, 0.0
    %v9382 = vadd.f32 %v9380, %v9381
    %v9383 = vsel %vm2736, %v9318, 0.0
    %v9384 = vadd.f32 %v9382, %v9383
    %v9385 = vsel %vm2736, %v9319, 0.0
    %v9386 = vadd.f32 %v9384, %v9385
    %v9387 = vsel %vm2736, %v9320, 0.0
    %v9388 = vadd.f32 %v9386, %v9387
    %v9389 = vsel %vm2736, %v9321, 0.0
    %v9390 = vadd.f32 %v9388, %v9389
    %v9391 = vsel %vm2736, %v9322, 0.0
    %v9392 = vadd.f32 %v9390, %v9391
    %v9393 = vsel %vm2736, %v9323, 0.0
    %v9394 = vadd.f32 %v9392, %v9393
    %v9395 = vsel %vm2736, %v9324, 0.0
    %v9396 = vadd.f32 %v9394, %v9395
    %v9397 = vsel %vm2736, %v9325, 0.0
    %v9398 = vadd.f32 %v9396, %v9397
    %v9399 = vsel %vm2736, %v9326, 0.0
    %v9400 = vadd.f32 %v9398, %v9399
    %v9401 = vsel %vm2736, %v9327, 0.0
    %v9402 = vadd.f32 %v9400, %v9401
    %v9403 = vsel %vm2736, %v9328, 0.0
    %v9404 = vadd.f32 %v9402, %v9403
    %v9405 = vsel %vm2736, %v9329, 0.0
    %v9406 = vadd.f32 %v9404, %v9405
    %v9407 = vsel %vm2736, %v9330, 0.0
    %v9408 = vadd.f32 %v9406, %v9407
    %v9409 = vsel %vm2736, %v9331, 0.0
    %v9410 = vadd.f32 %v9408, %v9409
    %v9411 = vsel %vm2736, %v9332, 0.0
    %v9412 = vadd.f32 %v9410, %v9411
    %v9413 = vsel %vm2736, %v9333, 0.0
    %v9414 = vadd.f32 %v9412, %v9413
    %v9415 = vsel %vm2736, %v9334, 0.0
    %v9416 = vadd.f32 %v9414, %v9415
    %v9417 = vsel %vm2736, %v9335, 0.0
    %v9418 = vadd.f32 %v9416, %v9417
    %v9419 = vsel %vm2736, %v9336, 0.0
    %v9420 = vadd.f32 %v9418, %v9419
    %v9421 = vsel %vm2736, %v9337, 0.0
    %v9422 = vadd.f32 %v9420, %v9421
    %v9423 = vsel %vm2736, %v9338, 0.0
    %v9424 = vadd.f32 %v9422, %v9423
    %v9425 = vsel %vm2736, %v9339, 0.0
    %v9426 = vadd.f32 %v9424, %v9425
    %v9427 = vsel %vm2736, %v9340, 0.0
    %v9428 = vadd.f32 %v9426, %v9427
    %v9429 = vsel %vm2736, %v9341, 0.0
    %v9430 = vadd.f32 %v9428, %v9429
    %v9431 = vsel %vm2736, %v9342, 0.0
    %v9432 = vadd.f32 %v9430, %v9431
    %v9433 = vsel %vm2736, %v9343, 0.0
    %v9434 = vadd.f32 %v9432, %v9433
    %v9435 = vsel %vm2736, %v9344, 0.0
    %v9436 = vadd.f32 %v9434, %v9435
    %v9437 = vsel %vm2736, %v9345, 0.0
    %v9438 = vadd.f32 %v9436, %v9437
    %v9439 = vsel %vm2736, %v9346, 0.0
    %v9440 = vadd.f32 %v9438, %v9439
    %v9441 = vsel %vm2736, %v9347, 0.0
    %v9442 = vadd.f32 %v9440, %v9441
    %v9443 = vrot.slane %v9442, 4
    %v9444 = vadd.f32 %v9442, %v9443
    %v9445 = vrot.slane %v9444, 2
    %v9446 = vadd.f32 %v9444, %v9445
    %v9447 = vrot.slane %v9446, 1
    %v9448 = vadd.f32 %v9446, %v9447
    %v9449 = vsel %vm2736, %v9348, 0.0
    %v9450 = vsel %vm2736, %v9349, 0.0
    %v9451 = vadd.f32 %v9449, %v9450
    %v9452 = vsel %vm2736, %v9350, 0.0
    %v9453 = vadd.f32 %v9451, %v9452
    %v9454 = vsel %vm2736, %v9351, 0.0
    %v9455 = vadd.f32 %v9453, %v9454
    %v9456 = vsel %vm2736, %v9352, 0.0
    %v9457 = vadd.f32 %v9455, %v9456
    %v9458 = vsel %vm2736, %v9353, 0.0
    %v9459 = vadd.f32 %v9457, %v9458
    %v9460 = vsel %vm2736, %v9354, 0.0
    %v9461 = vadd.f32 %v9459, %v9460
    %v9462 = vsel %vm2736, %v9355, 0.0
    %v9463 = vadd.f32 %v9461, %v9462
    %v9464 = vsel %vm2736, %v9356, 0.0
    %v9465 = vadd.f32 %v9463, %v9464
    %v9466 = vsel %vm2736, %v9357, 0.0
    %v9467 = vadd.f32 %v9465, %v9466
    %v9468 = vsel %vm2736, %v9358, 0.0
    %v9469 = vadd.f32 %v9467, %v9468
    %v9470 = vsel %vm2736, %v9359, 0.0
    %v9471 = vadd.f32 %v9469, %v9470
    %v9472 = vsel %vm2736, %v9360, 0.0
    %v9473 = vadd.f32 %v9471, %v9472
    %v9474 = vsel %vm2736, %v9361, 0.0
    %v9475 = vadd.f32 %v9473, %v9474
    %v9476 = vsel %vm2736, %v9362, 0.0
    %v9477 = vadd.f32 %v9475, %v9476
    %v9478 = vsel %vm2736, %v9363, 0.0
    %v9479 = vadd.f32 %v9477, %v9478
    %v9480 = vsel %vm2736, %v9364, 0.0
    %v9481 = vadd.f32 %v9479, %v9480
    %v9482 = vsel %vm2736, %v9365, 0.0
    %v9483 = vadd.f32 %v9481, %v9482
    %v9484 = vsel %vm2736, %v9366, 0.0
    %v9485 = vadd.f32 %v9483, %v9484
    %v9486 = vsel %vm2736, %v9367, 0.0
    %v9487 = vadd.f32 %v9485, %v9486
    %v9488 = vsel %vm2736, %v9368, 0.0
    %v9489 = vadd.f32 %v9487, %v9488
    %v9490 = vsel %vm2736, %v9369, 0.0
    %v9491 = vadd.f32 %v9489, %v9490
    %v9492 = vsel %vm2736, %v9370, 0.0
    %v9493 = vadd.f32 %v9491, %v9492
    %v9494 = vsel %vm2736, %v9371, 0.0
    %v9495 = vadd.f32 %v9493, %v9494
    %v9496 = vsel %vm2736, %v9372, 0.0
    %v9497 = vadd.f32 %v9495, %v9496
    %v9498 = vsel %vm2736, %v9373, 0.0
    %v9499 = vadd.f32 %v9497, %v9498
    %v9500 = vsel %vm2736, %v9374, 0.0
    %v9501 = vadd.f32 %v9499, %v9500
    %v9502 = vsel %vm2736, %v9375, 0.0
    %v9503 = vadd.f32 %v9501, %v9502
    %v9504 = vsel %vm2736, %v9376, 0.0
    %v9505 = vadd.f32 %v9503, %v9504
    %v9506 = vsel %vm2736, %v9377, 0.0
    %v9507 = vadd.f32 %v9505, %v9506
    %v9508 = vsel %vm2736, %v9378, 0.0
    %v9509 = vadd.f32 %v9507, %v9508
    %v9510 = vsel %vm2736, %v9379, 0.0
    %v9511 = vadd.f32 %v9509, %v9510
    %v9512 = vrot.slane %v9511, 4
    %v9513 = vadd.f32 %v9511, %v9512
    %v9514 = vrot.slane %v9513, 2
    %v9515 = vadd.f32 %v9513, %v9514
    %v9516 = vrot.slane %v9515, 1
    %v9517 = vadd.f32 %v9515, %v9516
    %v9518 = vmul.f32 %v9448, %v3752
    %v9519 = vmul.f32 %v9517, %v3752
    %v9520 = vadd.f32 %v9518, 1e-05
    %v9521 = vadd.f32 %v9519, 1e-05
    %v9522 = vrsqrt.pop %v9520
    %v9523 = vmul.f32 %v9522, %v9520
    %v9524 = vmul.f32 %v9523, %v9522
    %v9525 = vmul.f32 0.5, %v9524
    %v9526 = vsub.f32 1.5, %v9525
    %v9527 = vmul.f32 %v9522, %v9526
    %vm9528 = vweird.f32 %v9520
    %vm9529 = vweird.f32 %v9522
    %vm9530 = vmor %vm9528, %vm9529
    %v9531 = vsel %vm9530, %v9522, %v9527
    %v9532 = vrsqrt.pop %v9521
    %v9533 = vmul.f32 %v9532, %v9521
    %v9534 = vmul.f32 %v9533, %v9532
    %v9535 = vmul.f32 0.5, %v9534
    %v9536 = vsub.f32 1.5, %v9535
    %v9537 = vmul.f32 %v9532, %v9536
    %vm9538 = vweird.f32 %v9521
    %vm9539 = vweird.f32 %v9532
    %vm9540 = vmor %vm9538, %vm9539
    %v9541 = vsel %vm9540, %v9532, %v9537
    %v9542 = vmul.f32 %v9252, %v9531
    %v9543 = vmul.f32 %v9253, %v9531
    %v9544 = vmul.f32 %v9254, %v9531
    %v9545 = vmul.f32 %v9255, %v9531
    %v9546 = vmul.f32 %v9256, %v9531
    %v9547 = vmul.f32 %v9257, %v9531
    %v9548 = vmul.f32 %v9258, %v9531
    %v9549 = vmul.f32 %v9259, %v9531
    %v9550 = vmul.f32 %v9260, %v9531
    %v9551 = vmul.f32 %v9261, %v9531
    %v9552 = vmul.f32 %v9262, %v9531
    %v9553 = vmul.f32 %v9263, %v9531
    %v9554 = vmul.f32 %v9264, %v9531
    %v9555 = vmul.f32 %v9265, %v9531
    %v9556 = vmul.f32 %v9266, %v9531
    %v9557 = vmul.f32 %v9267, %v9531
    %v9558 = vmul.f32 %v9268, %v9531
    %v9559 = vmul.f32 %v9269, %v9531
    %v9560 = vmul.f32 %v9270, %v9531
    %v9561 = vmul.f32 %v9271, %v9531
    %v9562 = vmul.f32 %v9272, %v9531
    %v9563 = vmul.f32 %v9273, %v9531
    %v9564 = vmul.f32 %v9274, %v9531
    %v9565 = vmul.f32 %v9275, %v9531
    %v9566 = vmul.f32 %v9276, %v9531
    %v9567 = vmul.f32 %v9277, %v9531
    %v9568 = vmul.f32 %v9278, %v9531
    %v9569 = vmul.f32 %v9279, %v9531
    %v9570 = vmul.f32 %v9280, %v9531
    %v9571 = vmul.f32 %v9281, %v9531
    %v9572 = vmul.f32 %v9282, %v9531
    %v9573 = vmul.f32 %v9283, %v9531
    %v9574 = vmul.f32 %v9284, %v9541
    %v9575 = vmul.f32 %v9285, %v9541
    %v9576 = vmul.f32 %v9286, %v9541
    %v9577 = vmul.f32 %v9287, %v9541
    %v9578 = vmul.f32 %v9288, %v9541
    %v9579 = vmul.f32 %v9289, %v9541
    %v9580 = vmul.f32 %v9290, %v9541
    %v9581 = vmul.f32 %v9291, %v9541
    %v9582 = vmul.f32 %v9292, %v9541
    %v9583 = vmul.f32 %v9293, %v9541
    %v9584 = vmul.f32 %v9294, %v9541
    %v9585 = vmul.f32 %v9295, %v9541
    %v9586 = vmul.f32 %v9296, %v9541
    %v9587 = vmul.f32 %v9297, %v9541
    %v9588 = vmul.f32 %v9298, %v9541
    %v9589 = vmul.f32 %v9299, %v9541
    %v9590 = vmul.f32 %v9300, %v9541
    %v9591 = vmul.f32 %v9301, %v9541
    %v9592 = vmul.f32 %v9302, %v9541
    %v9593 = vmul.f32 %v9303, %v9541
    %v9594 = vmul.f32 %v9304, %v9541
    %v9595 = vmul.f32 %v9305, %v9541
    %v9596 = vmul.f32 %v9306, %v9541
    %v9597 = vmul.f32 %v9307, %v9541
    %v9598 = vmul.f32 %v9308, %v9541
    %v9599 = vmul.f32 %v9309, %v9541
    %v9600 = vmul.f32 %v9310, %v9541
    %v9601 = vmul.f32 %v9311, %v9541
    %v9602 = vmul.f32 %v9312, %v9541
    %v9603 = vmul.f32 %v9313, %v9541
    %v9604 = vmul.f32 %v9314, %v9541
    %v9605 = vmul.f32 %v9315, %v9541
    %v9607 = vperm.slane %v9110, 0
    %v9609 = vmul.f32 %v9542, %v9607
    %v9610 = vmul.f32 %v9543, %v9607
    %v9611 = vmul.f32 %v9544, %v9607
    %v9612 = vmul.f32 %v9545, %v9607
    %v9613 = vmul.f32 %v9546, %v9607
    %v9614 = vmul.f32 %v9547, %v9607
    %v9615 = vmul.f32 %v9548, %v9607
    %v9616 = vmul.f32 %v9549, %v9607
    %v9617 = vmul.f32 %v9550, %v9607
    %v9618 = vmul.f32 %v9551, %v9607
    %v9619 = vmul.f32 %v9552, %v9607
    %v9620 = vmul.f32 %v9553, %v9607
    %v9621 = vmul.f32 %v9554, %v9607
    %v9622 = vmul.f32 %v9555, %v9607
    %v9623 = vmul.f32 %v9556, %v9607
    %v9624 = vmul.f32 %v9557, %v9607
    %v9625 = vmul.f32 %v9558, %v9607
    %v9626 = vmul.f32 %v9559, %v9607
    %v9627 = vmul.f32 %v9560, %v9607
    %v9628 = vmul.f32 %v9561, %v9607
    %v9629 = vmul.f32 %v9562, %v9607
    %v9630 = vmul.f32 %v9563, %v9607
    %v9631 = vmul.f32 %v9564, %v9607
    %v9632 = vmul.f32 %v9565, %v9607
    %v9633 = vmul.f32 %v9566, %v9607
    %v9634 = vmul.f32 %v9567, %v9607
    %v9635 = vmul.f32 %v9568, %v9607
    %v9636 = vmul.f32 %v9569, %v9607
    %v9637 = vmul.f32 %v9570, %v9607
    %v9638 = vmul.f32 %v9571, %v9607
    %v9639 = vmul.f32 %v9572, %v9607
    %v9640 = vmul.f32 %v9573, %v9607
    %v9641 = vmul.f32 %v9574, %v9607
    %v9642 = vmul.f32 %v9575, %v9607
    %v9643 = vmul.f32 %v9576, %v9607
    %v9644 = vmul.f32 %v9577, %v9607
    %v9645 = vmul.f32 %v9578, %v9607
    %v9646 = vmul.f32 %v9579, %v9607
    %v9647 = vmul.f32 %v9580, %v9607
    %v9648 = vmul.f32 %v9581, %v9607
    %v9649 = vmul.f32 %v9582, %v9607
    %v9650 = vmul.f32 %v9583, %v9607
    %v9651 = vmul.f32 %v9584, %v9607
    %v9652 = vmul.f32 %v9585, %v9607
    %v9653 = vmul.f32 %v9586, %v9607
    %v9654 = vmul.f32 %v9587, %v9607
    %v9655 = vmul.f32 %v9588, %v9607
    %v9656 = vmul.f32 %v9589, %v9607
    %v9657 = vmul.f32 %v9590, %v9607
    %v9658 = vmul.f32 %v9591, %v9607
    %v9659 = vmul.f32 %v9592, %v9607
    %v9660 = vmul.f32 %v9593, %v9607
    %v9661 = vmul.f32 %v9594, %v9607
    %v9662 = vmul.f32 %v9595, %v9607
    %v9663 = vmul.f32 %v9596, %v9607
    %v9664 = vmul.f32 %v9597, %v9607
    %v9665 = vmul.f32 %v9598, %v9607
    %v9666 = vmul.f32 %v9599, %v9607
    %v9667 = vmul.f32 %v9600, %v9607
    %v9668 = vmul.f32 %v9601, %v9607
    %v9669 = vmul.f32 %v9602, %v9607
    %v9670 = vmul.f32 %v9603, %v9607
    %v9671 = vmul.f32 %v9604, %v9607
    %v9672 = vmul.f32 %v9605, %v9607
    %v9674 = vperm.slane %v9111, 0
    %v9676 = vadd.f32 %v9609, %v9674
    %v9677 = vadd.f32 %v9610, %v9674
    %v9678 = vadd.f32 %v9611, %v9674
    %v9679 = vadd.f32 %v9612, %v9674
    %v9680 = vadd.f32 %v9613, %v9674
    %v9681 = vadd.f32 %v9614, %v9674
    %v9682 = vadd.f32 %v9615, %v9674
    %v9683 = vadd.f32 %v9616, %v9674
    %v9684 = vadd.f32 %v9617, %v9674
    %v9685 = vadd.f32 %v9618, %v9674
    %v9686 = vadd.f32 %v9619, %v9674
    %v9687 = vadd.f32 %v9620, %v9674
    %v9688 = vadd.f32 %v9621, %v9674
    %v9689 = vadd.f32 %v9622, %v9674
    %v9690 = vadd.f32 %v9623, %v9674
    %v9691 = vadd.f32 %v9624, %v9674
    %v9692 = vadd.f32 %v9625, %v9674
    %v9693 = vadd.f32 %v9626, %v9674
    %v9694 = vadd.f32 %v9627, %v9674
    %v9695 = vadd.f32 %v9628, %v9674
    %v9696 = vadd.f32 %v9629, %v9674
    %v9697 = vadd.f32 %v9630, %v9674
    %v9698 = vadd.f32 %v9631, %v9674
    %v9699 = vadd.f32 %v9632, %v9674
    %v9700 = vadd.f32 %v9633, %v9674
    %v9701 = vadd.f32 %v9634, %v9674
    %v9702 = vadd.f32 %v9635, %v9674
    %v9703 = vadd.f32 %v9636, %v9674
    %v9704 = vadd.f32 %v9637, %v9674
    %v9705 = vadd.f32 %v9638, %v9674
    %v9706 = vadd.f32 %v9639, %v9674
    %v9707 = vadd.f32 %v9640, %v9674
    %v9708 = vadd.f32 %v9641, %v9674
    %v9709 = vadd.f32 %v9642, %v9674
    %v9710 = vadd.f32 %v9643, %v9674
    %v9711 = vadd.f32 %v9644, %v9674
    %v9712 = vadd.f32 %v9645, %v9674
    %v9713 = vadd.f32 %v9646, %v9674
    %v9714 = vadd.f32 %v9647, %v9674
    %v9715 = vadd.f32 %v9648, %v9674
    %v9716 = vadd.f32 %v9649, %v9674
    %v9717 = vadd.f32 %v9650, %v9674
    %v9718 = vadd.f32 %v9651, %v9674
    %v9719 = vadd.f32 %v9652, %v9674
    %v9720 = vadd.f32 %v9653, %v9674
    %v9721 = vadd.f32 %v9654, %v9674
    %v9722 = vadd.f32 %v9655, %v9674
    %v9723 = vadd.f32 %v9656, %v9674
    %v9724 = vadd.f32 %v9657, %v9674
    %v9725 = vadd.f32 %v9658, %v9674
    %v9726 = vadd.f32 %v9659, %v9674
    %v9727 = vadd.f32 %v9660, %v9674
    %v9728 = vadd.f32 %v9661, %v9674
    %v9729 = vadd.f32 %v9662, %v9674
    %v9730 = vadd.f32 %v9663, %v9674
    %v9731 = vadd.f32 %v9664, %v9674
    %v9732 = vadd.f32 %v9665, %v9674
    %v9733 = vadd.f32 %v9666, %v9674
    %v9734 = vadd.f32 %v9667, %v9674
    %v9735 = vadd.f32 %v9668, %v9674
    %v9736 = vadd.f32 %v9669, %v9674
    %v9737 = vadd.f32 %v9670, %v9674
    %v9738 = vadd.f32 %v9671, %v9674
    %v9739 = vadd.f32 %v9672, %v9674
    %v9740 = vadd.f32 %v9676, %v8573
    %v9741 = vadd.f32 %v9677, %v8574
    %v9742 = vadd.f32 %v9678, %v8575
    %v9743 = vadd.f32 %v9679, %v8576
    %v9744 = vadd.f32 %v9680, %v8577
    %v9745 = vadd.f32 %v9681, %v8578
    %v9746 = vadd.f32 %v9682, %v8579
    %v9747 = vadd.f32 %v9683, %v8580
    %v9748 = vadd.f32 %v9684, %v8581
    %v9749 = vadd.f32 %v9685, %v8582
    %v9750 = vadd.f32 %v9686, %v8583
    %v9751 = vadd.f32 %v9687, %v8584
    %v9752 = vadd.f32 %v9688, %v8585
    %v9753 = vadd.f32 %v9689, %v8586
    %v9754 = vadd.f32 %v9690, %v8587
    %v9755 = vadd.f32 %v9691, %v8588
    %v9756 = vadd.f32 %v9692, %v8589
    %v9757 = vadd.f32 %v9693, %v8590
    %v9758 = vadd.f32 %v9694, %v8591
    %v9759 = vadd.f32 %v9695, %v8592
    %v9760 = vadd.f32 %v9696, %v8593
    %v9761 = vadd.f32 %v9697, %v8594
    %v9762 = vadd.f32 %v9698, %v8595
    %v9763 = vadd.f32 %v9699, %v8596
    %v9764 = vadd.f32 %v9700, %v8597
    %v9765 = vadd.f32 %v9701, %v8598
    %v9766 = vadd.f32 %v9702, %v8599
    %v9767 = vadd.f32 %v9703, %v8600
    %v9768 = vadd.f32 %v9704, %v8601
    %v9769 = vadd.f32 %v9705, %v8602
    %v9770 = vadd.f32 %v9706, %v8603
    %v9771 = vadd.f32 %v9707, %v8604
    %v9772 = vadd.f32 %v9708, %v8605
    %v9773 = vadd.f32 %v9709, %v8606
    %v9774 = vadd.f32 %v9710, %v8607
    %v9775 = vadd.f32 %v9711, %v8608
    %v9776 = vadd.f32 %v9712, %v8609
    %v9777 = vadd.f32 %v9713, %v8610
    %v9778 = vadd.f32 %v9714, %v8611
    %v9779 = vadd.f32 %v9715, %v8612
    %v9780 = vadd.f32 %v9716, %v8613
    %v9781 = vadd.f32 %v9717, %v8614
    %v9782 = vadd.f32 %v9718, %v8615
    %v9783 = vadd.f32 %v9719, %v8616
    %v9784 = vadd.f32 %v9720, %v8617
    %v9785 = vadd.f32 %v9721, %v8618
    %v9786 = vadd.f32 %v9722, %v8619
    %v9787 = vadd.f32 %v9723, %v8620
    %v9788 = vadd.f32 %v9724, %v8621
    %v9789 = vadd.f32 %v9725, %v8622
    %v9790 = vadd.f32 %v9726, %v8623
    %v9791 = vadd.f32 %v9727, %v8624
    %v9792 = vadd.f32 %v9728, %v8625
    %v9793 = vadd.f32 %v9729, %v8626
    %v9794 = vadd.f32 %v9730, %v8627
    %v9795 = vadd.f32 %v9731, %v8628
    %v9796 = vadd.f32 %v9732, %v8629
    %v9797 = vadd.f32 %v9733, %v8630
    %v9798 = vadd.f32 %v9734, %v8631
    %v9799 = vadd.f32 %v9735, %v8632
    %v9800 = vadd.f32 %v9736, %v8633
    %v9801 = vadd.f32 %v9737, %v8634
    %v9802 = vadd.f32 %v9738, %v8635
    %v9803 = vadd.f32 %v9739, %v8636
    %v9804 = vmax.f32 %v9740, 0.0
    %v9805 = vmax.f32 %v9741, 0.0
    %v9806 = vmax.f32 %v9742, 0.0
    %v9807 = vmax.f32 %v9743, 0.0
    %v9808 = vmax.f32 %v9744, 0.0
    %v9809 = vmax.f32 %v9745, 0.0
    %v9810 = vmax.f32 %v9746, 0.0
    %v9811 = vmax.f32 %v9747, 0.0
    %v9812 = vmax.f32 %v9748, 0.0
    %v9813 = vmax.f32 %v9749, 0.0
    %v9814 = vmax.f32 %v9750, 0.0
    %v9815 = vmax.f32 %v9751, 0.0
    %v9816 = vmax.f32 %v9752, 0.0
    %v9817 = vmax.f32 %v9753, 0.0
    %v9818 = vmax.f32 %v9754, 0.0
    %v9819 = vmax.f32 %v9755, 0.0
    %v9820 = vmax.f32 %v9756, 0.0
    %v9821 = vmax.f32 %v9757, 0.0
    %v9822 = vmax.f32 %v9758, 0.0
    %v9823 = vmax.f32 %v9759, 0.0
    %v9824 = vmax.f32 %v9760, 0.0
    %v9825 = vmax.f32 %v9761, 0.0
    %v9826 = vmax.f32 %v9762, 0.0
    %v9827 = vmax.f32 %v9763, 0.0
    %v9828 = vmax.f32 %v9764, 0.0
    %v9829 = vmax.f32 %v9765, 0.0
    %v9830 = vmax.f32 %v9766, 0.0
    %v9831 = vmax.f32 %v9767, 0.0
    %v9832 = vmax.f32 %v9768, 0.0
    %v9833 = vmax.f32 %v9769, 0.0
    %v9834 = vmax.f32 %v9770, 0.0
    %v9835 = vmax.f32 %v9771, 0.0
    %v9836 = vmax.f32 %v9772, 0.0
    %v9837 = vmax.f32 %v9773, 0.0
    %v9838 = vmax.f32 %v9774, 0.0
    %v9839 = vmax.f32 %v9775, 0.0
    %v9840 = vmax.f32 %v9776, 0.0
    %v9841 = vmax.f32 %v9777, 0.0
    %v9842 = vmax.f32 %v9778, 0.0
    %v9843 = vmax.f32 %v9779, 0.0
    %v9844 = vmax.f32 %v9780, 0.0
    %v9845 = vmax.f32 %v9781, 0.0
    %v9846 = vmax.f32 %v9782, 0.0
    %v9847 = vmax.f32 %v9783, 0.0
    %v9848 = vmax.f32 %v9784, 0.0
    %v9849 = vmax.f32 %v9785, 0.0
    %v9850 = vmax.f32 %v9786, 0.0
    %v9851 = vmax.f32 %v9787, 0.0
    %v9852 = vmax.f32 %v9788, 0.0
    %v9853 = vmax.f32 %v9789, 0.0
    %v9854 = vmax.f32 %v9790, 0.0
    %v9855 = vmax.f32 %v9791, 0.0
    %v9856 = vmax.f32 %v9792, 0.0
    %v9857 = vmax.f32 %v9793, 0.0
    %v9858 = vmax.f32 %v9794, 0.0
    %v9859 = vmax.f32 %v9795, 0.0
    %v9860 = vmax.f32 %v9796, 0.0
    %v9861 = vmax.f32 %v9797, 0.0
    %v9862 = vmax.f32 %v9798, 0.0
    %v9863 = vmax.f32 %v9799, 0.0
    %v9864 = vmax.f32 %v9800, 0.0
    %v9865 = vmax.f32 %v9801, 0.0
    %v9866 = vmax.f32 %v9802, 0.0
    %v9867 = vmax.f32 %v9803, 0.0
    %9868 = vxpose.xlu0.b32.start [1/16] %v9804, 128
    %9869 = vxpose.xlu0.b32.cont [2/16] %v9805, 128
    %9870 = vxpose.xlu0.b32.cont [3/16] %v9806, 128
    %9871 = vxpose.xlu0.b32.cont [4/16] %v9807, 128
    %9872 = vxpose.xlu0.b32.cont [5/16] %v9808, 128
    %9873 = vxpose.xlu0.b32.cont [6/16] %v9809, 128
    %9874 = vxpose.xlu0.b32.cont [7/16] %v9810, 128
    %9875 = vxpose.xlu0.b32.cont [8/16] %v9811, 128
    %9876 = vxpose.xlu0.b32.cont [9/16] %v9812, 128
    %9877 = vxpose.xlu0.b32.cont [10/16] %v9813, 128
    %9878 = vxpose.xlu0.b32.cont [11/16] %v9814, 128
    %9879 = vxpose.xlu0.b32.cont [12/16] %v9815, 128
    %9880 = vxpose.xlu0.b32.cont [13/16] %v9816, 128
    %9881 = vxpose.xlu0.b32.cont [14/16] %v9817, 128
    %9882 = vxpose.xlu0.b32.cont [15/16] %v9818, 128
    %9883 = vxpose.xlu0.b32.end [16/16] %v9819, 128
    %v9884 = vpop.trf.xlu0
    %v9885 = vpop.trf.xlu0
    %v9886 = vpop.trf.xlu0
    %v9887 = vpop.trf.xlu0
    %v9888 = vpop.trf.xlu0
    %v9889 = vpop.trf.xlu0
    %v9890 = vpop.trf.xlu0
    %v9891 = vpop.trf.xlu0
    %v9892 = vpop.trf.xlu0
    %v9893 = vpop.trf.xlu0
    %v9894 = vpop.trf.xlu0
    %v9895 = vpop.trf.xlu0
    %v9896 = vpop.trf.xlu0
    %v9897 = vpop.trf.xlu0
    %v9898 = vpop.trf.xlu0
    %v9899 = vpop.trf.xlu0
    %9900 = vxpose.xlu0.b32.start [1/16] %v9820, 128
    %9901 = vxpose.xlu0.b32.cont [2/16] %v9821, 128
    %9902 = vxpose.xlu0.b32.cont [3/16] %v9822, 128
    %9903 = vxpose.xlu0.b32.cont [4/16] %v9823, 128
    %9904 = vxpose.xlu0.b32.cont [5/16] %v9824, 128
    %9905 = vxpose.xlu0.b32.cont [6/16] %v9825, 128
    %9906 = vxpose.xlu0.b32.cont [7/16] %v9826, 128
    %9907 = vxpose.xlu0.b32.cont [8/16] %v9827, 128
    %9908 = vxpose.xlu0.b32.cont [9/16] %v9828, 128
    %9909 = vxpose.xlu0.b32.cont [10/16] %v9829, 128
    %9910 = vxpose.xlu0.b32.cont [11/16] %v9830, 128
    %9911 = vxpose.xlu0.b32.cont [12/16] %v9831, 128
    %9912 = vxpose.xlu0.b32.cont [13/16] %v9832, 128
    %9913 = vxpose.xlu0.b32.cont [14/16] %v9833, 128
    %9914 = vxpose.xlu0.b32.cont [15/16] %v9834, 128
    %9915 = vxpose.xlu0.b32.end [16/16] %v9835, 128
    %v9916 = vpop.trf.xlu0
    %v9917 = vpop.trf.xlu0
    %v9918 = vpop.trf.xlu0
    %v9919 = vpop.trf.xlu0
    %v9920 = vpop.trf.xlu0
    %v9921 = vpop.trf.xlu0
    %v9922 = vpop.trf.xlu0
    %v9923 = vpop.trf.xlu0
    %v9924 = vpop.trf.xlu0
    %v9925 = vpop.trf.xlu0
    %v9926 = vpop.trf.xlu0
    %v9927 = vpop.trf.xlu0
    %v9928 = vpop.trf.xlu0
    %v9929 = vpop.trf.xlu0
    %v9930 = vpop.trf.xlu0
    %v9931 = vpop.trf.xlu0
    %9932 = vxpose.xlu0.b32.start [1/16] %v9836, 128
    %9933 = vxpose.xlu0.b32.cont [2/16] %v9837, 128
    %9934 = vxpose.xlu0.b32.cont [3/16] %v9838, 128
    %9935 = vxpose.xlu0.b32.cont [4/16] %v9839, 128
    %9936 = vxpose.xlu0.b32.cont [5/16] %v9840, 128
    %9937 = vxpose.xlu0.b32.cont [6/16] %v9841, 128
    %9938 = vxpose.xlu0.b32.cont [7/16] %v9842, 128
    %9939 = vxpose.xlu0.b32.cont [8/16] %v9843, 128
    %9940 = vxpose.xlu0.b32.cont [9/16] %v9844, 128
    %9941 = vxpose.xlu0.b32.cont [10/16] %v9845, 128
    %9942 = vxpose.xlu0.b32.cont [11/16] %v9846, 128
    %9943 = vxpose.xlu0.b32.cont [12/16] %v9847, 128
    %9944 = vxpose.xlu0.b32.cont [13/16] %v9848, 128
    %9945 = vxpose.xlu0.b32.cont [14/16] %v9849, 128
    %9946 = vxpose.xlu0.b32.cont [15/16] %v9850, 128
    %9947 = vxpose.xlu0.b32.end [16/16] %v9851, 128
    %v9948 = vpop.trf.xlu0
    %v9949 = vpop.trf.xlu0
    %v9950 = vpop.trf.xlu0
    %v9951 = vpop.trf.xlu0
    %v9952 = vpop.trf.xlu0
    %v9953 = vpop.trf.xlu0
    %v9954 = vpop.trf.xlu0
    %v9955 = vpop.trf.xlu0
    %v9956 = vpop.trf.xlu0
    %v9957 = vpop.trf.xlu0
    %v9958 = vpop.trf.xlu0
    %v9959 = vpop.trf.xlu0
    %v9960 = vpop.trf.xlu0
    %v9961 = vpop.trf.xlu0
    %v9962 = vpop.trf.xlu0
    %v9963 = vpop.trf.xlu0
    %9964 = vxpose.xlu0.b32.start [1/16] %v9852, 128
    %9965 = vxpose.xlu0.b32.cont [2/16] %v9853, 128
    %9966 = vxpose.xlu0.b32.cont [3/16] %v9854, 128
    %9967 = vxpose.xlu0.b32.cont [4/16] %v9855, 128
    %9968 = vxpose.xlu0.b32.cont [5/16] %v9856, 128
    %9969 = vxpose.xlu0.b32.cont [6/16] %v9857, 128
    %9970 = vxpose.xlu0.b32.cont [7/16] %v9858, 128
    %9971 = vxpose.xlu0.b32.cont [8/16] %v9859, 128
    %9972 = vxpose.xlu0.b32.cont [9/16] %v9860, 128
    %9973 = vxpose.xlu0.b32.cont [10/16] %v9861, 128
    %9974 = vxpose.xlu0.b32.cont [11/16] %v9862, 128
    %9975 = vxpose.xlu0.b32.cont [12/16] %v9863, 128
    %9976 = vxpose.xlu0.b32.cont [13/16] %v9864, 128
    %9977 = vxpose.xlu0.b32.cont [14/16] %v9865, 128
    %9978 = vxpose.xlu0.b32.cont [15/16] %v9866, 128
    %9979 = vxpose.xlu0.b32.end [16/16] %v9867, 128
    %v9980 = vpop.trf.xlu0
    %v9981 = vpop.trf.xlu0
    %v9982 = vpop.trf.xlu0
    %v9983 = vpop.trf.xlu0
    %v9984 = vpop.trf.xlu0
    %v9985 = vpop.trf.xlu0
    %v9986 = vpop.trf.xlu0
    %v9987 = vpop.trf.xlu0
    %v9988 = vpop.trf.xlu0
    %v9989 = vpop.trf.xlu0
    %v9990 = vpop.trf.xlu0
    %v9991 = vpop.trf.xlu0
    %v9992 = vpop.trf.xlu0
    %v9993 = vpop.trf.xlu0
    %v9994 = vpop.trf.xlu0
    %v9995 = vpop.trf.xlu0
    %9996 = vst [vmem:[#allocation3] sm:$0xff] %v9884
    %9997 = vst [vmem:[#allocation3 + $0x8] sm:$0xff] %v9916
    %9998 = vst [vmem:[#allocation3 + $0x10] sm:$0xff] %v9948
    %9999 = vst [vmem:[#allocation3 + $0x18] sm:$0xff] %v9980
    // Predicated region
    $region54: #{tpu_custom_call.1} parent=1 // pred_check
      _
    $region55: #{tpu_custom_call.1} parent=1 // pred_check_branch
      %10001 = sbr.rel (0) target = $region57
    $region56: #{tpu_custom_call.1} parent=1 // pred_region
      %10003 = vsyncadd [#allocation4], 0
      %s10004 = sshll.u32 [#allocation3], 4
      %s10005 = int_to_ptr.vmem [resolvable:$true] %s10004
      %s10006 = sshll.u32 %s13, 4
      %s10007 = int_to_ptr.hbm [resolvable:$true] %s10006
      %10012 = dma.vmem_to_hbm [thread:$0]  %s10005, 512, %s10007, [#allocation4], 256, 256, 16
    $region57: #{tpu_custom_call.1} parent=1 // pred_fallthru
      _
    // Predicated region
    $region58: #{tpu_custom_call.1} parent=1 // pred_check
      _
    $region59: #{tpu_custom_call.1} parent=1 // pred_check_branch
      %10014 = sbr.rel (0) target = $region61
    $region60: #{tpu_custom_call.1} parent=1 // pred_region
      %10016 = dma.done [#allocation4], 512
    $region61: #{tpu_custom_call.1} parent=1 // pred_fallthru
      _
    %10017 = vsyncpa [#allocation4], 1

</llo_original>
